<compile_context>
chip_gen: v5e
topology: v5e:2x2
jax: 0.10.0
libtpu: 0.0.40
codegen_flags: <defaults>
</compile_context>

<pallas_src>
import functools

import jax
import jax.numpy as jnp
from jax import lax
from jax.experimental import pallas as pl
from jax.experimental.pallas import tpu as pltpu


# MXU / activation dtype: bf16 inputs + f32 accumulate (fast path on v6e/v7x).
ACT_DTYPE = jnp.bfloat16


def _round_up(x, m):
    return ((x + m - 1) // m) * m


def _pick_tm(m, cap):
    """Row tile that divides m exactly when possible (multiple of 16/8), else cdiv."""
    if m <= cap:
        return m
    for align in (16, 8):
        d = (cap // align) * align
        while d >= align:
            if m % d == 0:
                return d
            d -= align
    return min(cap, m)   # fallback: masked edge tile (rows are independent)


# ----------------------------------------------------------------------------
# Pallas kernel 1: windowed conv (in-kernel im2col) + bias + ReLU
#   x_ref : (1, 1, Hp*Wp, Cin)   spatially flattened input (one image, one net)
#   w_ref : (1, nwin, Cin, OC)   per-window weight blocks
#   b_ref : (1, 1, OC)
#   o_ref : (1, 1, Hp*Wp, OC)    row ho*Wp+wo holds output pixel (ho, wo)
# ----------------------------------------------------------------------------
def _conv_win_kernel(x_ref, w_ref, b_ref, o_ref, *, offsets, lr):
    acc = jnp.dot(x_ref[0, 0, offsets[0]:offsets[0] + lr, :], w_ref[0, 0],
                  preferred_element_type=jnp.float32)
    for j in range(1, len(offsets)):
        off = offsets[j]
        acc = acc + jnp.dot(x_ref[0, 0, off:off + lr, :], w_ref[0, j],
                            preferred_element_type=jnp.float32)
    acc = jnp.maximum(acc + b_ref[0], 0.0)          # f32 epilogue (v5e-safe)
    o_ref[0, 0, :lr, :] = acc.astype(o_ref.dtype)
    pad_rows = o_ref.shape[2] - lr
    if pad_rows:                                     # padding rows (sliced off in XLA)
        o_ref[0, 0, lr:, :] = jnp.zeros((pad_rows, o_ref.shape[3]), o_ref.dtype)


def conv_relu_windows(x, w_st, b_st, *, wp, ho, wo, net_idx, G):
    """x: (Ga, B, Hp*Wp, Cin) with Ga in {1, G}; w_st: (2, nwin, Cin, OC) stacked
    [online, target]; returns (G, B, Hp*Wp, OC). Only rows ho_*wp+wo_ with
    ho_ < ho and wo_ < wo are valid conv outputs; other rows are padding."""
    Ga, B, hpwp, cin = x.shape
    nwin, oc = w_st.shape[1], w_st.shape[3]
    kp = int(round(nwin ** 0.5))
    assert kp * kp == nwin
    assert wp - (kp - 1) == wo
    offsets = tuple(dh * wp + dw for dh in range(kp) for dw in range(kp))
    lr = (ho - 1) * wp + wo
    assert offsets[-1] + lr <= hpwp

    x_map = (lambda g, b: (0, b, 0, 0)) if Ga == 1 else (lambda g, b: (g, b, 0, 0))
    if net_idx is None:                              # both nets in one launch
        w_map = lambda g, b: (g, 0, 0, 0)
        b_map = lambda g, b: (g, 0, 0)
    else:                                            # static net selection
        w_map = lambda g, b: (net_idx, 0, 0, 0)
        b_map = lambda g, b: (net_idx, 0, 0)

    kernel = functools.partial(_conv_win_kernel, offsets=offsets, lr=lr)
    return pl.pallas_call(
        kernel,
        out_shape=jax.ShapeDtypeStruct((G, B, hpwp, oc), ACT_DTYPE),
        grid_spec=pltpu.PrefetchScalarGridSpec(
            num_scalar_prefetch=0,
            grid=(G, B),                             # image axis innermost -> weights never re-DMA'd
            in_specs=[
                pl.BlockSpec((1, 1, hpwp, cin), x_map),
                pl.BlockSpec((1, nwin, cin, oc), w_map),
                pl.BlockSpec((1, 1, oc), b_map),
            ],
            out_specs=pl.BlockSpec((1, 1, hpwp, oc), lambda g, b: (g, b, 0, 0)),
        ),
        compiler_params=pltpu.CompilerParams(
            dimension_semantics=("parallel", "parallel"),
        ),
    )(x, w_st, b_st)


# ----------------------------------------------------------------------------
# Pallas kernel 2: fused fc1 + ReLU + fc2 head (both weight mats VMEM-resident)
# ----------------------------------------------------------------------------
def _fc_fused_kernel(h_ref, w1_ref, b1_ref, w2_ref, b2_ref, o_ref):
    h1 = jnp.dot(h_ref[0], w1_ref[0], preferred_element_type=jnp.float32)
    h1 = jnp.maximum(h1 + b1_ref[0], 0.0)
    q = jnp.dot(h1.astype(w2_ref.dtype), w2_ref[0],
                preferred_element_type=jnp.float32)
    o_ref[0] = (q + b2_ref[0]).astype(o_ref.dtype)


def fc_head(h, w1, b1, w2, b2, *, net_idx, G, tm_cap=256):
    """h: (G, M, K). Returns (G, M, Npad) f32 (padded columns sliced off outside)."""
    Ga, M, K = h.shape
    n_hidden, n_out = w1.shape[2], w2.shape[2]
    tm = _pick_tm(M, tm_cap)

    h_map = (lambda g, i: (0, i, 0)) if Ga == 1 else (lambda g, i: (g, i, 0))
    if net_idx is None:
        s_map = lambda g, i: (g, 0, 0)
    else:
        s_map = lambda g, i: (net_idx, 0, 0)

    return pl.pallas_call(
        _fc_fused_kernel,
        out_shape=jax.ShapeDtypeStruct((G, M, n_out), jnp.float32),
        grid_spec=pltpu.PrefetchScalarGridSpec(
            num_scalar_prefetch=0,
            grid=(G, pl.cdiv(M, tm)),
            in_specs=[
                pl.BlockSpec((1, tm, K), h_map),
                pl.BlockSpec((1, K, n_hidden), s_map),
                pl.BlockSpec((1, 1, n_hidden), s_map),
                pl.BlockSpec((1, n_hidden, n_out), s_map),
                pl.BlockSpec((1, 1, n_out), s_map),
            ],
            out_specs=pl.BlockSpec((1, tm, n_out), lambda g, i: (g, i, 0)),
        ),
        compiler_params=pltpu.CompilerParams(
            dimension_semantics=("parallel", "parallel"),
        ),
    )(h, w1, b1, w2, b2)


# ----------------------------------------------------------------------------
# Space-to-depth helpers (XLA glue; stride-s conv -> stride-1 kernel-2 conv)
# ----------------------------------------------------------------------------
def _space_to_depth(x, s):
    """(..., H, W, C) -> (..., H//s, W//s, s*s*C); feature order (r, q, c)."""
    *lead, H, W, C = x.shape
    hp, wpd = H // s, W // s
    x = x.reshape(*lead, hp, s, wpd, s, C)
    x = jnp.moveaxis(x, -4, -3)                       # (..., hp, wpd, r, q, C)
    return x.reshape(*lead, hp, wpd, s * s * C)


def _space_to_depth_nchw(x, s):
    """(..., C, H, W) -> (..., H//s, W//s, s*s*C); folds NCHW->NHWC into the same transpose."""
    *lead, C, H, W = x.shape
    hp, wpd = H // s, W // s
    nl = len(lead)
    x = x.reshape(*lead, C, hp, s, wpd, s)            # (..., C, hp, r, wpd, q)
    perm = tuple(range(nl)) + tuple(nl + i for i in (1, 3, 2, 4, 0))
    x = jnp.transpose(x, perm)                        # (..., hp, wpd, r, q, C)
    return x.reshape(*lead, hp, wpd, s * s * C)


# ----------------------------------------------------------------------------
# Parameter initialization (PyTorch layout) + one-time layout/dtype prep
# ----------------------------------------------------------------------------
def init_d2qn_params(key, c, output_dim):
    """Deterministic parameters in PyTorch layout (Conv2d / Linear shapes)."""
    def uniform(k, shape, fan_in):
        bound = 1.0 / jnp.sqrt(jnp.float32(fan_in))
        return jax.random.uniform(k, shape, jnp.float32, -bound, bound)

    ks = jax.random.split(key, 10)
    online = {
        "conv1_w": uniform(ks[0], (32, c, 8, 8), c * 8 * 8),
        "conv1_b": uniform(ks[1], (32,), c * 8 * 8),
        "conv2_w": uniform(ks[2], (64, 32, 4, 4), 32 * 4 * 4),
        "conv2_b": uniform(ks[3], (64,), 32 * 4 * 4),
        "conv3_w": uniform(ks[4], (64, 64, 3, 3), 64 * 3 * 3),
        "conv3_b": uniform(ks[5], (64,), 64 * 3 * 3),
        "fc1_w": uniform(ks[6], (512, 3136), 3136),   # PyTorch Linear (out, in)
        "fc1_b": uniform(ks[7], (512,), 3136),
        "fc2_w": uniform(ks[8], (output_dim, 512), 512),
        "fc2_b": uniform(ks[9], (output_dim,), 512),
    }
    target = {k: v for k, v in online.items()}        # target.load_state_dict(online)
    return {"online": online, "target": target}


def _prep_conv_windows(w, s):
    """(OC, IC, k, k) -> (kp*kp, s*s*IC, OC); window order (dh', dw'), feature (r, q, c)."""
    oc, ic, k, _ = w.shape
    kp = k // s
    assert kp * s == k
    wr = w.reshape(oc, ic, kp, s, kp, s)              # (oc, ic, dh', r, dw', q)
    wr = jnp.transpose(wr, (2, 4, 3, 5, 1, 0))        # (dh', dw', r, q, ic, oc)
    return wr.reshape(kp * kp, s * s * ic, oc).astype(ACT_DTYPE)


def _prep_bias_pair(b_on, b_tg):
    return jnp.stack([b_on.reshape(1, -1), b_tg.reshape(1, -1)]).astype(jnp.float32)


def _prep_conv_pair(w_on, w_tg, s):
    return jnp.stack([_prep_conv_windows(w_on, s), _prep_conv_windows(w_tg, s)])


def _prep_fc1_pair(w_on, w_tg, c, h, wdt):
    """Fold PyTorch's channel-major flatten into a one-time column permutation."""
    def prep(w):
        out_f, in_f = w.shape
        return (w.reshape(out_f, c, h, wdt)
                 .transpose(2, 3, 1, 0)
                 .reshape(in_f, out_f)).astype(ACT_DTYPE)
    return jnp.stack([prep(w_on), prep(w_tg)])


def _prep_fc2_pair(w_on, b_on, w_tg, b_tg):
    out_f, in_f = w_on.shape
    n_pad = max(128, _round_up(out_f, 128))
    def prep_w(w):
        return jnp.zeros((in_f, n_pad), ACT_DTYPE).at[:, :out_f].set(w.T.astype(ACT_DTYPE))
    def prep_b(b):
        return jnp.zeros((1, n_pad), jnp.float32).at[0, :out_f].set(b.astype(jnp.float32))
    return (jnp.stack([prep_w(w_on), prep_w(w_tg)]),
            jnp.stack([prep_b(b_on), prep_b(b_tg)]))


def prepare_d2qn_params(params):
    """One-time weight layout / dtype prep (online+target stacked along axis 0)."""
    on, tg = params["online"], params["target"]
    p = {}
    p["conv1_w"] = _prep_conv_pair(on["conv1_w"], tg["conv1_w"], 4)   # (2, 4, 64, 32)
    p["conv1_b"] = _prep_bias_pair(on["conv1_b"], tg["conv1_b"])
    p["conv2_w"] = _prep_conv_pair(on["conv2_w"], tg["conv2_w"], 2)   # (2, 4, 128, 64)
    p["conv2_b"] = _prep_bias_pair(on["conv2_b"], tg["conv2_b"])
    p["conv3_w"] = _prep_conv_pair(on["conv3_w"], tg["conv3_w"], 1)   # (2, 9, 64, 64)
    p["conv3_b"] = _prep_bias_pair(on["conv3_b"], tg["conv3_b"])
    p["fc1_w"] = _prep_fc1_pair(on["fc1_w"], tg["fc1_w"], 64, 7, 7)   # (2, 3136, 512)
    p["fc1_b"] = _prep_bias_pair(on["fc1_b"], tg["fc1_b"])
    p["fc2_w"], p["fc2_b"] = _prep_fc2_pair(on["fc2_w"], on["fc2_b"],
                                            tg["fc2_w"], tg["fc2_b"])  # (2, 512, 128)
    return p


# ----------------------------------------------------------------------------
# D2QN forward
# ----------------------------------------------------------------------------
def _forward_impl(x_nchw, p, net_idx, output_dim):
    B, C, H, W = x_nchw.shape
    if H != 84 or W != 84:
        raise ValueError("Expecting 84x84 input")
    G = 2 if net_idx is None else 1

    # conv1 (k=8, s=4): NCHW -> space-to-depth(4) in ONE transpose -> (1,B,441,64)
    x = _space_to_depth_nchw(x_nchw[None].astype(ACT_DTYPE), 4)
    x = x.reshape(1, B, 21 * 21, 16 * C)
    h = conv_relu_windows(x, p["conv1_w"], p["conv1_b"], wp=21, ho=20, wo=20,
                          net_idx=net_idx, G=G)                      # (G, B, 441, 32)
    h = h.reshape(G, B, 21, 21, 32)[:, :, :20, :20, :]               # valid 20x20

    # conv2 (k=4, s=2): space-to-depth(2) -> (G,B,100,128)
    h = _space_to_depth(h, 2).reshape(G, B, 10 * 10, 4 * 32)
    h = conv_relu_windows(h, p["conv2_w"], p["conv2_b"], wp=10, ho=9, wo=9,
                          net_idx=net_idx, G=G)                      # (G, B, 100, 64)
    h = h.reshape(G, B, 10, 10, 64)[:, :, :9, :9, :]                 # valid 9x9

    # conv3 (k=3, s=1): window conv directly on the flattened 9x9 map
    h = h.reshape(G, B, 81, 64)
    h = conv_relu_windows(h, p["conv3_w"], p["conv3_b"], wp=9, ho=7, wo=7,
                          net_idx=net_idx, G=G)                      # (G, B, 81, 64)
    h = h.reshape(G, B, 9, 9, 64)[:, :, :7, :7, :]                   # valid 7x7

    # Free NHWC flatten; fc1 columns were pre-permuted to match PyTorch's
    # channel-major flatten. fc1+ReLU+fc2 run as a single fused pallas_call.
    h = h.reshape(G, B, 7 * 7 * 64)
    q = fc_head(h, p["fc1_w"], p["fc1_b"], p["fc2_w"], p["fc2_b"],
                net_idx=net_idx, G=G)                                # (G, B, 128) f32
    return q[..., :output_dim]


def d2qn_forward(x_nchw, prepped, model, output_dim):
    """x: (B, C, 84, 84) float32 NCHW; model in {'online','target'}."""
    net_idx = {"online": 0, "target": 1}[model]
    return _forward_impl(x_nchw, prepped, net_idx, output_dim)[0]


def d2qn_forward_both(x_nchw, prepped, output_dim):
    """Evaluate online AND target networks on the same input in shared launches."""
    q = _forward_impl(x_nchw, prepped, None, output_dim)
    return q[0], q[1]


# ----------------------------------------------------------------------------
# Pure-XLA reference (PyTorch semantics, mimicking the bf16 cast points)
# ----------------------------------------------------------------------------
def d2qn_reference(x_nchw, params, model, output_dim):
    p = params[model]
    def c(v):  # emulate ACT_DTYPE rounding points of the kernel pipeline
        return v.astype(ACT_DTYPE).astype(jnp.float32)
    h = c(x_nchw)
    for name, stride in (("conv1", 4), ("conv2", 2), ("conv3", 1)):
        w = c(p[name + "_w"])
        b = p[name + "_b"].astype(jnp.float32)
        h = lax.conv_general_dilated(h, w, (stride, stride), "VALID",
                                     dimension_numbers=("NCHW", "OIHW", "NCHW"),
                                     precision=lax.Precision.HIGHEST)
        h = c(jnp.maximum(h + b[None, :, None, None], 0.0))
    h = h.reshape(h.shape[0], -1)                       # channel-major flatten
    h = c(jnp.maximum(
        jnp.dot(h, c(p["fc1_w"]).T, precision=lax.Precision.HIGHEST) + p["fc1_b"], 0.0))
    q = jnp.dot(h, c(p["fc2_w"]).T, precision=lax.Precision.HIGHEST) + p["fc2_b"]
    return q[:, :output_dim]


if __name__ == "__main__":
    import numpy as np

    B, C, H, W = 2, 4, 84, 84       # module requires 84x84; typical Atari stack c=4
    OUTPUT_DIM = 6

    key = jax.random.PRNGKey(0)
    k_param, k_x = jax.random.split(key)

    params = init_d2qn_params(k_param, C, OUTPUT_DIM)
    prepped = prepare_d2qn_params(params)               # one-time, off the hot path
    x = jax.random.normal(k_x, (B, C, H, W), jnp.float32)

    fwd = jax.jit(d2qn_forward, static_argnames=("model", "output_dim"))
    fwd_both = jax.jit(d2qn_forward_both, static_argnames=("output_dim",))

    q_online = fwd(x, prepped, model="online", output_dim=OUTPUT_DIM)
    q_target = fwd(x, prepped, model="target", output_dim=OUTPUT_DIM)
    q_on2, q_tg2 = fwd_both(x, prepped, output_dim=OUTPUT_DIM)
    jax.block_until_ready((q_online, q_target, q_on2, q_tg2))

    assert q_online.shape == (B, OUTPUT_DIM)
    assert q_target.shape == (B, OUTPUT_DIM)

    # Numerical validation against a pure-XLA reference (bf16-matched, loose tol).
    ref_on = d2qn_reference(x, params, "online", OUTPUT_DIM)
    ref_tg = d2qn_reference(x, params, "target", OUTPUT_DIM)
    np.testing.assert_allclose(np.asarray(q_online), np.asarray(ref_on), rtol=3e-2, atol=5e-3)
    np.testing.assert_allclose(np.asarray(q_target), np.asarray(ref_tg), rtol=3e-2, atol=5e-3)
    np.testing.assert_allclose(np.asarray(q_on2), np.asarray(q_online), rtol=1e-5, atol=1e-5)
    np.testing.assert_allclose(np.asarray(q_tg2), np.asarray(q_target), rtol=1e-5, atol=1e-5)

    print("KERNEL_OK")
</pallas_src>

<mosaic_0001>
module attributes {stable_mosaic.version = 11 : i64} {
  func.func @_conv_win_kernel(%arg0: i32, %arg1: i32, %arg2: memref<1x1x441x64xbf16, #tpu.memory_space<vmem>>, %arg3: memref<1x4x64x32xbf16, #tpu.memory_space<vmem>>, %arg4: memref<1x1x32xf32, #tpu.memory_space<vmem>>, %arg5: memref<1x1x441x32xbf16, #tpu.memory_space<vmem>>) attributes {dimension_semantics = [#tpu.dimension_semantics<parallel>, #tpu.dimension_semantics<parallel>], iteration_bounds = array<i64: 1, 2>, scalar_prefetch = 0 : i64, scratch_operands = 0 : i64, tpu.core_type = #tpu.core_type<tc>, window_params = [{transform_indices = @transform_0, window_bounds = array<i64: 1, 1, 441, 64>}, {transform_indices = @transform_1, window_bounds = array<i64: 1, 4, 64, 32>}, {transform_indices = @transform_2, window_bounds = array<i64: 1, 1, 32>}, {transform_indices = @transform_3, window_bounds = array<i64: 1, 1, 441, 32>}]} {
    %c0 = arith.constant 0 : index
    %c0_0 = arith.constant 0 : index
    %c0_1 = arith.constant 0 : index
    %c0_2 = arith.constant 0 : index
    %0 = vector.load %arg2[%c0, %c0_0, %c0_1, %c0_2] : memref<1x1x441x64xbf16, #tpu.memory_space<vmem>>, vector<1x1x419x64xbf16>
    %1 = vector.shape_cast %0 : vector<1x1x419x64xbf16> to vector<419x64xbf16>
    %c0_3 = arith.constant 0 : index
    %c0_4 = arith.constant 0 : index
    %c0_5 = arith.constant 0 : index
    %c0_6 = arith.constant 0 : index
    %2 = vector.load %arg3[%c0_3, %c0_4, %c0_5, %c0_6] : memref<1x4x64x32xbf16, #tpu.memory_space<vmem>>, vector<1x1x64x32xbf16>
    %3 = vector.shape_cast %2 : vector<1x1x64x32xbf16> to vector<64x32xbf16>
    %cst = arith.constant dense<0.000000e+00> : vector<419x32xf32>
    %4 = tpu.matmul %1, %3, %cst {dimension_numbers = #tpu.dot_dimension_numbers<[1], [0], [0], [1], [0, 0, 1, 1], [], []>} : vector<419x64xbf16>, vector<64x32xbf16>, vector<419x32xf32> -> vector<419x32xf32>
    %c0_7 = arith.constant 0 : index
    %c0_8 = arith.constant 0 : index
    %c1 = arith.constant 1 : index
    %c0_9 = arith.constant 0 : index
    %5 = vector.load %arg2[%c0_7, %c0_8, %c1, %c0_9] : memref<1x1x441x64xbf16, #tpu.memory_space<vmem>>, vector<1x1x419x64xbf16>
    %6 = vector.shape_cast %5 : vector<1x1x419x64xbf16> to vector<419x64xbf16>
    %c0_10 = arith.constant 0 : index
    %c1_11 = arith.constant 1 : index
    %c0_12 = arith.constant 0 : index
    %c0_13 = arith.constant 0 : index
    %7 = vector.load %arg3[%c0_10, %c1_11, %c0_12, %c0_13] : memref<1x4x64x32xbf16, #tpu.memory_space<vmem>>, vector<1x1x64x32xbf16>
    %8 = vector.shape_cast %7 : vector<1x1x64x32xbf16> to vector<64x32xbf16>
    %cst_14 = arith.constant dense<0.000000e+00> : vector<419x32xf32>
    %9 = tpu.matmul %6, %8, %cst_14 {dimension_numbers = #tpu.dot_dimension_numbers<[1], [0], [0], [1], [0, 0, 1, 1], [], []>} : vector<419x64xbf16>, vector<64x32xbf16>, vector<419x32xf32> -> vector<419x32xf32>
    %10 = arith.addf %4, %9 : vector<419x32xf32>
    %c0_15 = arith.constant 0 : index
    %c0_16 = arith.constant 0 : index
    %c21 = arith.constant 21 : index
    %c0_17 = arith.constant 0 : index
    %11 = vector.load %arg2[%c0_15, %c0_16, %c21, %c0_17] : memref<1x1x441x64xbf16, #tpu.memory_space<vmem>>, vector<1x1x419x64xbf16>
    %12 = vector.shape_cast %11 : vector<1x1x419x64xbf16> to vector<419x64xbf16>
    %c0_18 = arith.constant 0 : index
    %c2 = arith.constant 2 : index
    %c0_19 = arith.constant 0 : index
    %c0_20 = arith.constant 0 : index
    %13 = vector.load %arg3[%c0_18, %c2, %c0_19, %c0_20] : memref<1x4x64x32xbf16, #tpu.memory_space<vmem>>, vector<1x1x64x32xbf16>
    %14 = vector.shape_cast %13 : vector<1x1x64x32xbf16> to vector<64x32xbf16>
    %cst_21 = arith.constant dense<0.000000e+00> : vector<419x32xf32>
    %15 = tpu.matmul %12, %14, %cst_21 {dimension_numbers = #tpu.dot_dimension_numbers<[1], [0], [0], [1], [0, 0, 1, 1], [], []>} : vector<419x64xbf16>, vector<64x32xbf16>, vector<419x32xf32> -> vector<419x32xf32>
    %16 = arith.addf %10, %15 : vector<419x32xf32>
    %c0_22 = arith.constant 0 : index
    %c0_23 = arith.constant 0 : index
    %c22 = arith.constant 22 : index
    %c0_24 = arith.constant 0 : index
    %17 = vector.load %arg2[%c0_22, %c0_23, %c22, %c0_24] : memref<1x1x441x64xbf16, #tpu.memory_space<vmem>>, vector<1x1x419x64xbf16>
    %18 = vector.shape_cast %17 : vector<1x1x419x64xbf16> to vector<419x64xbf16>
    %c0_25 = arith.constant 0 : index
    %c3 = arith.constant 3 : index
    %c0_26 = arith.constant 0 : index
    %c0_27 = arith.constant 0 : index
    %19 = vector.load %arg3[%c0_25, %c3, %c0_26, %c0_27] : memref<1x4x64x32xbf16, #tpu.memory_space<vmem>>, vector<1x1x64x32xbf16>
    %20 = vector.shape_cast %19 : vector<1x1x64x32xbf16> to vector<64x32xbf16>
    %cst_28 = arith.constant dense<0.000000e+00> : vector<419x32xf32>
    %21 = tpu.matmul %18, %20, %cst_28 {dimension_numbers = #tpu.dot_dimension_numbers<[1], [0], [0], [1], [0, 0, 1, 1], [], []>} : vector<419x64xbf16>, vector<64x32xbf16>, vector<419x32xf32> -> vector<419x32xf32>
    %22 = arith.addf %16, %21 : vector<419x32xf32>
    %c0_29 = arith.constant 0 : index
    %c0_30 = arith.constant 0 : index
    %c0_31 = arith.constant 0 : index
    %23 = vector.load %arg4[%c0_29, %c0_30, %c0_31] : memref<1x1x32xf32, #tpu.memory_space<vmem>>, vector<1x1x32xf32>
    %24 = vector.shape_cast %23 : vector<1x1x32xf32> to vector<1x32xf32>
    %25 = vector.broadcast %24 : vector<1x32xf32> to vector<419x32xf32>
    %26 = arith.addf %22, %25 : vector<419x32xf32>
    %cst_32 = arith.constant 0.000000e+00 : f32
    %27 = vector.broadcast %cst_32 : f32 to vector<419x32xf32>
    %28 = arith.maximumf %26, %27 : vector<419x32xf32>
    %29 = arith.truncf %28 : vector<419x32xf32> to vector<419x32xbf16>
    %c0_33 = arith.constant 0 : index
    %c0_34 = arith.constant 0 : index
    %c0_35 = arith.constant 0 : index
    %c0_36 = arith.constant 0 : index
    %30 = vector.load %arg5[%c0_33, %c0_34, %c0_35, %c0_36] : memref<1x1x441x32xbf16, #tpu.memory_space<vmem>>, vector<1x1x419x32xbf16>
    %31 = vector.shape_cast %30 : vector<1x1x419x32xbf16> to vector<419x32xbf16>
    %32 = vector.shape_cast %29 : vector<419x32xbf16> to vector<1x1x419x32xbf16>
    tpu.vector_store %arg5[%c0_33, %c0_34, %c0_35, %c0_36], %32 {strides = array<i32>} : memref<1x1x441x32xbf16, #tpu.memory_space<vmem>>, vector<1x1x419x32xbf16>,
    %cst_37 = arith.constant 0.000000e+00 : bf16
    %33 = vector.broadcast %cst_37 : bf16 to vector<22x32xbf16>
    %c0_38 = arith.constant 0 : index
    %c0_39 = arith.constant 0 : index
    %c419 = arith.constant 419 : index
    %c0_40 = arith.constant 0 : index
    %34 = vector.load %arg5[%c0_38, %c0_39, %c419, %c0_40] : memref<1x1x441x32xbf16, #tpu.memory_space<vmem>>, vector<1x1x22x32xbf16>
    %35 = vector.shape_cast %34 : vector<1x1x22x32xbf16> to vector<22x32xbf16>
    %36 = vector.shape_cast %33 : vector<22x32xbf16> to vector<1x1x22x32xbf16>
    tpu.vector_store %arg5[%c0_38, %c0_39, %c419, %c0_40], %36 {strides = array<i32>} : memref<1x1x441x32xbf16, #tpu.memory_space<vmem>>, vector<1x1x22x32xbf16>,
    return
  }
  func.func @transform_0(%arg0: i32, %arg1: i32) -> (i32, i32, i32, i32) {
    %c0_i32 = arith.constant 0 : i32
    %c0_i32_0 = arith.constant 0 : i32
    %c0_i32_1 = arith.constant 0 : i32
    %c0_i32_2 = arith.constant 0 : i32
    return %c0_i32, %arg1, %c0_i32_0, %c0_i32_1 : i32, i32, i32, i32
  }
  func.func @transform_1(%arg0: i32, %arg1: i32) -> (i32, i32, i32, i32) {
    %c0_i32 = arith.constant 0 : i32
    %c0_i32_0 = arith.constant 0 : i32
    %c0_i32_1 = arith.constant 0 : i32
    %c0_i32_2 = arith.constant 0 : i32
    %c0_i32_3 = arith.constant 0 : i32
    return %c0_i32, %c0_i32_0, %c0_i32_1, %c0_i32_2 : i32, i32, i32, i32
  }
  func.func @transform_2(%arg0: i32, %arg1: i32) -> (i32, i32, i32) {
    %c0_i32 = arith.constant 0 : i32
    %c0_i32_0 = arith.constant 0 : i32
    %c0_i32_1 = arith.constant 0 : i32
    %c0_i32_2 = arith.constant 0 : i32
    return %c0_i32, %c0_i32_0, %c0_i32_1 : i32, i32, i32
  }
  func.func @transform_3(%arg0: i32, %arg1: i32) -> (i32, i32, i32, i32) {
    %c0_i32 = arith.constant 0 : i32
    %c0_i32_0 = arith.constant 0 : i32
    %c0_i32_1 = arith.constant 0 : i32
    return %arg0, %arg1, %c0_i32, %c0_i32_0 : i32, i32, i32, i32
  }
}

module attributes {stable_mosaic.version = 11 : i64} {
  func.func @_conv_win_kernel(%arg0: i32, %arg1: i32, %arg2: memref<1x1x100x128xbf16, #tpu.memory_space<vmem>>, %arg3: memref<1x4x128x64xbf16, #tpu.memory_space<vmem>>, %arg4: memref<1x1x64xf32, #tpu.memory_space<vmem>>, %arg5: memref<1x1x100x64xbf16, #tpu.memory_space<vmem>>) attributes {dimension_semantics = [#tpu.dimension_semantics<parallel>, #tpu.dimension_semantics<parallel>], iteration_bounds = array<i64: 1, 2>, scalar_prefetch = 0 : i64, scratch_operands = 0 : i64, tpu.core_type = #tpu.core_type<tc>, window_params = [{transform_indices = @transform_0, window_bounds = array<i64: 1, 1, 100, 128>}, {transform_indices = @transform_1, window_bounds = array<i64: 1, 4, 128, 64>}, {transform_indices = @transform_2, window_bounds = array<i64: 1, 1, 64>}, {transform_indices = @transform_3, window_bounds = array<i64: 1, 1, 100, 64>}]} {
    %c0 = arith.constant 0 : index
    %c0_0 = arith.constant 0 : index
    %c0_1 = arith.constant 0 : index
    %c0_2 = arith.constant 0 : index
    %0 = vector.load %arg2[%c0, %c0_0, %c0_1, %c0_2] : memref<1x1x100x128xbf16, #tpu.memory_space<vmem>>, vector<1x1x89x128xbf16>
    %1 = vector.shape_cast %0 : vector<1x1x89x128xbf16> to vector<89x128xbf16>
    %c0_3 = arith.constant 0 : index
    %c0_4 = arith.constant 0 : index
    %c0_5 = arith.constant 0 : index
    %c0_6 = arith.constant 0 : index
    %2 = vector.load %arg3[%c0_3, %c0_4, %c0_5, %c0_6] : memref<1x4x128x64xbf16, #tpu.memory_space<vmem>>, vector<1x1x128x64xbf16>
    %3 = vector.shape_cast %2 : vector<1x1x128x64xbf16> to vector<128x64xbf16>
    %cst = arith.constant dense<0.000000e+00> : vector<89x64xf32>
    %4 = tpu.matmul %1, %3, %cst {dimension_numbers = #tpu.dot_dimension_numbers<[1], [0], [0], [1], [0, 0, 1, 1], [], []>} : vector<89x128xbf16>, vector<128x64xbf16>, vector<89x64xf32> -> vector<89x64xf32>
    %c0_7 = arith.constant 0 : index
    %c0_8 = arith.constant 0 : index
    %c1 = arith.constant 1 : index
    %c0_9 = arith.constant 0 : index
    %5 = vector.load %arg2[%c0_7, %c0_8, %c1, %c0_9] : memref<1x1x100x128xbf16, #tpu.memory_space<vmem>>, vector<1x1x89x128xbf16>
    %6 = vector.shape_cast %5 : vector<1x1x89x128xbf16> to vector<89x128xbf16>
    %c0_10 = arith.constant 0 : index
    %c1_11 = arith.constant 1 : index
    %c0_12 = arith.constant 0 : index
    %c0_13 = arith.constant 0 : index
    %7 = vector.load %arg3[%c0_10, %c1_11, %c0_12, %c0_13] : memref<1x4x128x64xbf16, #tpu.memory_space<vmem>>, vector<1x1x128x64xbf16>
    %8 = vector.shape_cast %7 : vector<1x1x128x64xbf16> to vector<128x64xbf16>
    %cst_14 = arith.constant dense<0.000000e+00> : vector<89x64xf32>
    %9 = tpu.matmul %6, %8, %cst_14 {dimension_numbers = #tpu.dot_dimension_numbers<[1], [0], [0], [1], [0, 0, 1, 1], [], []>} : vector<89x128xbf16>, vector<128x64xbf16>, vector<89x64xf32> -> vector<89x64xf32>
    %10 = arith.addf %4, %9 : vector<89x64xf32>
    %c0_15 = arith.constant 0 : index
    %c0_16 = arith.constant 0 : index
    %c10 = arith.constant 10 : index
    %c0_17 = arith.constant 0 : index
    %11 = vector.load %arg2[%c0_15, %c0_16, %c10, %c0_17] : memref<1x1x100x128xbf16, #tpu.memory_space<vmem>>, vector<1x1x89x128xbf16>
    %12 = vector.shape_cast %11 : vector<1x1x89x128xbf16> to vector<89x128xbf16>
    %c0_18 = arith.constant 0 : index
    %c2 = arith.constant 2 : index
    %c0_19 = arith.constant 0 : index
    %c0_20 = arith.constant 0 : index
    %13 = vector.load %arg3[%c0_18, %c2, %c0_19, %c0_20] : memref<1x4x128x64xbf16, #tpu.memory_space<vmem>>, vector<1x1x128x64xbf16>
    %14 = vector.shape_cast %13 : vector<1x1x128x64xbf16> to vector<128x64xbf16>
    %cst_21 = arith.constant dense<0.000000e+00> : vector<89x64xf32>
    %15 = tpu.matmul %12, %14, %cst_21 {dimension_numbers = #tpu.dot_dimension_numbers<[1], [0], [0], [1], [0, 0, 1, 1], [], []>} : vector<89x128xbf16>, vector<128x64xbf16>, vector<89x64xf32> -> vector<89x64xf32>
    %16 = arith.addf %10, %15 : vector<89x64xf32>
    %c0_22 = arith.constant 0 : index
    %c0_23 = arith.constant 0 : index
    %c11 = arith.constant 11 : index
    %c0_24 = arith.constant 0 : index
    %17 = vector.load %arg2[%c0_22, %c0_23, %c11, %c0_24] : memref<1x1x100x128xbf16, #tpu.memory_space<vmem>>, vector<1x1x89x128xbf16>
    %18 = vector.shape_cast %17 : vector<1x1x89x128xbf16> to vector<89x128xbf16>
    %c0_25 = arith.constant 0 : index
    %c3 = arith.constant 3 : index
    %c0_26 = arith.constant 0 : index
    %c0_27 = arith.constant 0 : index
    %19 = vector.load %arg3[%c0_25, %c3, %c0_26, %c0_27] : memref<1x4x128x64xbf16, #tpu.memory_space<vmem>>, vector<1x1x128x64xbf16>
    %20 = vector.shape_cast %19 : vector<1x1x128x64xbf16> to vector<128x64xbf16>
    %cst_28 = arith.constant dense<0.000000e+00> : vector<89x64xf32>
    %21 = tpu.matmul %18, %20, %cst_28 {dimension_numbers = #tpu.dot_dimension_numbers<[1], [0], [0], [1], [0, 0, 1, 1], [], []>} : vector<89x128xbf16>, vector<128x64xbf16>, vector<89x64xf32> -> vector<89x64xf32>
    %22 = arith.addf %16, %21 : vector<89x64xf32>
    %c0_29 = arith.constant 0 : index
    %c0_30 = arith.constant 0 : index
    %c0_31 = arith.constant 0 : index
    %23 = vector.load %arg4[%c0_29, %c0_30, %c0_31] : memref<1x1x64xf32, #tpu.memory_space<vmem>>, vector<1x1x64xf32>
    %24 = vector.shape_cast %23 : vector<1x1x64xf32> to vector<1x64xf32>
    %25 = vector.broadcast %24 : vector<1x64xf32> to vector<89x64xf32>
    %26 = arith.addf %22, %25 : vector<89x64xf32>
    %cst_32 = arith.constant 0.000000e+00 : f32
    %27 = vector.broadcast %cst_32 : f32 to vector<89x64xf32>
    %28 = arith.maximumf %26, %27 : vector<89x64xf32>
    %29 = arith.truncf %28 : vector<89x64xf32> to vector<89x64xbf16>
    %c0_33 = arith.constant 0 : index
    %c0_34 = arith.constant 0 : index
    %c0_35 = arith.constant 0 : index
    %c0_36 = arith.constant 0 : index
    %30 = vector.load %arg5[%c0_33, %c0_34, %c0_35, %c0_36] : memref<1x1x100x64xbf16, #tpu.memory_space<vmem>>, vector<1x1x89x64xbf16>
    %31 = vector.shape_cast %30 : vector<1x1x89x64xbf16> to vector<89x64xbf16>
    %32 = vector.shape_cast %29 : vector<89x64xbf16> to vector<1x1x89x64xbf16>
    tpu.vector_store %arg5[%c0_33, %c0_34, %c0_35, %c0_36], %32 {strides = array<i32>} : memref<1x1x100x64xbf16, #tpu.memory_space<vmem>>, vector<1x1x89x64xbf16>,
    %cst_37 = arith.constant 0.000000e+00 : bf16
    %33 = vector.broadcast %cst_37 : bf16 to vector<11x64xbf16>
    %c0_38 = arith.constant 0 : index
    %c0_39 = arith.constant 0 : index
    %c89 = arith.constant 89 : index
    %c0_40 = arith.constant 0 : index
    %34 = vector.load %arg5[%c0_38, %c0_39, %c89, %c0_40] : memref<1x1x100x64xbf16, #tpu.memory_space<vmem>>, vector<1x1x11x64xbf16>
    %35 = vector.shape_cast %34 : vector<1x1x11x64xbf16> to vector<11x64xbf16>
    %36 = vector.shape_cast %33 : vector<11x64xbf16> to vector<1x1x11x64xbf16>
    tpu.vector_store %arg5[%c0_38, %c0_39, %c89, %c0_40], %36 {strides = array<i32>} : memref<1x1x100x64xbf16, #tpu.memory_space<vmem>>, vector<1x1x11x64xbf16>,
    return
  }
  func.func @transform_0(%arg0: i32, %arg1: i32) -> (i32, i32, i32, i32) {
    %c0_i32 = arith.constant 0 : i32
    %c0_i32_0 = arith.constant 0 : i32
    %c0_i32_1 = arith.constant 0 : i32
    %c0_i32_2 = arith.constant 0 : i32
    return %c0_i32, %arg1, %c0_i32_0, %c0_i32_1 : i32, i32, i32, i32
  }
  func.func @transform_1(%arg0: i32, %arg1: i32) -> (i32, i32, i32, i32) {
    %c0_i32 = arith.constant 0 : i32
    %c0_i32_0 = arith.constant 0 : i32
    %c0_i32_1 = arith.constant 0 : i32
    %c0_i32_2 = arith.constant 0 : i32
    %c0_i32_3 = arith.constant 0 : i32
    return %c0_i32, %c0_i32_0, %c0_i32_1, %c0_i32_2 : i32, i32, i32, i32
  }
  func.func @transform_2(%arg0: i32, %arg1: i32) -> (i32, i32, i32) {
    %c0_i32 = arith.constant 0 : i32
    %c0_i32_0 = arith.constant 0 : i32
    %c0_i32_1 = arith.constant 0 : i32
    %c0_i32_2 = arith.constant 0 : i32
    return %c0_i32, %c0_i32_0, %c0_i32_1 : i32, i32, i32
  }
  func.func @transform_3(%arg0: i32, %arg1: i32) -> (i32, i32, i32, i32) {
    %c0_i32 = arith.constant 0 : i32
    %c0_i32_0 = arith.constant 0 : i32
    %c0_i32_1 = arith.constant 0 : i32
    return %arg0, %arg1, %c0_i32, %c0_i32_0 : i32, i32, i32, i32
  }
}

module attributes {stable_mosaic.version = 11 : i64} {
  func.func @_conv_win_kernel(%arg0: i32, %arg1: i32, %arg2: memref<1x1x81x64xbf16, #tpu.memory_space<vmem>>, %arg3: memref<1x9x64x64xbf16, #tpu.memory_space<vmem>>, %arg4: memref<1x1x64xf32, #tpu.memory_space<vmem>>, %arg5: memref<1x1x81x64xbf16, #tpu.memory_space<vmem>>) attributes {dimension_semantics = [#tpu.dimension_semantics<parallel>, #tpu.dimension_semantics<parallel>], iteration_bounds = array<i64: 1, 2>, scalar_prefetch = 0 : i64, scratch_operands = 0 : i64, tpu.core_type = #tpu.core_type<tc>, window_params = [{transform_indices = @transform_0, window_bounds = array<i64: 1, 1, 81, 64>}, {transform_indices = @transform_1, window_bounds = array<i64: 1, 9, 64, 64>}, {transform_indices = @transform_2, window_bounds = array<i64: 1, 1, 64>}, {transform_indices = @transform_3, window_bounds = array<i64: 1, 1, 81, 64>}]} {
    %c0 = arith.constant 0 : index
    %c0_0 = arith.constant 0 : index
    %c0_1 = arith.constant 0 : index
    %c0_2 = arith.constant 0 : index
    %0 = vector.load %arg2[%c0, %c0_0, %c0_1, %c0_2] : memref<1x1x81x64xbf16, #tpu.memory_space<vmem>>, vector<1x1x61x64xbf16>
    %1 = vector.shape_cast %0 : vector<1x1x61x64xbf16> to vector<61x64xbf16>
    %c0_3 = arith.constant 0 : index
    %c0_4 = arith.constant 0 : index
    %c0_5 = arith.constant 0 : index
    %c0_6 = arith.constant 0 : index
    %2 = vector.load %arg3[%c0_3, %c0_4, %c0_5, %c0_6] : memref<1x9x64x64xbf16, #tpu.memory_space<vmem>>, vector<1x1x64x64xbf16>
    %3 = vector.shape_cast %2 : vector<1x1x64x64xbf16> to vector<64x64xbf16>
    %cst = arith.constant dense<0.000000e+00> : vector<61x64xf32>
    %4 = tpu.matmul %1, %3, %cst {dimension_numbers = #tpu.dot_dimension_numbers<[1], [0], [0], [1], [0, 0, 1, 1], [], []>} : vector<61x64xbf16>, vector<64x64xbf16>, vector<61x64xf32> -> vector<61x64xf32>
    %c0_7 = arith.constant 0 : index
    %c0_8 = arith.constant 0 : index
    %c1 = arith.constant 1 : index
    %c0_9 = arith.constant 0 : index
    %5 = vector.load %arg2[%c0_7, %c0_8, %c1, %c0_9] : memref<1x1x81x64xbf16, #tpu.memory_space<vmem>>, vector<1x1x61x64xbf16>
    %6 = vector.shape_cast %5 : vector<1x1x61x64xbf16> to vector<61x64xbf16>
    %c0_10 = arith.constant 0 : index
    %c1_11 = arith.constant 1 : index
    %c0_12 = arith.constant 0 : index
    %c0_13 = arith.constant 0 : index
    %7 = vector.load %arg3[%c0_10, %c1_11, %c0_12, %c0_13] : memref<1x9x64x64xbf16, #tpu.memory_space<vmem>>, vector<1x1x64x64xbf16>
    %8 = vector.shape_cast %7 : vector<1x1x64x64xbf16> to vector<64x64xbf16>
    %cst_14 = arith.constant dense<0.000000e+00> : vector<61x64xf32>
    %9 = tpu.matmul %6, %8, %cst_14 {dimension_numbers = #tpu.dot_dimension_numbers<[1], [0], [0], [1], [0, 0, 1, 1], [], []>} : vector<61x64xbf16>, vector<64x64xbf16>, vector<61x64xf32> -> vector<61x64xf32>
    %10 = arith.addf %4, %9 : vector<61x64xf32>
    %c0_15 = arith.constant 0 : index
    %c0_16 = arith.constant 0 : index
    %c2 = arith.constant 2 : index
    %c0_17 = arith.constant 0 : index
    %11 = vector.load %arg2[%c0_15, %c0_16, %c2, %c0_17] : memref<1x1x81x64xbf16, #tpu.memory_space<vmem>>, vector<1x1x61x64xbf16>
    %12 = vector.shape_cast %11 : vector<1x1x61x64xbf16> to vector<61x64xbf16>
    %c0_18 = arith.constant 0 : index
    %c2_19 = arith.constant 2 : index
    %c0_20 = arith.constant 0 : index
    %c0_21 = arith.constant 0 : index
    %13 = vector.load %arg3[%c0_18, %c2_19, %c0_20, %c0_21] : memref<1x9x64x64xbf16, #tpu.memory_space<vmem>>, vector<1x1x64x64xbf16>
    %14 = vector.shape_cast %13 : vector<1x1x64x64xbf16> to vector<64x64xbf16>
    %cst_22 = arith.constant dense<0.000000e+00> : vector<61x64xf32>
    %15 = tpu.matmul %12, %14, %cst_22 {dimension_numbers = #tpu.dot_dimension_numbers<[1], [0], [0], [1], [0, 0, 1, 1], [], []>} : vector<61x64xbf16>, vector<64x64xbf16>, vector<61x64xf32> -> vector<61x64xf32>
    %16 = arith.addf %10, %15 : vector<61x64xf32>
    %c0_23 = arith.constant 0 : index
    %c0_24 = arith.constant 0 : index
    %c9 = arith.constant 9 : index
    %c0_25 = arith.constant 0 : index
    %17 = vector.load %arg2[%c0_23, %c0_24, %c9, %c0_25] : memref<1x1x81x64xbf16, #tpu.memory_space<vmem>>, vector<1x1x61x64xbf16>
    %18 = vector.shape_cast %17 : vector<1x1x61x64xbf16> to vector<61x64xbf16>
    %c0_26 = arith.constant 0 : index
    %c3 = arith.constant 3 : index
    %c0_27 = arith.constant 0 : index
    %c0_28 = arith.constant 0 : index
    %19 = vector.load %arg3[%c0_26, %c3, %c0_27, %c0_28] : memref<1x9x64x64xbf16, #tpu.memory_space<vmem>>, vector<1x1x64x64xbf16>
    %20 = vector.shape_cast %19 : vector<1x1x64x64xbf16> to vector<64x64xbf16>
    %cst_29 = arith.constant dense<0.000000e+00> : vector<61x64xf32>
    %21 = tpu.matmul %18, %20, %cst_29 {dimension_numbers = #tpu.dot_dimension_numbers<[1], [0], [0], [1], [0, 0, 1, 1], [], []>} : vector<61x64xbf16>, vector<64x64xbf16>, vector<61x64xf32> -> vector<61x64xf32>
    %22 = arith.addf %16, %21 : vector<61x64xf32>
    %c0_30 = arith.constant 0 : index
    %c0_31 = arith.constant 0 : index
    %c10 = arith.constant 10 : index
    %c0_32 = arith.constant 0 : index
    %23 = vector.load %arg2[%c0_30, %c0_31, %c10, %c0_32] : memref<1x1x81x64xbf16, #tpu.memory_space<vmem>>, vector<1x1x61x64xbf16>
    %24 = vector.shape_cast %23 : vector<1x1x61x64xbf16> to vector<61x64xbf16>
    %c0_33 = arith.constant 0 : index
    %c4 = arith.constant 4 : index
    %c0_34 = arith.constant 0 : index
    %c0_35 = arith.constant 0 : index
    %25 = vector.load %arg3[%c0_33, %c4, %c0_34, %c0_35] : memref<1x9x64x64xbf16, #tpu.memory_space<vmem>>, vector<1x1x64x64xbf16>
    %26 = vector.shape_cast %25 : vector<1x1x64x64xbf16> to vector<64x64xbf16>
    %cst_36 = arith.constant dense<0.000000e+00> : vector<61x64xf32>
    %27 = tpu.matmul %24, %26, %cst_36 {dimension_numbers = #tpu.dot_dimension_numbers<[1], [0], [0], [1], [0, 0, 1, 1], [], []>} : vector<61x64xbf16>, vector<64x64xbf16>, vector<61x64xf32> -> vector<61x64xf32>
    %28 = arith.addf %22, %27 : vector<61x64xf32>
    %c0_37 = arith.constant 0 : index
    %c0_38 = arith.constant 0 : index
    %c11 = arith.constant 11 : index
    %c0_39 = arith.constant 0 : index
    %29 = vector.load %arg2[%c0_37, %c0_38, %c11, %c0_39] : memref<1x1x81x64xbf16, #tpu.memory_space<vmem>>, vector<1x1x61x64xbf16>
    %30 = vector.shape_cast %29 : vector<1x1x61x64xbf16> to vector<61x64xbf16>
    %c0_40 = arith.constant 0 : index
    %c5 = arith.constant 5 : index
    %c0_41 = arith.constant 0 : index
    %c0_42 = arith.constant 0 : index
    %31 = vector.load %arg3[%c0_40, %c5, %c0_41, %c0_42] : memref<1x9x64x64xbf16, #tpu.memory_space<vmem>>, vector<1x1x64x64xbf16>
    %32 = vector.shape_cast %31 : vector<1x1x64x64xbf16> to vector<64x64xbf16>
    %cst_43 = arith.constant dense<0.000000e+00> : vector<61x64xf32>
    %33 = tpu.matmul %30, %32, %cst_43 {dimension_numbers = #tpu.dot_dimension_numbers<[1], [0], [0], [1], [0, 0, 1, 1], [], []>} : vector<61x64xbf16>, vector<64x64xbf16>, vector<61x64xf32> -> vector<61x64xf32>
    %34 = arith.addf %28, %33 : vector<61x64xf32>
    %c0_44 = arith.constant 0 : index
    %c0_45 = arith.constant 0 : index
    %c18 = arith.constant 18 : index
    %c0_46 = arith.constant 0 : index
    %35 = vector.load %arg2[%c0_44, %c0_45, %c18, %c0_46] : memref<1x1x81x64xbf16, #tpu.memory_space<vmem>>, vector<1x1x61x64xbf16>
    %36 = vector.shape_cast %35 : vector<1x1x61x64xbf16> to vector<61x64xbf16>
    %c0_47 = arith.constant 0 : index
    %c6 = arith.constant 6 : index
    %c0_48 = arith.constant 0 : index
    %c0_49 = arith.constant 0 : index
    %37 = vector.load %arg3[%c0_47, %c6, %c0_48, %c0_49] : memref<1x9x64x64xbf16, #tpu.memory_space<vmem>>, vector<1x1x64x64xbf16>
    %38 = vector.shape_cast %37 : vector<1x1x64x64xbf16> to vector<64x64xbf16>
    %cst_50 = arith.constant dense<0.000000e+00> : vector<61x64xf32>
    %39 = tpu.matmul %36, %38, %cst_50 {dimension_numbers = #tpu.dot_dimension_numbers<[1], [0], [0], [1], [0, 0, 1, 1], [], []>} : vector<61x64xbf16>, vector<64x64xbf16>, vector<61x64xf32> -> vector<61x64xf32>
    %40 = arith.addf %34, %39 : vector<61x64xf32>
    %c0_51 = arith.constant 0 : index
    %c0_52 = arith.constant 0 : index
    %c19 = arith.constant 19 : index
    %c0_53 = arith.constant 0 : index
    %41 = vector.load %arg2[%c0_51, %c0_52, %c19, %c0_53] : memref<1x1x81x64xbf16, #tpu.memory_space<vmem>>, vector<1x1x61x64xbf16>
    %42 = vector.shape_cast %41 : vector<1x1x61x64xbf16> to vector<61x64xbf16>
    %c0_54 = arith.constant 0 : index
    %c7 = arith.constant 7 : index
    %c0_55 = arith.constant 0 : index
    %c0_56 = arith.constant 0 : index
    %43 = vector.load %arg3[%c0_54, %c7, %c0_55, %c0_56] : memref<1x9x64x64xbf16, #tpu.memory_space<vmem>>, vector<1x1x64x64xbf16>
    %44 = vector.shape_cast %43 : vector<1x1x64x64xbf16> to vector<64x64xbf16>
    %cst_57 = arith.constant dense<0.000000e+00> : vector<61x64xf32>
    %45 = tpu.matmul %42, %44, %cst_57 {dimension_numbers = #tpu.dot_dimension_numbers<[1], [0], [0], [1], [0, 0, 1, 1], [], []>} : vector<61x64xbf16>, vector<64x64xbf16>, vector<61x64xf32> -> vector<61x64xf32>
    %46 = arith.addf %40, %45 : vector<61x64xf32>
    %c0_58 = arith.constant 0 : index
    %c0_59 = arith.constant 0 : index
    %c20 = arith.constant 20 : index
    %c0_60 = arith.constant 0 : index
    %47 = vector.load %arg2[%c0_58, %c0_59, %c20, %c0_60] : memref<1x1x81x64xbf16, #tpu.memory_space<vmem>>, vector<1x1x61x64xbf16>
    %48 = vector.shape_cast %47 : vector<1x1x61x64xbf16> to vector<61x64xbf16>
    %c0_61 = arith.constant 0 : index
    %c8 = arith.constant 8 : index
    %c0_62 = arith.constant 0 : index
    %c0_63 = arith.constant 0 : index
    %49 = vector.load %arg3[%c0_61, %c8, %c0_62, %c0_63] : memref<1x9x64x64xbf16, #tpu.memory_space<vmem>>, vector<1x1x64x64xbf16>
    %50 = vector.shape_cast %49 : vector<1x1x64x64xbf16> to vector<64x64xbf16>
    %cst_64 = arith.constant dense<0.000000e+00> : vector<61x64xf32>
    %51 = tpu.matmul %48, %50, %cst_64 {dimension_numbers = #tpu.dot_dimension_numbers<[1], [0], [0], [1], [0, 0, 1, 1], [], []>} : vector<61x64xbf16>, vector<64x64xbf16>, vector<61x64xf32> -> vector<61x64xf32>
    %52 = arith.addf %46, %51 : vector<61x64xf32>
    %c0_65 = arith.constant 0 : index
    %c0_66 = arith.constant 0 : index
    %c0_67 = arith.constant 0 : index
    %53 = vector.load %arg4[%c0_65, %c0_66, %c0_67] : memref<1x1x64xf32, #tpu.memory_space<vmem>>, vector<1x1x64xf32>
    %54 = vector.shape_cast %53 : vector<1x1x64xf32> to vector<1x64xf32>
    %55 = vector.broadcast %54 : vector<1x64xf32> to vector<61x64xf32>
    %56 = arith.addf %52, %55 : vector<61x64xf32>
    %cst_68 = arith.constant 0.000000e+00 : f32
    %57 = vector.broadcast %cst_68 : f32 to vector<61x64xf32>
    %58 = arith.maximumf %56, %57 : vector<61x64xf32>
    %59 = arith.truncf %58 : vector<61x64xf32> to vector<61x64xbf16>
    %c0_69 = arith.constant 0 : index
    %c0_70 = arith.constant 0 : index
    %c0_71 = arith.constant 0 : index
    %c0_72 = arith.constant 0 : index
    %60 = vector.load %arg5[%c0_69, %c0_70, %c0_71, %c0_72] : memref<1x1x81x64xbf16, #tpu.memory_space<vmem>>, vector<1x1x61x64xbf16>
    %61 = vector.shape_cast %60 : vector<1x1x61x64xbf16> to vector<61x64xbf16>
    %62 = vector.shape_cast %59 : vector<61x64xbf16> to vector<1x1x61x64xbf16>
    tpu.vector_store %arg5[%c0_69, %c0_70, %c0_71, %c0_72], %62 {strides = array<i32>} : memref<1x1x81x64xbf16, #tpu.memory_space<vmem>>, vector<1x1x61x64xbf16>,
    %cst_73 = arith.constant 0.000000e+00 : bf16
    %63 = vector.broadcast %cst_73 : bf16 to vector<20x64xbf16>
    %c0_74 = arith.constant 0 : index
    %c0_75 = arith.constant 0 : index
    %c61 = arith.constant 61 : index
    %c0_76 = arith.constant 0 : index
    %64 = vector.load %arg5[%c0_74, %c0_75, %c61, %c0_76] : memref<1x1x81x64xbf16, #tpu.memory_space<vmem>>, vector<1x1x20x64xbf16>
    %65 = vector.shape_cast %64 : vector<1x1x20x64xbf16> to vector<20x64xbf16>
    %66 = vector.shape_cast %63 : vector<20x64xbf16> to vector<1x1x20x64xbf16>
    tpu.vector_store %arg5[%c0_74, %c0_75, %c61, %c0_76], %66 {strides = array<i32>} : memref<1x1x81x64xbf16, #tpu.memory_space<vmem>>, vector<1x1x20x64xbf16>,
    return
  }
  func.func @transform_0(%arg0: i32, %arg1: i32) -> (i32, i32, i32, i32) {
    %c0_i32 = arith.constant 0 : i32
    %c0_i32_0 = arith.constant 0 : i32
    %c0_i32_1 = arith.constant 0 : i32
    %c0_i32_2 = arith.constant 0 : i32
    return %c0_i32, %arg1, %c0_i32_0, %c0_i32_1 : i32, i32, i32, i32
  }
  func.func @transform_1(%arg0: i32, %arg1: i32) -> (i32, i32, i32, i32) {
    %c0_i32 = arith.constant 0 : i32
    %c0_i32_0 = arith.constant 0 : i32
    %c0_i32_1 = arith.constant 0 : i32
    %c0_i32_2 = arith.constant 0 : i32
    %c0_i32_3 = arith.constant 0 : i32
    return %c0_i32, %c0_i32_0, %c0_i32_1, %c0_i32_2 : i32, i32, i32, i32
  }
  func.func @transform_2(%arg0: i32, %arg1: i32) -> (i32, i32, i32) {
    %c0_i32 = arith.constant 0 : i32
    %c0_i32_0 = arith.constant 0 : i32
    %c0_i32_1 = arith.constant 0 : i32
    %c0_i32_2 = arith.constant 0 : i32
    return %c0_i32, %c0_i32_0, %c0_i32_1 : i32, i32, i32
  }
  func.func @transform_3(%arg0: i32, %arg1: i32) -> (i32, i32, i32, i32) {
    %c0_i32 = arith.constant 0 : i32
    %c0_i32_0 = arith.constant 0 : i32
    %c0_i32_1 = arith.constant 0 : i32
    return %arg0, %arg1, %c0_i32, %c0_i32_0 : i32, i32, i32, i32
  }
}

module attributes {stable_mosaic.version = 11 : i64} {
  func.func @_fc_fused_kernel(%arg0: i32, %arg1: i32, %arg2: memref<1x2x3136xbf16, #tpu.memory_space<vmem>>, %arg3: memref<1x3136x512xbf16, #tpu.memory_space<vmem>>, %arg4: memref<1x1x512xf32, #tpu.memory_space<vmem>>, %arg5: memref<1x512x128xbf16, #tpu.memory_space<vmem>>, %arg6: memref<1x1x128xf32, #tpu.memory_space<vmem>>, %arg7: memref<1x2x128xf32, #tpu.memory_space<vmem>>) attributes {dimension_semantics = [#tpu.dimension_semantics<parallel>, #tpu.dimension_semantics<parallel>], iteration_bounds = array<i64: 1, 1>, scalar_prefetch = 0 : i64, scratch_operands = 0 : i64, tpu.core_type = #tpu.core_type<tc>, window_params = [{transform_indices = @transform_0, window_bounds = array<i64: 1, 2, 3136>}, {transform_indices = @transform_1, window_bounds = array<i64: 1, 3136, 512>}, {transform_indices = @transform_2, window_bounds = array<i64: 1, 1, 512>}, {transform_indices = @transform_3, window_bounds = array<i64: 1, 512, 128>}, {transform_indices = @transform_4, window_bounds = array<i64: 1, 1, 128>}, {transform_indices = @transform_5, window_bounds = array<i64: 1, 2, 128>}]} {
    %c0 = arith.constant 0 : index
    %c0_0 = arith.constant 0 : index
    %c0_1 = arith.constant 0 : index
    %0 = vector.load %arg2[%c0, %c0_0, %c0_1] : memref<1x2x3136xbf16, #tpu.memory_space<vmem>>, vector<1x2x3136xbf16>
    %1 = vector.shape_cast %0 : vector<1x2x3136xbf16> to vector<2x3136xbf16>
    %c0_2 = arith.constant 0 : index
    %c0_3 = arith.constant 0 : index
    %c0_4 = arith.constant 0 : index
    %2 = vector.load %arg3[%c0_2, %c0_3, %c0_4] : memref<1x3136x512xbf16, #tpu.memory_space<vmem>>, vector<1x3136x512xbf16>
    %3 = vector.shape_cast %2 : vector<1x3136x512xbf16> to vector<3136x512xbf16>
    %cst = arith.constant dense<0.000000e+00> : vector<2x512xf32>
    %4 = tpu.matmul %1, %3, %cst {dimension_numbers = #tpu.dot_dimension_numbers<[1], [0], [0], [1], [0, 0, 1, 1], [], []>} : vector<2x3136xbf16>, vector<3136x512xbf16>, vector<2x512xf32> -> vector<2x512xf32>
    %c0_5 = arith.constant 0 : index
    %c0_6 = arith.constant 0 : index
    %c0_7 = arith.constant 0 : index
    %5 = vector.load %arg4[%c0_5, %c0_6, %c0_7] : memref<1x1x512xf32, #tpu.memory_space<vmem>>, vector<1x1x512xf32>
    %6 = vector.shape_cast %5 : vector<1x1x512xf32> to vector<1x512xf32>
    %7 = vector.broadcast %6 : vector<1x512xf32> to vector<2x512xf32>
    %8 = arith.addf %4, %7 : vector<2x512xf32>
    %cst_8 = arith.constant 0.000000e+00 : f32
    %9 = vector.broadcast %cst_8 : f32 to vector<2x512xf32>
    %10 = arith.maximumf %8, %9 : vector<2x512xf32>
    %11 = arith.truncf %10 : vector<2x512xf32> to vector<2x512xbf16>
    %c0_9 = arith.constant 0 : index
    %c0_10 = arith.constant 0 : index
    %c0_11 = arith.constant 0 : index
    %12 = vector.load %arg5[%c0_9, %c0_10, %c0_11] : memref<1x512x128xbf16, #tpu.memory_space<vmem>>, vector<1x512x128xbf16>
    %13 = vector.shape_cast %12 : vector<1x512x128xbf16> to vector<512x128xbf16>
    %cst_12 = arith.constant dense<0.000000e+00> : vector<2x128xf32>
    %14 = tpu.matmul %11, %13, %cst_12 {dimension_numbers = #tpu.dot_dimension_numbers<[1], [0], [0], [1], [0, 0, 1, 1], [], []>} : vector<2x512xbf16>, vector<512x128xbf16>, vector<2x128xf32> -> vector<2x128xf32>
    %c0_13 = arith.constant 0 : index
    %c0_14 = arith.constant 0 : index
    %c0_15 = arith.constant 0 : index
    %15 = vector.load %arg6[%c0_13, %c0_14, %c0_15] : memref<1x1x128xf32, #tpu.memory_space<vmem>>, vector<1x1x128xf32>
    %16 = vector.shape_cast %15 : vector<1x1x128xf32> to vector<1x128xf32>
    %17 = vector.broadcast %16 : vector<1x128xf32> to vector<2x128xf32>
    %18 = arith.addf %14, %17 : vector<2x128xf32>
    %c0_16 = arith.constant 0 : index
    %c0_17 = arith.constant 0 : index
    %c0_18 = arith.constant 0 : index
    %19 = vector.load %arg7[%c0_16, %c0_17, %c0_18] : memref<1x2x128xf32, #tpu.memory_space<vmem>>, vector<1x2x128xf32>
    %20 = vector.shape_cast %19 : vector<1x2x128xf32> to vector<2x128xf32>
    %21 = vector.shape_cast %18 : vector<2x128xf32> to vector<1x2x128xf32>
    tpu.vector_store %arg7[%c0_16, %c0_17, %c0_18], %21 {strides = array<i32>} : memref<1x2x128xf32, #tpu.memory_space<vmem>>, vector<1x2x128xf32>,
    return
  }
  func.func @transform_0(%arg0: i32, %arg1: i32) -> (i32, i32, i32) {
    %c0_i32 = arith.constant 0 : i32
    %c0_i32_0 = arith.constant 0 : i32
    %c0_i32_1 = arith.constant 0 : i32
    return %c0_i32, %arg1, %c0_i32_0 : i32, i32, i32
  }
  func.func @transform_1(%arg0: i32, %arg1: i32) -> (i32, i32, i32) {
    %c0_i32 = arith.constant 0 : i32
    %c0_i32_0 = arith.constant 0 : i32
    %c0_i32_1 = arith.constant 0 : i32
    %c0_i32_2 = arith.constant 0 : i32
    return %c0_i32, %c0_i32_0, %c0_i32_1 : i32, i32, i32
  }
  func.func @transform_2(%arg0: i32, %arg1: i32) -> (i32, i32, i32) {
    %c0_i32 = arith.constant 0 : i32
    %c0_i32_0 = arith.constant 0 : i32
    %c0_i32_1 = arith.constant 0 : i32
    %c0_i32_2 = arith.constant 0 : i32
    return %c0_i32, %c0_i32_0, %c0_i32_1 : i32, i32, i32
  }
  func.func @transform_3(%arg0: i32, %arg1: i32) -> (i32, i32, i32) {
    %c0_i32 = arith.constant 0 : i32
    %c0_i32_0 = arith.constant 0 : i32
    %c0_i32_1 = arith.constant 0 : i32
    %c0_i32_2 = arith.constant 0 : i32
    return %c0_i32, %c0_i32_0, %c0_i32_1 : i32, i32, i32
  }
  func.func @transform_4(%arg0: i32, %arg1: i32) -> (i32, i32, i32) {
    %c0_i32 = arith.constant 0 : i32
    %c0_i32_0 = arith.constant 0 : i32
    %c0_i32_1 = arith.constant 0 : i32
    %c0_i32_2 = arith.constant 0 : i32
    return %c0_i32, %c0_i32_0, %c0_i32_1 : i32, i32, i32
  }
  func.func @transform_5(%arg0: i32, %arg1: i32) -> (i32, i32, i32) {
    %c0_i32 = arith.constant 0 : i32
    %c0_i32_0 = arith.constant 0 : i32
    return %arg0, %arg1, %c0_i32 : i32, i32, i32
  }
}

</mosaic_0001>

<llo_original>
// kernel: d2qn_forward.4
$region0: #{d2qn_forward.4}
  #allocation0 [shape = 'u32[]', space=smem, size = 0x4, offset = 0x4, fixed_abs, tag = 'smem constant byte address 0x4 - core index']
  #allocation1 [shape = 'u32[72,128]{1,0:T(1,128)}', space=vmem, size = 0x9000, scoped, tag = 'internal scratch']
  %s0 = inlined_call_operand.vmem [shape: bf16[1,2,441,64], index: 0, kind: input, shape index: {}]
  %s1 = inlined_call_operand.vmem [shape: bf16[2,4,64,32], index: 1, kind: input, shape index: {}]
  %s2 = inlined_call_operand.vmem [shape: f32[2,1,32], index: 2, kind: input, shape index: {}]
  %s3 = inlined_call_operand.vmem [shape: bf16[1,2,441,32], index: 3, kind: output, shape index: {}]
  %s4 = sld [smem:[#allocation0]]
  $region45: #{d2qn_forward.4} parent=0
    _
  %s6 = ssub.s32 1, %s4
  %s7 = scalar_select 0, %s6, %s4
  loop: start=0, step=1, limit=4
  $region2: #{d2qn_forward.4} parent=0 // loop_pre_header
    _
  $region3: #{d2qn_forward.4} parent=0 // loop_header
    %s9 = sphi 0, %s13
    %p10 = scmp.ge.s32.totalorder %s9, 4
    %s16 = sphi 0, %s28
    %s17 = sphi 0, %s24
    %s18 = sphi 0, %s16
    %s19 = sphi 0, %s17
    %s20 = sphi 0, %s18
    %s21 = sphi 0, %s19
    %s31 = sphi 0, %s33
    %s34 = sphi 0, %s31
    %s35 = sphi 0, %s34
    %s51 = sphi 0, %s35
    %s55 = sphi 0, %s55
    %s57 = sphi 0, %s55
    %s58 = sphi 0, %s57
    %s72 = sphi 0, %s58
    %s76 = sphi 0, %s76
    %s78 = sphi 0, %s76
    %s79 = sphi 0, %s78
    %s93 = sphi 0, %s79
    %s101 = sphi 0, %s103
    %s104 = sphi 0, %s101
    %s105 = sphi 0, %s104
    %s121 = sphi 0, %s105
  $region4: #{d2qn_forward.4} parent=0 // loop_header_branch
    %12 = sbr.rel (%p10) target = $region8
  $region5: #{d2qn_forward.4} parent=0 // loop_body
    %s14 = ssub.s32 %s9, 1
    %s15 = ssub.s32 %s9, 2
    %s22 = sadd.s32 1, %s17
    %p23 = scmp.ge.s32.totalorder %s22, 2
    %s24 = scalar_select %p23, 0, %s22
    %s25 = sadd.s32 1, %s16
    %s26 = scalar_select %p23, %s25, %s16
    %p27 = scmp.ge.s32.totalorder %s26, 1
    %s28 = scalar_select %p27, 0, %s26
    %s29 = ssub.s32 %s17, %s24
    %p30 = scmp.eq.s32.totalorder %s29, 0
    %s32 = sadd.s32 %s31, 1
    %s33 = scalar_select %p30, %s31, %s32
    %p36 = pneg %p30
    %p37 = scmp.eq.s32.totalorder %s9, 1
    %p38 = por %p36, %p37
    %p39 = scmp.ne.s32.totalorder %s31, %s34
    %p40 = scmp.eq.s32.totalorder %s9, 0
    %p41 = por %p39, %p40
    %p42 = scmp.ne.s32.totalorder %s31, %s34
    %p43 = scmp.eq.s32.totalorder %s14, 1
    %p44 = por %p42, %p43
    %p45 = scmp.ne.s32.totalorder %s34, %s35
    %p46 = scmp.eq.s32.totalorder %s14, 0
    %p47 = por %p45, %p46
    %p48 = scmp.ne.s32.totalorder %s34, %s35
    %p49 = scmp.eq.s32.totalorder %s15, 1
    %p50 = por %p48, %p49
    %p52 = scmp.ne.s32.totalorder %s35, %s51
    %p53 = scmp.eq.s32.totalorder %s15, 0
    %p54 = por %p52, %p53
    %s56 = sadd.s32 %s55, 1
    %p59 = scmp.eq.s32.totalorder %s9, 1
    %p60 = scmp.ne.s32.totalorder %s55, %s57
    %p61 = scmp.eq.s32.totalorder %s9, 0
    %p62 = por %p60, %p61
    %p63 = scmp.ne.s32.totalorder %s55, %s57
    %p64 = scmp.eq.s32.totalorder %s14, 1
    %p65 = por %p63, %p64
    %p66 = scmp.ne.s32.totalorder %s57, %s58
    %p67 = scmp.eq.s32.totalorder %s14, 0
    %p68 = por %p66, %p67
    %p69 = scmp.ne.s32.totalorder %s57, %s58
    %p70 = scmp.eq.s32.totalorder %s15, 1
    %p71 = por %p69, %p70
    %p73 = scmp.ne.s32.totalorder %s58, %s72
    %p74 = scmp.eq.s32.totalorder %s15, 0
    %p75 = por %p73, %p74
    %s77 = sadd.s32 %s76, 1
    %p80 = scmp.eq.s32.totalorder %s9, 1
    %p81 = scmp.ne.s32.totalorder %s76, %s78
    %p82 = scmp.eq.s32.totalorder %s9, 0
    %p83 = por %p81, %p82
    %p84 = scmp.ne.s32.totalorder %s76, %s78
    %p85 = scmp.eq.s32.totalorder %s14, 1
    %p86 = por %p84, %p85
    %p87 = scmp.ne.s32.totalorder %s78, %s79
    %p88 = scmp.eq.s32.totalorder %s14, 0
    %p89 = por %p87, %p88
    %p90 = scmp.ne.s32.totalorder %s78, %s79
    %p91 = scmp.eq.s32.totalorder %s15, 1
    %p92 = por %p90, %p91
    %p94 = scmp.ne.s32.totalorder %s79, %s93
    %p95 = scmp.eq.s32.totalorder %s15, 0
    %p96 = por %p94, %p95
    %s97 = ssub.s32 %s16, %s28
    %s98 = ssub.s32 %s17, %s24
    %s99 = sor.u32 %s97, %s98
    %p100 = scmp.eq.s32.totalorder %s99, 0
    %s102 = sadd.s32 %s101, 1
    %s103 = scalar_select %p100, %s101, %s102
    %p106 = pneg %p100
    %p107 = scmp.eq.s32.totalorder %s9, 1
    %p108 = por %p106, %p107
    %p109 = scmp.ne.s32.totalorder %s101, %s104
    %p110 = scmp.eq.s32.totalorder %s9, 0
    %p111 = por %p109, %p110
    %p112 = scmp.ne.s32.totalorder %s101, %s104
    %p113 = scmp.eq.s32.totalorder %s14, 1
    %p114 = por %p112, %p113
    %p115 = scmp.ne.s32.totalorder %s104, %s105
    %p116 = scmp.eq.s32.totalorder %s14, 0
    %p117 = por %p115, %p116
    %p118 = scmp.ne.s32.totalorder %s104, %s105
    %p119 = scmp.eq.s32.totalorder %s15, 1
    %p120 = por %p118, %p119
    %p122 = scmp.ne.s32.totalorder %s105, %s121
    %p123 = scmp.eq.s32.totalorder %s15, 0
    %p124 = por %p122, %p123
    %p125 = scmp.le.s32.totalorder 1, %s9
    %p126 = scmp.lt.s32.totalorder %s9, 3
    %p127 = pnand %p125, %p126
    %p128 = pneg %p127
    // Predicated region
    $region9: #{d2qn_forward.4} parent=5 // pred_check
      _
    $region10: #{d2qn_forward.4} parent=5 // pred_check_branch
      %130 = sbr.rel (%p127) target = $region12
    $region11: #{d2qn_forward.4} parent=5 // pred_region
      %s131 = ssub.s32 %s9, 1
      // Predicated region
      $region13: #{d2qn_forward.4} parent=11 // pred_check
        %p132 = pneg %p68
      $region14: #{d2qn_forward.4} parent=11 // pred_check_branch
        %134 = sbr.rel (%p132) target = $region16
      $region15: #{d2qn_forward.4} parent=11 // pred_region
        _
      $region16: #{d2qn_forward.4} parent=11 // pred_fallthru
        _
      // Predicated region
      $region17: #{d2qn_forward.4} parent=11 // pred_check
        %p135 = pneg %p89
      $region18: #{d2qn_forward.4} parent=11 // pred_check_branch
        %137 = sbr.rel (%p135) target = $region20
      $region19: #{d2qn_forward.4} parent=11 // pred_region
        _
      $region20: #{d2qn_forward.4} parent=11 // pred_fallthru
        _
    $region12: #{d2qn_forward.4} parent=5 // pred_fallthru
      _
    %p138 = scmp.lt.s32.totalorder %s9, 2
    // Predicated region
    $region21: #{d2qn_forward.4} parent=5 // pred_check
      %p139 = pneg %p138
    $region22: #{d2qn_forward.4} parent=5 // pred_check_branch
      %141 = sbr.rel (%p139) target = $region24
    $region23: #{d2qn_forward.4} parent=5 // pred_region
      // Predicated region
      $region25: #{d2qn_forward.4} parent=23 // pred_check
        %p142 = pneg %p41
      $region26: #{d2qn_forward.4} parent=23 // pred_check_branch
        %144 = sbr.rel (%p142) target = $region28
      $region27: #{d2qn_forward.4} parent=23 // pred_region
        %p145 = scmp.lt.s32.totalorder %s17, 1
        %s146 = scalar_select %p145, %s17, 1
        %s147 = smul.addr %s146, 56
        %s148 = smul.addr %s147, 4
        %s149 = scalar_lea.vmem %s0, %s148
      $region28: #{d2qn_forward.4} parent=23 // pred_fallthru
        _
    $region24: #{d2qn_forward.4} parent=5 // pred_fallthru
      _
    %p150 = scmp.le.s32.totalorder 1, %s9
    %p151 = scmp.lt.s32.totalorder %s9, 3
    %p152 = pnand %p150, %p151
    %p153 = pneg %p152
    // Predicated region
    $region29: #{d2qn_forward.4} parent=5 // pred_check
      _
    $region30: #{d2qn_forward.4} parent=5 // pred_check_branch
      %155 = sbr.rel (%p152) target = $region32
    $region31: #{d2qn_forward.4} parent=5 // pred_region
      %s156 = ssub.s32 %s9, 1
      %p157 = scmp.lt.s32.totalorder %s19, 1
      %s158 = scalar_select %p157, %s19, 1
      %s159 = smul.addr %s158, 56
      %s160 = smul.addr %s159, 4
      %s161 = scalar_lea.vmem %s0, %s160
      %p162 = pneg %p47
      %p163 = pneg %p44
      %p164 = pneg %p68
      %p165 = pneg %p65
      %p166 = pneg %p89
      %p167 = pneg %p86
      %p168 = pneg %p117
      %p169 = pneg %p114
      %p170 = scmp.lt.s32.totalorder %s18, 0
      %s171 = scalar_select %p170, %s18, 0
      %p172 = scmp.lt.s32.totalorder %s19, 1
      %s173 = scalar_select %p172, %s19, 1
      %s174 = smul.addr %s173, 56
      %s175 = smul.addr %s171, 112
      %s176 = sadd.s32 %s174, %s175
      %s177 = smul.addr %s176, 4
      %s178 = scalar_lea.vmem %s3, %s177
      %p179 = scmp.lt.s32.totalorder %s19, 1
      %s180 = scalar_select %p179, %s19, 1
      %s181 = smul.addr %s180, 56
      %s182 = smul.addr %s181, 4
      %s183 = scalar_lea.vmem %s0, %s182
      %p184 = scmp.lt.s32.totalorder %s18, 0
      %s185 = scalar_select %p184, %s18, 0
      %p186 = scmp.lt.s32.totalorder %s19, 1
      %s187 = scalar_select %p186, %s19, 1
      %s188 = smul.addr %s187, 56
      %s189 = smul.addr %s185, 112
      %s190 = sadd.s32 %s188, %s189
      %s191 = smul.addr %s190, 4
      %s192 = scalar_lea.vmem %s3, %s191
      %v194 = vld [vmem:[%s183] sm:$0xf]
      %v195 = vld [vmem:[%s183 + $0x4] sm:$0xf]
      %v196 = vld [vmem:[%s183 + $0x8] sm:$0xf]
      %v197 = vld [vmem:[%s183 + $0xc] sm:$0xf]
      %v198 = vld [vmem:[%s183 + $0x10] sm:$0xf]
      %v199 = vld [vmem:[%s183 + $0x14] sm:$0xf]
      %v200 = vld [vmem:[%s183 + $0x18] sm:$0xf]
      %v201 = vld [vmem:[%s183 + $0x1c] sm:$0xf]
      %v202 = vld [vmem:[%s183 + $0x20] sm:$0xf]
      %v203 = vld [vmem:[%s183 + $0x24] sm:$0xf]
      %v204 = vld [vmem:[%s183 + $0x28] sm:$0xf]
      %v205 = vld [vmem:[%s183 + $0x2c] sm:$0xf]
      %v206 = vld [vmem:[%s183 + $0x30] sm:$0xf]
      %v207 = vld [vmem:[%s183 + $0x34] sm:$0xf]
      %v208 = vld [vmem:[%s183 + $0x38] sm:$0xf]
      %v209 = vld [vmem:[%s183 + $0x3c] sm:$0xf]
      %v210 = vld [vmem:[%s183 + $0x40] sm:$0xf]
      %v211 = vld [vmem:[%s183 + $0x44] sm:$0xf]
      %v212 = vld [vmem:[%s183 + $0x48] sm:$0xf]
      %v213 = vld [vmem:[%s183 + $0x4c] sm:$0xf]
      %v214 = vld [vmem:[%s183 + $0x50] sm:$0xf]
      %v215 = vld [vmem:[%s183 + $0x54] sm:$0xf]
      %v216 = vld [vmem:[%s183 + $0x58] sm:$0xf]
      %v217 = vld [vmem:[%s183 + $0x5c] sm:$0xf]
      %v218 = vld [vmem:[%s183 + $0x60] sm:$0xf]
      %v219 = vld [vmem:[%s183 + $0x64] sm:$0xf]
      %v220 = vld [vmem:[%s183 + $0x68] sm:$0xf]
      %v221 = vld [vmem:[%s183 + $0x6c] sm:$0xf]
      %v222 = vld [vmem:[%s183 + $0x70] sm:$0xf]
      %v223 = vld [vmem:[%s183 + $0x74] sm:$0xf]
      %v224 = vld [vmem:[%s183 + $0x78] sm:$0xf]
      %v225 = vld [vmem:[%s183 + $0x7c] sm:$0xf]
      %v226 = vld [vmem:[%s183 + $0x80] sm:$0xf]
      %v227 = vld [vmem:[%s183 + $0x84] sm:$0xf]
      %v228 = vld [vmem:[%s183 + $0x88] sm:$0xf]
      %v229 = vld [vmem:[%s183 + $0x8c] sm:$0xf]
      %v230 = vld [vmem:[%s183 + $0x90] sm:$0xf]
      %v231 = vld [vmem:[%s183 + $0x94] sm:$0xf]
      %v232 = vld [vmem:[%s183 + $0x98] sm:$0xf]
      %v233 = vld [vmem:[%s183 + $0x9c] sm:$0xf]
      %v234 = vld [vmem:[%s183 + $0xa0] sm:$0xf]
      %v235 = vld [vmem:[%s183 + $0xa4] sm:$0xf]
      %v236 = vld [vmem:[%s183 + $0xa8] sm:$0xf]
      %v237 = vld [vmem:[%s183 + $0xac] sm:$0xf]
      %v238 = vld [vmem:[%s183 + $0xb0] sm:$0xf]
      %v239 = vld [vmem:[%s183 + $0xb4] sm:$0xf]
      %v240 = vld [vmem:[%s183 + $0xb8] sm:$0xf]
      %v241 = vld [vmem:[%s183 + $0xbc] sm:$0xf]
      %v242 = vld [vmem:[%s183 + $0xc0] sm:$0xf]
      %v243 = vld [vmem:[%s183 + $0xc4] sm:$0xf]
      %v244 = vld [vmem:[%s183 + $0xc8] sm:$0xf]
      %v245 = vld [vmem:[%s183 + $0xcc] sm:$0xf]
      %v246 = vld [vmem:[%s183 + $0xd0] sm:$0x3]
      %v247 = vld [vmem:[%s1] sm:$0xf]
      %v248 = vld [vmem:[%s1 + $0x4] sm:$0xf]
      %v249 = vld [vmem:[%s1 + $0x8] sm:$0xf]
      %v250 = vld [vmem:[%s1 + $0xc] sm:$0xf]
      %v251 = vld [vmem:[%s1 + $0x10] sm:$0xf]
      %v252 = vld [vmem:[%s1 + $0x14] sm:$0xf]
      %v253 = vld [vmem:[%s1 + $0x18] sm:$0xf]
      %v254 = vld [vmem:[%s1 + $0x1c] sm:$0xf]
      %s255 = scalar_lea.vmem %s1, 32
      %v256 = vld [vmem:[%s255] sm:$0xf]
      %v257 = vld [vmem:[%s255 + $0x4] sm:$0xf]
      %v258 = vld [vmem:[%s255 + $0x8] sm:$0xf]
      %v259 = vld [vmem:[%s255 + $0xc] sm:$0xf]
      %v260 = vld [vmem:[%s255 + $0x10] sm:$0xf]
      %v261 = vld [vmem:[%s255 + $0x14] sm:$0xf]
      %v262 = vld [vmem:[%s255 + $0x18] sm:$0xf]
      %v263 = vld [vmem:[%s255 + $0x1c] sm:$0xf]
      %v317 = vunpack.c.l.b16 %v194
      %v318 = vunpack.c.l.b16 %v195
      %v319 = vunpack.c.l.b16 %v196
      %v320 = vunpack.c.l.b16 %v197
      %v321 = vunpack.c.l.b16 %v198
      %v322 = vunpack.c.l.b16 %v199
      %v323 = vunpack.c.l.b16 %v200
      %v324 = vunpack.c.l.b16 %v201
      %v325 = vunpack.c.l.b16 %v202
      %v326 = vunpack.c.l.b16 %v203
      %v327 = vunpack.c.l.b16 %v204
      %v328 = vunpack.c.l.b16 %v205
      %v329 = vunpack.c.l.b16 %v206
      %v330 = vunpack.c.l.b16 %v207
      %v331 = vunpack.c.l.b16 %v208
      %v332 = vunpack.c.l.b16 %v209
      %v333 = vunpack.c.l.b16 %v210
      %v334 = vunpack.c.l.b16 %v211
      %v335 = vunpack.c.l.b16 %v212
      %v336 = vunpack.c.l.b16 %v213
      %v337 = vunpack.c.l.b16 %v214
      %v338 = vunpack.c.l.b16 %v215
      %v339 = vunpack.c.l.b16 %v216
      %v340 = vunpack.c.l.b16 %v217
      %v341 = vunpack.c.l.b16 %v218
      %v342 = vunpack.c.l.b16 %v219
      %v343 = vunpack.c.l.b16 %v220
      %v344 = vunpack.c.l.b16 %v221
      %v345 = vunpack.c.l.b16 %v222
      %v346 = vunpack.c.l.b16 %v223
      %v347 = vunpack.c.l.b16 %v224
      %v348 = vunpack.c.l.b16 %v225
      %v349 = vunpack.c.l.b16 %v226
      %v350 = vunpack.c.l.b16 %v227
      %v351 = vunpack.c.l.b16 %v228
      %v352 = vunpack.c.l.b16 %v229
      %v353 = vunpack.c.l.b16 %v230
      %v354 = vunpack.c.l.b16 %v231
      %v355 = vunpack.c.l.b16 %v232
      %v356 = vunpack.c.l.b16 %v233
      %v357 = vunpack.c.l.b16 %v234
      %v358 = vunpack.c.l.b16 %v235
      %v359 = vunpack.c.l.b16 %v236
      %v360 = vunpack.c.l.b16 %v237
      %v361 = vunpack.c.l.b16 %v238
      %v362 = vunpack.c.l.b16 %v239
      %v363 = vunpack.c.l.b16 %v240
      %v364 = vunpack.c.l.b16 %v241
      %v365 = vunpack.c.l.b16 %v242
      %v366 = vunpack.c.l.b16 %v243
      %v367 = vunpack.c.l.b16 %v244
      %v368 = vunpack.c.l.b16 %v245
      %v369 = vunpack.c.l.b16 %v246
      %v370 = vpack.c.b16 %v318, %v317
      %v371 = vpack.c.b16 %v320, %v319
      %v372 = vpack.c.b16 %v322, %v321
      %v373 = vpack.c.b16 %v324, %v323
      %v374 = vpack.c.b16 %v326, %v325
      %v375 = vpack.c.b16 %v328, %v327
      %v376 = vpack.c.b16 %v330, %v329
      %v377 = vpack.c.b16 %v332, %v331
      %v378 = vpack.c.b16 %v334, %v333
      %v379 = vpack.c.b16 %v336, %v335
      %v380 = vpack.c.b16 %v338, %v337
      %v381 = vpack.c.b16 %v340, %v339
      %v382 = vpack.c.b16 %v342, %v341
      %v383 = vpack.c.b16 %v344, %v343
      %v384 = vpack.c.b16 %v346, %v345
      %v385 = vpack.c.b16 %v348, %v347
      %v386 = vpack.c.b16 %v350, %v349
      %v387 = vpack.c.b16 %v352, %v351
      %v388 = vpack.c.b16 %v354, %v353
      %v389 = vpack.c.b16 %v356, %v355
      %v390 = vpack.c.b16 %v358, %v357
      %v391 = vpack.c.b16 %v360, %v359
      %v392 = vpack.c.b16 %v362, %v361
      %v393 = vpack.c.b16 %v364, %v363
      %v394 = vpack.c.b16 %v366, %v365
      %v395 = vpack.c.b16 %v368, %v367
      %v396 = vpack.c.b16 %v369, %v369
      %vm397 = vsmask.f32 7424
      %v399 = vshrl.u32 %v370, 16
      %v401 = vshll.u32 %v370, 16
      %v403 = vrot.slane %v401, 1
      %v404 = vor.u32 %v399, %v403
      %v406 = vshll.u32 %v371, 16
      %v408 = vrot.slane %v406, 1
      %v409 = vsel %vm397, %v404, %v408
      %v410 = vshrl.u32 %v371, 16
      %v412 = vor.u32 %v410, %v408
      %v414 = vshll.u32 %v372, 16
      %v416 = vrot.slane %v414, 1
      %v417 = vsel %vm397, %v412, %v416
      %v418 = vshrl.u32 %v372, 16
      %v420 = vor.u32 %v418, %v416
      %v422 = vshll.u32 %v373, 16
      %v424 = vrot.slane %v422, 1
      %v425 = vsel %vm397, %v420, %v424
      %v426 = vshrl.u32 %v373, 16
      %v428 = vor.u32 %v426, %v424
      %v430 = vshll.u32 %v374, 16
      %v432 = vrot.slane %v430, 1
      %v433 = vsel %vm397, %v428, %v432
      %v434 = vshrl.u32 %v374, 16
      %v436 = vor.u32 %v434, %v432
      %v438 = vshll.u32 %v375, 16
      %v440 = vrot.slane %v438, 1
      %v441 = vsel %vm397, %v436, %v440
      %v442 = vshrl.u32 %v375, 16
      %v444 = vor.u32 %v442, %v440
      %v446 = vshll.u32 %v376, 16
      %v448 = vrot.slane %v446, 1
      %v449 = vsel %vm397, %v444, %v448
      %v450 = vshrl.u32 %v376, 16
      %v452 = vor.u32 %v450, %v448
      %v454 = vshll.u32 %v377, 16
      %v456 = vrot.slane %v454, 1
      %v457 = vsel %vm397, %v452, %v456
      %v458 = vshrl.u32 %v377, 16
      %v460 = vor.u32 %v458, %v456
      %v462 = vshll.u32 %v378, 16
      %v464 = vrot.slane %v462, 1
      %v465 = vsel %vm397, %v460, %v464
      %v466 = vshrl.u32 %v378, 16
      %v468 = vor.u32 %v466, %v464
      %v470 = vshll.u32 %v379, 16
      %v472 = vrot.slane %v470, 1
      %v473 = vsel %vm397, %v468, %v472
      %v474 = vshrl.u32 %v379, 16
      %v476 = vor.u32 %v474, %v472
      %v478 = vshll.u32 %v380, 16
      %v480 = vrot.slane %v478, 1
      %v481 = vsel %vm397, %v476, %v480
      %v482 = vshrl.u32 %v380, 16
      %v484 = vor.u32 %v482, %v480
      %v486 = vshll.u32 %v381, 16
      %v488 = vrot.slane %v486, 1
      %v489 = vsel %vm397, %v484, %v488
      %v490 = vshrl.u32 %v381, 16
      %v492 = vor.u32 %v490, %v488
      %v494 = vshll.u32 %v382, 16
      %v496 = vrot.slane %v494, 1
      %v497 = vsel %vm397, %v492, %v496
      %v498 = vshrl.u32 %v382, 16
      %v500 = vor.u32 %v498, %v496
      %v502 = vshll.u32 %v383, 16
      %v504 = vrot.slane %v502, 1
      %v505 = vsel %vm397, %v500, %v504
      %v506 = vshrl.u32 %v383, 16
      %v508 = vor.u32 %v506, %v504
      %v510 = vshll.u32 %v384, 16
      %v512 = vrot.slane %v510, 1
      %v513 = vsel %vm397, %v508, %v512
      %v514 = vshrl.u32 %v384, 16
      %v516 = vor.u32 %v514, %v512
      %v518 = vshll.u32 %v385, 16
      %v520 = vrot.slane %v518, 1
      %v521 = vsel %vm397, %v516, %v520
      %v522 = vshrl.u32 %v385, 16
      %v524 = vor.u32 %v522, %v520
      %v526 = vshll.u32 %v386, 16
      %v528 = vrot.slane %v526, 1
      %v529 = vsel %vm397, %v524, %v528
      %v530 = vshrl.u32 %v386, 16
      %v532 = vor.u32 %v530, %v528
      %v534 = vshll.u32 %v387, 16
      %v536 = vrot.slane %v534, 1
      %v537 = vsel %vm397, %v532, %v536
      %v538 = vshrl.u32 %v387, 16
      %v540 = vor.u32 %v538, %v536
      %v542 = vshll.u32 %v388, 16
      %v544 = vrot.slane %v542, 1
      %v545 = vsel %vm397, %v540, %v544
      %v546 = vshrl.u32 %v388, 16
      %v548 = vor.u32 %v546, %v544
      %v550 = vshll.u32 %v389, 16
      %v552 = vrot.slane %v550, 1
      %v553 = vsel %vm397, %v548, %v552
      %v554 = vshrl.u32 %v389, 16
      %v556 = vor.u32 %v554, %v552
      %v558 = vshll.u32 %v390, 16
      %v560 = vrot.slane %v558, 1
      %v561 = vsel %vm397, %v556, %v560
      %v562 = vshrl.u32 %v390, 16
      %v564 = vor.u32 %v562, %v560
      %v566 = vshll.u32 %v391, 16
      %v568 = vrot.slane %v566, 1
      %v569 = vsel %vm397, %v564, %v568
      %v570 = vshrl.u32 %v391, 16
      %v572 = vor.u32 %v570, %v568
      %v574 = vshll.u32 %v392, 16
      %v576 = vrot.slane %v574, 1
      %v577 = vsel %vm397, %v572, %v576
      %v578 = vshrl.u32 %v392, 16
      %v580 = vor.u32 %v578, %v576
      %v582 = vshll.u32 %v393, 16
      %v584 = vrot.slane %v582, 1
      %v585 = vsel %vm397, %v580, %v584
      %v586 = vshrl.u32 %v393, 16
      %v588 = vor.u32 %v586, %v584
      %v590 = vshll.u32 %v394, 16
      %v592 = vrot.slane %v590, 1
      %v593 = vsel %vm397, %v588, %v592
      %v594 = vshrl.u32 %v394, 16
      %v596 = vor.u32 %v594, %v592
      %v598 = vshll.u32 %v395, 16
      %v600 = vrot.slane %v598, 1
      %v601 = vsel %vm397, %v596, %v600
      %v602 = vshrl.u32 %v395, 16
      %v604 = vor.u32 %v602, %v600
      %v606 = vshll.u32 %v396, 16
      %v608 = vrot.slane %v606, 1
      %v609 = vsel %vm397, %v604, %v608
      %v610 = vshrl.u32 %v396, 16
      %v612 = vor.u32 %v610, %v608
      %v621 = vunpack.c.l.b16 %v256
      %v622 = vunpack.c.l.b16 %v257
      %v623 = vunpack.c.l.b16 %v258
      %v624 = vunpack.c.l.b16 %v259
      %v625 = vunpack.c.l.b16 %v260
      %v626 = vunpack.c.l.b16 %v261
      %v627 = vunpack.c.l.b16 %v262
      %v628 = vunpack.c.l.b16 %v263
      %v629 = vpack.c.b16 %v622, %v621
      %v630 = vpack.c.b16 %v624, %v623
      %v631 = vpack.c.b16 %v626, %v625
      %v632 = vpack.c.b16 %v628, %v627
      %vm637 = vcmask 523264
      %v639 = vsel %vm637, %v409, 0
      %v642 = vsel %vm637, %v417, 0
      %v645 = vsel %vm637, %v425, 0
      %v648 = vsel %vm637, %v433, 0
      %v651 = vsel %vm637, %v441, 0
      %v654 = vsel %vm637, %v449, 0
      %v657 = vsel %vm637, %v457, 0
      %v660 = vsel %vm637, %v465, 0
      %v663 = vsel %vm637, %v473, 0
      %v666 = vsel %vm637, %v481, 0
      %v669 = vsel %vm637, %v489, 0
      %v672 = vsel %vm637, %v497, 0
      %v675 = vsel %vm637, %v505, 0
      %v678 = vsel %vm637, %v513, 0
      %v681 = vsel %vm637, %v521, 0
      %v684 = vsel %vm637, %v529, 0
      %v687 = vsel %vm637, %v537, 0
      %v690 = vsel %vm637, %v545, 0
      %v693 = vsel %vm637, %v553, 0
      %v696 = vsel %vm637, %v561, 0
      %v699 = vsel %vm637, %v569, 0
      %v702 = vsel %vm637, %v577, 0
      %v705 = vsel %vm637, %v585, 0
      %v708 = vsel %vm637, %v593, 0
      %v711 = vsel %vm637, %v601, 0
      %v714 = vsel %vm637, %v609, 0
      %v717 = vsel %vm637, %v612, 0
      %719 = vmatpush.bf16.msra.mxu0 0
      %720 = vmatpush.bf16.msra.mxu0 0
      %721 = vmatpush.bf16.msra.mxu0 0
      %722 = vmatpush.bf16.msra.mxu0 0
      %723 = vmatpush.bf16.msra.mxu0 %v632
      %724 = vmatpush.bf16.msra.mxu0 %v631
      %725 = vmatpush.bf16.msra.mxu0 %v630
      %726 = vmatpush.bf16.msra.mxu0 %v629
      %727 = vmatmul.bf16.gmra.mxu0 %v639
      %v728 = vpop.f32.mrf.mxu0
      %v729 = vadd.f32 0.0, %v728
      %v730 = vpop.f32.mrf.mxu0
      %v731 = vadd.f32 0.0, %v730
      %732 = vmatmul.bf16.gmra.mxu0 %v642
      %v733 = vpop.f32.mrf.mxu0
      %v734 = vadd.f32 0.0, %v733
      %v735 = vpop.f32.mrf.mxu0
      %v736 = vadd.f32 0.0, %v735
      %737 = vmatmul.bf16.gmra.mxu0 %v645
      %v738 = vpop.f32.mrf.mxu0
      %v739 = vadd.f32 0.0, %v738
      %v740 = vpop.f32.mrf.mxu0
      %v741 = vadd.f32 0.0, %v740
      %742 = vmatmul.bf16.gmra.mxu0 %v648
      %v743 = vpop.f32.mrf.mxu0
      %v744 = vadd.f32 0.0, %v743
      %v745 = vpop.f32.mrf.mxu0
      %v746 = vadd.f32 0.0, %v745
      %747 = vmatmul.bf16.gmra.mxu0 %v651
      %v748 = vpop.f32.mrf.mxu0
      %v749 = vadd.f32 0.0, %v748
      %v750 = vpop.f32.mrf.mxu0
      %v751 = vadd.f32 0.0, %v750
      %752 = vmatmul.bf16.gmra.mxu0 %v654
      %v753 = vpop.f32.mrf.mxu0
      %v754 = vadd.f32 0.0, %v753
      %v755 = vpop.f32.mrf.mxu0
      %v756 = vadd.f32 0.0, %v755
      %757 = vmatmul.bf16.gmra.mxu0 %v657
      %v758 = vpop.f32.mrf.mxu0
      %v759 = vadd.f32 0.0, %v758
      %v760 = vpop.f32.mrf.mxu0
      %v761 = vadd.f32 0.0, %v760
      %762 = vmatmul.bf16.gmra.mxu0 %v660
      %v763 = vpop.f32.mrf.mxu0
      %v764 = vadd.f32 0.0, %v763
      %v765 = vpop.f32.mrf.mxu0
      %v766 = vadd.f32 0.0, %v765
      %767 = vmatmul.bf16.gmra.mxu0 %v663
      %v768 = vpop.f32.mrf.mxu0
      %v769 = vadd.f32 0.0, %v768
      %v770 = vpop.f32.mrf.mxu0
      %v771 = vadd.f32 0.0, %v770
      %772 = vmatmul.bf16.gmra.mxu0 %v666
      %v773 = vpop.f32.mrf.mxu0
      %v774 = vadd.f32 0.0, %v773
      %v775 = vpop.f32.mrf.mxu0
      %v776 = vadd.f32 0.0, %v775
      %777 = vmatmul.bf16.gmra.mxu0 %v669
      %v778 = vpop.f32.mrf.mxu0
      %v779 = vadd.f32 0.0, %v778
      %v780 = vpop.f32.mrf.mxu0
      %v781 = vadd.f32 0.0, %v780
      %782 = vmatmul.bf16.gmra.mxu0 %v672
      %v783 = vpop.f32.mrf.mxu0
      %v784 = vadd.f32 0.0, %v783
      %v785 = vpop.f32.mrf.mxu0
      %v786 = vadd.f32 0.0, %v785
      %787 = vmatmul.bf16.gmra.mxu0 %v675
      %v788 = vpop.f32.mrf.mxu0
      %v789 = vadd.f32 0.0, %v788
      %v790 = vpop.f32.mrf.mxu0
      %v791 = vadd.f32 0.0, %v790
      %792 = vmatmul.bf16.gmra.mxu0 %v678
      %v793 = vpop.f32.mrf.mxu0
      %v794 = vadd.f32 0.0, %v793
      %v795 = vpop.f32.mrf.mxu0
      %v796 = vadd.f32 0.0, %v795
      %797 = vmatmul.bf16.gmra.mxu0 %v681
      %v798 = vpop.f32.mrf.mxu0
      %v799 = vadd.f32 0.0, %v798
      %v800 = vpop.f32.mrf.mxu0
      %v801 = vadd.f32 0.0, %v800
      %802 = vmatmul.bf16.gmra.mxu0 %v684
      %v803 = vpop.f32.mrf.mxu0
      %v804 = vadd.f32 0.0, %v803
      %v805 = vpop.f32.mrf.mxu0
      %v806 = vadd.f32 0.0, %v805
      %807 = vmatmul.bf16.gmra.mxu0 %v687
      %v808 = vpop.f32.mrf.mxu0
      %v809 = vadd.f32 0.0, %v808
      %v810 = vpop.f32.mrf.mxu0
      %v811 = vadd.f32 0.0, %v810
      %812 = vmatmul.bf16.gmra.mxu0 %v690
      %v813 = vpop.f32.mrf.mxu0
      %v814 = vadd.f32 0.0, %v813
      %v815 = vpop.f32.mrf.mxu0
      %v816 = vadd.f32 0.0, %v815
      %817 = vmatmul.bf16.gmra.mxu0 %v693
      %v818 = vpop.f32.mrf.mxu0
      %v819 = vadd.f32 0.0, %v818
      %v820 = vpop.f32.mrf.mxu0
      %v821 = vadd.f32 0.0, %v820
      %822 = vmatmul.bf16.gmra.mxu0 %v696
      %v823 = vpop.f32.mrf.mxu0
      %v824 = vadd.f32 0.0, %v823
      %v825 = vpop.f32.mrf.mxu0
      %v826 = vadd.f32 0.0, %v825
      %827 = vmatmul.bf16.gmra.mxu0 %v699
      %v828 = vpop.f32.mrf.mxu0
      %v829 = vadd.f32 0.0, %v828
      %v830 = vpop.f32.mrf.mxu0
      %v831 = vadd.f32 0.0, %v830
      %832 = vmatmul.bf16.gmra.mxu0 %v702
      %v833 = vpop.f32.mrf.mxu0
      %v834 = vadd.f32 0.0, %v833
      %v835 = vpop.f32.mrf.mxu0
      %v836 = vadd.f32 0.0, %v835
      %837 = vmatmul.bf16.gmra.mxu0 %v705
      %v838 = vpop.f32.mrf.mxu0
      %v839 = vadd.f32 0.0, %v838
      %v840 = vpop.f32.mrf.mxu0
      %v841 = vadd.f32 0.0, %v840
      %842 = vmatmul.bf16.gmra.mxu0 %v708
      %v843 = vpop.f32.mrf.mxu0
      %v844 = vadd.f32 0.0, %v843
      %v845 = vpop.f32.mrf.mxu0
      %v846 = vadd.f32 0.0, %v845
      %847 = vmatmul.bf16.gmra.mxu0 %v711
      %v848 = vpop.f32.mrf.mxu0
      %v849 = vadd.f32 0.0, %v848
      %v850 = vpop.f32.mrf.mxu0
      %v851 = vadd.f32 0.0, %v850
      %852 = vmatmul.bf16.gmra.mxu0 %v714
      %v853 = vpop.f32.mrf.mxu0
      %v854 = vadd.f32 0.0, %v853
      %v855 = vpop.f32.mrf.mxu0
      %v856 = vadd.f32 0.0, %v855
      %857 = vmatmul.bf16.gmra.mxu0 %v717
      %v858 = vpop.f32.mrf.mxu0
      %v859 = vadd.f32 0.0, %v858
      %v860 = vpop.f32.mrf.mxu0
      %861 = vdwg.mxu0
      %v870 = vunpack.c.l.b16 %v247
      %v871 = vunpack.c.l.b16 %v248
      %v872 = vunpack.c.l.b16 %v249
      %v873 = vunpack.c.l.b16 %v250
      %v874 = vunpack.c.l.b16 %v251
      %v875 = vunpack.c.l.b16 %v252
      %v876 = vunpack.c.l.b16 %v253
      %v877 = vunpack.c.l.b16 %v254
      %v878 = vpack.c.b16 %v871, %v870
      %v879 = vpack.c.b16 %v873, %v872
      %v880 = vpack.c.b16 %v875, %v874
      %v881 = vpack.c.b16 %v877, %v876
      %v886 = vsel %vm637, %v370, 0
      %v888 = vsel %vm637, %v371, 0
      %v890 = vsel %vm637, %v372, 0
      %v892 = vsel %vm637, %v373, 0
      %v894 = vsel %vm637, %v374, 0
      %v896 = vsel %vm637, %v375, 0
      %v898 = vsel %vm637, %v376, 0
      %v900 = vsel %vm637, %v377, 0
      %v902 = vsel %vm637, %v378, 0
      %v904 = vsel %vm637, %v379, 0
      %v906 = vsel %vm637, %v380, 0
      %v908 = vsel %vm637, %v381, 0
      %v910 = vsel %vm637, %v382, 0
      %v912 = vsel %vm637, %v383, 0
      %v914 = vsel %vm637, %v384, 0
      %v916 = vsel %vm637, %v385, 0
      %v918 = vsel %vm637, %v386, 0
      %v920 = vsel %vm637, %v387, 0
      %v922 = vsel %vm637, %v388, 0
      %v924 = vsel %vm637, %v389, 0
      %v926 = vsel %vm637, %v390, 0
      %v928 = vsel %vm637, %v391, 0
      %v930 = vsel %vm637, %v392, 0
      %v932 = vsel %vm637, %v393, 0
      %v934 = vsel %vm637, %v394, 0
      %v936 = vsel %vm637, %v395, 0
      %v938 = vsel %vm637, %v396, 0
      %940 = vmatpush.bf16.msra.mxu0 0
      %941 = vmatpush.bf16.msra.mxu0 0
      %942 = vmatpush.bf16.msra.mxu0 0
      %943 = vmatpush.bf16.msra.mxu0 0
      %944 = vmatpush.bf16.msra.mxu0 %v881
      %945 = vmatpush.bf16.msra.mxu0 %v880
      %946 = vmatpush.bf16.msra.mxu0 %v879
      %947 = vmatpush.bf16.msra.mxu0 %v878
      %948 = vmatmul.bf16.gmra.mxu0 %v886
      %v949 = vpop.f32.mrf.mxu0
      %v950 = vadd.f32 %v729, %v949
      %v951 = vpop.f32.mrf.mxu0
      %v952 = vadd.f32 %v731, %v951
      %953 = vmatmul.bf16.gmra.mxu0 %v888
      %v954 = vpop.f32.mrf.mxu0
      %v955 = vadd.f32 %v734, %v954
      %v956 = vpop.f32.mrf.mxu0
      %v957 = vadd.f32 %v736, %v956
      %958 = vmatmul.bf16.gmra.mxu0 %v890
      %v959 = vpop.f32.mrf.mxu0
      %v960 = vadd.f32 %v739, %v959
      %v961 = vpop.f32.mrf.mxu0
      %v962 = vadd.f32 %v741, %v961
      %963 = vmatmul.bf16.gmra.mxu0 %v892
      %v964 = vpop.f32.mrf.mxu0
      %v965 = vadd.f32 %v744, %v964
      %v966 = vpop.f32.mrf.mxu0
      %v967 = vadd.f32 %v746, %v966
      %968 = vmatmul.bf16.gmra.mxu0 %v894
      %v969 = vpop.f32.mrf.mxu0
      %v970 = vadd.f32 %v749, %v969
      %v971 = vpop.f32.mrf.mxu0
      %v972 = vadd.f32 %v751, %v971
      %973 = vmatmul.bf16.gmra.mxu0 %v896
      %v974 = vpop.f32.mrf.mxu0
      %v975 = vadd.f32 %v754, %v974
      %v976 = vpop.f32.mrf.mxu0
      %v977 = vadd.f32 %v756, %v976
      %978 = vmatmul.bf16.gmra.mxu0 %v898
      %v979 = vpop.f32.mrf.mxu0
      %v980 = vadd.f32 %v759, %v979
      %v981 = vpop.f32.mrf.mxu0
      %v982 = vadd.f32 %v761, %v981
      %983 = vmatmul.bf16.gmra.mxu0 %v900
      %v984 = vpop.f32.mrf.mxu0
      %v985 = vadd.f32 %v764, %v984
      %v986 = vpop.f32.mrf.mxu0
      %v987 = vadd.f32 %v766, %v986
      %988 = vmatmul.bf16.gmra.mxu0 %v902
      %v989 = vpop.f32.mrf.mxu0
      %v990 = vadd.f32 %v769, %v989
      %v991 = vpop.f32.mrf.mxu0
      %v992 = vadd.f32 %v771, %v991
      %993 = vmatmul.bf16.gmra.mxu0 %v904
      %v994 = vpop.f32.mrf.mxu0
      %v995 = vadd.f32 %v774, %v994
      %v996 = vpop.f32.mrf.mxu0
      %v997 = vadd.f32 %v776, %v996
      %998 = vmatmul.bf16.gmra.mxu0 %v906
      %v999 = vpop.f32.mrf.mxu0
      %v1000 = vadd.f32 %v779, %v999
      %v1001 = vpop.f32.mrf.mxu0
      %v1002 = vadd.f32 %v781, %v1001
      %1003 = vmatmul.bf16.gmra.mxu0 %v908
      %v1004 = vpop.f32.mrf.mxu0
      %v1005 = vadd.f32 %v784, %v1004
      %v1006 = vpop.f32.mrf.mxu0
      %v1007 = vadd.f32 %v786, %v1006
      %1008 = vmatmul.bf16.gmra.mxu0 %v910
      %v1009 = vpop.f32.mrf.mxu0
      %v1010 = vadd.f32 %v789, %v1009
      %v1011 = vpop.f32.mrf.mxu0
      %v1012 = vadd.f32 %v791, %v1011
      %1013 = vmatmul.bf16.gmra.mxu0 %v912
      %v1014 = vpop.f32.mrf.mxu0
      %v1015 = vadd.f32 %v794, %v1014
      %v1016 = vpop.f32.mrf.mxu0
      %v1017 = vadd.f32 %v796, %v1016
      %1018 = vmatmul.bf16.gmra.mxu0 %v914
      %v1019 = vpop.f32.mrf.mxu0
      %v1020 = vadd.f32 %v799, %v1019
      %v1021 = vpop.f32.mrf.mxu0
      %v1022 = vadd.f32 %v801, %v1021
      %1023 = vmatmul.bf16.gmra.mxu0 %v916
      %v1024 = vpop.f32.mrf.mxu0
      %v1025 = vadd.f32 %v804, %v1024
      %v1026 = vpop.f32.mrf.mxu0
      %v1027 = vadd.f32 %v806, %v1026
      %1028 = vmatmul.bf16.gmra.mxu0 %v918
      %v1029 = vpop.f32.mrf.mxu0
      %v1030 = vadd.f32 %v809, %v1029
      %v1031 = vpop.f32.mrf.mxu0
      %v1032 = vadd.f32 %v811, %v1031
      %1033 = vmatmul.bf16.gmra.mxu0 %v920
      %v1034 = vpop.f32.mrf.mxu0
      %v1035 = vadd.f32 %v814, %v1034
      %v1036 = vpop.f32.mrf.mxu0
      %v1037 = vadd.f32 %v816, %v1036
      %1038 = vmatmul.bf16.gmra.mxu0 %v922
      %v1039 = vpop.f32.mrf.mxu0
      %v1040 = vadd.f32 %v819, %v1039
      %v1041 = vpop.f32.mrf.mxu0
      %v1042 = vadd.f32 %v821, %v1041
      %1043 = vmatmul.bf16.gmra.mxu0 %v924
      %v1044 = vpop.f32.mrf.mxu0
      %v1045 = vadd.f32 %v824, %v1044
      %v1046 = vpop.f32.mrf.mxu0
      %v1047 = vadd.f32 %v826, %v1046
      %1048 = vmatmul.bf16.gmra.mxu0 %v926
      %v1049 = vpop.f32.mrf.mxu0
      %v1050 = vadd.f32 %v829, %v1049
      %v1051 = vpop.f32.mrf.mxu0
      %v1052 = vadd.f32 %v831, %v1051
      %1053 = vmatmul.bf16.gmra.mxu0 %v928
      %v1054 = vpop.f32.mrf.mxu0
      %v1055 = vadd.f32 %v834, %v1054
      %v1056 = vpop.f32.mrf.mxu0
      %v1057 = vadd.f32 %v836, %v1056
      %1058 = vmatmul.bf16.gmra.mxu0 %v930
      %v1059 = vpop.f32.mrf.mxu0
      %v1060 = vadd.f32 %v839, %v1059
      %v1061 = vpop.f32.mrf.mxu0
      %v1062 = vadd.f32 %v841, %v1061
      %1063 = vmatmul.bf16.gmra.mxu0 %v932
      %v1064 = vpop.f32.mrf.mxu0
      %v1065 = vadd.f32 %v844, %v1064
      %v1066 = vpop.f32.mrf.mxu0
      %v1067 = vadd.f32 %v846, %v1066
      %1068 = vmatmul.bf16.gmra.mxu0 %v934
      %v1069 = vpop.f32.mrf.mxu0
      %v1070 = vadd.f32 %v849, %v1069
      %v1071 = vpop.f32.mrf.mxu0
      %v1072 = vadd.f32 %v851, %v1071
      %1073 = vmatmul.bf16.gmra.mxu0 %v936
      %v1074 = vpop.f32.mrf.mxu0
      %v1075 = vadd.f32 %v854, %v1074
      %v1076 = vpop.f32.mrf.mxu0
      %v1077 = vadd.f32 %v856, %v1076
      %1078 = vmatmul.bf16.gmra.mxu0 %v938
      %v1079 = vpop.f32.mrf.mxu0
      %v1080 = vadd.f32 %v859, %v1079
      %v1081 = vpop.f32.mrf.mxu0
      %1082 = vdwg.mxu0
      %v1083 = vld [vmem:[%s183 + $0x8] sm:$0xc]
      %v1084 = vld [vmem:[%s183 + $0xc] sm:$0xf]
      %v1085 = vld [vmem:[%s183 + $0x10] sm:$0xf]
      %v1086 = vld [vmem:[%s183 + $0x14] sm:$0xf]
      %v1087 = vld [vmem:[%s183 + $0x18] sm:$0xf]
      %v1088 = vld [vmem:[%s183 + $0x1c] sm:$0xf]
      %v1089 = vld [vmem:[%s183 + $0x20] sm:$0xf]
      %v1090 = vld [vmem:[%s183 + $0x24] sm:$0xf]
      %v1091 = vld [vmem:[%s183 + $0x28] sm:$0xf]
      %v1092 = vld [vmem:[%s183 + $0x2c] sm:$0xf]
      %v1093 = vld [vmem:[%s183 + $0x30] sm:$0xf]
      %v1094 = vld [vmem:[%s183 + $0x34] sm:$0xf]
      %v1095 = vld [vmem:[%s183 + $0x38] sm:$0xf]
      %v1096 = vld [vmem:[%s183 + $0x3c] sm:$0xf]
      %v1097 = vld [vmem:[%s183 + $0x40] sm:$0xf]
      %v1098 = vld [vmem:[%s183 + $0x44] sm:$0xf]
      %v1099 = vld [vmem:[%s183 + $0x48] sm:$0xf]
      %v1100 = vld [vmem:[%s183 + $0x4c] sm:$0xf]
      %v1101 = vld [vmem:[%s183 + $0x50] sm:$0xf]
      %v1102 = vld [vmem:[%s183 + $0x54] sm:$0xf]
      %v1103 = vld [vmem:[%s183 + $0x58] sm:$0xf]
      %v1104 = vld [vmem:[%s183 + $0x5c] sm:$0xf]
      %v1105 = vld [vmem:[%s183 + $0x60] sm:$0xf]
      %v1106 = vld [vmem:[%s183 + $0x64] sm:$0xf]
      %v1107 = vld [vmem:[%s183 + $0x68] sm:$0xf]
      %v1108 = vld [vmem:[%s183 + $0x6c] sm:$0xf]
      %v1109 = vld [vmem:[%s183 + $0x70] sm:$0xf]
      %v1110 = vld [vmem:[%s183 + $0x74] sm:$0xf]
      %v1111 = vld [vmem:[%s183 + $0x78] sm:$0xf]
      %v1112 = vld [vmem:[%s183 + $0x7c] sm:$0xf]
      %v1113 = vld [vmem:[%s183 + $0x80] sm:$0xf]
      %v1114 = vld [vmem:[%s183 + $0x84] sm:$0xf]
      %v1115 = vld [vmem:[%s183 + $0x88] sm:$0xf]
      %v1116 = vld [vmem:[%s183 + $0x8c] sm:$0xf]
      %v1117 = vld [vmem:[%s183 + $0x90] sm:$0xf]
      %v1118 = vld [vmem:[%s183 + $0x94] sm:$0xf]
      %v1119 = vld [vmem:[%s183 + $0x98] sm:$0xf]
      %v1120 = vld [vmem:[%s183 + $0x9c] sm:$0xf]
      %v1121 = vld [vmem:[%s183 + $0xa0] sm:$0xf]
      %v1122 = vld [vmem:[%s183 + $0xa4] sm:$0xf]
      %v1123 = vld [vmem:[%s183 + $0xa8] sm:$0xf]
      %v1124 = vld [vmem:[%s183 + $0xac] sm:$0xf]
      %v1125 = vld [vmem:[%s183 + $0xb0] sm:$0xf]
      %v1126 = vld [vmem:[%s183 + $0xb4] sm:$0xf]
      %v1127 = vld [vmem:[%s183 + $0xb8] sm:$0xf]
      %v1128 = vld [vmem:[%s183 + $0xbc] sm:$0xf]
      %v1129 = vld [vmem:[%s183 + $0xc0] sm:$0xf]
      %v1130 = vld [vmem:[%s183 + $0xc4] sm:$0xf]
      %v1131 = vld [vmem:[%s183 + $0xc8] sm:$0xf]
      %v1132 = vld [vmem:[%s183 + $0xcc] sm:$0xf]
      %v1133 = vld [vmem:[%s183 + $0xd0] sm:$0xf]
      %v1134 = vld [vmem:[%s183 + $0xd4] sm:$0xf]
      %v1135 = vld [vmem:[%s183 + $0xd8] sm:$0xf]
      %s1136 = scalar_lea.vmem %s1, 64
      %v1137 = vld [vmem:[%s1136] sm:$0xf]
      %v1138 = vld [vmem:[%s1136 + $0x4] sm:$0xf]
      %v1139 = vld [vmem:[%s1136 + $0x8] sm:$0xf]
      %v1140 = vld [vmem:[%s1136 + $0xc] sm:$0xf]
      %v1141 = vld [vmem:[%s1136 + $0x10] sm:$0xf]
      %v1142 = vld [vmem:[%s1136 + $0x14] sm:$0xf]
      %v1143 = vld [vmem:[%s1136 + $0x18] sm:$0xf]
      %v1144 = vld [vmem:[%s1136 + $0x1c] sm:$0xf]
      %v1198 = vunpack.c.l.b16 %v1083
      %v1199 = vunpack.c.l.b16 %v1084
      %v1200 = vunpack.c.l.b16 %v1085
      %v1201 = vunpack.c.l.b16 %v1086
      %v1202 = vunpack.c.l.b16 %v1087
      %v1203 = vunpack.c.l.b16 %v1088
      %v1204 = vunpack.c.l.b16 %v1089
      %v1205 = vunpack.c.l.b16 %v1090
      %v1206 = vunpack.c.l.b16 %v1091
      %v1207 = vunpack.c.l.b16 %v1092
      %v1208 = vunpack.c.l.b16 %v1093
      %v1209 = vunpack.c.l.b16 %v1094
      %v1210 = vunpack.c.l.b16 %v1095
      %v1211 = vunpack.c.l.b16 %v1096
      %v1212 = vunpack.c.l.b16 %v1097
      %v1213 = vunpack.c.l.b16 %v1098
      %v1214 = vunpack.c.l.b16 %v1099
      %v1215 = vunpack.c.l.b16 %v1100
      %v1216 = vunpack.c.l.b16 %v1101
      %v1217 = vunpack.c.l.b16 %v1102
      %v1218 = vunpack.c.l.b16 %v1103
      %v1219 = vunpack.c.l.b16 %v1104
      %v1220 = vunpack.c.l.b16 %v1105
      %v1221 = vunpack.c.l.b16 %v1106
      %v1222 = vunpack.c.l.b16 %v1107
      %v1223 = vunpack.c.l.b16 %v1108
      %v1224 = vunpack.c.l.b16 %v1109
      %v1225 = vunpack.c.l.b16 %v1110
      %v1226 = vunpack.c.l.b16 %v1111
      %v1227 = vunpack.c.l.b16 %v1112
      %v1228 = vunpack.c.l.b16 %v1113
      %v1229 = vunpack.c.l.b16 %v1114
      %v1230 = vunpack.c.l.b16 %v1115
      %v1231 = vunpack.c.l.b16 %v1116
      %v1232 = vunpack.c.l.b16 %v1117
      %v1233 = vunpack.c.l.b16 %v1118
      %v1234 = vunpack.c.l.b16 %v1119
      %v1235 = vunpack.c.l.b16 %v1120
      %v1236 = vunpack.c.l.b16 %v1121
      %v1237 = vunpack.c.l.b16 %v1122
      %v1238 = vunpack.c.l.b16 %v1123
      %v1239 = vunpack.c.l.b16 %v1124
      %v1240 = vunpack.c.l.b16 %v1125
      %v1241 = vunpack.c.l.b16 %v1126
      %v1242 = vunpack.c.l.b16 %v1127
      %v1243 = vunpack.c.l.b16 %v1128
      %v1244 = vunpack.c.l.b16 %v1129
      %v1245 = vunpack.c.l.b16 %v1130
      %v1246 = vunpack.c.l.b16 %v1131
      %v1247 = vunpack.c.l.b16 %v1132
      %v1248 = vunpack.c.l.b16 %v1133
      %v1249 = vunpack.c.l.b16 %v1134
      %v1250 = vunpack.c.l.b16 %v1135
      %v1251 = vpack.c.b16 %v1199, %v1198
      %v1252 = vpack.c.b16 %v1201, %v1200
      %v1253 = vpack.c.b16 %v1203, %v1202
      %v1254 = vpack.c.b16 %v1205, %v1204
      %v1255 = vpack.c.b16 %v1207, %v1206
      %v1256 = vpack.c.b16 %v1209, %v1208
      %v1257 = vpack.c.b16 %v1211, %v1210
      %v1258 = vpack.c.b16 %v1213, %v1212
      %v1259 = vpack.c.b16 %v1215, %v1214
      %v1260 = vpack.c.b16 %v1217, %v1216
      %v1261 = vpack.c.b16 %v1219, %v1218
      %v1262 = vpack.c.b16 %v1221, %v1220
      %v1263 = vpack.c.b16 %v1223, %v1222
      %v1264 = vpack.c.b16 %v1225, %v1224
      %v1265 = vpack.c.b16 %v1227, %v1226
      %v1266 = vpack.c.b16 %v1229, %v1228
      %v1267 = vpack.c.b16 %v1231, %v1230
      %v1268 = vpack.c.b16 %v1233, %v1232
      %v1269 = vpack.c.b16 %v1235, %v1234
      %v1270 = vpack.c.b16 %v1237, %v1236
      %v1271 = vpack.c.b16 %v1239, %v1238
      %v1272 = vpack.c.b16 %v1241, %v1240
      %v1273 = vpack.c.b16 %v1243, %v1242
      %v1274 = vpack.c.b16 %v1245, %v1244
      %v1275 = vpack.c.b16 %v1247, %v1246
      %v1276 = vpack.c.b16 %v1249, %v1248
      %v1277 = vpack.c.b16 %v1250, %v1250
      %vm1278 = vsmask.f32 5376
      %v1280 = vshrl.u32 %v1251, 16
      %v1282 = vrot.slane %v1280, 2
      %v1283 = vshll.u32 %v1251, 16
      %v1285 = vrot.slane %v1283, 3
      %v1286 = vor.u32 %v1282, %v1285
      %v1288 = vshrl.u32 %v1252, 16
      %v1290 = vrot.slane %v1288, 2
      %v1291 = vshll.u32 %v1252, 16
      %v1293 = vrot.slane %v1291, 3
      %v1294 = vor.u32 %v1290, %v1293
      %v1295 = vsel %vm1278, %v1286, %v1294
      %v1297 = vshrl.u32 %v1253, 16
      %v1299 = vrot.slane %v1297, 2
      %v1300 = vshll.u32 %v1253, 16
      %v1302 = vrot.slane %v1300, 3
      %v1303 = vor.u32 %v1299, %v1302
      %v1304 = vsel %vm1278, %v1294, %v1303
      %v1306 = vshrl.u32 %v1254, 16
      %v1308 = vrot.slane %v1306, 2
      %v1309 = vshll.u32 %v1254, 16
      %v1311 = vrot.slane %v1309, 3
      %v1312 = vor.u32 %v1308, %v1311
      %v1313 = vsel %vm1278, %v1303, %v1312
      %v1315 = vshrl.u32 %v1255, 16
      %v1317 = vrot.slane %v1315, 2
      %v1318 = vshll.u32 %v1255, 16
      %v1320 = vrot.slane %v1318, 3
      %v1321 = vor.u32 %v1317, %v1320
      %v1322 = vsel %vm1278, %v1312, %v1321
      %v1324 = vshrl.u32 %v1256, 16
      %v1326 = vrot.slane %v1324, 2
      %v1327 = vshll.u32 %v1256, 16
      %v1329 = vrot.slane %v1327, 3
      %v1330 = vor.u32 %v1326, %v1329
      %v1331 = vsel %vm1278, %v1321, %v1330
      %v1333 = vshrl.u32 %v1257, 16
      %v1335 = vrot.slane %v1333, 2
      %v1336 = vshll.u32 %v1257, 16
      %v1338 = vrot.slane %v1336, 3
      %v1339 = vor.u32 %v1335, %v1338
      %v1340 = vsel %vm1278, %v1330, %v1339
      %v1342 = vshrl.u32 %v1258, 16
      %v1344 = vrot.slane %v1342, 2
      %v1345 = vshll.u32 %v1258, 16
      %v1347 = vrot.slane %v1345, 3
      %v1348 = vor.u32 %v1344, %v1347
      %v1349 = vsel %vm1278, %v1339, %v1348
      %v1351 = vshrl.u32 %v1259, 16
      %v1353 = vrot.slane %v1351, 2
      %v1354 = vshll.u32 %v1259, 16
      %v1356 = vrot.slane %v1354, 3
      %v1357 = vor.u32 %v1353, %v1356
      %v1358 = vsel %vm1278, %v1348, %v1357
      %v1360 = vshrl.u32 %v1260, 16
      %v1362 = vrot.slane %v1360, 2
      %v1363 = vshll.u32 %v1260, 16
      %v1365 = vrot.slane %v1363, 3
      %v1366 = vor.u32 %v1362, %v1365
      %v1367 = vsel %vm1278, %v1357, %v1366
      %v1369 = vshrl.u32 %v1261, 16
      %v1371 = vrot.slane %v1369, 2
      %v1372 = vshll.u32 %v1261, 16
      %v1374 = vrot.slane %v1372, 3
      %v1375 = vor.u32 %v1371, %v1374
      %v1376 = vsel %vm1278, %v1366, %v1375
      %v1378 = vshrl.u32 %v1262, 16
      %v1380 = vrot.slane %v1378, 2
      %v1381 = vshll.u32 %v1262, 16
      %v1383 = vrot.slane %v1381, 3
      %v1384 = vor.u32 %v1380, %v1383
      %v1385 = vsel %vm1278, %v1375, %v1384
      %v1387 = vshrl.u32 %v1263, 16
      %v1389 = vrot.slane %v1387, 2
      %v1390 = vshll.u32 %v1263, 16
      %v1392 = vrot.slane %v1390, 3
      %v1393 = vor.u32 %v1389, %v1392
      %v1394 = vsel %vm1278, %v1384, %v1393
      %v1396 = vshrl.u32 %v1264, 16
      %v1398 = vrot.slane %v1396, 2
      %v1399 = vshll.u32 %v1264, 16
      %v1401 = vrot.slane %v1399, 3
      %v1402 = vor.u32 %v1398, %v1401
      %v1403 = vsel %vm1278, %v1393, %v1402
      %v1405 = vshrl.u32 %v1265, 16
      %v1407 = vrot.slane %v1405, 2
      %v1408 = vshll.u32 %v1265, 16
      %v1410 = vrot.slane %v1408, 3
      %v1411 = vor.u32 %v1407, %v1410
      %v1412 = vsel %vm1278, %v1402, %v1411
      %v1414 = vshrl.u32 %v1266, 16
      %v1416 = vrot.slane %v1414, 2
      %v1417 = vshll.u32 %v1266, 16
      %v1419 = vrot.slane %v1417, 3
      %v1420 = vor.u32 %v1416, %v1419
      %v1421 = vsel %vm1278, %v1411, %v1420
      %v1423 = vshrl.u32 %v1267, 16
      %v1425 = vrot.slane %v1423, 2
      %v1426 = vshll.u32 %v1267, 16
      %v1428 = vrot.slane %v1426, 3
      %v1429 = vor.u32 %v1425, %v1428
      %v1430 = vsel %vm1278, %v1420, %v1429
      %v1432 = vshrl.u32 %v1268, 16
      %v1434 = vrot.slane %v1432, 2
      %v1435 = vshll.u32 %v1268, 16
      %v1437 = vrot.slane %v1435, 3
      %v1438 = vor.u32 %v1434, %v1437
      %v1439 = vsel %vm1278, %v1429, %v1438
      %v1441 = vshrl.u32 %v1269, 16
      %v1443 = vrot.slane %v1441, 2
      %v1444 = vshll.u32 %v1269, 16
      %v1446 = vrot.slane %v1444, 3
      %v1447 = vor.u32 %v1443, %v1446
      %v1448 = vsel %vm1278, %v1438, %v1447
      %v1450 = vshrl.u32 %v1270, 16
      %v1452 = vrot.slane %v1450, 2
      %v1453 = vshll.u32 %v1270, 16
      %v1455 = vrot.slane %v1453, 3
      %v1456 = vor.u32 %v1452, %v1455
      %v1457 = vsel %vm1278, %v1447, %v1456
      %v1459 = vshrl.u32 %v1271, 16
      %v1461 = vrot.slane %v1459, 2
      %v1462 = vshll.u32 %v1271, 16
      %v1464 = vrot.slane %v1462, 3
      %v1465 = vor.u32 %v1461, %v1464
      %v1466 = vsel %vm1278, %v1456, %v1465
      %v1468 = vshrl.u32 %v1272, 16
      %v1470 = vrot.slane %v1468, 2
      %v1471 = vshll.u32 %v1272, 16
      %v1473 = vrot.slane %v1471, 3
      %v1474 = vor.u32 %v1470, %v1473
      %v1475 = vsel %vm1278, %v1465, %v1474
      %v1477 = vshrl.u32 %v1273, 16
      %v1479 = vrot.slane %v1477, 2
      %v1480 = vshll.u32 %v1273, 16
      %v1482 = vrot.slane %v1480, 3
      %v1483 = vor.u32 %v1479, %v1482
      %v1484 = vsel %vm1278, %v1474, %v1483
      %v1486 = vshrl.u32 %v1274, 16
      %v1488 = vrot.slane %v1486, 2
      %v1489 = vshll.u32 %v1274, 16
      %v1491 = vrot.slane %v1489, 3
      %v1492 = vor.u32 %v1488, %v1491
      %v1493 = vsel %vm1278, %v1483, %v1492
      %v1495 = vshrl.u32 %v1275, 16
      %v1497 = vrot.slane %v1495, 2
      %v1498 = vshll.u32 %v1275, 16
      %v1500 = vrot.slane %v1498, 3
      %v1501 = vor.u32 %v1497, %v1500
      %v1502 = vsel %vm1278, %v1492, %v1501
      %v1504 = vshrl.u32 %v1276, 16
      %v1506 = vrot.slane %v1504, 2
      %v1507 = vshll.u32 %v1276, 16
      %v1509 = vrot.slane %v1507, 3
      %v1510 = vor.u32 %v1506, %v1509
      %v1511 = vsel %vm1278, %v1501, %v1510
      %v1513 = vshrl.u32 %v1277, 16
      %v1515 = vrot.slane %v1513, 2
      %v1516 = vshll.u32 %v1277, 16
      %v1518 = vrot.slane %v1516, 3
      %v1519 = vor.u32 %v1515, %v1518
      %v1520 = vsel %vm1278, %v1510, %v1519
      %v1529 = vunpack.c.l.b16 %v1137
      %v1530 = vunpack.c.l.b16 %v1138
      %v1531 = vunpack.c.l.b16 %v1139
      %v1532 = vunpack.c.l.b16 %v1140
      %v1533 = vunpack.c.l.b16 %v1141
      %v1534 = vunpack.c.l.b16 %v1142
      %v1535 = vunpack.c.l.b16 %v1143
      %v1536 = vunpack.c.l.b16 %v1144
      %v1537 = vpack.c.b16 %v1530, %v1529
      %v1538 = vpack.c.b16 %v1532, %v1531
      %v1539 = vpack.c.b16 %v1534, %v1533
      %v1540 = vpack.c.b16 %v1536, %v1535
      %v1546 = vsel %vm637, %v1295, 0
      %v1549 = vsel %vm637, %v1304, 0
      %v1552 = vsel %vm637, %v1313, 0
      %v1555 = vsel %vm637, %v1322, 0
      %v1558 = vsel %vm637, %v1331, 0
      %v1561 = vsel %vm637, %v1340, 0
      %v1564 = vsel %vm637, %v1349, 0
      %v1567 = vsel %vm637, %v1358, 0
      %v1570 = vsel %vm637, %v1367, 0
      %v1573 = vsel %vm637, %v1376, 0
      %v1576 = vsel %vm637, %v1385, 0
      %v1579 = vsel %vm637, %v1394, 0
      %v1582 = vsel %vm637, %v1403, 0
      %v1585 = vsel %vm637, %v1412, 0
      %v1588 = vsel %vm637, %v1421, 0
      %v1591 = vsel %vm637, %v1430, 0
      %v1594 = vsel %vm637, %v1439, 0
      %v1597 = vsel %vm637, %v1448, 0
      %v1600 = vsel %vm637, %v1457, 0
      %v1603 = vsel %vm637, %v1466, 0
      %v1606 = vsel %vm637, %v1475, 0
      %v1609 = vsel %vm637, %v1484, 0
      %v1612 = vsel %vm637, %v1493, 0
      %v1615 = vsel %vm637, %v1502, 0
      %v1618 = vsel %vm637, %v1511, 0
      %v1621 = vsel %vm637, %v1520, 0
      %v1624 = vsel %vm637, %v1519, 0
      %1626 = vmatpush.bf16.msra.mxu0 0
      %1627 = vmatpush.bf16.msra.mxu0 0
      %1628 = vmatpush.bf16.msra.mxu0 0
      %1629 = vmatpush.bf16.msra.mxu0 0
      %1630 = vmatpush.bf16.msra.mxu0 %v1540
      %1631 = vmatpush.bf16.msra.mxu0 %v1539
      %1632 = vmatpush.bf16.msra.mxu0 %v1538
      %1633 = vmatpush.bf16.msra.mxu0 %v1537
      %1634 = vmatmul.bf16.gmra.mxu0 %v1546
      %v1635 = vpop.f32.mrf.mxu0
      %v1636 = vadd.f32 0.0, %v1635
      %v1637 = vpop.f32.mrf.mxu0
      %v1638 = vadd.f32 0.0, %v1637
      %1639 = vmatmul.bf16.gmra.mxu0 %v1549
      %v1640 = vpop.f32.mrf.mxu0
      %v1641 = vadd.f32 0.0, %v1640
      %v1642 = vpop.f32.mrf.mxu0
      %v1643 = vadd.f32 0.0, %v1642
      %1644 = vmatmul.bf16.gmra.mxu0 %v1552
      %v1645 = vpop.f32.mrf.mxu0
      %v1646 = vadd.f32 0.0, %v1645
      %v1647 = vpop.f32.mrf.mxu0
      %v1648 = vadd.f32 0.0, %v1647
      %1649 = vmatmul.bf16.gmra.mxu0 %v1555
      %v1650 = vpop.f32.mrf.mxu0
      %v1651 = vadd.f32 0.0, %v1650
      %v1652 = vpop.f32.mrf.mxu0
      %v1653 = vadd.f32 0.0, %v1652
      %1654 = vmatmul.bf16.gmra.mxu0 %v1558
      %v1655 = vpop.f32.mrf.mxu0
      %v1656 = vadd.f32 0.0, %v1655
      %v1657 = vpop.f32.mrf.mxu0
      %v1658 = vadd.f32 0.0, %v1657
      %1659 = vmatmul.bf16.gmra.mxu0 %v1561
      %v1660 = vpop.f32.mrf.mxu0
      %v1661 = vadd.f32 0.0, %v1660
      %v1662 = vpop.f32.mrf.mxu0
      %v1663 = vadd.f32 0.0, %v1662
      %1664 = vmatmul.bf16.gmra.mxu0 %v1564
      %v1665 = vpop.f32.mrf.mxu0
      %v1666 = vadd.f32 0.0, %v1665
      %v1667 = vpop.f32.mrf.mxu0
      %v1668 = vadd.f32 0.0, %v1667
      %1669 = vmatmul.bf16.gmra.mxu0 %v1567
      %v1670 = vpop.f32.mrf.mxu0
      %v1671 = vadd.f32 0.0, %v1670
      %v1672 = vpop.f32.mrf.mxu0
      %v1673 = vadd.f32 0.0, %v1672
      %1674 = vmatmul.bf16.gmra.mxu0 %v1570
      %v1675 = vpop.f32.mrf.mxu0
      %v1676 = vadd.f32 0.0, %v1675
      %v1677 = vpop.f32.mrf.mxu0
      %v1678 = vadd.f32 0.0, %v1677
      %1679 = vmatmul.bf16.gmra.mxu0 %v1573
      %v1680 = vpop.f32.mrf.mxu0
      %v1681 = vadd.f32 0.0, %v1680
      %v1682 = vpop.f32.mrf.mxu0
      %v1683 = vadd.f32 0.0, %v1682
      %1684 = vmatmul.bf16.gmra.mxu0 %v1576
      %v1685 = vpop.f32.mrf.mxu0
      %v1686 = vadd.f32 0.0, %v1685
      %v1687 = vpop.f32.mrf.mxu0
      %v1688 = vadd.f32 0.0, %v1687
      %1689 = vmatmul.bf16.gmra.mxu0 %v1579
      %v1690 = vpop.f32.mrf.mxu0
      %v1691 = vadd.f32 0.0, %v1690
      %v1692 = vpop.f32.mrf.mxu0
      %v1693 = vadd.f32 0.0, %v1692
      %1694 = vmatmul.bf16.gmra.mxu0 %v1582
      %v1695 = vpop.f32.mrf.mxu0
      %v1696 = vadd.f32 0.0, %v1695
      %v1697 = vpop.f32.mrf.mxu0
      %v1698 = vadd.f32 0.0, %v1697
      %1699 = vmatmul.bf16.gmra.mxu0 %v1585
      %v1700 = vpop.f32.mrf.mxu0
      %v1701 = vadd.f32 0.0, %v1700
      %v1702 = vpop.f32.mrf.mxu0
      %v1703 = vadd.f32 0.0, %v1702
      %1704 = vmatmul.bf16.gmra.mxu0 %v1588
      %v1705 = vpop.f32.mrf.mxu0
      %v1706 = vadd.f32 0.0, %v1705
      %v1707 = vpop.f32.mrf.mxu0
      %v1708 = vadd.f32 0.0, %v1707
      %1709 = vmatmul.bf16.gmra.mxu0 %v1591
      %v1710 = vpop.f32.mrf.mxu0
      %v1711 = vadd.f32 0.0, %v1710
      %v1712 = vpop.f32.mrf.mxu0
      %v1713 = vadd.f32 0.0, %v1712
      %1714 = vmatmul.bf16.gmra.mxu0 %v1594
      %v1715 = vpop.f32.mrf.mxu0
      %v1716 = vadd.f32 0.0, %v1715
      %v1717 = vpop.f32.mrf.mxu0
      %v1718 = vadd.f32 0.0, %v1717
      %1719 = vmatmul.bf16.gmra.mxu0 %v1597
      %v1720 = vpop.f32.mrf.mxu0
      %v1721 = vadd.f32 0.0, %v1720
      %v1722 = vpop.f32.mrf.mxu0
      %v1723 = vadd.f32 0.0, %v1722
      %1724 = vmatmul.bf16.gmra.mxu0 %v1600
      %v1725 = vpop.f32.mrf.mxu0
      %v1726 = vadd.f32 0.0, %v1725
      %v1727 = vpop.f32.mrf.mxu0
      %v1728 = vadd.f32 0.0, %v1727
      %1729 = vmatmul.bf16.gmra.mxu0 %v1603
      %v1730 = vpop.f32.mrf.mxu0
      %v1731 = vadd.f32 0.0, %v1730
      %v1732 = vpop.f32.mrf.mxu0
      %v1733 = vadd.f32 0.0, %v1732
      %1734 = vmatmul.bf16.gmra.mxu0 %v1606
      %v1735 = vpop.f32.mrf.mxu0
      %v1736 = vadd.f32 0.0, %v1735
      %v1737 = vpop.f32.mrf.mxu0
      %v1738 = vadd.f32 0.0, %v1737
      %1739 = vmatmul.bf16.gmra.mxu0 %v1609
      %v1740 = vpop.f32.mrf.mxu0
      %v1741 = vadd.f32 0.0, %v1740
      %v1742 = vpop.f32.mrf.mxu0
      %v1743 = vadd.f32 0.0, %v1742
      %1744 = vmatmul.bf16.gmra.mxu0 %v1612
      %v1745 = vpop.f32.mrf.mxu0
      %v1746 = vadd.f32 0.0, %v1745
      %v1747 = vpop.f32.mrf.mxu0
      %v1748 = vadd.f32 0.0, %v1747
      %1749 = vmatmul.bf16.gmra.mxu0 %v1615
      %v1750 = vpop.f32.mrf.mxu0
      %v1751 = vadd.f32 0.0, %v1750
      %v1752 = vpop.f32.mrf.mxu0
      %v1753 = vadd.f32 0.0, %v1752
      %1754 = vmatmul.bf16.gmra.mxu0 %v1618
      %v1755 = vpop.f32.mrf.mxu0
      %v1756 = vadd.f32 0.0, %v1755
      %v1757 = vpop.f32.mrf.mxu0
      %v1758 = vadd.f32 0.0, %v1757
      %1759 = vmatmul.bf16.gmra.mxu0 %v1621
      %v1760 = vpop.f32.mrf.mxu0
      %v1761 = vadd.f32 0.0, %v1760
      %v1762 = vpop.f32.mrf.mxu0
      %v1763 = vadd.f32 0.0, %v1762
      %1764 = vmatmul.bf16.gmra.mxu0 %v1624
      %v1765 = vpop.f32.mrf.mxu0
      %v1766 = vadd.f32 0.0, %v1765
      %v1767 = vpop.f32.mrf.mxu0
      %1768 = vdwg.mxu0
      %v1769 = vadd.f32 %v950, %v1636
      %v1770 = vadd.f32 %v952, %v1638
      %v1771 = vadd.f32 %v955, %v1641
      %v1772 = vadd.f32 %v957, %v1643
      %v1773 = vadd.f32 %v960, %v1646
      %v1774 = vadd.f32 %v962, %v1648
      %v1775 = vadd.f32 %v965, %v1651
      %v1776 = vadd.f32 %v967, %v1653
      %v1777 = vadd.f32 %v970, %v1656
      %v1778 = vadd.f32 %v972, %v1658
      %v1779 = vadd.f32 %v975, %v1661
      %v1780 = vadd.f32 %v977, %v1663
      %v1781 = vadd.f32 %v980, %v1666
      %v1782 = vadd.f32 %v982, %v1668
      %v1783 = vadd.f32 %v985, %v1671
      %v1784 = vadd.f32 %v987, %v1673
      %v1785 = vadd.f32 %v990, %v1676
      %v1786 = vadd.f32 %v992, %v1678
      %v1787 = vadd.f32 %v995, %v1681
      %v1788 = vadd.f32 %v997, %v1683
      %v1789 = vadd.f32 %v1000, %v1686
      %v1790 = vadd.f32 %v1002, %v1688
      %v1791 = vadd.f32 %v1005, %v1691
      %v1792 = vadd.f32 %v1007, %v1693
      %v1793 = vadd.f32 %v1010, %v1696
      %v1794 = vadd.f32 %v1012, %v1698
      %v1795 = vadd.f32 %v1015, %v1701
      %v1796 = vadd.f32 %v1017, %v1703
      %v1797 = vadd.f32 %v1020, %v1706
      %v1798 = vadd.f32 %v1022, %v1708
      %v1799 = vadd.f32 %v1025, %v1711
      %v1800 = vadd.f32 %v1027, %v1713
      %v1801 = vadd.f32 %v1030, %v1716
      %v1802 = vadd.f32 %v1032, %v1718
      %v1803 = vadd.f32 %v1035, %v1721
      %v1804 = vadd.f32 %v1037, %v1723
      %v1805 = vadd.f32 %v1040, %v1726
      %v1806 = vadd.f32 %v1042, %v1728
      %v1807 = vadd.f32 %v1045, %v1731
      %v1808 = vadd.f32 %v1047, %v1733
      %v1809 = vadd.f32 %v1050, %v1736
      %v1810 = vadd.f32 %v1052, %v1738
      %v1811 = vadd.f32 %v1055, %v1741
      %v1812 = vadd.f32 %v1057, %v1743
      %v1813 = vadd.f32 %v1060, %v1746
      %v1814 = vadd.f32 %v1062, %v1748
      %v1815 = vadd.f32 %v1065, %v1751
      %v1816 = vadd.f32 %v1067, %v1753
      %v1817 = vadd.f32 %v1070, %v1756
      %v1818 = vadd.f32 %v1072, %v1758
      %v1819 = vadd.f32 %v1075, %v1761
      %v1820 = vadd.f32 %v1077, %v1763
      %v1821 = vadd.f32 %v1080, %v1766
      %v1822 = vld [vmem:[%s183 + $0x8] sm:$0x8]
      %v1823 = vld [vmem:[%s183 + $0xc] sm:$0xf]
      %v1824 = vld [vmem:[%s183 + $0x10] sm:$0xf]
      %v1825 = vld [vmem:[%s183 + $0x14] sm:$0xf]
      %v1826 = vld [vmem:[%s183 + $0x18] sm:$0xf]
      %v1827 = vld [vmem:[%s183 + $0x1c] sm:$0xf]
      %v1828 = vld [vmem:[%s183 + $0x20] sm:$0xf]
      %v1829 = vld [vmem:[%s183 + $0x24] sm:$0xf]
      %v1830 = vld [vmem:[%s183 + $0x28] sm:$0xf]
      %v1831 = vld [vmem:[%s183 + $0x2c] sm:$0xf]
      %v1832 = vld [vmem:[%s183 + $0x30] sm:$0xf]
      %v1833 = vld [vmem:[%s183 + $0x34] sm:$0xf]
      %v1834 = vld [vmem:[%s183 + $0x38] sm:$0xf]
      %v1835 = vld [vmem:[%s183 + $0x3c] sm:$0xf]
      %v1836 = vld [vmem:[%s183 + $0x40] sm:$0xf]
      %v1837 = vld [vmem:[%s183 + $0x44] sm:$0xf]
      %v1838 = vld [vmem:[%s183 + $0x48] sm:$0xf]
      %v1839 = vld [vmem:[%s183 + $0x4c] sm:$0xf]
      %v1840 = vld [vmem:[%s183 + $0x50] sm:$0xf]
      %v1841 = vld [vmem:[%s183 + $0x54] sm:$0xf]
      %v1842 = vld [vmem:[%s183 + $0x58] sm:$0xf]
      %v1843 = vld [vmem:[%s183 + $0x5c] sm:$0xf]
      %v1844 = vld [vmem:[%s183 + $0x60] sm:$0xf]
      %v1845 = vld [vmem:[%s183 + $0x64] sm:$0xf]
      %v1846 = vld [vmem:[%s183 + $0x68] sm:$0xf]
      %v1847 = vld [vmem:[%s183 + $0x6c] sm:$0xf]
      %v1848 = vld [vmem:[%s183 + $0x70] sm:$0xf]
      %v1849 = vld [vmem:[%s183 + $0x74] sm:$0xf]
      %v1850 = vld [vmem:[%s183 + $0x78] sm:$0xf]
      %v1851 = vld [vmem:[%s183 + $0x7c] sm:$0xf]
      %v1852 = vld [vmem:[%s183 + $0x80] sm:$0xf]
      %v1853 = vld [vmem:[%s183 + $0x84] sm:$0xf]
      %v1854 = vld [vmem:[%s183 + $0x88] sm:$0xf]
      %v1855 = vld [vmem:[%s183 + $0x8c] sm:$0xf]
      %v1856 = vld [vmem:[%s183 + $0x90] sm:$0xf]
      %v1857 = vld [vmem:[%s183 + $0x94] sm:$0xf]
      %v1858 = vld [vmem:[%s183 + $0x98] sm:$0xf]
      %v1859 = vld [vmem:[%s183 + $0x9c] sm:$0xf]
      %v1860 = vld [vmem:[%s183 + $0xa0] sm:$0xf]
      %v1861 = vld [vmem:[%s183 + $0xa4] sm:$0xf]
      %v1862 = vld [vmem:[%s183 + $0xa8] sm:$0xf]
      %v1863 = vld [vmem:[%s183 + $0xac] sm:$0xf]
      %v1864 = vld [vmem:[%s183 + $0xb0] sm:$0xf]
      %v1865 = vld [vmem:[%s183 + $0xb4] sm:$0xf]
      %v1866 = vld [vmem:[%s183 + $0xb8] sm:$0xf]
      %v1867 = vld [vmem:[%s183 + $0xbc] sm:$0xf]
      %v1868 = vld [vmem:[%s183 + $0xc0] sm:$0xf]
      %v1869 = vld [vmem:[%s183 + $0xc4] sm:$0xf]
      %v1870 = vld [vmem:[%s183 + $0xc8] sm:$0xf]
      %v1871 = vld [vmem:[%s183 + $0xcc] sm:$0xf]
      %v1872 = vld [vmem:[%s183 + $0xd0] sm:$0xf]
      %v1873 = vld [vmem:[%s183 + $0xd4] sm:$0xf]
      %v1874 = vld [vmem:[%s183 + $0xd8] sm:$0xf]
      %v1875 = vld [vmem:[%s183 + $0xdc] sm:$0x1]
      %s1876 = scalar_lea.vmem %s1, 96
      %v1877 = vld [vmem:[%s1876] sm:$0xf]
      %v1878 = vld [vmem:[%s1876 + $0x4] sm:$0xf]
      %v1879 = vld [vmem:[%s1876 + $0x8] sm:$0xf]
      %v1880 = vld [vmem:[%s1876 + $0xc] sm:$0xf]
      %v1881 = vld [vmem:[%s1876 + $0x10] sm:$0xf]
      %v1882 = vld [vmem:[%s1876 + $0x14] sm:$0xf]
      %v1883 = vld [vmem:[%s1876 + $0x18] sm:$0xf]
      %v1884 = vld [vmem:[%s1876 + $0x1c] sm:$0xf]
      %v1939 = vunpack.c.l.b16 %v1822
      %v1940 = vunpack.c.l.b16 %v1823
      %v1941 = vunpack.c.l.b16 %v1824
      %v1942 = vunpack.c.l.b16 %v1825
      %v1943 = vunpack.c.l.b16 %v1826
      %v1944 = vunpack.c.l.b16 %v1827
      %v1945 = vunpack.c.l.b16 %v1828
      %v1946 = vunpack.c.l.b16 %v1829
      %v1947 = vunpack.c.l.b16 %v1830
      %v1948 = vunpack.c.l.b16 %v1831
      %v1949 = vunpack.c.l.b16 %v1832
      %v1950 = vunpack.c.l.b16 %v1833
      %v1951 = vunpack.c.l.b16 %v1834
      %v1952 = vunpack.c.l.b16 %v1835
      %v1953 = vunpack.c.l.b16 %v1836
      %v1954 = vunpack.c.l.b16 %v1837
      %v1955 = vunpack.c.l.b16 %v1838
      %v1956 = vunpack.c.l.b16 %v1839
      %v1957 = vunpack.c.l.b16 %v1840
      %v1958 = vunpack.c.l.b16 %v1841
      %v1959 = vunpack.c.l.b16 %v1842
      %v1960 = vunpack.c.l.b16 %v1843
      %v1961 = vunpack.c.l.b16 %v1844
      %v1962 = vunpack.c.l.b16 %v1845
      %v1963 = vunpack.c.l.b16 %v1846
      %v1964 = vunpack.c.l.b16 %v1847
      %v1965 = vunpack.c.l.b16 %v1848
      %v1966 = vunpack.c.l.b16 %v1849
      %v1967 = vunpack.c.l.b16 %v1850
      %v1968 = vunpack.c.l.b16 %v1851
      %v1969 = vunpack.c.l.b16 %v1852
      %v1970 = vunpack.c.l.b16 %v1853
      %v1971 = vunpack.c.l.b16 %v1854
      %v1972 = vunpack.c.l.b16 %v1855
      %v1973 = vunpack.c.l.b16 %v1856
      %v1974 = vunpack.c.l.b16 %v1857
      %v1975 = vunpack.c.l.b16 %v1858
      %v1976 = vunpack.c.l.b16 %v1859
      %v1977 = vunpack.c.l.b16 %v1860
      %v1978 = vunpack.c.l.b16 %v1861
      %v1979 = vunpack.c.l.b16 %v1862
      %v1980 = vunpack.c.l.b16 %v1863
      %v1981 = vunpack.c.l.b16 %v1864
      %v1982 = vunpack.c.l.b16 %v1865
      %v1983 = vunpack.c.l.b16 %v1866
      %v1984 = vunpack.c.l.b16 %v1867
      %v1985 = vunpack.c.l.b16 %v1868
      %v1986 = vunpack.c.l.b16 %v1869
      %v1987 = vunpack.c.l.b16 %v1870
      %v1988 = vunpack.c.l.b16 %v1871
      %v1989 = vunpack.c.l.b16 %v1872
      %v1990 = vunpack.c.l.b16 %v1873
      %v1991 = vunpack.c.l.b16 %v1874
      %v1992 = vunpack.c.l.b16 %v1875
      %v1993 = vpack.c.b16 %v1940, %v1939
      %v1994 = vpack.c.b16 %v1942, %v1941
      %v1995 = vpack.c.b16 %v1944, %v1943
      %v1996 = vpack.c.b16 %v1946, %v1945
      %v1997 = vpack.c.b16 %v1948, %v1947
      %v1998 = vpack.c.b16 %v1950, %v1949
      %v1999 = vpack.c.b16 %v1952, %v1951
      %v2000 = vpack.c.b16 %v1954, %v1953
      %v2001 = vpack.c.b16 %v1956, %v1955
      %v2002 = vpack.c.b16 %v1958, %v1957
      %v2003 = vpack.c.b16 %v1960, %v1959
      %v2004 = vpack.c.b16 %v1962, %v1961
      %v2005 = vpack.c.b16 %v1964, %v1963
      %v2006 = vpack.c.b16 %v1966, %v1965
      %v2007 = vpack.c.b16 %v1968, %v1967
      %v2008 = vpack.c.b16 %v1970, %v1969
      %v2009 = vpack.c.b16 %v1972, %v1971
      %v2010 = vpack.c.b16 %v1974, %v1973
      %v2011 = vpack.c.b16 %v1976, %v1975
      %v2012 = vpack.c.b16 %v1978, %v1977
      %v2013 = vpack.c.b16 %v1980, %v1979
      %v2014 = vpack.c.b16 %v1982, %v1981
      %v2015 = vpack.c.b16 %v1984, %v1983
      %v2016 = vpack.c.b16 %v1986, %v1985
      %v2017 = vpack.c.b16 %v1988, %v1987
      %v2018 = vpack.c.b16 %v1990, %v1989
      %v2019 = vpack.c.b16 %v1992, %v1991
      %vm2020 = vcmask 1044480
      %v2021 = vrot.slane %v1993, 3
      %v2022 = vrot.slane %v1994, 3
      %v2023 = vsel %vm2020, %v2021, %v2022
      %v2024 = vrot.slane %v1995, 3
      %v2025 = vsel %vm2020, %v2022, %v2024
      %v2026 = vrot.slane %v1996, 3
      %v2027 = vsel %vm2020, %v2024, %v2026
      %v2028 = vrot.slane %v1997, 3
      %v2029 = vsel %vm2020, %v2026, %v2028
      %v2030 = vrot.slane %v1998, 3
      %v2031 = vsel %vm2020, %v2028, %v2030
      %v2032 = vrot.slane %v1999, 3
      %v2033 = vsel %vm2020, %v2030, %v2032
      %v2034 = vrot.slane %v2000, 3
      %v2035 = vsel %vm2020, %v2032, %v2034
      %v2036 = vrot.slane %v2001, 3
      %v2037 = vsel %vm2020, %v2034, %v2036
      %v2038 = vrot.slane %v2002, 3
      %v2039 = vsel %vm2020, %v2036, %v2038
      %v2040 = vrot.slane %v2003, 3
      %v2041 = vsel %vm2020, %v2038, %v2040
      %v2042 = vrot.slane %v2004, 3
      %v2043 = vsel %vm2020, %v2040, %v2042
      %v2044 = vrot.slane %v2005, 3
      %v2045 = vsel %vm2020, %v2042, %v2044
      %v2046 = vrot.slane %v2006, 3
      %v2047 = vsel %vm2020, %v2044, %v2046
      %v2048 = vrot.slane %v2007, 3
      %v2049 = vsel %vm2020, %v2046, %v2048
      %v2050 = vrot.slane %v2008, 3
      %v2051 = vsel %vm2020, %v2048, %v2050
      %v2052 = vrot.slane %v2009, 3
      %v2053 = vsel %vm2020, %v2050, %v2052
      %v2054 = vrot.slane %v2010, 3
      %v2055 = vsel %vm2020, %v2052, %v2054
      %v2056 = vrot.slane %v2011, 3
      %v2057 = vsel %vm2020, %v2054, %v2056
      %v2058 = vrot.slane %v2012, 3
      %v2059 = vsel %vm2020, %v2056, %v2058
      %v2060 = vrot.slane %v2013, 3
      %v2061 = vsel %vm2020, %v2058, %v2060
      %v2062 = vrot.slane %v2014, 3
      %v2063 = vsel %vm2020, %v2060, %v2062
      %v2064 = vrot.slane %v2015, 3
      %v2065 = vsel %vm2020, %v2062, %v2064
      %v2066 = vrot.slane %v2016, 3
      %v2067 = vsel %vm2020, %v2064, %v2066
      %v2068 = vrot.slane %v2017, 3
      %v2069 = vsel %vm2020, %v2066, %v2068
      %v2070 = vrot.slane %v2018, 3
      %v2071 = vsel %vm2020, %v2068, %v2070
      %v2072 = vrot.slane %v2019, 3
      %v2073 = vsel %vm2020, %v2070, %v2072
      %v2082 = vunpack.c.l.b16 %v1877
      %v2083 = vunpack.c.l.b16 %v1878
      %v2084 = vunpack.c.l.b16 %v1879
      %v2085 = vunpack.c.l.b16 %v1880
      %v2086 = vunpack.c.l.b16 %v1881
      %v2087 = vunpack.c.l.b16 %v1882
      %v2088 = vunpack.c.l.b16 %v1883
      %v2089 = vunpack.c.l.b16 %v1884
      %v2090 = vpack.c.b16 %v2083, %v2082
      %v2091 = vpack.c.b16 %v2085, %v2084
      %v2092 = vpack.c.b16 %v2087, %v2086
      %v2093 = vpack.c.b16 %v2089, %v2088
      %v2099 = vsel %vm637, %v2023, 0
      %v2102 = vsel %vm637, %v2025, 0
      %v2105 = vsel %vm637, %v2027, 0
      %v2108 = vsel %vm637, %v2029, 0
      %v2111 = vsel %vm637, %v2031, 0
      %v2114 = vsel %vm637, %v2033, 0
      %v2117 = vsel %vm637, %v2035, 0
      %v2120 = vsel %vm637, %v2037, 0
      %v2123 = vsel %vm637, %v2039, 0
      %v2126 = vsel %vm637, %v2041, 0
      %v2129 = vsel %vm637, %v2043, 0
      %v2132 = vsel %vm637, %v2045, 0
      %v2135 = vsel %vm637, %v2047, 0
      %v2138 = vsel %vm637, %v2049, 0
      %v2141 = vsel %vm637, %v2051, 0
      %v2144 = vsel %vm637, %v2053, 0
      %v2147 = vsel %vm637, %v2055, 0
      %v2150 = vsel %vm637, %v2057, 0
      %v2153 = vsel %vm637, %v2059, 0
      %v2156 = vsel %vm637, %v2061, 0
      %v2159 = vsel %vm637, %v2063, 0
      %v2162 = vsel %vm637, %v2065, 0
      %v2165 = vsel %vm637, %v2067, 0
      %v2168 = vsel %vm637, %v2069, 0
      %v2171 = vsel %vm637, %v2071, 0
      %v2174 = vsel %vm637, %v2073, 0
      %v2177 = vsel %vm637, %v2072, 0
      %2179 = vmatpush.bf16.msra.mxu0 0
      %2180 = vmatpush.bf16.msra.mxu0 0
      %2181 = vmatpush.bf16.msra.mxu0 0
      %2182 = vmatpush.bf16.msra.mxu0 0
      %2183 = vmatpush.bf16.msra.mxu0 %v2093
      %2184 = vmatpush.bf16.msra.mxu0 %v2092
      %2185 = vmatpush.bf16.msra.mxu0 %v2091
      %2186 = vmatpush.bf16.msra.mxu0 %v2090
      %2187 = vmatmul.bf16.gmra.mxu0 %v2099
      %v2188 = vpop.f32.mrf.mxu0
      %v2189 = vadd.f32 0.0, %v2188
      %v2190 = vpop.f32.mrf.mxu0
      %v2191 = vadd.f32 0.0, %v2190
      %2192 = vmatmul.bf16.gmra.mxu0 %v2102
      %v2193 = vpop.f32.mrf.mxu0
      %v2194 = vadd.f32 0.0, %v2193
      %v2195 = vpop.f32.mrf.mxu0
      %v2196 = vadd.f32 0.0, %v2195
      %2197 = vmatmul.bf16.gmra.mxu0 %v2105
      %v2198 = vpop.f32.mrf.mxu0
      %v2199 = vadd.f32 0.0, %v2198
      %v2200 = vpop.f32.mrf.mxu0
      %v2201 = vadd.f32 0.0, %v2200
      %2202 = vmatmul.bf16.gmra.mxu0 %v2108
      %v2203 = vpop.f32.mrf.mxu0
      %v2204 = vadd.f32 0.0, %v2203
      %v2205 = vpop.f32.mrf.mxu0
      %v2206 = vadd.f32 0.0, %v2205
      %2207 = vmatmul.bf16.gmra.mxu0 %v2111
      %v2208 = vpop.f32.mrf.mxu0
      %v2209 = vadd.f32 0.0, %v2208
      %v2210 = vpop.f32.mrf.mxu0
      %v2211 = vadd.f32 0.0, %v2210
      %2212 = vmatmul.bf16.gmra.mxu0 %v2114
      %v2213 = vpop.f32.mrf.mxu0
      %v2214 = vadd.f32 0.0, %v2213
      %v2215 = vpop.f32.mrf.mxu0
      %v2216 = vadd.f32 0.0, %v2215
      %2217 = vmatmul.bf16.gmra.mxu0 %v2117
      %v2218 = vpop.f32.mrf.mxu0
      %v2219 = vadd.f32 0.0, %v2218
      %v2220 = vpop.f32.mrf.mxu0
      %v2221 = vadd.f32 0.0, %v2220
      %2222 = vmatmul.bf16.gmra.mxu0 %v2120
      %v2223 = vpop.f32.mrf.mxu0
      %v2224 = vadd.f32 0.0, %v2223
      %v2225 = vpop.f32.mrf.mxu0
      %v2226 = vadd.f32 0.0, %v2225
      %2227 = vmatmul.bf16.gmra.mxu0 %v2123
      %v2228 = vpop.f32.mrf.mxu0
      %v2229 = vadd.f32 0.0, %v2228
      %v2230 = vpop.f32.mrf.mxu0
      %v2231 = vadd.f32 0.0, %v2230
      %2232 = vmatmul.bf16.gmra.mxu0 %v2126
      %v2233 = vpop.f32.mrf.mxu0
      %v2234 = vadd.f32 0.0, %v2233
      %v2235 = vpop.f32.mrf.mxu0
      %v2236 = vadd.f32 0.0, %v2235
      %2237 = vmatmul.bf16.gmra.mxu0 %v2129
      %v2238 = vpop.f32.mrf.mxu0
      %v2239 = vadd.f32 0.0, %v2238
      %v2240 = vpop.f32.mrf.mxu0
      %v2241 = vadd.f32 0.0, %v2240
      %2242 = vmatmul.bf16.gmra.mxu0 %v2132
      %v2243 = vpop.f32.mrf.mxu0
      %v2244 = vadd.f32 0.0, %v2243
      %v2245 = vpop.f32.mrf.mxu0
      %v2246 = vadd.f32 0.0, %v2245
      %2247 = vmatmul.bf16.gmra.mxu0 %v2135
      %v2248 = vpop.f32.mrf.mxu0
      %v2249 = vadd.f32 0.0, %v2248
      %v2250 = vpop.f32.mrf.mxu0
      %v2251 = vadd.f32 0.0, %v2250
      %2252 = vmatmul.bf16.gmra.mxu0 %v2138
      %v2253 = vpop.f32.mrf.mxu0
      %v2254 = vadd.f32 0.0, %v2253
      %v2255 = vpop.f32.mrf.mxu0
      %v2256 = vadd.f32 0.0, %v2255
      %2257 = vmatmul.bf16.gmra.mxu0 %v2141
      %v2258 = vpop.f32.mrf.mxu0
      %v2259 = vadd.f32 0.0, %v2258
      %v2260 = vpop.f32.mrf.mxu0
      %v2261 = vadd.f32 0.0, %v2260
      %2262 = vmatmul.bf16.gmra.mxu0 %v2144
      %v2263 = vpop.f32.mrf.mxu0
      %v2264 = vadd.f32 0.0, %v2263
      %v2265 = vpop.f32.mrf.mxu0
      %v2266 = vadd.f32 0.0, %v2265
      %2267 = vmatmul.bf16.gmra.mxu0 %v2147
      %v2268 = vpop.f32.mrf.mxu0
      %v2269 = vadd.f32 0.0, %v2268
      %v2270 = vpop.f32.mrf.mxu0
      %v2271 = vadd.f32 0.0, %v2270
      %2272 = vmatmul.bf16.gmra.mxu0 %v2150
      %v2273 = vpop.f32.mrf.mxu0
      %v2274 = vadd.f32 0.0, %v2273
      %v2275 = vpop.f32.mrf.mxu0
      %v2276 = vadd.f32 0.0, %v2275
      %2277 = vmatmul.bf16.gmra.mxu0 %v2153
      %v2278 = vpop.f32.mrf.mxu0
      %v2279 = vadd.f32 0.0, %v2278
      %v2280 = vpop.f32.mrf.mxu0
      %v2281 = vadd.f32 0.0, %v2280
      %2282 = vmatmul.bf16.gmra.mxu0 %v2156
      %v2283 = vpop.f32.mrf.mxu0
      %v2284 = vadd.f32 0.0, %v2283
      %v2285 = vpop.f32.mrf.mxu0
      %v2286 = vadd.f32 0.0, %v2285
      %2287 = vmatmul.bf16.gmra.mxu0 %v2159
      %v2288 = vpop.f32.mrf.mxu0
      %v2289 = vadd.f32 0.0, %v2288
      %v2290 = vpop.f32.mrf.mxu0
      %v2291 = vadd.f32 0.0, %v2290
      %2292 = vmatmul.bf16.gmra.mxu0 %v2162
      %v2293 = vpop.f32.mrf.mxu0
      %v2294 = vadd.f32 0.0, %v2293
      %v2295 = vpop.f32.mrf.mxu0
      %v2296 = vadd.f32 0.0, %v2295
      %2297 = vmatmul.bf16.gmra.mxu0 %v2165
      %v2298 = vpop.f32.mrf.mxu0
      %v2299 = vadd.f32 0.0, %v2298
      %v2300 = vpop.f32.mrf.mxu0
      %v2301 = vadd.f32 0.0, %v2300
      %2302 = vmatmul.bf16.gmra.mxu0 %v2168
      %v2303 = vpop.f32.mrf.mxu0
      %v2304 = vadd.f32 0.0, %v2303
      %v2305 = vpop.f32.mrf.mxu0
      %v2306 = vadd.f32 0.0, %v2305
      %2307 = vmatmul.bf16.gmra.mxu0 %v2171
      %v2308 = vpop.f32.mrf.mxu0
      %v2309 = vadd.f32 0.0, %v2308
      %v2310 = vpop.f32.mrf.mxu0
      %v2311 = vadd.f32 0.0, %v2310
      %2312 = vmatmul.bf16.gmra.mxu0 %v2174
      %v2313 = vpop.f32.mrf.mxu0
      %v2314 = vadd.f32 0.0, %v2313
      %v2315 = vpop.f32.mrf.mxu0
      %v2316 = vadd.f32 0.0, %v2315
      %2317 = vmatmul.bf16.gmra.mxu0 %v2177
      %v2318 = vpop.f32.mrf.mxu0
      %v2319 = vadd.f32 0.0, %v2318
      %v2320 = vpop.f32.mrf.mxu0
      %2321 = vdwg.mxu0
      %v2322 = vadd.f32 %v1769, %v2189
      %v2323 = vadd.f32 %v1770, %v2191
      %v2324 = vadd.f32 %v1771, %v2194
      %v2325 = vadd.f32 %v1772, %v2196
      %v2326 = vadd.f32 %v1773, %v2199
      %v2327 = vadd.f32 %v1774, %v2201
      %v2328 = vadd.f32 %v1775, %v2204
      %v2329 = vadd.f32 %v1776, %v2206
      %v2330 = vadd.f32 %v1777, %v2209
      %v2331 = vadd.f32 %v1778, %v2211
      %v2332 = vadd.f32 %v1779, %v2214
      %v2333 = vadd.f32 %v1780, %v2216
      %v2334 = vadd.f32 %v1781, %v2219
      %v2335 = vadd.f32 %v1782, %v2221
      %v2336 = vadd.f32 %v1783, %v2224
      %v2337 = vadd.f32 %v1784, %v2226
      %v2338 = vadd.f32 %v1785, %v2229
      %v2339 = vadd.f32 %v1786, %v2231
      %v2340 = vadd.f32 %v1787, %v2234
      %v2341 = vadd.f32 %v1788, %v2236
      %v2342 = vadd.f32 %v1789, %v2239
      %v2343 = vadd.f32 %v1790, %v2241
      %v2344 = vadd.f32 %v1791, %v2244
      %v2345 = vadd.f32 %v1792, %v2246
      %v2346 = vadd.f32 %v1793, %v2249
      %v2347 = vadd.f32 %v1794, %v2251
      %v2348 = vadd.f32 %v1795, %v2254
      %v2349 = vadd.f32 %v1796, %v2256
      %v2350 = vadd.f32 %v1797, %v2259
      %v2351 = vadd.f32 %v1798, %v2261
      %v2352 = vadd.f32 %v1799, %v2264
      %v2353 = vadd.f32 %v1800, %v2266
      %v2354 = vadd.f32 %v1801, %v2269
      %v2355 = vadd.f32 %v1802, %v2271
      %v2356 = vadd.f32 %v1803, %v2274
      %v2357 = vadd.f32 %v1804, %v2276
      %v2358 = vadd.f32 %v1805, %v2279
      %v2359 = vadd.f32 %v1806, %v2281
      %v2360 = vadd.f32 %v1807, %v2284
      %v2361 = vadd.f32 %v1808, %v2286
      %v2362 = vadd.f32 %v1809, %v2289
      %v2363 = vadd.f32 %v1810, %v2291
      %v2364 = vadd.f32 %v1811, %v2294
      %v2365 = vadd.f32 %v1812, %v2296
      %v2366 = vadd.f32 %v1813, %v2299
      %v2367 = vadd.f32 %v1814, %v2301
      %v2368 = vadd.f32 %v1815, %v2304
      %v2369 = vadd.f32 %v1816, %v2306
      %v2370 = vadd.f32 %v1817, %v2309
      %v2371 = vadd.f32 %v1818, %v2311
      %v2372 = vadd.f32 %v1819, %v2314
      %v2373 = vadd.f32 %v1820, %v2316
      %v2374 = vadd.f32 %v1821, %v2319
      %v2375 = vld [vmem:[%s2] sm:$0x1]
      %v2377 = vperm.slane %v2375, 0
      %v2379 = vadd.f32 %v2322, %v2377
      %v2380 = vadd.f32 %v2323, %v2377
      %v2381 = vadd.f32 %v2324, %v2377
      %v2382 = vadd.f32 %v2325, %v2377
      %v2383 = vadd.f32 %v2326, %v2377
      %v2384 = vadd.f32 %v2327, %v2377
      %v2385 = vadd.f32 %v2328, %v2377
      %v2386 = vadd.f32 %v2329, %v2377
      %v2387 = vadd.f32 %v2330, %v2377
      %v2388 = vadd.f32 %v2331, %v2377
      %v2389 = vadd.f32 %v2332, %v2377
      %v2390 = vadd.f32 %v2333, %v2377
      %v2391 = vadd.f32 %v2334, %v2377
      %v2392 = vadd.f32 %v2335, %v2377
      %v2393 = vadd.f32 %v2336, %v2377
      %v2394 = vadd.f32 %v2337, %v2377
      %v2395 = vadd.f32 %v2338, %v2377
      %v2396 = vadd.f32 %v2339, %v2377
      %v2397 = vadd.f32 %v2340, %v2377
      %v2398 = vadd.f32 %v2341, %v2377
      %v2399 = vadd.f32 %v2342, %v2377
      %v2400 = vadd.f32 %v2343, %v2377
      %v2401 = vadd.f32 %v2344, %v2377
      %v2402 = vadd.f32 %v2345, %v2377
      %v2403 = vadd.f32 %v2346, %v2377
      %v2404 = vadd.f32 %v2347, %v2377
      %v2405 = vadd.f32 %v2348, %v2377
      %v2406 = vadd.f32 %v2349, %v2377
      %v2407 = vadd.f32 %v2350, %v2377
      %v2408 = vadd.f32 %v2351, %v2377
      %v2409 = vadd.f32 %v2352, %v2377
      %v2410 = vadd.f32 %v2353, %v2377
      %v2411 = vadd.f32 %v2354, %v2377
      %v2412 = vadd.f32 %v2355, %v2377
      %v2413 = vadd.f32 %v2356, %v2377
      %v2414 = vadd.f32 %v2357, %v2377
      %v2415 = vadd.f32 %v2358, %v2377
      %v2416 = vadd.f32 %v2359, %v2377
      %v2417 = vadd.f32 %v2360, %v2377
      %v2418 = vadd.f32 %v2361, %v2377
      %v2419 = vadd.f32 %v2362, %v2377
      %v2420 = vadd.f32 %v2363, %v2377
      %v2421 = vadd.f32 %v2364, %v2377
      %v2422 = vadd.f32 %v2365, %v2377
      %v2423 = vadd.f32 %v2366, %v2377
      %v2424 = vadd.f32 %v2367, %v2377
      %v2425 = vadd.f32 %v2368, %v2377
      %v2426 = vadd.f32 %v2369, %v2377
      %v2427 = vadd.f32 %v2370, %v2377
      %v2428 = vadd.f32 %v2371, %v2377
      %v2429 = vadd.f32 %v2372, %v2377
      %v2430 = vadd.f32 %v2373, %v2377
      %v2431 = vadd.f32 %v2374, %v2377
      %v2432 = vmax.f32 %v2379, 0.0
      %v2433 = vmax.f32 %v2380, 0.0
      %v2434 = vmax.f32 %v2381, 0.0
      %v2435 = vmax.f32 %v2382, 0.0
      %v2436 = vmax.f32 %v2383, 0.0
      %v2437 = vmax.f32 %v2384, 0.0
      %v2438 = vmax.f32 %v2385, 0.0
      %v2439 = vmax.f32 %v2386, 0.0
      %v2440 = vmax.f32 %v2387, 0.0
      %v2441 = vmax.f32 %v2388, 0.0
      %v2442 = vmax.f32 %v2389, 0.0
      %v2443 = vmax.f32 %v2390, 0.0
      %v2444 = vmax.f32 %v2391, 0.0
      %v2445 = vmax.f32 %v2392, 0.0
      %v2446 = vmax.f32 %v2393, 0.0
      %v2447 = vmax.f32 %v2394, 0.0
      %v2448 = vmax.f32 %v2395, 0.0
      %v2449 = vmax.f32 %v2396, 0.0
      %v2450 = vmax.f32 %v2397, 0.0
      %v2451 = vmax.f32 %v2398, 0.0
      %v2452 = vmax.f32 %v2399, 0.0
      %v2453 = vmax.f32 %v2400, 0.0
      %v2454 = vmax.f32 %v2401, 0.0
      %v2455 = vmax.f32 %v2402, 0.0
      %v2456 = vmax.f32 %v2403, 0.0
      %v2457 = vmax.f32 %v2404, 0.0
      %v2458 = vmax.f32 %v2405, 0.0
      %v2459 = vmax.f32 %v2406, 0.0
      %v2460 = vmax.f32 %v2407, 0.0
      %v2461 = vmax.f32 %v2408, 0.0
      %v2462 = vmax.f32 %v2409, 0.0
      %v2463 = vmax.f32 %v2410, 0.0
      %v2464 = vmax.f32 %v2411, 0.0
      %v2465 = vmax.f32 %v2412, 0.0
      %v2466 = vmax.f32 %v2413, 0.0
      %v2467 = vmax.f32 %v2414, 0.0
      %v2468 = vmax.f32 %v2415, 0.0
      %v2469 = vmax.f32 %v2416, 0.0
      %v2470 = vmax.f32 %v2417, 0.0
      %v2471 = vmax.f32 %v2418, 0.0
      %v2472 = vmax.f32 %v2419, 0.0
      %v2473 = vmax.f32 %v2420, 0.0
      %v2474 = vmax.f32 %v2421, 0.0
      %v2475 = vmax.f32 %v2422, 0.0
      %v2476 = vmax.f32 %v2423, 0.0
      %v2477 = vmax.f32 %v2424, 0.0
      %v2478 = vmax.f32 %v2425, 0.0
      %v2479 = vmax.f32 %v2426, 0.0
      %v2480 = vmax.f32 %v2427, 0.0
      %v2481 = vmax.f32 %v2428, 0.0
      %v2482 = vmax.f32 %v2429, 0.0
      %v2483 = vmax.f32 %v2430, 0.0
      %v2484 = vmax.f32 %v2431, 0.0
      %v2485 = vpack.c.bf16 %v2432, %v2432
      %v2486 = vpack.c.bf16 %v2433, %v2433
      %v2487 = vpack.c.bf16 %v2434, %v2434
      %v2488 = vpack.c.bf16 %v2435, %v2435
      %v2489 = vpack.c.bf16 %v2436, %v2436
      %v2490 = vpack.c.bf16 %v2437, %v2437
      %v2491 = vpack.c.bf16 %v2438, %v2438
      %v2492 = vpack.c.bf16 %v2439, %v2439
      %v2493 = vpack.c.bf16 %v2440, %v2440
      %v2494 = vpack.c.bf16 %v2441, %v2441
      %v2495 = vpack.c.bf16 %v2442, %v2442
      %v2496 = vpack.c.bf16 %v2443, %v2443
      %v2497 = vpack.c.bf16 %v2444, %v2444
      %v2498 = vpack.c.bf16 %v2445, %v2445
      %v2499 = vpack.c.bf16 %v2446, %v2446
      %v2500 = vpack.c.bf16 %v2447, %v2447
      %v2501 = vpack.c.bf16 %v2448, %v2448
      %v2502 = vpack.c.bf16 %v2449, %v2449
      %v2503 = vpack.c.bf16 %v2450, %v2450
      %v2504 = vpack.c.bf16 %v2451, %v2451
      %v2505 = vpack.c.bf16 %v2452, %v2452
      %v2506 = vpack.c.bf16 %v2453, %v2453
      %v2507 = vpack.c.bf16 %v2454, %v2454
      %v2508 = vpack.c.bf16 %v2455, %v2455
      %v2509 = vpack.c.bf16 %v2456, %v2456
      %v2510 = vpack.c.bf16 %v2457, %v2457
      %v2511 = vpack.c.bf16 %v2458, %v2458
      %v2512 = vpack.c.bf16 %v2459, %v2459
      %v2513 = vpack.c.bf16 %v2460, %v2460
      %v2514 = vpack.c.bf16 %v2461, %v2461
      %v2515 = vpack.c.bf16 %v2462, %v2462
      %v2516 = vpack.c.bf16 %v2463, %v2463
      %v2517 = vpack.c.bf16 %v2464, %v2464
      %v2518 = vpack.c.bf16 %v2465, %v2465
      %v2519 = vpack.c.bf16 %v2466, %v2466
      %v2520 = vpack.c.bf16 %v2467, %v2467
      %v2521 = vpack.c.bf16 %v2468, %v2468
      %v2522 = vpack.c.bf16 %v2469, %v2469
      %v2523 = vpack.c.bf16 %v2470, %v2470
      %v2524 = vpack.c.bf16 %v2471, %v2471
      %v2525 = vpack.c.bf16 %v2472, %v2472
      %v2526 = vpack.c.bf16 %v2473, %v2473
      %v2527 = vpack.c.bf16 %v2474, %v2474
      %v2528 = vpack.c.bf16 %v2475, %v2475
      %v2529 = vpack.c.bf16 %v2476, %v2476
      %v2530 = vpack.c.bf16 %v2477, %v2477
      %v2531 = vpack.c.bf16 %v2478, %v2478
      %v2532 = vpack.c.bf16 %v2479, %v2479
      %v2533 = vpack.c.bf16 %v2480, %v2480
      %v2534 = vpack.c.bf16 %v2481, %v2481
      %v2535 = vpack.c.bf16 %v2482, %v2482
      %v2536 = vpack.c.bf16 %v2483, %v2483
      %v2537 = vpack.c.bf16 %v2484, %v2484
      %vm2538 = vcmask 257024
      %2539 = vst.msk [vmem:[%s192] sm:$0xf] %vm2538, %v2485
      %2540 = vst.msk [vmem:[%s192 + $0x4] sm:$0xf] %vm2538, %v2486
      %2541 = vst.msk [vmem:[%s192 + $0x8] sm:$0xf] %vm2538, %v2487
      %2542 = vst.msk [vmem:[%s192 + $0xc] sm:$0xf] %vm2538, %v2488
      %2543 = vst.msk [vmem:[%s192 + $0x10] sm:$0xf] %vm2538, %v2489
      %2544 = vst.msk [vmem:[%s192 + $0x14] sm:$0xf] %vm2538, %v2490
      %2545 = vst.msk [vmem:[%s192 + $0x18] sm:$0xf] %vm2538, %v2491
      %2546 = vst.msk [vmem:[%s192 + $0x1c] sm:$0xf] %vm2538, %v2492
      %2547 = vst.msk [vmem:[%s192 + $0x20] sm:$0xf] %vm2538, %v2493
      %2548 = vst.msk [vmem:[%s192 + $0x24] sm:$0xf] %vm2538, %v2494
      %2549 = vst.msk [vmem:[%s192 + $0x28] sm:$0xf] %vm2538, %v2495
      %2550 = vst.msk [vmem:[%s192 + $0x2c] sm:$0xf] %vm2538, %v2496
      %2551 = vst.msk [vmem:[%s192 + $0x30] sm:$0xf] %vm2538, %v2497
      %2552 = vst.msk [vmem:[%s192 + $0x34] sm:$0xf] %vm2538, %v2498
      %2553 = vst.msk [vmem:[%s192 + $0x38] sm:$0xf] %vm2538, %v2499
      %2554 = vst.msk [vmem:[%s192 + $0x3c] sm:$0xf] %vm2538, %v2500
      %2555 = vst.msk [vmem:[%s192 + $0x40] sm:$0xf] %vm2538, %v2501
      %2556 = vst.msk [vmem:[%s192 + $0x44] sm:$0xf] %vm2538, %v2502
      %2557 = vst.msk [vmem:[%s192 + $0x48] sm:$0xf] %vm2538, %v2503
      %2558 = vst.msk [vmem:[%s192 + $0x4c] sm:$0xf] %vm2538, %v2504
      %2559 = vst.msk [vmem:[%s192 + $0x50] sm:$0xf] %vm2538, %v2505
      %2560 = vst.msk [vmem:[%s192 + $0x54] sm:$0xf] %vm2538, %v2506
      %2561 = vst.msk [vmem:[%s192 + $0x58] sm:$0xf] %vm2538, %v2507
      %2562 = vst.msk [vmem:[%s192 + $0x5c] sm:$0xf] %vm2538, %v2508
      %2563 = vst.msk [vmem:[%s192 + $0x60] sm:$0xf] %vm2538, %v2509
      %2564 = vst.msk [vmem:[%s192 + $0x64] sm:$0xf] %vm2538, %v2510
      %2565 = vst.msk [vmem:[%s192 + $0x68] sm:$0xf] %vm2538, %v2511
      %2566 = vst.msk [vmem:[%s192 + $0x6c] sm:$0xf] %vm2538, %v2512
      %2567 = vst.msk [vmem:[%s192 + $0x70] sm:$0xf] %vm2538, %v2513
      %2568 = vst.msk [vmem:[%s192 + $0x74] sm:$0xf] %vm2538, %v2514
      %2569 = vst.msk [vmem:[%s192 + $0x78] sm:$0xf] %vm2538, %v2515
      %2570 = vst.msk [vmem:[%s192 + $0x7c] sm:$0xf] %vm2538, %v2516
      %2571 = vst.msk [vmem:[%s192 + $0x80] sm:$0xf] %vm2538, %v2517
      %2572 = vst.msk [vmem:[%s192 + $0x84] sm:$0xf] %vm2538, %v2518
      %2573 = vst.msk [vmem:[%s192 + $0x88] sm:$0xf] %vm2538, %v2519
      %2574 = vst.msk [vmem:[%s192 + $0x8c] sm:$0xf] %vm2538, %v2520
      %2575 = vst.msk [vmem:[%s192 + $0x90] sm:$0xf] %vm2538, %v2521
      %2576 = vst.msk [vmem:[%s192 + $0x94] sm:$0xf] %vm2538, %v2522
      %2577 = vst.msk [vmem:[%s192 + $0x98] sm:$0xf] %vm2538, %v2523
      %2578 = vst.msk [vmem:[%s192 + $0x9c] sm:$0xf] %vm2538, %v2524
      %2579 = vst.msk [vmem:[%s192 + $0xa0] sm:$0xf] %vm2538, %v2525
      %2580 = vst.msk [vmem:[%s192 + $0xa4] sm:$0xf] %vm2538, %v2526
      %2581 = vst.msk [vmem:[%s192 + $0xa8] sm:$0xf] %vm2538, %v2527
      %2582 = vst.msk [vmem:[%s192 + $0xac] sm:$0xf] %vm2538, %v2528
      %2583 = vst.msk [vmem:[%s192 + $0xb0] sm:$0xf] %vm2538, %v2529
      %2584 = vst.msk [vmem:[%s192 + $0xb4] sm:$0xf] %vm2538, %v2530
      %2585 = vst.msk [vmem:[%s192 + $0xb8] sm:$0xf] %vm2538, %v2531
      %2586 = vst.msk [vmem:[%s192 + $0xbc] sm:$0xf] %vm2538, %v2532
      %2587 = vst.msk [vmem:[%s192 + $0xc0] sm:$0xf] %vm2538, %v2533
      %2588 = vst.msk [vmem:[%s192 + $0xc4] sm:$0xf] %vm2538, %v2534
      %2589 = vst.msk [vmem:[%s192 + $0xc8] sm:$0xf] %vm2538, %v2535
      %2590 = vst.msk [vmem:[%s192 + $0xcc] sm:$0xf] %vm2538, %v2536
      %vm2591 = vcmask 254976
      %vm2592 = vsmask.f32 1280
      %vm2593 = vmand %vm2591, %vm2592
      %v2594 = vld [vmem:[%s192 + $0xd0] sm:$0x3]
      %v2595 = vsel %vm2593, %v2537, %v2594
      %2596 = vst [vmem:[%s192 + $0xd0] sm:$0x3] %v2595
      %vm2597 = vcmask 257025
      %vm2598 = vsmask.f32 7942
      %vm2599 = vmand %vm2597, %vm2598
      %v2600 = vld [vmem:[%s192 + $0xd0] sm:$0xe]
      %v2601 = vsel %vm2599, 0, %v2600
      %2602 = vst [vmem:[%s192 + $0xd0] sm:$0xe] %v2601
      %2603 = vst.msk [vmem:[%s192 + $0xd4] sm:$0xf] %vm2538, 0
      %2604 = vst.msk [vmem:[%s192 + $0xd8] sm:$0xf] %vm2538, 0
      %vm2605 = vcmask 253952
      %vm2606 = vsmask.f32 256
      %vm2607 = vmand %vm2605, %vm2606
      %v2608 = vld [vmem:[%s192 + $0xdc] sm:$0x1]
      %v2609 = vsel %vm2607, 0, %v2608
      %2610 = vst [vmem:[%s192 + $0xdc] sm:$0x1] %v2609
      %p2611 = scmp.lt.s32.totalorder %s18, 0
      %s2612 = scalar_select %p2611, %s18, 0
      %p2613 = scmp.lt.s32.totalorder %s19, 1
      %s2614 = scalar_select %p2613, %s19, 1
      %s2615 = smul.addr %s2614, 56
      %s2616 = smul.addr %s2612, 112
      %s2617 = sadd.s32 %s2615, %s2616
      %s2618 = smul.addr %s2617, 4
      %s2619 = scalar_lea.vmem %s3, %s2618
      // Predicated region
      $region33: #{d2qn_forward.4} parent=31 // pred_check
        %p2620 = pneg %p114
      $region34: #{d2qn_forward.4} parent=31 // pred_check_branch
        %2622 = sbr.rel (%p2620) target = $region36
      $region35: #{d2qn_forward.4} parent=31 // pred_region
        _
      $region36: #{d2qn_forward.4} parent=31 // pred_fallthru
        _
    $region32: #{d2qn_forward.4} parent=5 // pred_fallthru
      _
    %p2623 = scmp.le.s32.totalorder 2, %s9
    // Predicated region
    $region37: #{d2qn_forward.4} parent=5 // pred_check
      %p2624 = pneg %p2623
    $region38: #{d2qn_forward.4} parent=5 // pred_check_branch
      %2626 = sbr.rel (%p2624) target = $region40
    $region39: #{d2qn_forward.4} parent=5 // pred_region
      %s2627 = ssub.s32 %s9, 2
      // Predicated region
      $region41: #{d2qn_forward.4} parent=39 // pred_check
        %p2628 = pneg %p120
      $region42: #{d2qn_forward.4} parent=39 // pred_check_branch
        %2630 = sbr.rel (%p2628) target = $region44
      $region43: #{d2qn_forward.4} parent=39 // pred_region
        %p2631 = scmp.lt.s32.totalorder %s20, 0
        %s2632 = scalar_select %p2631, %s20, 0
        %p2633 = scmp.lt.s32.totalorder %s21, 1
        %s2634 = scalar_select %p2633, %s21, 1
        %s2635 = smul.addr %s2634, 56
        %s2636 = smul.addr %s2632, 112
        %s2637 = sadd.s32 %s2635, %s2636
        %s2638 = smul.addr %s2637, 4
        %s2639 = scalar_lea.vmem %s3, %s2638
      $region44: #{d2qn_forward.4} parent=39 // pred_fallthru
        _
    $region40: #{d2qn_forward.4} parent=5 // pred_fallthru
      _
  $region6: #{d2qn_forward.4} parent=0 // loop_footer
    %s13 = sadd.s32 1, %s9
  $region7: #{d2qn_forward.4} parent=0 // loop_footer_branch
    %8 = sbr.rel target = $region3
  $region8: #{d2qn_forward.4} parent=0 // loop_exit
    _

// kernel: d2qn_forward.5
$region0: #{d2qn_forward.5}
  #allocation0 [shape = 'u32[]', space=smem, size = 0x4, offset = 0x4, fixed_abs, tag = 'smem constant byte address 0x4 - core index']
  #allocation1 [shape = 'u32[72,128]{1,0:T(1,128)}', space=vmem, size = 0x9000, scoped, tag = 'internal scratch']
  %s0 = inlined_call_operand.vmem [shape: bf16[1,2,100,128], index: 0, kind: input, shape index: {}]
  %s1 = inlined_call_operand.vmem [shape: bf16[2,4,128,64], index: 1, kind: input, shape index: {}]
  %s2 = inlined_call_operand.vmem [shape: f32[2,1,64], index: 2, kind: input, shape index: {}]
  %s3 = inlined_call_operand.vmem [shape: bf16[1,2,100,64], index: 3, kind: output, shape index: {}]
  %s4 = sld [smem:[#allocation0]]
  $region45: #{d2qn_forward.5} parent=0
    _
  %s6 = ssub.s32 1, %s4
  %s7 = scalar_select 0, %s6, %s4
  loop: start=0, step=1, limit=4
  $region2: #{d2qn_forward.5} parent=0 // loop_pre_header
    _
  $region3: #{d2qn_forward.5} parent=0 // loop_header
    %s9 = sphi 0, %s13
    %p10 = scmp.ge.s32.totalorder %s9, 4
    %s16 = sphi 0, %s28
    %s17 = sphi 0, %s24
    %s18 = sphi 0, %s16
    %s19 = sphi 0, %s17
    %s20 = sphi 0, %s18
    %s21 = sphi 0, %s19
    %s31 = sphi 0, %s33
    %s34 = sphi 0, %s31
    %s35 = sphi 0, %s34
    %s51 = sphi 0, %s35
    %s55 = sphi 0, %s55
    %s57 = sphi 0, %s55
    %s58 = sphi 0, %s57
    %s72 = sphi 0, %s58
    %s76 = sphi 0, %s76
    %s78 = sphi 0, %s76
    %s79 = sphi 0, %s78
    %s93 = sphi 0, %s79
    %s101 = sphi 0, %s103
    %s104 = sphi 0, %s101
    %s105 = sphi 0, %s104
    %s121 = sphi 0, %s105
  $region4: #{d2qn_forward.5} parent=0 // loop_header_branch
    %12 = sbr.rel (%p10) target = $region8
  $region5: #{d2qn_forward.5} parent=0 // loop_body
    %s14 = ssub.s32 %s9, 1
    %s15 = ssub.s32 %s9, 2
    %s22 = sadd.s32 1, %s17
    %p23 = scmp.ge.s32.totalorder %s22, 2
    %s24 = scalar_select %p23, 0, %s22
    %s25 = sadd.s32 1, %s16
    %s26 = scalar_select %p23, %s25, %s16
    %p27 = scmp.ge.s32.totalorder %s26, 1
    %s28 = scalar_select %p27, 0, %s26
    %s29 = ssub.s32 %s17, %s24
    %p30 = scmp.eq.s32.totalorder %s29, 0
    %s32 = sadd.s32 %s31, 1
    %s33 = scalar_select %p30, %s31, %s32
    %p36 = pneg %p30
    %p37 = scmp.eq.s32.totalorder %s9, 1
    %p38 = por %p36, %p37
    %p39 = scmp.ne.s32.totalorder %s31, %s34
    %p40 = scmp.eq.s32.totalorder %s9, 0
    %p41 = por %p39, %p40
    %p42 = scmp.ne.s32.totalorder %s31, %s34
    %p43 = scmp.eq.s32.totalorder %s14, 1
    %p44 = por %p42, %p43
    %p45 = scmp.ne.s32.totalorder %s34, %s35
    %p46 = scmp.eq.s32.totalorder %s14, 0
    %p47 = por %p45, %p46
    %p48 = scmp.ne.s32.totalorder %s34, %s35
    %p49 = scmp.eq.s32.totalorder %s15, 1
    %p50 = por %p48, %p49
    %p52 = scmp.ne.s32.totalorder %s35, %s51
    %p53 = scmp.eq.s32.totalorder %s15, 0
    %p54 = por %p52, %p53
    %s56 = sadd.s32 %s55, 1
    %p59 = scmp.eq.s32.totalorder %s9, 1
    %p60 = scmp.ne.s32.totalorder %s55, %s57
    %p61 = scmp.eq.s32.totalorder %s9, 0
    %p62 = por %p60, %p61
    %p63 = scmp.ne.s32.totalorder %s55, %s57
    %p64 = scmp.eq.s32.totalorder %s14, 1
    %p65 = por %p63, %p64
    %p66 = scmp.ne.s32.totalorder %s57, %s58
    %p67 = scmp.eq.s32.totalorder %s14, 0
    %p68 = por %p66, %p67
    %p69 = scmp.ne.s32.totalorder %s57, %s58
    %p70 = scmp.eq.s32.totalorder %s15, 1
    %p71 = por %p69, %p70
    %p73 = scmp.ne.s32.totalorder %s58, %s72
    %p74 = scmp.eq.s32.totalorder %s15, 0
    %p75 = por %p73, %p74
    %s77 = sadd.s32 %s76, 1
    %p80 = scmp.eq.s32.totalorder %s9, 1
    %p81 = scmp.ne.s32.totalorder %s76, %s78
    %p82 = scmp.eq.s32.totalorder %s9, 0
    %p83 = por %p81, %p82
    %p84 = scmp.ne.s32.totalorder %s76, %s78
    %p85 = scmp.eq.s32.totalorder %s14, 1
    %p86 = por %p84, %p85
    %p87 = scmp.ne.s32.totalorder %s78, %s79
    %p88 = scmp.eq.s32.totalorder %s14, 0
    %p89 = por %p87, %p88
    %p90 = scmp.ne.s32.totalorder %s78, %s79
    %p91 = scmp.eq.s32.totalorder %s15, 1
    %p92 = por %p90, %p91
    %p94 = scmp.ne.s32.totalorder %s79, %s93
    %p95 = scmp.eq.s32.totalorder %s15, 0
    %p96 = por %p94, %p95
    %s97 = ssub.s32 %s16, %s28
    %s98 = ssub.s32 %s17, %s24
    %s99 = sor.u32 %s97, %s98
    %p100 = scmp.eq.s32.totalorder %s99, 0
    %s102 = sadd.s32 %s101, 1
    %s103 = scalar_select %p100, %s101, %s102
    %p106 = pneg %p100
    %p107 = scmp.eq.s32.totalorder %s9, 1
    %p108 = por %p106, %p107
    %p109 = scmp.ne.s32.totalorder %s101, %s104
    %p110 = scmp.eq.s32.totalorder %s9, 0
    %p111 = por %p109, %p110
    %p112 = scmp.ne.s32.totalorder %s101, %s104
    %p113 = scmp.eq.s32.totalorder %s14, 1
    %p114 = por %p112, %p113
    %p115 = scmp.ne.s32.totalorder %s104, %s105
    %p116 = scmp.eq.s32.totalorder %s14, 0
    %p117 = por %p115, %p116
    %p118 = scmp.ne.s32.totalorder %s104, %s105
    %p119 = scmp.eq.s32.totalorder %s15, 1
    %p120 = por %p118, %p119
    %p122 = scmp.ne.s32.totalorder %s105, %s121
    %p123 = scmp.eq.s32.totalorder %s15, 0
    %p124 = por %p122, %p123
    %p125 = scmp.le.s32.totalorder 1, %s9
    %p126 = scmp.lt.s32.totalorder %s9, 3
    %p127 = pnand %p125, %p126
    %p128 = pneg %p127
    // Predicated region
    $region9: #{d2qn_forward.5} parent=5 // pred_check
      _
    $region10: #{d2qn_forward.5} parent=5 // pred_check_branch
      %130 = sbr.rel (%p127) target = $region12
    $region11: #{d2qn_forward.5} parent=5 // pred_region
      %s131 = ssub.s32 %s9, 1
      // Predicated region
      $region13: #{d2qn_forward.5} parent=11 // pred_check
        %p132 = pneg %p68
      $region14: #{d2qn_forward.5} parent=11 // pred_check_branch
        %134 = sbr.rel (%p132) target = $region16
      $region15: #{d2qn_forward.5} parent=11 // pred_region
        _
      $region16: #{d2qn_forward.5} parent=11 // pred_fallthru
        _
      // Predicated region
      $region17: #{d2qn_forward.5} parent=11 // pred_check
        %p135 = pneg %p89
      $region18: #{d2qn_forward.5} parent=11 // pred_check_branch
        %137 = sbr.rel (%p135) target = $region20
      $region19: #{d2qn_forward.5} parent=11 // pred_region
        _
      $region20: #{d2qn_forward.5} parent=11 // pred_fallthru
        _
    $region12: #{d2qn_forward.5} parent=5 // pred_fallthru
      _
    %p138 = scmp.lt.s32.totalorder %s9, 2
    // Predicated region
    $region21: #{d2qn_forward.5} parent=5 // pred_check
      %p139 = pneg %p138
    $region22: #{d2qn_forward.5} parent=5 // pred_check_branch
      %141 = sbr.rel (%p139) target = $region24
    $region23: #{d2qn_forward.5} parent=5 // pred_region
      // Predicated region
      $region25: #{d2qn_forward.5} parent=23 // pred_check
        %p142 = pneg %p41
      $region26: #{d2qn_forward.5} parent=23 // pred_check_branch
        %144 = sbr.rel (%p142) target = $region28
      $region27: #{d2qn_forward.5} parent=23 // pred_region
        %p145 = scmp.lt.s32.totalorder %s17, 1
        %s146 = scalar_select %p145, %s17, 1
        %s147 = smul.addr %s146, 13
        %s148 = smul.addr %s147, 4
        %s149 = scalar_lea.vmem %s0, %s148
      $region28: #{d2qn_forward.5} parent=23 // pred_fallthru
        _
    $region24: #{d2qn_forward.5} parent=5 // pred_fallthru
      _
    %p150 = scmp.le.s32.totalorder 1, %s9
    %p151 = scmp.lt.s32.totalorder %s9, 3
    %p152 = pnand %p150, %p151
    %p153 = pneg %p152
    // Predicated region
    $region29: #{d2qn_forward.5} parent=5 // pred_check
      _
    $region30: #{d2qn_forward.5} parent=5 // pred_check_branch
      %155 = sbr.rel (%p152) target = $region32
    $region31: #{d2qn_forward.5} parent=5 // pred_region
      %s156 = ssub.s32 %s9, 1
      %p157 = scmp.lt.s32.totalorder %s19, 1
      %s158 = scalar_select %p157, %s19, 1
      %s159 = smul.addr %s158, 13
      %s160 = smul.addr %s159, 4
      %s161 = scalar_lea.vmem %s0, %s160
      %p162 = pneg %p47
      %p163 = pneg %p44
      %p164 = pneg %p68
      %p165 = pneg %p65
      %p166 = pneg %p89
      %p167 = pneg %p86
      %p168 = pneg %p117
      %p169 = pneg %p114
      %p170 = scmp.lt.s32.totalorder %s18, 0
      %s171 = scalar_select %p170, %s18, 0
      %p172 = scmp.lt.s32.totalorder %s19, 1
      %s173 = scalar_select %p172, %s19, 1
      %s174 = smul.addr %s173, 13
      %s175 = smul.addr %s171, 26
      %s176 = sadd.s32 %s174, %s175
      %s177 = smul.addr %s176, 4
      %s178 = scalar_lea.vmem %s3, %s177
      %p179 = scmp.lt.s32.totalorder %s19, 1
      %s180 = scalar_select %p179, %s19, 1
      %s181 = smul.addr %s180, 13
      %s182 = smul.addr %s181, 4
      %s183 = scalar_lea.vmem %s0, %s182
      %p184 = scmp.lt.s32.totalorder %s18, 0
      %s185 = scalar_select %p184, %s18, 0
      %p186 = scmp.lt.s32.totalorder %s19, 1
      %s187 = scalar_select %p186, %s19, 1
      %s188 = smul.addr %s187, 13
      %s189 = smul.addr %s185, 26
      %s190 = sadd.s32 %s188, %s189
      %s191 = smul.addr %s190, 4
      %s192 = scalar_lea.vmem %s3, %s191
      %v194 = vld [vmem:[%s183] sm:$0xf]
      %v195 = vld [vmem:[%s183 + $0x4] sm:$0xf]
      %v196 = vld [vmem:[%s183 + $0x8] sm:$0xf]
      %v197 = vld [vmem:[%s183 + $0xc] sm:$0xf]
      %v198 = vld [vmem:[%s183 + $0x10] sm:$0xf]
      %v199 = vld [vmem:[%s183 + $0x14] sm:$0xf]
      %v200 = vld [vmem:[%s183 + $0x18] sm:$0xf]
      %v201 = vld [vmem:[%s183 + $0x1c] sm:$0xf]
      %v202 = vld [vmem:[%s183 + $0x20] sm:$0xf]
      %v203 = vld [vmem:[%s183 + $0x24] sm:$0xf]
      %v204 = vld [vmem:[%s183 + $0x28] sm:$0xf]
      %v205 = vld [vmem:[%s183 + $0x2c] sm:$0x1]
      %v206 = vld [vmem:[%s1] sm:$0xf]
      %v207 = vld [vmem:[%s1 + $0x4] sm:$0xf]
      %v208 = vld [vmem:[%s1 + $0x8] sm:$0xf]
      %v209 = vld [vmem:[%s1 + $0xc] sm:$0xf]
      %v210 = vld [vmem:[%s1 + $0x10] sm:$0xf]
      %v211 = vld [vmem:[%s1 + $0x14] sm:$0xf]
      %v212 = vld [vmem:[%s1 + $0x18] sm:$0xf]
      %v213 = vld [vmem:[%s1 + $0x1c] sm:$0xf]
      %v214 = vld [vmem:[%s1 + $0x20] sm:$0xf]
      %v215 = vld [vmem:[%s1 + $0x24] sm:$0xf]
      %v216 = vld [vmem:[%s1 + $0x28] sm:$0xf]
      %v217 = vld [vmem:[%s1 + $0x2c] sm:$0xf]
      %v218 = vld [vmem:[%s1 + $0x30] sm:$0xf]
      %v219 = vld [vmem:[%s1 + $0x34] sm:$0xf]
      %v220 = vld [vmem:[%s1 + $0x38] sm:$0xf]
      %v221 = vld [vmem:[%s1 + $0x3c] sm:$0xf]
      %s222 = scalar_lea.vmem %s1, 64
      %v223 = vld [vmem:[%s222] sm:$0xf]
      %v224 = vld [vmem:[%s222 + $0x4] sm:$0xf]
      %v225 = vld [vmem:[%s222 + $0x8] sm:$0xf]
      %v226 = vld [vmem:[%s222 + $0xc] sm:$0xf]
      %v227 = vld [vmem:[%s222 + $0x10] sm:$0xf]
      %v228 = vld [vmem:[%s222 + $0x14] sm:$0xf]
      %v229 = vld [vmem:[%s222 + $0x18] sm:$0xf]
      %v230 = vld [vmem:[%s222 + $0x1c] sm:$0xf]
      %v231 = vld [vmem:[%s222 + $0x20] sm:$0xf]
      %v232 = vld [vmem:[%s222 + $0x24] sm:$0xf]
      %v233 = vld [vmem:[%s222 + $0x28] sm:$0xf]
      %v234 = vld [vmem:[%s222 + $0x2c] sm:$0xf]
      %v235 = vld [vmem:[%s222 + $0x30] sm:$0xf]
      %v236 = vld [vmem:[%s222 + $0x34] sm:$0xf]
      %v237 = vld [vmem:[%s222 + $0x38] sm:$0xf]
      %v238 = vld [vmem:[%s222 + $0x3c] sm:$0xf]
      %v251 = vunpack.c.l.b16 %v194
      %v252 = vunpack.c.l.b16 %v195
      %v253 = vunpack.c.l.b16 %v196
      %v254 = vunpack.c.l.b16 %v197
      %v255 = vunpack.c.l.b16 %v198
      %v256 = vunpack.c.l.b16 %v199
      %v257 = vunpack.c.l.b16 %v200
      %v258 = vunpack.c.l.b16 %v201
      %v259 = vunpack.c.l.b16 %v202
      %v260 = vunpack.c.l.b16 %v203
      %v261 = vunpack.c.l.b16 %v204
      %v262 = vunpack.c.l.b16 %v205
      %v263 = vpack.c.b16 %v252, %v251
      %v264 = vpack.c.b16 %v254, %v253
      %v265 = vpack.c.b16 %v256, %v255
      %v266 = vpack.c.b16 %v258, %v257
      %v267 = vpack.c.b16 %v260, %v259
      %v268 = vpack.c.b16 %v262, %v261
      %vm269 = vsmask.f32 7424
      %v271 = vshrl.u32 %v263, 16
      %v273 = vshll.u32 %v263, 16
      %v275 = vrot.slane %v273, 1
      %v276 = vor.u32 %v271, %v275
      %v278 = vshll.u32 %v264, 16
      %v280 = vrot.slane %v278, 1
      %v281 = vsel %vm269, %v276, %v280
      %v282 = vshrl.u32 %v264, 16
      %v284 = vor.u32 %v282, %v280
      %v286 = vshll.u32 %v265, 16
      %v288 = vrot.slane %v286, 1
      %v289 = vsel %vm269, %v284, %v288
      %v290 = vshrl.u32 %v265, 16
      %v292 = vor.u32 %v290, %v288
      %v294 = vshll.u32 %v266, 16
      %v296 = vrot.slane %v294, 1
      %v297 = vsel %vm269, %v292, %v296
      %v298 = vshrl.u32 %v266, 16
      %v300 = vor.u32 %v298, %v296
      %v302 = vshll.u32 %v267, 16
      %v304 = vrot.slane %v302, 1
      %v305 = vsel %vm269, %v300, %v304
      %v306 = vshrl.u32 %v267, 16
      %v308 = vor.u32 %v306, %v304
      %v310 = vshll.u32 %v268, 16
      %v312 = vrot.slane %v310, 1
      %v313 = vsel %vm269, %v308, %v312
      %v314 = vshrl.u32 %v268, 16
      %v316 = vor.u32 %v314, %v312
      %v339 = vunpack.c.l.b16 %v223
      %v340 = vunpack.c.l.b16 %v224
      %v341 = vunpack.c.l.b16 %v225
      %v342 = vunpack.c.l.b16 %v226
      %v343 = vunpack.c.l.b16 %v227
      %v344 = vunpack.c.l.b16 %v228
      %v345 = vunpack.c.l.b16 %v229
      %v346 = vunpack.c.l.b16 %v230
      %v347 = vunpack.c.l.b16 %v231
      %v348 = vunpack.c.l.b16 %v232
      %v349 = vunpack.c.l.b16 %v233
      %v350 = vunpack.c.l.b16 %v234
      %v351 = vunpack.c.l.b16 %v235
      %v352 = vunpack.c.l.b16 %v236
      %v353 = vunpack.c.l.b16 %v237
      %v354 = vunpack.c.l.b16 %v238
      %v355 = vpack.c.b16 %v340, %v339
      %v356 = vpack.c.b16 %v342, %v341
      %v357 = vpack.c.b16 %v344, %v343
      %v358 = vpack.c.b16 %v346, %v345
      %v359 = vpack.c.b16 %v348, %v347
      %v360 = vpack.c.b16 %v350, %v349
      %v361 = vpack.c.b16 %v352, %v351
      %v362 = vpack.c.b16 %v354, %v353
      %371 = vmatpush.bf16.msra.mxu0 %v362
      %372 = vmatpush.bf16.msra.mxu0 %v361
      %373 = vmatpush.bf16.msra.mxu0 %v360
      %374 = vmatpush.bf16.msra.mxu0 %v359
      %375 = vmatpush.bf16.msra.mxu0 %v358
      %376 = vmatpush.bf16.msra.mxu0 %v357
      %377 = vmatpush.bf16.msra.mxu0 %v356
      %378 = vmatpush.bf16.msra.mxu0 %v355
      %379 = vmatmul.bf16.gmra.mxu0 %v281
      %v380 = vpop.f32.mrf.mxu0
      %v381 = vadd.f32 0.0, %v380
      %v382 = vpop.f32.mrf.mxu0
      %v383 = vadd.f32 0.0, %v382
      %384 = vmatmul.bf16.gmra.mxu0 %v289
      %v385 = vpop.f32.mrf.mxu0
      %v386 = vadd.f32 0.0, %v385
      %v387 = vpop.f32.mrf.mxu0
      %v388 = vadd.f32 0.0, %v387
      %389 = vmatmul.bf16.gmra.mxu0 %v297
      %v390 = vpop.f32.mrf.mxu0
      %v391 = vadd.f32 0.0, %v390
      %v392 = vpop.f32.mrf.mxu0
      %v393 = vadd.f32 0.0, %v392
      %394 = vmatmul.bf16.gmra.mxu0 %v305
      %v395 = vpop.f32.mrf.mxu0
      %v396 = vadd.f32 0.0, %v395
      %v397 = vpop.f32.mrf.mxu0
      %v398 = vadd.f32 0.0, %v397
      %399 = vmatmul.bf16.gmra.mxu0 %v313
      %v400 = vpop.f32.mrf.mxu0
      %v401 = vadd.f32 0.0, %v400
      %v402 = vpop.f32.mrf.mxu0
      %v403 = vadd.f32 0.0, %v402
      %404 = vmatmul.bf16.gmra.mxu0 %v316
      %v405 = vpop.f32.mrf.mxu0
      %v406 = vadd.f32 0.0, %v405
      %v407 = vpop.f32.mrf.mxu0
      %v408 = vadd.f32 0.0, %v407
      %409 = vdwg.mxu0
      %v432 = vunpack.c.l.b16 %v206
      %v433 = vunpack.c.l.b16 %v207
      %v434 = vunpack.c.l.b16 %v208
      %v435 = vunpack.c.l.b16 %v209
      %v436 = vunpack.c.l.b16 %v210
      %v437 = vunpack.c.l.b16 %v211
      %v438 = vunpack.c.l.b16 %v212
      %v439 = vunpack.c.l.b16 %v213
      %v440 = vunpack.c.l.b16 %v214
      %v441 = vunpack.c.l.b16 %v215
      %v442 = vunpack.c.l.b16 %v216
      %v443 = vunpack.c.l.b16 %v217
      %v444 = vunpack.c.l.b16 %v218
      %v445 = vunpack.c.l.b16 %v219
      %v446 = vunpack.c.l.b16 %v220
      %v447 = vunpack.c.l.b16 %v221
      %v448 = vpack.c.b16 %v433, %v432
      %v449 = vpack.c.b16 %v435, %v434
      %v450 = vpack.c.b16 %v437, %v436
      %v451 = vpack.c.b16 %v439, %v438
      %v452 = vpack.c.b16 %v441, %v440
      %v453 = vpack.c.b16 %v443, %v442
      %v454 = vpack.c.b16 %v445, %v444
      %v455 = vpack.c.b16 %v447, %v446
      %464 = vmatpush.bf16.msra.mxu0 %v455
      %465 = vmatpush.bf16.msra.mxu0 %v454
      %466 = vmatpush.bf16.msra.mxu0 %v453
      %467 = vmatpush.bf16.msra.mxu0 %v452
      %468 = vmatpush.bf16.msra.mxu0 %v451
      %469 = vmatpush.bf16.msra.mxu0 %v450
      %470 = vmatpush.bf16.msra.mxu0 %v449
      %471 = vmatpush.bf16.msra.mxu0 %v448
      %472 = vmatmul.bf16.gmra.mxu0 %v263
      %v473 = vpop.f32.mrf.mxu0
      %v474 = vadd.f32 %v381, %v473
      %v475 = vpop.f32.mrf.mxu0
      %v476 = vadd.f32 %v383, %v475
      %477 = vmatmul.bf16.gmra.mxu0 %v264
      %v478 = vpop.f32.mrf.mxu0
      %v479 = vadd.f32 %v386, %v478
      %v480 = vpop.f32.mrf.mxu0
      %v481 = vadd.f32 %v388, %v480
      %482 = vmatmul.bf16.gmra.mxu0 %v265
      %v483 = vpop.f32.mrf.mxu0
      %v484 = vadd.f32 %v391, %v483
      %v485 = vpop.f32.mrf.mxu0
      %v486 = vadd.f32 %v393, %v485
      %487 = vmatmul.bf16.gmra.mxu0 %v266
      %v488 = vpop.f32.mrf.mxu0
      %v489 = vadd.f32 %v396, %v488
      %v490 = vpop.f32.mrf.mxu0
      %v491 = vadd.f32 %v398, %v490
      %492 = vmatmul.bf16.gmra.mxu0 %v267
      %v493 = vpop.f32.mrf.mxu0
      %v494 = vadd.f32 %v401, %v493
      %v495 = vpop.f32.mrf.mxu0
      %v496 = vadd.f32 %v403, %v495
      %497 = vmatmul.bf16.gmra.mxu0 %v268
      %v498 = vpop.f32.mrf.mxu0
      %v499 = vadd.f32 %v406, %v498
      %v500 = vpop.f32.mrf.mxu0
      %v501 = vadd.f32 %v408, %v500
      %502 = vdwg.mxu0
      %v503 = vld [vmem:[%s183 + $0x4] sm:$0xe]
      %v504 = vld [vmem:[%s183 + $0x8] sm:$0xf]
      %v505 = vld [vmem:[%s183 + $0xc] sm:$0xf]
      %v506 = vld [vmem:[%s183 + $0x10] sm:$0xf]
      %v507 = vld [vmem:[%s183 + $0x14] sm:$0xf]
      %v508 = vld [vmem:[%s183 + $0x18] sm:$0xf]
      %v509 = vld [vmem:[%s183 + $0x1c] sm:$0xf]
      %v510 = vld [vmem:[%s183 + $0x20] sm:$0xf]
      %v511 = vld [vmem:[%s183 + $0x24] sm:$0xf]
      %v512 = vld [vmem:[%s183 + $0x28] sm:$0xf]
      %v513 = vld [vmem:[%s183 + $0x2c] sm:$0xf]
      %v514 = vld [vmem:[%s183 + $0x30] sm:$0x3]
      %s515 = scalar_lea.vmem %s1, 128
      %v516 = vld [vmem:[%s515] sm:$0xf]
      %v517 = vld [vmem:[%s515 + $0x4] sm:$0xf]
      %v518 = vld [vmem:[%s515 + $0x8] sm:$0xf]
      %v519 = vld [vmem:[%s515 + $0xc] sm:$0xf]
      %v520 = vld [vmem:[%s515 + $0x10] sm:$0xf]
      %v521 = vld [vmem:[%s515 + $0x14] sm:$0xf]
      %v522 = vld [vmem:[%s515 + $0x18] sm:$0xf]
      %v523 = vld [vmem:[%s515 + $0x1c] sm:$0xf]
      %v524 = vld [vmem:[%s515 + $0x20] sm:$0xf]
      %v525 = vld [vmem:[%s515 + $0x24] sm:$0xf]
      %v526 = vld [vmem:[%s515 + $0x28] sm:$0xf]
      %v527 = vld [vmem:[%s515 + $0x2c] sm:$0xf]
      %v528 = vld [vmem:[%s515 + $0x30] sm:$0xf]
      %v529 = vld [vmem:[%s515 + $0x34] sm:$0xf]
      %v530 = vld [vmem:[%s515 + $0x38] sm:$0xf]
      %v531 = vld [vmem:[%s515 + $0x3c] sm:$0xf]
      %v544 = vunpack.c.l.b16 %v503
      %v545 = vunpack.c.l.b16 %v504
      %v546 = vunpack.c.l.b16 %v505
      %v547 = vunpack.c.l.b16 %v506
      %v548 = vunpack.c.l.b16 %v507
      %v549 = vunpack.c.l.b16 %v508
      %v550 = vunpack.c.l.b16 %v509
      %v551 = vunpack.c.l.b16 %v510
      %v552 = vunpack.c.l.b16 %v511
      %v553 = vunpack.c.l.b16 %v512
      %v554 = vunpack.c.l.b16 %v513
      %v555 = vunpack.c.l.b16 %v514
      %v556 = vpack.c.b16 %v545, %v544
      %v557 = vpack.c.b16 %v547, %v546
      %v558 = vpack.c.b16 %v549, %v548
      %v559 = vpack.c.b16 %v551, %v550
      %v560 = vpack.c.b16 %v553, %v552
      %v561 = vpack.c.b16 %v555, %v554
      %vm562 = vcmask 1046528
      %v563 = vrot.slane %v556, 1
      %v564 = vrot.slane %v557, 1
      %v565 = vsel %vm562, %v563, %v564
      %v566 = vrot.slane %v558, 1
      %v567 = vsel %vm562, %v564, %v566
      %v568 = vrot.slane %v559, 1
      %v569 = vsel %vm562, %v566, %v568
      %v570 = vrot.slane %v560, 1
      %v571 = vsel %vm562, %v568, %v570
      %v572 = vrot.slane %v561, 1
      %v573 = vsel %vm562, %v570, %v572
      %v596 = vunpack.c.l.b16 %v516
      %v597 = vunpack.c.l.b16 %v517
      %v598 = vunpack.c.l.b16 %v518
      %v599 = vunpack.c.l.b16 %v519
      %v600 = vunpack.c.l.b16 %v520
      %v601 = vunpack.c.l.b16 %v521
      %v602 = vunpack.c.l.b16 %v522
      %v603 = vunpack.c.l.b16 %v523
      %v604 = vunpack.c.l.b16 %v524
      %v605 = vunpack.c.l.b16 %v525
      %v606 = vunpack.c.l.b16 %v526
      %v607 = vunpack.c.l.b16 %v527
      %v608 = vunpack.c.l.b16 %v528
      %v609 = vunpack.c.l.b16 %v529
      %v610 = vunpack.c.l.b16 %v530
      %v611 = vunpack.c.l.b16 %v531
      %v612 = vpack.c.b16 %v597, %v596
      %v613 = vpack.c.b16 %v599, %v598
      %v614 = vpack.c.b16 %v601, %v600
      %v615 = vpack.c.b16 %v603, %v602
      %v616 = vpack.c.b16 %v605, %v604
      %v617 = vpack.c.b16 %v607, %v606
      %v618 = vpack.c.b16 %v609, %v608
      %v619 = vpack.c.b16 %v611, %v610
      %628 = vmatpush.bf16.msra.mxu0 %v619
      %629 = vmatpush.bf16.msra.mxu0 %v618
      %630 = vmatpush.bf16.msra.mxu0 %v617
      %631 = vmatpush.bf16.msra.mxu0 %v616
      %632 = vmatpush.bf16.msra.mxu0 %v615
      %633 = vmatpush.bf16.msra.mxu0 %v614
      %634 = vmatpush.bf16.msra.mxu0 %v613
      %635 = vmatpush.bf16.msra.mxu0 %v612
      %636 = vmatmul.bf16.gmra.mxu0 %v565
      %v637 = vpop.f32.mrf.mxu0
      %v638 = vadd.f32 0.0, %v637
      %v639 = vpop.f32.mrf.mxu0
      %v640 = vadd.f32 0.0, %v639
      %641 = vmatmul.bf16.gmra.mxu0 %v567
      %v642 = vpop.f32.mrf.mxu0
      %v643 = vadd.f32 0.0, %v642
      %v644 = vpop.f32.mrf.mxu0
      %v645 = vadd.f32 0.0, %v644
      %646 = vmatmul.bf16.gmra.mxu0 %v569
      %v647 = vpop.f32.mrf.mxu0
      %v648 = vadd.f32 0.0, %v647
      %v649 = vpop.f32.mrf.mxu0
      %v650 = vadd.f32 0.0, %v649
      %651 = vmatmul.bf16.gmra.mxu0 %v571
      %v652 = vpop.f32.mrf.mxu0
      %v653 = vadd.f32 0.0, %v652
      %v654 = vpop.f32.mrf.mxu0
      %v655 = vadd.f32 0.0, %v654
      %656 = vmatmul.bf16.gmra.mxu0 %v573
      %v657 = vpop.f32.mrf.mxu0
      %v658 = vadd.f32 0.0, %v657
      %v659 = vpop.f32.mrf.mxu0
      %v660 = vadd.f32 0.0, %v659
      %661 = vmatmul.bf16.gmra.mxu0 %v572
      %v662 = vpop.f32.mrf.mxu0
      %v663 = vadd.f32 0.0, %v662
      %v664 = vpop.f32.mrf.mxu0
      %v665 = vadd.f32 0.0, %v664
      %666 = vdwg.mxu0
      %v667 = vadd.f32 %v474, %v638
      %v668 = vadd.f32 %v476, %v640
      %v669 = vadd.f32 %v479, %v643
      %v670 = vadd.f32 %v481, %v645
      %v671 = vadd.f32 %v484, %v648
      %v672 = vadd.f32 %v486, %v650
      %v673 = vadd.f32 %v489, %v653
      %v674 = vadd.f32 %v491, %v655
      %v675 = vadd.f32 %v494, %v658
      %v676 = vadd.f32 %v496, %v660
      %v677 = vadd.f32 %v499, %v663
      %v678 = vadd.f32 %v501, %v665
      %s679 = scalar_lea.vmem %s1, 192
      %v680 = vld [vmem:[%s679] sm:$0xf]
      %v681 = vld [vmem:[%s679 + $0x4] sm:$0xf]
      %v682 = vld [vmem:[%s679 + $0x8] sm:$0xf]
      %v683 = vld [vmem:[%s679 + $0xc] sm:$0xf]
      %v684 = vld [vmem:[%s679 + $0x10] sm:$0xf]
      %v685 = vld [vmem:[%s679 + $0x14] sm:$0xf]
      %v686 = vld [vmem:[%s679 + $0x18] sm:$0xf]
      %v687 = vld [vmem:[%s679 + $0x1c] sm:$0xf]
      %v688 = vld [vmem:[%s679 + $0x20] sm:$0xf]
      %v689 = vld [vmem:[%s679 + $0x24] sm:$0xf]
      %v690 = vld [vmem:[%s679 + $0x28] sm:$0xf]
      %v691 = vld [vmem:[%s679 + $0x2c] sm:$0xf]
      %v692 = vld [vmem:[%s679 + $0x30] sm:$0xf]
      %v693 = vld [vmem:[%s679 + $0x34] sm:$0xf]
      %v694 = vld [vmem:[%s679 + $0x38] sm:$0xf]
      %v695 = vld [vmem:[%s679 + $0x3c] sm:$0xf]
      %vm696 = vsmask.f32 6400
      %v698 = vshrl.u32 %v556, 16
      %v700 = vrot.slane %v698, 1
      %v701 = vshll.u32 %v556, 16
      %v703 = vrot.slane %v701, 2
      %v704 = vor.u32 %v700, %v703
      %v706 = vshrl.u32 %v557, 16
      %v708 = vrot.slane %v706, 1
      %v709 = vshll.u32 %v557, 16
      %v711 = vrot.slane %v709, 2
      %v712 = vor.u32 %v708, %v711
      %v713 = vsel %vm696, %v704, %v712
      %v715 = vshrl.u32 %v558, 16
      %v717 = vrot.slane %v715, 1
      %v718 = vshll.u32 %v558, 16
      %v720 = vrot.slane %v718, 2
      %v721 = vor.u32 %v717, %v720
      %v722 = vsel %vm696, %v712, %v721
      %v724 = vshrl.u32 %v559, 16
      %v726 = vrot.slane %v724, 1
      %v727 = vshll.u32 %v559, 16
      %v729 = vrot.slane %v727, 2
      %v730 = vor.u32 %v726, %v729
      %v731 = vsel %vm696, %v721, %v730
      %v733 = vshrl.u32 %v560, 16
      %v735 = vrot.slane %v733, 1
      %v736 = vshll.u32 %v560, 16
      %v738 = vrot.slane %v736, 2
      %v739 = vor.u32 %v735, %v738
      %v740 = vsel %vm696, %v730, %v739
      %v742 = vshrl.u32 %v561, 16
      %v744 = vrot.slane %v742, 1
      %v745 = vshll.u32 %v561, 16
      %v747 = vrot.slane %v745, 2
      %v748 = vor.u32 %v744, %v747
      %v749 = vsel %vm696, %v739, %v748
      %v772 = vunpack.c.l.b16 %v680
      %v773 = vunpack.c.l.b16 %v681
      %v774 = vunpack.c.l.b16 %v682
      %v775 = vunpack.c.l.b16 %v683
      %v776 = vunpack.c.l.b16 %v684
      %v777 = vunpack.c.l.b16 %v685
      %v778 = vunpack.c.l.b16 %v686
      %v779 = vunpack.c.l.b16 %v687
      %v780 = vunpack.c.l.b16 %v688
      %v781 = vunpack.c.l.b16 %v689
      %v782 = vunpack.c.l.b16 %v690
      %v783 = vunpack.c.l.b16 %v691
      %v784 = vunpack.c.l.b16 %v692
      %v785 = vunpack.c.l.b16 %v693
      %v786 = vunpack.c.l.b16 %v694
      %v787 = vunpack.c.l.b16 %v695
      %v788 = vpack.c.b16 %v773, %v772
      %v789 = vpack.c.b16 %v775, %v774
      %v790 = vpack.c.b16 %v777, %v776
      %v791 = vpack.c.b16 %v779, %v778
      %v792 = vpack.c.b16 %v781, %v780
      %v793 = vpack.c.b16 %v783, %v782
      %v794 = vpack.c.b16 %v785, %v784
      %v795 = vpack.c.b16 %v787, %v786
      %804 = vmatpush.bf16.msra.mxu0 %v795
      %805 = vmatpush.bf16.msra.mxu0 %v794
      %806 = vmatpush.bf16.msra.mxu0 %v793
      %807 = vmatpush.bf16.msra.mxu0 %v792
      %808 = vmatpush.bf16.msra.mxu0 %v791
      %809 = vmatpush.bf16.msra.mxu0 %v790
      %810 = vmatpush.bf16.msra.mxu0 %v789
      %811 = vmatpush.bf16.msra.mxu0 %v788
      %812 = vmatmul.bf16.gmra.mxu0 %v713
      %v813 = vpop.f32.mrf.mxu0
      %v814 = vadd.f32 0.0, %v813
      %v815 = vpop.f32.mrf.mxu0
      %v816 = vadd.f32 0.0, %v815
      %817 = vmatmul.bf16.gmra.mxu0 %v722
      %v818 = vpop.f32.mrf.mxu0
      %v819 = vadd.f32 0.0, %v818
      %v820 = vpop.f32.mrf.mxu0
      %v821 = vadd.f32 0.0, %v820
      %822 = vmatmul.bf16.gmra.mxu0 %v731
      %v823 = vpop.f32.mrf.mxu0
      %v824 = vadd.f32 0.0, %v823
      %v825 = vpop.f32.mrf.mxu0
      %v826 = vadd.f32 0.0, %v825
      %827 = vmatmul.bf16.gmra.mxu0 %v740
      %v828 = vpop.f32.mrf.mxu0
      %v829 = vadd.f32 0.0, %v828
      %v830 = vpop.f32.mrf.mxu0
      %v831 = vadd.f32 0.0, %v830
      %832 = vmatmul.bf16.gmra.mxu0 %v749
      %v833 = vpop.f32.mrf.mxu0
      %v834 = vadd.f32 0.0, %v833
      %v835 = vpop.f32.mrf.mxu0
      %v836 = vadd.f32 0.0, %v835
      %837 = vmatmul.bf16.gmra.mxu0 %v748
      %v838 = vpop.f32.mrf.mxu0
      %v839 = vadd.f32 0.0, %v838
      %v840 = vpop.f32.mrf.mxu0
      %v841 = vadd.f32 0.0, %v840
      %842 = vdwg.mxu0
      %v843 = vadd.f32 %v667, %v814
      %v844 = vadd.f32 %v668, %v816
      %v845 = vadd.f32 %v669, %v819
      %v846 = vadd.f32 %v670, %v821
      %v847 = vadd.f32 %v671, %v824
      %v848 = vadd.f32 %v672, %v826
      %v849 = vadd.f32 %v673, %v829
      %v850 = vadd.f32 %v674, %v831
      %v851 = vadd.f32 %v675, %v834
      %v852 = vadd.f32 %v676, %v836
      %v853 = vadd.f32 %v677, %v839
      %v854 = vadd.f32 %v678, %v841
      %v855 = vld [vmem:[%s2] sm:$0x1]
      %v857 = vperm.slane %v855, 0
      %v859 = vadd.f32 %v843, %v857
      %v860 = vadd.f32 %v844, %v857
      %v861 = vadd.f32 %v845, %v857
      %v862 = vadd.f32 %v846, %v857
      %v863 = vadd.f32 %v847, %v857
      %v864 = vadd.f32 %v848, %v857
      %v865 = vadd.f32 %v849, %v857
      %v866 = vadd.f32 %v850, %v857
      %v867 = vadd.f32 %v851, %v857
      %v868 = vadd.f32 %v852, %v857
      %v869 = vadd.f32 %v853, %v857
      %v870 = vadd.f32 %v854, %v857
      %v871 = vmax.f32 %v859, 0.0
      %v872 = vmax.f32 %v860, 0.0
      %v873 = vmax.f32 %v861, 0.0
      %v874 = vmax.f32 %v862, 0.0
      %v875 = vmax.f32 %v863, 0.0
      %v876 = vmax.f32 %v864, 0.0
      %v877 = vmax.f32 %v865, 0.0
      %v878 = vmax.f32 %v866, 0.0
      %v879 = vmax.f32 %v867, 0.0
      %v880 = vmax.f32 %v868, 0.0
      %v881 = vmax.f32 %v869, 0.0
      %v882 = vmax.f32 %v870, 0.0
      %v883 = vpack.c.bf16 %v871, %v871
      %v884 = vpack.c.bf16 %v872, %v872
      %v885 = vpack.c.bf16 %v873, %v873
      %v886 = vpack.c.bf16 %v874, %v874
      %v887 = vpack.c.bf16 %v875, %v875
      %v888 = vpack.c.bf16 %v876, %v876
      %v889 = vpack.c.bf16 %v877, %v877
      %v890 = vpack.c.bf16 %v878, %v878
      %v891 = vpack.c.bf16 %v879, %v879
      %v892 = vpack.c.bf16 %v880, %v880
      %v893 = vpack.c.bf16 %v881, %v881
      %v894 = vpack.c.bf16 %v882, %v882
      %vm895 = vcmask 519168
      %896 = vst.msk [vmem:[%s192] sm:$0xf] %vm895, %v883
      %897 = vst.msk [vmem:[%s192 + $0x4] sm:$0xf] %vm895, %v884
      %898 = vst.msk [vmem:[%s192 + $0x8] sm:$0xf] %vm895, %v885
      %899 = vst.msk [vmem:[%s192 + $0xc] sm:$0xf] %vm895, %v886
      %900 = vst.msk [vmem:[%s192 + $0x10] sm:$0xf] %vm895, %v887
      %901 = vst.msk [vmem:[%s192 + $0x14] sm:$0xf] %vm895, %v888
      %902 = vst.msk [vmem:[%s192 + $0x18] sm:$0xf] %vm895, %v889
      %903 = vst.msk [vmem:[%s192 + $0x1c] sm:$0xf] %vm895, %v890
      %904 = vst.msk [vmem:[%s192 + $0x20] sm:$0xf] %vm895, %v891
      %905 = vst.msk [vmem:[%s192 + $0x24] sm:$0xf] %vm895, %v892
      %906 = vst.msk [vmem:[%s192 + $0x28] sm:$0xf] %vm895, %v893
      %vm907 = vcmask 516096
      %vm908 = vsmask.f32 256
      %vm909 = vmand %vm907, %vm908
      %v910 = vld [vmem:[%s192 + $0x2c] sm:$0x1]
      %v911 = vsel %vm909, %v894, %v910
      %912 = vst [vmem:[%s192 + $0x2c] sm:$0x1] %v911
      %vm913 = vcmask 519168
      %vm914 = vsmask.f32 7938
      %vm915 = vmand %vm913, %vm914
      %v916 = vld [vmem:[%s192 + $0x2c] sm:$0xf]
      %v917 = vsel %vm915, 0, %v916
      %918 = vst [vmem:[%s192 + $0x2c] sm:$0xf] %v917
      %vm919 = vcmask 517120
      %920 = vst.msk [vmem:[%s192 + $0x30] sm:$0x3] %vm919, 0
      %p921 = scmp.lt.s32.totalorder %s18, 0
      %s922 = scalar_select %p921, %s18, 0
      %p923 = scmp.lt.s32.totalorder %s19, 1
      %s924 = scalar_select %p923, %s19, 1
      %s925 = smul.addr %s924, 13
      %s926 = smul.addr %s922, 26
      %s927 = sadd.s32 %s925, %s926
      %s928 = smul.addr %s927, 4
      %s929 = scalar_lea.vmem %s3, %s928
      // Predicated region
      $region33: #{d2qn_forward.5} parent=31 // pred_check
        %p930 = pneg %p114
      $region34: #{d2qn_forward.5} parent=31 // pred_check_branch
        %932 = sbr.rel (%p930) target = $region36
      $region35: #{d2qn_forward.5} parent=31 // pred_region
        _
      $region36: #{d2qn_forward.5} parent=31 // pred_fallthru
        _
    $region32: #{d2qn_forward.5} parent=5 // pred_fallthru
      _
    %p933 = scmp.le.s32.totalorder 2, %s9
    // Predicated region
    $region37: #{d2qn_forward.5} parent=5 // pred_check
      %p934 = pneg %p933
    $region38: #{d2qn_forward.5} parent=5 // pred_check_branch
      %936 = sbr.rel (%p934) target = $region40
    $region39: #{d2qn_forward.5} parent=5 // pred_region
      %s937 = ssub.s32 %s9, 2
      // Predicated region
      $region41: #{d2qn_forward.5} parent=39 // pred_check
        %p938 = pneg %p120
      $region42: #{d2qn_forward.5} parent=39 // pred_check_branch
        %940 = sbr.rel (%p938) target = $region44
      $region43: #{d2qn_forward.5} parent=39 // pred_region
        %p941 = scmp.lt.s32.totalorder %s20, 0
        %s942 = scalar_select %p941, %s20, 0
        %p943 = scmp.lt.s32.totalorder %s21, 1
        %s944 = scalar_select %p943, %s21, 1
        %s945 = smul.addr %s944, 13
        %s946 = smul.addr %s942, 26
        %s947 = sadd.s32 %s945, %s946
        %s948 = smul.addr %s947, 4
        %s949 = scalar_lea.vmem %s3, %s948
      $region44: #{d2qn_forward.5} parent=39 // pred_fallthru
        _
    $region40: #{d2qn_forward.5} parent=5 // pred_fallthru
      _
  $region6: #{d2qn_forward.5} parent=0 // loop_footer
    %s13 = sadd.s32 1, %s9
  $region7: #{d2qn_forward.5} parent=0 // loop_footer_branch
    %8 = sbr.rel target = $region3
  $region8: #{d2qn_forward.5} parent=0 // loop_exit
    _

// kernel: d2qn_forward.6
$region0: #{d2qn_forward.6}
  #allocation0 [shape = 'u32[]', space=smem, size = 0x4, offset = 0x4, fixed_abs, tag = 'smem constant byte address 0x4 - core index']
  #allocation1 [shape = 'u32[72,128]{1,0:T(1,128)}', space=vmem, size = 0x9000, scoped, tag = 'internal scratch']
  %s0 = inlined_call_operand.vmem [shape: bf16[1,2,81,64], index: 0, kind: input, shape index: {}]
  %s1 = inlined_call_operand.vmem [shape: bf16[2,9,64,64], index: 1, kind: input, shape index: {}]
  %s2 = inlined_call_operand.vmem [shape: f32[2,1,64], index: 2, kind: input, shape index: {}]
  %s3 = inlined_call_operand.vmem [shape: bf16[1,2,81,64], index: 3, kind: output, shape index: {}]
  %s4 = sld [smem:[#allocation0]]
  $region45: #{d2qn_forward.6} parent=0
    _
  %s6 = ssub.s32 1, %s4
  %s7 = scalar_select 0, %s6, %s4
  loop: start=0, step=1, limit=4
  $region2: #{d2qn_forward.6} parent=0 // loop_pre_header
    _
  $region3: #{d2qn_forward.6} parent=0 // loop_header
    %s9 = sphi 0, %s13
    %p10 = scmp.ge.s32.totalorder %s9, 4
    %s16 = sphi 0, %s28
    %s17 = sphi 0, %s24
    %s18 = sphi 0, %s16
    %s19 = sphi 0, %s17
    %s20 = sphi 0, %s18
    %s21 = sphi 0, %s19
    %s31 = sphi 0, %s33
    %s34 = sphi 0, %s31
    %s35 = sphi 0, %s34
    %s51 = sphi 0, %s35
    %s55 = sphi 0, %s55
    %s57 = sphi 0, %s55
    %s58 = sphi 0, %s57
    %s72 = sphi 0, %s58
    %s76 = sphi 0, %s76
    %s78 = sphi 0, %s76
    %s79 = sphi 0, %s78
    %s93 = sphi 0, %s79
    %s101 = sphi 0, %s103
    %s104 = sphi 0, %s101
    %s105 = sphi 0, %s104
    %s121 = sphi 0, %s105
  $region4: #{d2qn_forward.6} parent=0 // loop_header_branch
    %12 = sbr.rel (%p10) target = $region8
  $region5: #{d2qn_forward.6} parent=0 // loop_body
    %s14 = ssub.s32 %s9, 1
    %s15 = ssub.s32 %s9, 2
    %s22 = sadd.s32 1, %s17
    %p23 = scmp.ge.s32.totalorder %s22, 2
    %s24 = scalar_select %p23, 0, %s22
    %s25 = sadd.s32 1, %s16
    %s26 = scalar_select %p23, %s25, %s16
    %p27 = scmp.ge.s32.totalorder %s26, 1
    %s28 = scalar_select %p27, 0, %s26
    %s29 = ssub.s32 %s17, %s24
    %p30 = scmp.eq.s32.totalorder %s29, 0
    %s32 = sadd.s32 %s31, 1
    %s33 = scalar_select %p30, %s31, %s32
    %p36 = pneg %p30
    %p37 = scmp.eq.s32.totalorder %s9, 1
    %p38 = por %p36, %p37
    %p39 = scmp.ne.s32.totalorder %s31, %s34
    %p40 = scmp.eq.s32.totalorder %s9, 0
    %p41 = por %p39, %p40
    %p42 = scmp.ne.s32.totalorder %s31, %s34
    %p43 = scmp.eq.s32.totalorder %s14, 1
    %p44 = por %p42, %p43
    %p45 = scmp.ne.s32.totalorder %s34, %s35
    %p46 = scmp.eq.s32.totalorder %s14, 0
    %p47 = por %p45, %p46
    %p48 = scmp.ne.s32.totalorder %s34, %s35
    %p49 = scmp.eq.s32.totalorder %s15, 1
    %p50 = por %p48, %p49
    %p52 = scmp.ne.s32.totalorder %s35, %s51
    %p53 = scmp.eq.s32.totalorder %s15, 0
    %p54 = por %p52, %p53
    %s56 = sadd.s32 %s55, 1
    %p59 = scmp.eq.s32.totalorder %s9, 1
    %p60 = scmp.ne.s32.totalorder %s55, %s57
    %p61 = scmp.eq.s32.totalorder %s9, 0
    %p62 = por %p60, %p61
    %p63 = scmp.ne.s32.totalorder %s55, %s57
    %p64 = scmp.eq.s32.totalorder %s14, 1
    %p65 = por %p63, %p64
    %p66 = scmp.ne.s32.totalorder %s57, %s58
    %p67 = scmp.eq.s32.totalorder %s14, 0
    %p68 = por %p66, %p67
    %p69 = scmp.ne.s32.totalorder %s57, %s58
    %p70 = scmp.eq.s32.totalorder %s15, 1
    %p71 = por %p69, %p70
    %p73 = scmp.ne.s32.totalorder %s58, %s72
    %p74 = scmp.eq.s32.totalorder %s15, 0
    %p75 = por %p73, %p74
    %s77 = sadd.s32 %s76, 1
    %p80 = scmp.eq.s32.totalorder %s9, 1
    %p81 = scmp.ne.s32.totalorder %s76, %s78
    %p82 = scmp.eq.s32.totalorder %s9, 0
    %p83 = por %p81, %p82
    %p84 = scmp.ne.s32.totalorder %s76, %s78
    %p85 = scmp.eq.s32.totalorder %s14, 1
    %p86 = por %p84, %p85
    %p87 = scmp.ne.s32.totalorder %s78, %s79
    %p88 = scmp.eq.s32.totalorder %s14, 0
    %p89 = por %p87, %p88
    %p90 = scmp.ne.s32.totalorder %s78, %s79
    %p91 = scmp.eq.s32.totalorder %s15, 1
    %p92 = por %p90, %p91
    %p94 = scmp.ne.s32.totalorder %s79, %s93
    %p95 = scmp.eq.s32.totalorder %s15, 0
    %p96 = por %p94, %p95
    %s97 = ssub.s32 %s16, %s28
    %s98 = ssub.s32 %s17, %s24
    %s99 = sor.u32 %s97, %s98
    %p100 = scmp.eq.s32.totalorder %s99, 0
    %s102 = sadd.s32 %s101, 1
    %s103 = scalar_select %p100, %s101, %s102
    %p106 = pneg %p100
    %p107 = scmp.eq.s32.totalorder %s9, 1
    %p108 = por %p106, %p107
    %p109 = scmp.ne.s32.totalorder %s101, %s104
    %p110 = scmp.eq.s32.totalorder %s9, 0
    %p111 = por %p109, %p110
    %p112 = scmp.ne.s32.totalorder %s101, %s104
    %p113 = scmp.eq.s32.totalorder %s14, 1
    %p114 = por %p112, %p113
    %p115 = scmp.ne.s32.totalorder %s104, %s105
    %p116 = scmp.eq.s32.totalorder %s14, 0
    %p117 = por %p115, %p116
    %p118 = scmp.ne.s32.totalorder %s104, %s105
    %p119 = scmp.eq.s32.totalorder %s15, 1
    %p120 = por %p118, %p119
    %p122 = scmp.ne.s32.totalorder %s105, %s121
    %p123 = scmp.eq.s32.totalorder %s15, 0
    %p124 = por %p122, %p123
    %p125 = scmp.le.s32.totalorder 1, %s9
    %p126 = scmp.lt.s32.totalorder %s9, 3
    %p127 = pnand %p125, %p126
    %p128 = pneg %p127
    // Predicated region
    $region9: #{d2qn_forward.6} parent=5 // pred_check
      _
    $region10: #{d2qn_forward.6} parent=5 // pred_check_branch
      %130 = sbr.rel (%p127) target = $region12
    $region11: #{d2qn_forward.6} parent=5 // pred_region
      %s131 = ssub.s32 %s9, 1
      // Predicated region
      $region13: #{d2qn_forward.6} parent=11 // pred_check
        %p132 = pneg %p68
      $region14: #{d2qn_forward.6} parent=11 // pred_check_branch
        %134 = sbr.rel (%p132) target = $region16
      $region15: #{d2qn_forward.6} parent=11 // pred_region
        _
      $region16: #{d2qn_forward.6} parent=11 // pred_fallthru
        _
      // Predicated region
      $region17: #{d2qn_forward.6} parent=11 // pred_check
        %p135 = pneg %p89
      $region18: #{d2qn_forward.6} parent=11 // pred_check_branch
        %137 = sbr.rel (%p135) target = $region20
      $region19: #{d2qn_forward.6} parent=11 // pred_region
        _
      $region20: #{d2qn_forward.6} parent=11 // pred_fallthru
        _
    $region12: #{d2qn_forward.6} parent=5 // pred_fallthru
      _
    %p138 = scmp.lt.s32.totalorder %s9, 2
    // Predicated region
    $region21: #{d2qn_forward.6} parent=5 // pred_check
      %p139 = pneg %p138
    $region22: #{d2qn_forward.6} parent=5 // pred_check_branch
      %141 = sbr.rel (%p139) target = $region24
    $region23: #{d2qn_forward.6} parent=5 // pred_region
      // Predicated region
      $region25: #{d2qn_forward.6} parent=23 // pred_check
        %p142 = pneg %p41
      $region26: #{d2qn_forward.6} parent=23 // pred_check_branch
        %144 = sbr.rel (%p142) target = $region28
      $region27: #{d2qn_forward.6} parent=23 // pred_region
        %p145 = scmp.lt.s32.totalorder %s17, 1
        %s146 = scalar_select %p145, %s17, 1
        %s147 = smul.addr %s146, 11
        %s148 = smul.addr %s147, 4
        %s149 = scalar_lea.vmem %s0, %s148
      $region28: #{d2qn_forward.6} parent=23 // pred_fallthru
        _
    $region24: #{d2qn_forward.6} parent=5 // pred_fallthru
      _
    %p150 = scmp.le.s32.totalorder 1, %s9
    %p151 = scmp.lt.s32.totalorder %s9, 3
    %p152 = pnand %p150, %p151
    %p153 = pneg %p152
    // Predicated region
    $region29: #{d2qn_forward.6} parent=5 // pred_check
      _
    $region30: #{d2qn_forward.6} parent=5 // pred_check_branch
      %155 = sbr.rel (%p152) target = $region32
    $region31: #{d2qn_forward.6} parent=5 // pred_region
      %s156 = ssub.s32 %s9, 1
      %p157 = scmp.lt.s32.totalorder %s19, 1
      %s158 = scalar_select %p157, %s19, 1
      %s159 = smul.addr %s158, 11
      %s160 = smul.addr %s159, 4
      %s161 = scalar_lea.vmem %s0, %s160
      %p162 = pneg %p47
      %p163 = pneg %p44
      %p164 = pneg %p68
      %p165 = pneg %p65
      %p166 = pneg %p89
      %p167 = pneg %p86
      %p168 = pneg %p117
      %p169 = pneg %p114
      %p170 = scmp.lt.s32.totalorder %s18, 0
      %s171 = scalar_select %p170, %s18, 0
      %p172 = scmp.lt.s32.totalorder %s19, 1
      %s173 = scalar_select %p172, %s19, 1
      %s174 = smul.addr %s173, 11
      %s175 = smul.addr %s171, 22
      %s176 = sadd.s32 %s174, %s175
      %s177 = smul.addr %s176, 4
      %s178 = scalar_lea.vmem %s3, %s177
      %p179 = scmp.lt.s32.totalorder %s19, 1
      %s180 = scalar_select %p179, %s19, 1
      %s181 = smul.addr %s180, 11
      %s182 = smul.addr %s181, 4
      %s183 = scalar_lea.vmem %s0, %s182
      %p184 = scmp.lt.s32.totalorder %s18, 0
      %s185 = scalar_select %p184, %s18, 0
      %p186 = scmp.lt.s32.totalorder %s19, 1
      %s187 = scalar_select %p186, %s19, 1
      %s188 = smul.addr %s187, 11
      %s189 = smul.addr %s185, 22
      %s190 = sadd.s32 %s188, %s189
      %s191 = smul.addr %s190, 4
      %s192 = scalar_lea.vmem %s3, %s191
      %v194 = vld [vmem:[%s183] sm:$0xf]
      %v195 = vld [vmem:[%s183 + $0x4] sm:$0xf]
      %v196 = vld [vmem:[%s183 + $0x8] sm:$0xf]
      %v197 = vld [vmem:[%s183 + $0xc] sm:$0xf]
      %v198 = vld [vmem:[%s183 + $0x10] sm:$0xf]
      %v199 = vld [vmem:[%s183 + $0x14] sm:$0xf]
      %v200 = vld [vmem:[%s183 + $0x18] sm:$0xf]
      %v201 = vld [vmem:[%s183 + $0x1c] sm:$0x7]
      %v202 = vld [vmem:[%s1] sm:$0xf]
      %v203 = vld [vmem:[%s1 + $0x4] sm:$0xf]
      %v204 = vld [vmem:[%s1 + $0x8] sm:$0xf]
      %v205 = vld [vmem:[%s1 + $0xc] sm:$0xf]
      %v206 = vld [vmem:[%s1 + $0x10] sm:$0xf]
      %v207 = vld [vmem:[%s1 + $0x14] sm:$0xf]
      %v208 = vld [vmem:[%s1 + $0x18] sm:$0xf]
      %v209 = vld [vmem:[%s1 + $0x1c] sm:$0xf]
      %s210 = scalar_lea.vmem %s1, 32
      %v211 = vld [vmem:[%s210] sm:$0xf]
      %v212 = vld [vmem:[%s210 + $0x4] sm:$0xf]
      %v213 = vld [vmem:[%s210 + $0x8] sm:$0xf]
      %v214 = vld [vmem:[%s210 + $0xc] sm:$0xf]
      %v215 = vld [vmem:[%s210 + $0x10] sm:$0xf]
      %v216 = vld [vmem:[%s210 + $0x14] sm:$0xf]
      %v217 = vld [vmem:[%s210 + $0x18] sm:$0xf]
      %v218 = vld [vmem:[%s210 + $0x1c] sm:$0xf]
      %v227 = vunpack.c.l.b16 %v194
      %v228 = vunpack.c.l.b16 %v195
      %v229 = vunpack.c.l.b16 %v196
      %v230 = vunpack.c.l.b16 %v197
      %v231 = vunpack.c.l.b16 %v198
      %v232 = vunpack.c.l.b16 %v199
      %v233 = vunpack.c.l.b16 %v200
      %v234 = vunpack.c.l.b16 %v201
      %v235 = vpack.c.b16 %v228, %v227
      %v236 = vpack.c.b16 %v230, %v229
      %v237 = vpack.c.b16 %v232, %v231
      %v238 = vpack.c.b16 %v234, %v233
      %vm239 = vsmask.f32 7424
      %v241 = vshrl.u32 %v235, 16
      %v243 = vshll.u32 %v235, 16
      %v245 = vrot.slane %v243, 1
      %v246 = vor.u32 %v241, %v245
      %v248 = vshll.u32 %v236, 16
      %v250 = vrot.slane %v248, 1
      %v251 = vsel %vm239, %v246, %v250
      %v252 = vshrl.u32 %v236, 16
      %v254 = vor.u32 %v252, %v250
      %v256 = vshll.u32 %v237, 16
      %v258 = vrot.slane %v256, 1
      %v259 = vsel %vm239, %v254, %v258
      %v260 = vshrl.u32 %v237, 16
      %v262 = vor.u32 %v260, %v258
      %v264 = vshll.u32 %v238, 16
      %v266 = vrot.slane %v264, 1
      %v267 = vsel %vm239, %v262, %v266
      %v268 = vshrl.u32 %v238, 16
      %v270 = vor.u32 %v268, %v266
      %v279 = vunpack.c.l.b16 %v211
      %v280 = vunpack.c.l.b16 %v212
      %v281 = vunpack.c.l.b16 %v213
      %v282 = vunpack.c.l.b16 %v214
      %v283 = vunpack.c.l.b16 %v215
      %v284 = vunpack.c.l.b16 %v216
      %v285 = vunpack.c.l.b16 %v217
      %v286 = vunpack.c.l.b16 %v218
      %v287 = vpack.c.b16 %v280, %v279
      %v288 = vpack.c.b16 %v282, %v281
      %v289 = vpack.c.b16 %v284, %v283
      %v290 = vpack.c.b16 %v286, %v285
      %vm295 = vcmask 523264
      %v297 = vsel %vm295, %v251, 0
      %v300 = vsel %vm295, %v259, 0
      %v303 = vsel %vm295, %v267, 0
      %v306 = vsel %vm295, %v270, 0
      %308 = vmatpush.bf16.msra.mxu0 0
      %309 = vmatpush.bf16.msra.mxu0 0
      %310 = vmatpush.bf16.msra.mxu0 0
      %311 = vmatpush.bf16.msra.mxu0 0
      %312 = vmatpush.bf16.msra.mxu0 %v290
      %313 = vmatpush.bf16.msra.mxu0 %v289
      %314 = vmatpush.bf16.msra.mxu0 %v288
      %315 = vmatpush.bf16.msra.mxu0 %v287
      %316 = vmatmul.bf16.gmra.mxu0 %v297
      %v317 = vpop.f32.mrf.mxu0
      %v318 = vadd.f32 0.0, %v317
      %v319 = vpop.f32.mrf.mxu0
      %v320 = vadd.f32 0.0, %v319
      %321 = vmatmul.bf16.gmra.mxu0 %v300
      %v322 = vpop.f32.mrf.mxu0
      %v323 = vadd.f32 0.0, %v322
      %v324 = vpop.f32.mrf.mxu0
      %v325 = vadd.f32 0.0, %v324
      %326 = vmatmul.bf16.gmra.mxu0 %v303
      %v327 = vpop.f32.mrf.mxu0
      %v328 = vadd.f32 0.0, %v327
      %v329 = vpop.f32.mrf.mxu0
      %v330 = vadd.f32 0.0, %v329
      %331 = vmatmul.bf16.gmra.mxu0 %v306
      %v332 = vpop.f32.mrf.mxu0
      %v333 = vadd.f32 0.0, %v332
      %v334 = vpop.f32.mrf.mxu0
      %v335 = vadd.f32 0.0, %v334
      %336 = vdwg.mxu0
      %v345 = vunpack.c.l.b16 %v202
      %v346 = vunpack.c.l.b16 %v203
      %v347 = vunpack.c.l.b16 %v204
      %v348 = vunpack.c.l.b16 %v205
      %v349 = vunpack.c.l.b16 %v206
      %v350 = vunpack.c.l.b16 %v207
      %v351 = vunpack.c.l.b16 %v208
      %v352 = vunpack.c.l.b16 %v209
      %v353 = vpack.c.b16 %v346, %v345
      %v354 = vpack.c.b16 %v348, %v347
      %v355 = vpack.c.b16 %v350, %v349
      %v356 = vpack.c.b16 %v352, %v351
      %v361 = vsel %vm295, %v235, 0
      %v363 = vsel %vm295, %v236, 0
      %v365 = vsel %vm295, %v237, 0
      %v367 = vsel %vm295, %v238, 0
      %369 = vmatpush.bf16.msra.mxu0 0
      %370 = vmatpush.bf16.msra.mxu0 0
      %371 = vmatpush.bf16.msra.mxu0 0
      %372 = vmatpush.bf16.msra.mxu0 0
      %373 = vmatpush.bf16.msra.mxu0 %v356
      %374 = vmatpush.bf16.msra.mxu0 %v355
      %375 = vmatpush.bf16.msra.mxu0 %v354
      %376 = vmatpush.bf16.msra.mxu0 %v353
      %377 = vmatmul.bf16.gmra.mxu0 %v361
      %v378 = vpop.f32.mrf.mxu0
      %v379 = vadd.f32 %v318, %v378
      %v380 = vpop.f32.mrf.mxu0
      %v381 = vadd.f32 %v320, %v380
      %382 = vmatmul.bf16.gmra.mxu0 %v363
      %v383 = vpop.f32.mrf.mxu0
      %v384 = vadd.f32 %v323, %v383
      %v385 = vpop.f32.mrf.mxu0
      %v386 = vadd.f32 %v325, %v385
      %387 = vmatmul.bf16.gmra.mxu0 %v365
      %v388 = vpop.f32.mrf.mxu0
      %v389 = vadd.f32 %v328, %v388
      %v390 = vpop.f32.mrf.mxu0
      %v391 = vadd.f32 %v330, %v390
      %392 = vmatmul.bf16.gmra.mxu0 %v367
      %v393 = vpop.f32.mrf.mxu0
      %v394 = vadd.f32 %v333, %v393
      %v395 = vpop.f32.mrf.mxu0
      %v396 = vadd.f32 %v335, %v395
      %397 = vdwg.mxu0
      %v398 = vld [vmem:[%s183] sm:$0xe]
      %v399 = vld [vmem:[%s183 + $0x1c] sm:$0xf]
      %s400 = scalar_lea.vmem %s1, 64
      %v401 = vld [vmem:[%s400] sm:$0xf]
      %v402 = vld [vmem:[%s400 + $0x4] sm:$0xf]
      %v403 = vld [vmem:[%s400 + $0x8] sm:$0xf]
      %v404 = vld [vmem:[%s400 + $0xc] sm:$0xf]
      %v405 = vld [vmem:[%s400 + $0x10] sm:$0xf]
      %v406 = vld [vmem:[%s400 + $0x14] sm:$0xf]
      %v407 = vld [vmem:[%s400 + $0x18] sm:$0xf]
      %v408 = vld [vmem:[%s400 + $0x1c] sm:$0xf]
      %v411 = vunpack.c.l.b16 %v398
      %v412 = vunpack.c.l.b16 %v399
      %v413 = vpack.c.b16 %v228, %v411
      %v414 = vpack.c.b16 %v412, %v233
      %vm415 = vcmask 1046528
      %v416 = vrot.slane %v413, 1
      %v417 = vrot.slane %v236, 1
      %v418 = vsel %vm415, %v416, %v417
      %v419 = vrot.slane %v237, 1
      %v420 = vsel %vm415, %v417, %v419
      %v421 = vrot.slane %v414, 1
      %v422 = vsel %vm415, %v419, %v421
      %v431 = vunpack.c.l.b16 %v401
      %v432 = vunpack.c.l.b16 %v402
      %v433 = vunpack.c.l.b16 %v403
      %v434 = vunpack.c.l.b16 %v404
      %v435 = vunpack.c.l.b16 %v405
      %v436 = vunpack.c.l.b16 %v406
      %v437 = vunpack.c.l.b16 %v407
      %v438 = vunpack.c.l.b16 %v408
      %v439 = vpack.c.b16 %v432, %v431
      %v440 = vpack.c.b16 %v434, %v433
      %v441 = vpack.c.b16 %v436, %v435
      %v442 = vpack.c.b16 %v438, %v437
      %v448 = vsel %vm295, %v418, 0
      %v451 = vsel %vm295, %v420, 0
      %v454 = vsel %vm295, %v422, 0
      %v457 = vsel %vm295, %v421, 0
      %459 = vmatpush.bf16.msra.mxu0 0
      %460 = vmatpush.bf16.msra.mxu0 0
      %461 = vmatpush.bf16.msra.mxu0 0
      %462 = vmatpush.bf16.msra.mxu0 0
      %463 = vmatpush.bf16.msra.mxu0 %v442
      %464 = vmatpush.bf16.msra.mxu0 %v441
      %465 = vmatpush.bf16.msra.mxu0 %v440
      %466 = vmatpush.bf16.msra.mxu0 %v439
      %467 = vmatmul.bf16.gmra.mxu0 %v448
      %v468 = vpop.f32.mrf.mxu0
      %v469 = vadd.f32 0.0, %v468
      %v470 = vpop.f32.mrf.mxu0
      %v471 = vadd.f32 0.0, %v470
      %472 = vmatmul.bf16.gmra.mxu0 %v451
      %v473 = vpop.f32.mrf.mxu0
      %v474 = vadd.f32 0.0, %v473
      %v475 = vpop.f32.mrf.mxu0
      %v476 = vadd.f32 0.0, %v475
      %477 = vmatmul.bf16.gmra.mxu0 %v454
      %v478 = vpop.f32.mrf.mxu0
      %v479 = vadd.f32 0.0, %v478
      %v480 = vpop.f32.mrf.mxu0
      %v481 = vadd.f32 0.0, %v480
      %482 = vmatmul.bf16.gmra.mxu0 %v457
      %v483 = vpop.f32.mrf.mxu0
      %v484 = vadd.f32 0.0, %v483
      %v485 = vpop.f32.mrf.mxu0
      %v486 = vadd.f32 0.0, %v485
      %487 = vdwg.mxu0
      %v488 = vadd.f32 %v379, %v469
      %v489 = vadd.f32 %v381, %v471
      %v490 = vadd.f32 %v384, %v474
      %v491 = vadd.f32 %v386, %v476
      %v492 = vadd.f32 %v389, %v479
      %v493 = vadd.f32 %v391, %v481
      %v494 = vadd.f32 %v394, %v484
      %v495 = vadd.f32 %v396, %v486
      %v496 = vld [vmem:[%s183 + $0x4] sm:$0xf]
      %v497 = vld [vmem:[%s183 + $0x8] sm:$0xf]
      %v498 = vld [vmem:[%s183 + $0xc] sm:$0xf]
      %v499 = vld [vmem:[%s183 + $0x10] sm:$0xf]
      %v500 = vld [vmem:[%s183 + $0x14] sm:$0xf]
      %v501 = vld [vmem:[%s183 + $0x18] sm:$0xf]
      %v502 = vld [vmem:[%s183 + $0x1c] sm:$0xf]
      %v503 = vld [vmem:[%s183 + $0x20] sm:$0x7]
      %s504 = scalar_lea.vmem %s1, 96
      %v505 = vld [vmem:[%s504] sm:$0xf]
      %v506 = vld [vmem:[%s504 + $0x4] sm:$0xf]
      %v507 = vld [vmem:[%s504 + $0x8] sm:$0xf]
      %v508 = vld [vmem:[%s504 + $0xc] sm:$0xf]
      %v509 = vld [vmem:[%s504 + $0x10] sm:$0xf]
      %v510 = vld [vmem:[%s504 + $0x14] sm:$0xf]
      %v511 = vld [vmem:[%s504 + $0x18] sm:$0xf]
      %v512 = vld [vmem:[%s504 + $0x1c] sm:$0xf]
      %v521 = vunpack.c.l.b16 %v496
      %v522 = vunpack.c.l.b16 %v497
      %v523 = vunpack.c.l.b16 %v498
      %v524 = vunpack.c.l.b16 %v499
      %v525 = vunpack.c.l.b16 %v500
      %v526 = vunpack.c.l.b16 %v501
      %v527 = vunpack.c.l.b16 %v502
      %v528 = vunpack.c.l.b16 %v503
      %v529 = vpack.c.b16 %v522, %v521
      %v530 = vpack.c.b16 %v524, %v523
      %v531 = vpack.c.b16 %v526, %v525
      %v532 = vpack.c.b16 %v528, %v527
      %v534 = vshrl.u32 %v529, 16
      %v536 = vshll.u32 %v529, 16
      %v538 = vrot.slane %v536, 1
      %v539 = vor.u32 %v534, %v538
      %v541 = vshll.u32 %v530, 16
      %v543 = vrot.slane %v541, 1
      %v544 = vsel %vm239, %v539, %v543
      %v545 = vshrl.u32 %v530, 16
      %v547 = vor.u32 %v545, %v543
      %v549 = vshll.u32 %v531, 16
      %v551 = vrot.slane %v549, 1
      %v552 = vsel %vm239, %v547, %v551
      %v553 = vshrl.u32 %v531, 16
      %v555 = vor.u32 %v553, %v551
      %v557 = vshll.u32 %v532, 16
      %v559 = vrot.slane %v557, 1
      %v560 = vsel %vm239, %v555, %v559
      %v561 = vshrl.u32 %v532, 16
      %v563 = vor.u32 %v561, %v559
      %v572 = vunpack.c.l.b16 %v505
      %v573 = vunpack.c.l.b16 %v506
      %v574 = vunpack.c.l.b16 %v507
      %v575 = vunpack.c.l.b16 %v508
      %v576 = vunpack.c.l.b16 %v509
      %v577 = vunpack.c.l.b16 %v510
      %v578 = vunpack.c.l.b16 %v511
      %v579 = vunpack.c.l.b16 %v512
      %v580 = vpack.c.b16 %v573, %v572
      %v581 = vpack.c.b16 %v575, %v574
      %v582 = vpack.c.b16 %v577, %v576
      %v583 = vpack.c.b16 %v579, %v578
      %v589 = vsel %vm295, %v544, 0
      %v592 = vsel %vm295, %v552, 0
      %v595 = vsel %vm295, %v560, 0
      %v598 = vsel %vm295, %v563, 0
      %600 = vmatpush.bf16.msra.mxu0 0
      %601 = vmatpush.bf16.msra.mxu0 0
      %602 = vmatpush.bf16.msra.mxu0 0
      %603 = vmatpush.bf16.msra.mxu0 0
      %604 = vmatpush.bf16.msra.mxu0 %v583
      %605 = vmatpush.bf16.msra.mxu0 %v582
      %606 = vmatpush.bf16.msra.mxu0 %v581
      %607 = vmatpush.bf16.msra.mxu0 %v580
      %608 = vmatmul.bf16.gmra.mxu0 %v589
      %v609 = vpop.f32.mrf.mxu0
      %v610 = vadd.f32 0.0, %v609
      %v611 = vpop.f32.mrf.mxu0
      %v612 = vadd.f32 0.0, %v611
      %613 = vmatmul.bf16.gmra.mxu0 %v592
      %v614 = vpop.f32.mrf.mxu0
      %v615 = vadd.f32 0.0, %v614
      %v616 = vpop.f32.mrf.mxu0
      %v617 = vadd.f32 0.0, %v616
      %618 = vmatmul.bf16.gmra.mxu0 %v595
      %v619 = vpop.f32.mrf.mxu0
      %v620 = vadd.f32 0.0, %v619
      %v621 = vpop.f32.mrf.mxu0
      %v622 = vadd.f32 0.0, %v621
      %623 = vmatmul.bf16.gmra.mxu0 %v598
      %v624 = vpop.f32.mrf.mxu0
      %v625 = vadd.f32 0.0, %v624
      %v626 = vpop.f32.mrf.mxu0
      %v627 = vadd.f32 0.0, %v626
      %628 = vdwg.mxu0
      %v629 = vadd.f32 %v488, %v610
      %v630 = vadd.f32 %v489, %v612
      %v631 = vadd.f32 %v490, %v615
      %v632 = vadd.f32 %v491, %v617
      %v633 = vadd.f32 %v492, %v620
      %v634 = vadd.f32 %v493, %v622
      %v635 = vadd.f32 %v494, %v625
      %v636 = vadd.f32 %v495, %v627
      %v637 = vld [vmem:[%s183 + $0x4] sm:$0xe]
      %v638 = vld [vmem:[%s183 + $0x20] sm:$0xf]
      %s639 = scalar_lea.vmem %s1, 128
      %v640 = vld [vmem:[%s639] sm:$0xf]
      %v641 = vld [vmem:[%s639 + $0x4] sm:$0xf]
      %v642 = vld [vmem:[%s639 + $0x8] sm:$0xf]
      %v643 = vld [vmem:[%s639 + $0xc] sm:$0xf]
      %v644 = vld [vmem:[%s639 + $0x10] sm:$0xf]
      %v645 = vld [vmem:[%s639 + $0x14] sm:$0xf]
      %v646 = vld [vmem:[%s639 + $0x18] sm:$0xf]
      %v647 = vld [vmem:[%s639 + $0x1c] sm:$0xf]
      %v650 = vunpack.c.l.b16 %v637
      %v651 = vunpack.c.l.b16 %v638
      %v652 = vpack.c.b16 %v522, %v650
      %v653 = vpack.c.b16 %v651, %v527
      %v654 = vrot.slane %v652, 1
      %v655 = vrot.slane %v530, 1
      %v656 = vsel %vm415, %v654, %v655
      %v657 = vrot.slane %v531, 1
      %v658 = vsel %vm415, %v655, %v657
      %v659 = vrot.slane %v653, 1
      %v660 = vsel %vm415, %v657, %v659
      %v669 = vunpack.c.l.b16 %v640
      %v670 = vunpack.c.l.b16 %v641
      %v671 = vunpack.c.l.b16 %v642
      %v672 = vunpack.c.l.b16 %v643
      %v673 = vunpack.c.l.b16 %v644
      %v674 = vunpack.c.l.b16 %v645
      %v675 = vunpack.c.l.b16 %v646
      %v676 = vunpack.c.l.b16 %v647
      %v677 = vpack.c.b16 %v670, %v669
      %v678 = vpack.c.b16 %v672, %v671
      %v679 = vpack.c.b16 %v674, %v673
      %v680 = vpack.c.b16 %v676, %v675
      %v686 = vsel %vm295, %v656, 0
      %v689 = vsel %vm295, %v658, 0
      %v692 = vsel %vm295, %v660, 0
      %v695 = vsel %vm295, %v659, 0
      %697 = vmatpush.bf16.msra.mxu0 0
      %698 = vmatpush.bf16.msra.mxu0 0
      %699 = vmatpush.bf16.msra.mxu0 0
      %700 = vmatpush.bf16.msra.mxu0 0
      %701 = vmatpush.bf16.msra.mxu0 %v680
      %702 = vmatpush.bf16.msra.mxu0 %v679
      %703 = vmatpush.bf16.msra.mxu0 %v678
      %704 = vmatpush.bf16.msra.mxu0 %v677
      %705 = vmatmul.bf16.gmra.mxu0 %v686
      %v706 = vpop.f32.mrf.mxu0
      %v707 = vadd.f32 0.0, %v706
      %v708 = vpop.f32.mrf.mxu0
      %v709 = vadd.f32 0.0, %v708
      %710 = vmatmul.bf16.gmra.mxu0 %v689
      %v711 = vpop.f32.mrf.mxu0
      %v712 = vadd.f32 0.0, %v711
      %v713 = vpop.f32.mrf.mxu0
      %v714 = vadd.f32 0.0, %v713
      %715 = vmatmul.bf16.gmra.mxu0 %v692
      %v716 = vpop.f32.mrf.mxu0
      %v717 = vadd.f32 0.0, %v716
      %v718 = vpop.f32.mrf.mxu0
      %v719 = vadd.f32 0.0, %v718
      %720 = vmatmul.bf16.gmra.mxu0 %v695
      %v721 = vpop.f32.mrf.mxu0
      %v722 = vadd.f32 0.0, %v721
      %v723 = vpop.f32.mrf.mxu0
      %v724 = vadd.f32 0.0, %v723
      %725 = vdwg.mxu0
      %v726 = vadd.f32 %v629, %v707
      %v727 = vadd.f32 %v630, %v709
      %v728 = vadd.f32 %v631, %v712
      %v729 = vadd.f32 %v632, %v714
      %v730 = vadd.f32 %v633, %v717
      %v731 = vadd.f32 %v634, %v719
      %v732 = vadd.f32 %v635, %v722
      %v733 = vadd.f32 %v636, %v724
      %s734 = scalar_lea.vmem %s1, 160
      %v735 = vld [vmem:[%s734] sm:$0xf]
      %v736 = vld [vmem:[%s734 + $0x4] sm:$0xf]
      %v737 = vld [vmem:[%s734 + $0x8] sm:$0xf]
      %v738 = vld [vmem:[%s734 + $0xc] sm:$0xf]
      %v739 = vld [vmem:[%s734 + $0x10] sm:$0xf]
      %v740 = vld [vmem:[%s734 + $0x14] sm:$0xf]
      %v741 = vld [vmem:[%s734 + $0x18] sm:$0xf]
      %v742 = vld [vmem:[%s734 + $0x1c] sm:$0xf]
      %vm743 = vsmask.f32 6400
      %v745 = vshrl.u32 %v652, 16
      %v747 = vrot.slane %v745, 1
      %v748 = vshll.u32 %v652, 16
      %v750 = vrot.slane %v748, 2
      %v751 = vor.u32 %v747, %v750
      %v752 = vrot.slane %v545, 1
      %v753 = vrot.slane %v541, 2
      %v754 = vor.u32 %v752, %v753
      %v755 = vsel %vm743, %v751, %v754
      %v756 = vrot.slane %v553, 1
      %v757 = vrot.slane %v549, 2
      %v758 = vor.u32 %v756, %v757
      %v759 = vsel %vm743, %v754, %v758
      %v761 = vshrl.u32 %v653, 16
      %v763 = vrot.slane %v761, 1
      %v764 = vshll.u32 %v653, 16
      %v766 = vrot.slane %v764, 2
      %v767 = vor.u32 %v763, %v766
      %v768 = vsel %vm743, %v758, %v767
      %v777 = vunpack.c.l.b16 %v735
      %v778 = vunpack.c.l.b16 %v736
      %v779 = vunpack.c.l.b16 %v737
      %v780 = vunpack.c.l.b16 %v738
      %v781 = vunpack.c.l.b16 %v739
      %v782 = vunpack.c.l.b16 %v740
      %v783 = vunpack.c.l.b16 %v741
      %v784 = vunpack.c.l.b16 %v742
      %v785 = vpack.c.b16 %v778, %v777
      %v786 = vpack.c.b16 %v780, %v779
      %v787 = vpack.c.b16 %v782, %v781
      %v788 = vpack.c.b16 %v784, %v783
      %v794 = vsel %vm295, %v755, 0
      %v797 = vsel %vm295, %v759, 0
      %v800 = vsel %vm295, %v768, 0
      %v803 = vsel %vm295, %v767, 0
      %805 = vmatpush.bf16.msra.mxu0 0
      %806 = vmatpush.bf16.msra.mxu0 0
      %807 = vmatpush.bf16.msra.mxu0 0
      %808 = vmatpush.bf16.msra.mxu0 0
      %809 = vmatpush.bf16.msra.mxu0 %v788
      %810 = vmatpush.bf16.msra.mxu0 %v787
      %811 = vmatpush.bf16.msra.mxu0 %v786
      %812 = vmatpush.bf16.msra.mxu0 %v785
      %813 = vmatmul.bf16.gmra.mxu0 %v794
      %v814 = vpop.f32.mrf.mxu0
      %v815 = vadd.f32 0.0, %v814
      %v816 = vpop.f32.mrf.mxu0
      %v817 = vadd.f32 0.0, %v816
      %818 = vmatmul.bf16.gmra.mxu0 %v797
      %v819 = vpop.f32.mrf.mxu0
      %v820 = vadd.f32 0.0, %v819
      %v821 = vpop.f32.mrf.mxu0
      %v822 = vadd.f32 0.0, %v821
      %823 = vmatmul.bf16.gmra.mxu0 %v800
      %v824 = vpop.f32.mrf.mxu0
      %v825 = vadd.f32 0.0, %v824
      %v826 = vpop.f32.mrf.mxu0
      %v827 = vadd.f32 0.0, %v826
      %828 = vmatmul.bf16.gmra.mxu0 %v803
      %v829 = vpop.f32.mrf.mxu0
      %v830 = vadd.f32 0.0, %v829
      %v831 = vpop.f32.mrf.mxu0
      %v832 = vadd.f32 0.0, %v831
      %833 = vdwg.mxu0
      %v834 = vadd.f32 %v726, %v815
      %v835 = vadd.f32 %v727, %v817
      %v836 = vadd.f32 %v728, %v820
      %v837 = vadd.f32 %v729, %v822
      %v838 = vadd.f32 %v730, %v825
      %v839 = vadd.f32 %v731, %v827
      %v840 = vadd.f32 %v732, %v830
      %v841 = vadd.f32 %v733, %v832
      %v842 = vld [vmem:[%s183 + $0x8] sm:$0xe]
      %v843 = vld [vmem:[%s183 + $0xc] sm:$0xf]
      %v844 = vld [vmem:[%s183 + $0x10] sm:$0xf]
      %v845 = vld [vmem:[%s183 + $0x14] sm:$0xf]
      %v846 = vld [vmem:[%s183 + $0x18] sm:$0xf]
      %v847 = vld [vmem:[%s183 + $0x1c] sm:$0xf]
      %v848 = vld [vmem:[%s183 + $0x20] sm:$0xf]
      %v849 = vld [vmem:[%s183 + $0x24] sm:$0xf]
      %s850 = scalar_lea.vmem %s1, 192
      %v851 = vld [vmem:[%s850] sm:$0xf]
      %v852 = vld [vmem:[%s850 + $0x4] sm:$0xf]
      %v853 = vld [vmem:[%s850 + $0x8] sm:$0xf]
      %v854 = vld [vmem:[%s850 + $0xc] sm:$0xf]
      %v855 = vld [vmem:[%s850 + $0x10] sm:$0xf]
      %v856 = vld [vmem:[%s850 + $0x14] sm:$0xf]
      %v857 = vld [vmem:[%s850 + $0x18] sm:$0xf]
      %v858 = vld [vmem:[%s850 + $0x1c] sm:$0xf]
      %v867 = vunpack.c.l.b16 %v842
      %v868 = vunpack.c.l.b16 %v843
      %v869 = vunpack.c.l.b16 %v844
      %v870 = vunpack.c.l.b16 %v845
      %v871 = vunpack.c.l.b16 %v846
      %v872 = vunpack.c.l.b16 %v847
      %v873 = vunpack.c.l.b16 %v848
      %v874 = vunpack.c.l.b16 %v849
      %v875 = vpack.c.b16 %v868, %v867
      %v876 = vpack.c.b16 %v870, %v869
      %v877 = vpack.c.b16 %v872, %v871
      %v878 = vpack.c.b16 %v874, %v873
      %v879 = vrot.slane %v875, 1
      %v880 = vrot.slane %v876, 1
      %v881 = vsel %vm415, %v879, %v880
      %v882 = vrot.slane %v877, 1
      %v883 = vsel %vm415, %v880, %v882
      %v884 = vrot.slane %v878, 1
      %v885 = vsel %vm415, %v882, %v884
      %v894 = vunpack.c.l.b16 %v851
      %v895 = vunpack.c.l.b16 %v852
      %v896 = vunpack.c.l.b16 %v853
      %v897 = vunpack.c.l.b16 %v854
      %v898 = vunpack.c.l.b16 %v855
      %v899 = vunpack.c.l.b16 %v856
      %v900 = vunpack.c.l.b16 %v857
      %v901 = vunpack.c.l.b16 %v858
      %v902 = vpack.c.b16 %v895, %v894
      %v903 = vpack.c.b16 %v897, %v896
      %v904 = vpack.c.b16 %v899, %v898
      %v905 = vpack.c.b16 %v901, %v900
      %v911 = vsel %vm295, %v881, 0
      %v914 = vsel %vm295, %v883, 0
      %v917 = vsel %vm295, %v885, 0
      %v920 = vsel %vm295, %v884, 0
      %922 = vmatpush.bf16.msra.mxu0 0
      %923 = vmatpush.bf16.msra.mxu0 0
      %924 = vmatpush.bf16.msra.mxu0 0
      %925 = vmatpush.bf16.msra.mxu0 0
      %926 = vmatpush.bf16.msra.mxu0 %v905
      %927 = vmatpush.bf16.msra.mxu0 %v904
      %928 = vmatpush.bf16.msra.mxu0 %v903
      %929 = vmatpush.bf16.msra.mxu0 %v902
      %930 = vmatmul.bf16.gmra.mxu0 %v911
      %v931 = vpop.f32.mrf.mxu0
      %v932 = vadd.f32 0.0, %v931
      %v933 = vpop.f32.mrf.mxu0
      %v934 = vadd.f32 0.0, %v933
      %935 = vmatmul.bf16.gmra.mxu0 %v914
      %v936 = vpop.f32.mrf.mxu0
      %v937 = vadd.f32 0.0, %v936
      %v938 = vpop.f32.mrf.mxu0
      %v939 = vadd.f32 0.0, %v938
      %940 = vmatmul.bf16.gmra.mxu0 %v917
      %v941 = vpop.f32.mrf.mxu0
      %v942 = vadd.f32 0.0, %v941
      %v943 = vpop.f32.mrf.mxu0
      %v944 = vadd.f32 0.0, %v943
      %945 = vmatmul.bf16.gmra.mxu0 %v920
      %v946 = vpop.f32.mrf.mxu0
      %v947 = vadd.f32 0.0, %v946
      %v948 = vpop.f32.mrf.mxu0
      %v949 = vadd.f32 0.0, %v948
      %950 = vdwg.mxu0
      %v951 = vadd.f32 %v834, %v932
      %v952 = vadd.f32 %v835, %v934
      %v953 = vadd.f32 %v836, %v937
      %v954 = vadd.f32 %v837, %v939
      %v955 = vadd.f32 %v838, %v942
      %v956 = vadd.f32 %v839, %v944
      %v957 = vadd.f32 %v840, %v947
      %v958 = vadd.f32 %v841, %v949
      %s959 = scalar_lea.vmem %s1, 224
      %v960 = vld [vmem:[%s959] sm:$0xf]
      %v961 = vld [vmem:[%s959 + $0x4] sm:$0xf]
      %v962 = vld [vmem:[%s959 + $0x8] sm:$0xf]
      %v963 = vld [vmem:[%s959 + $0xc] sm:$0xf]
      %v964 = vld [vmem:[%s959 + $0x10] sm:$0xf]
      %v965 = vld [vmem:[%s959 + $0x14] sm:$0xf]
      %v966 = vld [vmem:[%s959 + $0x18] sm:$0xf]
      %v967 = vld [vmem:[%s959 + $0x1c] sm:$0xf]
      %v969 = vshrl.u32 %v875, 16
      %v971 = vrot.slane %v969, 1
      %v972 = vshll.u32 %v875, 16
      %v974 = vrot.slane %v972, 2
      %v975 = vor.u32 %v971, %v974
      %v977 = vshrl.u32 %v876, 16
      %v979 = vrot.slane %v977, 1
      %v980 = vshll.u32 %v876, 16
      %v982 = vrot.slane %v980, 2
      %v983 = vor.u32 %v979, %v982
      %v984 = vsel %vm743, %v975, %v983
      %v986 = vshrl.u32 %v877, 16
      %v988 = vrot.slane %v986, 1
      %v989 = vshll.u32 %v877, 16
      %v991 = vrot.slane %v989, 2
      %v992 = vor.u32 %v988, %v991
      %v993 = vsel %vm743, %v983, %v992
      %v995 = vshrl.u32 %v878, 16
      %v997 = vrot.slane %v995, 1
      %v998 = vshll.u32 %v878, 16
      %v1000 = vrot.slane %v998, 2
      %v1001 = vor.u32 %v997, %v1000
      %v1002 = vsel %vm743, %v992, %v1001
      %v1011 = vunpack.c.l.b16 %v960
      %v1012 = vunpack.c.l.b16 %v961
      %v1013 = vunpack.c.l.b16 %v962
      %v1014 = vunpack.c.l.b16 %v963
      %v1015 = vunpack.c.l.b16 %v964
      %v1016 = vunpack.c.l.b16 %v965
      %v1017 = vunpack.c.l.b16 %v966
      %v1018 = vunpack.c.l.b16 %v967
      %v1019 = vpack.c.b16 %v1012, %v1011
      %v1020 = vpack.c.b16 %v1014, %v1013
      %v1021 = vpack.c.b16 %v1016, %v1015
      %v1022 = vpack.c.b16 %v1018, %v1017
      %v1028 = vsel %vm295, %v984, 0
      %v1031 = vsel %vm295, %v993, 0
      %v1034 = vsel %vm295, %v1002, 0
      %v1037 = vsel %vm295, %v1001, 0
      %1039 = vmatpush.bf16.msra.mxu0 0
      %1040 = vmatpush.bf16.msra.mxu0 0
      %1041 = vmatpush.bf16.msra.mxu0 0
      %1042 = vmatpush.bf16.msra.mxu0 0
      %1043 = vmatpush.bf16.msra.mxu0 %v1022
      %1044 = vmatpush.bf16.msra.mxu0 %v1021
      %1045 = vmatpush.bf16.msra.mxu0 %v1020
      %1046 = vmatpush.bf16.msra.mxu0 %v1019
      %1047 = vmatmul.bf16.gmra.mxu0 %v1028
      %v1048 = vpop.f32.mrf.mxu0
      %v1049 = vadd.f32 0.0, %v1048
      %v1050 = vpop.f32.mrf.mxu0
      %v1051 = vadd.f32 0.0, %v1050
      %1052 = vmatmul.bf16.gmra.mxu0 %v1031
      %v1053 = vpop.f32.mrf.mxu0
      %v1054 = vadd.f32 0.0, %v1053
      %v1055 = vpop.f32.mrf.mxu0
      %v1056 = vadd.f32 0.0, %v1055
      %1057 = vmatmul.bf16.gmra.mxu0 %v1034
      %v1058 = vpop.f32.mrf.mxu0
      %v1059 = vadd.f32 0.0, %v1058
      %v1060 = vpop.f32.mrf.mxu0
      %v1061 = vadd.f32 0.0, %v1060
      %1062 = vmatmul.bf16.gmra.mxu0 %v1037
      %v1063 = vpop.f32.mrf.mxu0
      %v1064 = vadd.f32 0.0, %v1063
      %v1065 = vpop.f32.mrf.mxu0
      %v1066 = vadd.f32 0.0, %v1065
      %1067 = vdwg.mxu0
      %v1068 = vadd.f32 %v951, %v1049
      %v1069 = vadd.f32 %v952, %v1051
      %v1070 = vadd.f32 %v953, %v1054
      %v1071 = vadd.f32 %v954, %v1056
      %v1072 = vadd.f32 %v955, %v1059
      %v1073 = vadd.f32 %v956, %v1061
      %v1074 = vadd.f32 %v957, %v1064
      %v1075 = vadd.f32 %v958, %v1066
      %v1076 = vld [vmem:[%s183 + $0x8] sm:$0xc]
      %v1077 = vld [vmem:[%s183 + $0xc] sm:$0xf]
      %v1078 = vld [vmem:[%s183 + $0x10] sm:$0xf]
      %v1079 = vld [vmem:[%s183 + $0x14] sm:$0xf]
      %v1080 = vld [vmem:[%s183 + $0x18] sm:$0xf]
      %v1081 = vld [vmem:[%s183 + $0x1c] sm:$0xf]
      %v1082 = vld [vmem:[%s183 + $0x20] sm:$0xf]
      %v1083 = vld [vmem:[%s183 + $0x24] sm:$0xf]
      %v1084 = vld [vmem:[%s183 + $0x28] sm:$0x1]
      %s1085 = scalar_lea.vmem %s1, 256
      %v1086 = vld [vmem:[%s1085] sm:$0xf]
      %v1087 = vld [vmem:[%s1085 + $0x4] sm:$0xf]
      %v1088 = vld [vmem:[%s1085 + $0x8] sm:$0xf]
      %v1089 = vld [vmem:[%s1085 + $0xc] sm:$0xf]
      %v1090 = vld [vmem:[%s1085 + $0x10] sm:$0xf]
      %v1091 = vld [vmem:[%s1085 + $0x14] sm:$0xf]
      %v1092 = vld [vmem:[%s1085 + $0x18] sm:$0xf]
      %v1093 = vld [vmem:[%s1085 + $0x1c] sm:$0xf]
      %v1103 = vunpack.c.l.b16 %v1076
      %v1104 = vunpack.c.l.b16 %v1077
      %v1105 = vunpack.c.l.b16 %v1078
      %v1106 = vunpack.c.l.b16 %v1079
      %v1107 = vunpack.c.l.b16 %v1080
      %v1108 = vunpack.c.l.b16 %v1081
      %v1109 = vunpack.c.l.b16 %v1082
      %v1110 = vunpack.c.l.b16 %v1083
      %v1111 = vunpack.c.l.b16 %v1084
      %v1112 = vpack.c.b16 %v1104, %v1103
      %v1113 = vpack.c.b16 %v1106, %v1105
      %v1114 = vpack.c.b16 %v1108, %v1107
      %v1115 = vpack.c.b16 %v1110, %v1109
      %v1116 = vpack.c.b16 %v1111, %v1111
      %vm1117 = vcmask 1045504
      %v1118 = vrot.slane %v1112, 2
      %v1119 = vrot.slane %v1113, 2
      %v1120 = vsel %vm1117, %v1118, %v1119
      %v1121 = vrot.slane %v1114, 2
      %v1122 = vsel %vm1117, %v1119, %v1121
      %v1123 = vrot.slane %v1115, 2
      %v1124 = vsel %vm1117, %v1121, %v1123
      %v1125 = vrot.slane %v1116, 2
      %v1126 = vsel %vm1117, %v1123, %v1125
      %v1135 = vunpack.c.l.b16 %v1086
      %v1136 = vunpack.c.l.b16 %v1087
      %v1137 = vunpack.c.l.b16 %v1088
      %v1138 = vunpack.c.l.b16 %v1089
      %v1139 = vunpack.c.l.b16 %v1090
      %v1140 = vunpack.c.l.b16 %v1091
      %v1141 = vunpack.c.l.b16 %v1092
      %v1142 = vunpack.c.l.b16 %v1093
      %v1143 = vpack.c.b16 %v1136, %v1135
      %v1144 = vpack.c.b16 %v1138, %v1137
      %v1145 = vpack.c.b16 %v1140, %v1139
      %v1146 = vpack.c.b16 %v1142, %v1141
      %v1152 = vsel %vm295, %v1120, 0
      %v1155 = vsel %vm295, %v1122, 0
      %v1158 = vsel %vm295, %v1124, 0
      %v1161 = vsel %vm295, %v1126, 0
      %1163 = vmatpush.bf16.msra.mxu0 0
      %1164 = vmatpush.bf16.msra.mxu0 0
      %1165 = vmatpush.bf16.msra.mxu0 0
      %1166 = vmatpush.bf16.msra.mxu0 0
      %1167 = vmatpush.bf16.msra.mxu0 %v1146
      %1168 = vmatpush.bf16.msra.mxu0 %v1145
      %1169 = vmatpush.bf16.msra.mxu0 %v1144
      %1170 = vmatpush.bf16.msra.mxu0 %v1143
      %1171 = vmatmul.bf16.gmra.mxu0 %v1152
      %v1172 = vpop.f32.mrf.mxu0
      %v1173 = vadd.f32 0.0, %v1172
      %v1174 = vpop.f32.mrf.mxu0
      %v1175 = vadd.f32 0.0, %v1174
      %1176 = vmatmul.bf16.gmra.mxu0 %v1155
      %v1177 = vpop.f32.mrf.mxu0
      %v1178 = vadd.f32 0.0, %v1177
      %v1179 = vpop.f32.mrf.mxu0
      %v1180 = vadd.f32 0.0, %v1179
      %1181 = vmatmul.bf16.gmra.mxu0 %v1158
      %v1182 = vpop.f32.mrf.mxu0
      %v1183 = vadd.f32 0.0, %v1182
      %v1184 = vpop.f32.mrf.mxu0
      %v1185 = vadd.f32 0.0, %v1184
      %1186 = vmatmul.bf16.gmra.mxu0 %v1161
      %v1187 = vpop.f32.mrf.mxu0
      %v1188 = vadd.f32 0.0, %v1187
      %v1189 = vpop.f32.mrf.mxu0
      %v1190 = vadd.f32 0.0, %v1189
      %1191 = vdwg.mxu0
      %v1192 = vadd.f32 %v1068, %v1173
      %v1193 = vadd.f32 %v1069, %v1175
      %v1194 = vadd.f32 %v1070, %v1178
      %v1195 = vadd.f32 %v1071, %v1180
      %v1196 = vadd.f32 %v1072, %v1183
      %v1197 = vadd.f32 %v1073, %v1185
      %v1198 = vadd.f32 %v1074, %v1188
      %v1199 = vadd.f32 %v1075, %v1190
      %v1200 = vld [vmem:[%s2] sm:$0x1]
      %v1202 = vperm.slane %v1200, 0
      %v1204 = vadd.f32 %v1192, %v1202
      %v1205 = vadd.f32 %v1193, %v1202
      %v1206 = vadd.f32 %v1194, %v1202
      %v1207 = vadd.f32 %v1195, %v1202
      %v1208 = vadd.f32 %v1196, %v1202
      %v1209 = vadd.f32 %v1197, %v1202
      %v1210 = vadd.f32 %v1198, %v1202
      %v1211 = vadd.f32 %v1199, %v1202
      %v1212 = vmax.f32 %v1204, 0.0
      %v1213 = vmax.f32 %v1205, 0.0
      %v1214 = vmax.f32 %v1206, 0.0
      %v1215 = vmax.f32 %v1207, 0.0
      %v1216 = vmax.f32 %v1208, 0.0
      %v1217 = vmax.f32 %v1209, 0.0
      %v1218 = vmax.f32 %v1210, 0.0
      %v1219 = vmax.f32 %v1211, 0.0
      %v1220 = vpack.c.bf16 %v1212, %v1212
      %v1221 = vpack.c.bf16 %v1213, %v1213
      %v1222 = vpack.c.bf16 %v1214, %v1214
      %v1223 = vpack.c.bf16 %v1215, %v1215
      %v1224 = vpack.c.bf16 %v1216, %v1216
      %v1225 = vpack.c.bf16 %v1217, %v1217
      %v1226 = vpack.c.bf16 %v1218, %v1218
      %v1227 = vpack.c.bf16 %v1219, %v1219
      %vm1228 = vcmask 519168
      %1229 = vst.msk [vmem:[%s192] sm:$0xf] %vm1228, %v1220
      %1230 = vst.msk [vmem:[%s192 + $0x4] sm:$0xf] %vm1228, %v1221
      %1231 = vst.msk [vmem:[%s192 + $0x8] sm:$0xf] %vm1228, %v1222
      %1232 = vst.msk [vmem:[%s192 + $0xc] sm:$0xf] %vm1228, %v1223
      %1233 = vst.msk [vmem:[%s192 + $0x10] sm:$0xf] %vm1228, %v1224
      %1234 = vst.msk [vmem:[%s192 + $0x14] sm:$0xf] %vm1228, %v1225
      %1235 = vst.msk [vmem:[%s192 + $0x18] sm:$0xf] %vm1228, %v1226
      %vm1236 = vcmask 518144
      %vm1237 = vsmask.f32 2304
      %vm1238 = vmand %vm1236, %vm1237
      %v1239 = vld [vmem:[%s192 + $0x1c] sm:$0x7]
      %v1240 = vsel %vm1238, %v1227, %v1239
      %1241 = vst [vmem:[%s192 + $0x1c] sm:$0x7] %v1240
      %vm1242 = vcmask 519170
      %vm1243 = vsmask.f32 7946
      %vm1244 = vmand %vm1242, %vm1243
      %v1245 = vld [vmem:[%s192 + $0x1c] sm:$0xc]
      %v1246 = vsel %vm1244, 0, %v1245
      %1247 = vst [vmem:[%s192 + $0x1c] sm:$0xc] %v1246
      %1248 = vst.msk [vmem:[%s192 + $0x20] sm:$0xf] %vm1228, 0
      %1249 = vst.msk [vmem:[%s192 + $0x24] sm:$0xf] %vm1228, 0
      %vm1250 = vcmask 516096
      %vm1251 = vsmask.f32 256
      %vm1252 = vmand %vm1250, %vm1251
      %v1253 = vld [vmem:[%s192 + $0x28] sm:$0x1]
      %v1254 = vsel %vm1252, 0, %v1253
      %1255 = vst [vmem:[%s192 + $0x28] sm:$0x1] %v1254
      %p1256 = scmp.lt.s32.totalorder %s18, 0
      %s1257 = scalar_select %p1256, %s18, 0
      %p1258 = scmp.lt.s32.totalorder %s19, 1
      %s1259 = scalar_select %p1258, %s19, 1
      %s1260 = smul.addr %s1259, 11
      %s1261 = smul.addr %s1257, 22
      %s1262 = sadd.s32 %s1260, %s1261
      %s1263 = smul.addr %s1262, 4
      %s1264 = scalar_lea.vmem %s3, %s1263
      // Predicated region
      $region33: #{d2qn_forward.6} parent=31 // pred_check
        %p1265 = pneg %p114
      $region34: #{d2qn_forward.6} parent=31 // pred_check_branch
        %1267 = sbr.rel (%p1265) target = $region36
      $region35: #{d2qn_forward.6} parent=31 // pred_region
        _
      $region36: #{d2qn_forward.6} parent=31 // pred_fallthru
        _
    $region32: #{d2qn_forward.6} parent=5 // pred_fallthru
      _
    %p1268 = scmp.le.s32.totalorder 2, %s9
    // Predicated region
    $region37: #{d2qn_forward.6} parent=5 // pred_check
      %p1269 = pneg %p1268
    $region38: #{d2qn_forward.6} parent=5 // pred_check_branch
      %1271 = sbr.rel (%p1269) target = $region40
    $region39: #{d2qn_forward.6} parent=5 // pred_region
      %s1272 = ssub.s32 %s9, 2
      // Predicated region
      $region41: #{d2qn_forward.6} parent=39 // pred_check
        %p1273 = pneg %p120
      $region42: #{d2qn_forward.6} parent=39 // pred_check_branch
        %1275 = sbr.rel (%p1273) target = $region44
      $region43: #{d2qn_forward.6} parent=39 // pred_region
        %p1276 = scmp.lt.s32.totalorder %s20, 0
        %s1277 = scalar_select %p1276, %s20, 0
        %p1278 = scmp.lt.s32.totalorder %s21, 1
        %s1279 = scalar_select %p1278, %s21, 1
        %s1280 = smul.addr %s1279, 11
        %s1281 = smul.addr %s1277, 22
        %s1282 = sadd.s32 %s1280, %s1281
        %s1283 = smul.addr %s1282, 4
        %s1284 = scalar_lea.vmem %s3, %s1283
      $region44: #{d2qn_forward.6} parent=39 // pred_fallthru
        _
    $region40: #{d2qn_forward.6} parent=5 // pred_fallthru
      _
  $region6: #{d2qn_forward.6} parent=0 // loop_footer
    %s13 = sadd.s32 1, %s9
  $region7: #{d2qn_forward.6} parent=0 // loop_footer_branch
    %8 = sbr.rel target = $region3
  $region8: #{d2qn_forward.6} parent=0 // loop_exit
    _

// kernel: d2qn_forward.7
$region0: #{d2qn_forward.7}
  #allocation0 [shape = 'u32[]', space=smem, size = 0x4, offset = 0x4, fixed_abs, tag = 'smem constant byte address 0x4 - core index']
  #allocation1 [shape = 'u32[72,128]{1,0:T(1,128)}', space=vmem, size = 0x9000, scoped, tag = 'internal scratch']
  %s0 = inlined_call_operand.vmem [shape: bf16[1,2,3136], index: 0, kind: input, shape index: {}]
  %s1 = inlined_call_operand.vmem [shape: bf16[2,3136,512], index: 1, kind: input, shape index: {}]
  %s2 = inlined_call_operand.vmem [shape: f32[2,1,512], index: 2, kind: input, shape index: {}]
  %s3 = inlined_call_operand.vmem [shape: bf16[2,512,128], index: 3, kind: input, shape index: {}]
  %s4 = inlined_call_operand.vmem [shape: f32[2,1,128], index: 4, kind: input, shape index: {}]
  %s5 = inlined_call_operand.vmem [shape: f32[1,2,128], index: 5, kind: output, shape index: {}]
  %s6 = sld [smem:[#allocation0]]
  $region30: #{d2qn_forward.7} parent=0
    _
  %s8 = ssub.s32 1, %s6
  %s9 = scalar_select 0, %s8, %s6
  // Predicated region
  $region2: #{d2qn_forward.7} parent=0 // pred_check
    _
  $region3: #{d2qn_forward.7} parent=0 // pred_check_branch
    %11 = sbr.rel (0) target = $region5
  $region4: #{d2qn_forward.7} parent=0 // pred_region
    _
  $region5: #{d2qn_forward.7} parent=0 // pred_fallthru
    _
  // Predicated region
  $region6: #{d2qn_forward.7} parent=0 // pred_check
    _
  $region7: #{d2qn_forward.7} parent=0 // pred_check_branch
    %13 = sbr.rel (0) target = $region9
  $region8: #{d2qn_forward.7} parent=0 // pred_region
    _
  $region9: #{d2qn_forward.7} parent=0 // pred_fallthru
    _
  // Predicated region
  $region10: #{d2qn_forward.7} parent=0 // pred_check
    _
  $region11: #{d2qn_forward.7} parent=0 // pred_check_branch
    %15 = sbr.rel (0) target = $region13
  $region12: #{d2qn_forward.7} parent=0 // pred_region
    _
  $region13: #{d2qn_forward.7} parent=0 // pred_fallthru
    _
  // Predicated region
  $region14: #{d2qn_forward.7} parent=0 // pred_check
    _
  $region15: #{d2qn_forward.7} parent=0 // pred_check_branch
    %17 = sbr.rel (0) target = $region17
  $region16: #{d2qn_forward.7} parent=0 // pred_region
    _
  $region17: #{d2qn_forward.7} parent=0 // pred_fallthru
    _
  // Predicated region
  $region18: #{d2qn_forward.7} parent=0 // pred_check
    _
  $region19: #{d2qn_forward.7} parent=0 // pred_check_branch
    %19 = sbr.rel (0) target = $region21
  $region20: #{d2qn_forward.7} parent=0 // pred_region
    _
  $region21: #{d2qn_forward.7} parent=0 // pred_fallthru
    _
  %v21 = vld [vmem:[%s0] sm:$0xff]
  %v22 = vld [vmem:[%s0 + $0x8] sm:$0xff]
  %v23 = vld [vmem:[%s0 + $0x10] sm:$0xff]
  %v24 = vld [vmem:[%s0 + $0x18] sm:$0x1]
  %v25 = vld [vmem:[%s1] sm:$0xff]
  %v26 = vld [vmem:[%s1 + $0x8] sm:$0xff]
  %v27 = vld [vmem:[%s1 + $0x10] sm:$0xff]
  %v28 = vld [vmem:[%s1 + $0x18] sm:$0xff]
  %v29 = vld [vmem:[%s1 + $0x20] sm:$0xff]
  %v30 = vld [vmem:[%s1 + $0x28] sm:$0xff]
  %v31 = vld [vmem:[%s1 + $0x30] sm:$0xff]
  %v32 = vld [vmem:[%s1 + $0x38] sm:$0xff]
  %v33 = vld [vmem:[%s1 + $0x40] sm:$0xff]
  %v34 = vld [vmem:[%s1 + $0x48] sm:$0xff]
  %v35 = vld [vmem:[%s1 + $0x50] sm:$0xff]
  %v36 = vld [vmem:[%s1 + $0x58] sm:$0xff]
  %v37 = vld [vmem:[%s1 + $0x60] sm:$0xff]
  %v38 = vld [vmem:[%s1 + $0x68] sm:$0xff]
  %v39 = vld [vmem:[%s1 + $0x70] sm:$0xff]
  %v40 = vld [vmem:[%s1 + $0x78] sm:$0xff]
  %v41 = vld [vmem:[%s1 + $0x80] sm:$0xff]
  %v42 = vld [vmem:[%s1 + $0x88] sm:$0xff]
  %v43 = vld [vmem:[%s1 + $0x90] sm:$0xff]
  %v44 = vld [vmem:[%s1 + $0x98] sm:$0xff]
  %v45 = vld [vmem:[%s1 + $0xa0] sm:$0xff]
  %v46 = vld [vmem:[%s1 + $0xa8] sm:$0xff]
  %v47 = vld [vmem:[%s1 + $0xb0] sm:$0xff]
  %v48 = vld [vmem:[%s1 + $0xb8] sm:$0xff]
  %v49 = vld [vmem:[%s1 + $0xc0] sm:$0xff]
  %v50 = vld [vmem:[%s1 + $0xc8] sm:$0xff]
  %v51 = vld [vmem:[%s1 + $0xd0] sm:$0xff]
  %v52 = vld [vmem:[%s1 + $0xd8] sm:$0xff]
  %v53 = vld [vmem:[%s1 + $0xe0] sm:$0xff]
  %v54 = vld [vmem:[%s1 + $0xe8] sm:$0xff]
  %v55 = vld [vmem:[%s1 + $0xf0] sm:$0xff]
  %v56 = vld [vmem:[%s1 + $0xf8] sm:$0xff]
  %v57 = vld [vmem:[%s1 + $0x100] sm:$0xff]
  %v58 = vld [vmem:[%s1 + $0x108] sm:$0xff]
  %v59 = vld [vmem:[%s1 + $0x110] sm:$0xff]
  %v60 = vld [vmem:[%s1 + $0x118] sm:$0xff]
  %v61 = vld [vmem:[%s1 + $0x120] sm:$0xff]
  %v62 = vld [vmem:[%s1 + $0x128] sm:$0xff]
  %v63 = vld [vmem:[%s1 + $0x130] sm:$0xff]
  %v64 = vld [vmem:[%s1 + $0x138] sm:$0xff]
  %v65 = vld [vmem:[%s1 + $0x140] sm:$0xff]
  %v66 = vld [vmem:[%s1 + $0x148] sm:$0xff]
  %v67 = vld [vmem:[%s1 + $0x150] sm:$0xff]
  %v68 = vld [vmem:[%s1 + $0x158] sm:$0xff]
  %v69 = vld [vmem:[%s1 + $0x160] sm:$0xff]
  %v70 = vld [vmem:[%s1 + $0x168] sm:$0xff]
  %v71 = vld [vmem:[%s1 + $0x170] sm:$0xff]
  %v72 = vld [vmem:[%s1 + $0x178] sm:$0xff]
  %v73 = vld [vmem:[%s1 + $0x180] sm:$0xff]
  %v74 = vld [vmem:[%s1 + $0x188] sm:$0xff]
  %v75 = vld [vmem:[%s1 + $0x190] sm:$0xff]
  %v76 = vld [vmem:[%s1 + $0x198] sm:$0xff]
  %v77 = vld [vmem:[%s1 + $0x1a0] sm:$0xff]
  %v78 = vld [vmem:[%s1 + $0x1a8] sm:$0xff]
  %v79 = vld [vmem:[%s1 + $0x1b0] sm:$0xff]
  %v80 = vld [vmem:[%s1 + $0x1b8] sm:$0xff]
  %v81 = vld [vmem:[%s1 + $0x1c0] sm:$0xff]
  %v82 = vld [vmem:[%s1 + $0x1c8] sm:$0xff]
  %v83 = vld [vmem:[%s1 + $0x1d0] sm:$0xff]
  %v84 = vld [vmem:[%s1 + $0x1d8] sm:$0xff]
  %v85 = vld [vmem:[%s1 + $0x1e0] sm:$0xff]
  %v86 = vld [vmem:[%s1 + $0x1e8] sm:$0xff]
  %v87 = vld [vmem:[%s1 + $0x1f0] sm:$0xff]
  %v88 = vld [vmem:[%s1 + $0x1f8] sm:$0xff]
  %v89 = vld [vmem:[%s1 + $0x200] sm:$0xff]
  %v90 = vld [vmem:[%s1 + $0x208] sm:$0xff]
  %v91 = vld [vmem:[%s1 + $0x210] sm:$0xff]
  %v92 = vld [vmem:[%s1 + $0x218] sm:$0xff]
  %v93 = vld [vmem:[%s1 + $0x220] sm:$0xff]
  %v94 = vld [vmem:[%s1 + $0x228] sm:$0xff]
  %v95 = vld [vmem:[%s1 + $0x230] sm:$0xff]
  %v96 = vld [vmem:[%s1 + $0x238] sm:$0xff]
  %v97 = vld [vmem:[%s1 + $0x240] sm:$0xff]
  %v98 = vld [vmem:[%s1 + $0x248] sm:$0xff]
  %v99 = vld [vmem:[%s1 + $0x250] sm:$0xff]
  %v100 = vld [vmem:[%s1 + $0x258] sm:$0xff]
  %v101 = vld [vmem:[%s1 + $0x260] sm:$0xff]
  %v102 = vld [vmem:[%s1 + $0x268] sm:$0xff]
  %v103 = vld [vmem:[%s1 + $0x270] sm:$0xff]
  %v104 = vld [vmem:[%s1 + $0x278] sm:$0xff]
  %v105 = vld [vmem:[%s1 + $0x280] sm:$0xff]
  %v106 = vld [vmem:[%s1 + $0x288] sm:$0xff]
  %v107 = vld [vmem:[%s1 + $0x290] sm:$0xff]
  %v108 = vld [vmem:[%s1 + $0x298] sm:$0xff]
  %v109 = vld [vmem:[%s1 + $0x2a0] sm:$0xff]
  %v110 = vld [vmem:[%s1 + $0x2a8] sm:$0xff]
  %v111 = vld [vmem:[%s1 + $0x2b0] sm:$0xff]
  %v112 = vld [vmem:[%s1 + $0x2b8] sm:$0xff]
  %v113 = vld [vmem:[%s1 + $0x2c0] sm:$0xff]
  %v114 = vld [vmem:[%s1 + $0x2c8] sm:$0xff]
  %v115 = vld [vmem:[%s1 + $0x2d0] sm:$0xff]
  %v116 = vld [vmem:[%s1 + $0x2d8] sm:$0xff]
  %v117 = vld [vmem:[%s1 + $0x2e0] sm:$0xff]
  %v118 = vld [vmem:[%s1 + $0x2e8] sm:$0xff]
  %v119 = vld [vmem:[%s1 + $0x2f0] sm:$0xff]
  %v120 = vld [vmem:[%s1 + $0x2f8] sm:$0xff]
  %v121 = vld [vmem:[%s1 + $0x300] sm:$0xff]
  %v122 = vld [vmem:[%s1 + $0x308] sm:$0xff]
  %v123 = vld [vmem:[%s1 + $0x310] sm:$0xff]
  %v124 = vld [vmem:[%s1 + $0x318] sm:$0xff]
  %v125 = vld [vmem:[%s1 + $0x320] sm:$0xff]
  %v126 = vld [vmem:[%s1 + $0x328] sm:$0xff]
  %v127 = vld [vmem:[%s1 + $0x330] sm:$0xff]
  %v128 = vld [vmem:[%s1 + $0x338] sm:$0xff]
  %v129 = vld [vmem:[%s1 + $0x340] sm:$0xff]
  %v130 = vld [vmem:[%s1 + $0x348] sm:$0xff]
  %v131 = vld [vmem:[%s1 + $0x350] sm:$0xff]
  %v132 = vld [vmem:[%s1 + $0x358] sm:$0xff]
  %v133 = vld [vmem:[%s1 + $0x360] sm:$0xff]
  %v134 = vld [vmem:[%s1 + $0x368] sm:$0xff]
  %v135 = vld [vmem:[%s1 + $0x370] sm:$0xff]
  %v136 = vld [vmem:[%s1 + $0x378] sm:$0xff]
  %v137 = vld [vmem:[%s1 + $0x380] sm:$0xff]
  %v138 = vld [vmem:[%s1 + $0x388] sm:$0xff]
  %v139 = vld [vmem:[%s1 + $0x390] sm:$0xff]
  %v140 = vld [vmem:[%s1 + $0x398] sm:$0xff]
  %v141 = vld [vmem:[%s1 + $0x3a0] sm:$0xff]
  %v142 = vld [vmem:[%s1 + $0x3a8] sm:$0xff]
  %v143 = vld [vmem:[%s1 + $0x3b0] sm:$0xff]
  %v144 = vld [vmem:[%s1 + $0x3b8] sm:$0xff]
  %v145 = vld [vmem:[%s1 + $0x3c0] sm:$0xff]
  %v146 = vld [vmem:[%s1 + $0x3c8] sm:$0xff]
  %v147 = vld [vmem:[%s1 + $0x3d0] sm:$0xff]
  %v148 = vld [vmem:[%s1 + $0x3d8] sm:$0xff]
  %v149 = vld [vmem:[%s1 + $0x3e0] sm:$0xff]
  %v150 = vld [vmem:[%s1 + $0x3e8] sm:$0xff]
  %v151 = vld [vmem:[%s1 + $0x3f0] sm:$0xff]
  %v152 = vld [vmem:[%s1 + $0x3f8] sm:$0xff]
  %v153 = vld [vmem:[%s1 + $0x400] sm:$0xff]
  %v154 = vld [vmem:[%s1 + $0x408] sm:$0xff]
  %v155 = vld [vmem:[%s1 + $0x410] sm:$0xff]
  %v156 = vld [vmem:[%s1 + $0x418] sm:$0xff]
  %v157 = vld [vmem:[%s1 + $0x420] sm:$0xff]
  %v158 = vld [vmem:[%s1 + $0x428] sm:$0xff]
  %v159 = vld [vmem:[%s1 + $0x430] sm:$0xff]
  %v160 = vld [vmem:[%s1 + $0x438] sm:$0xff]
  %v161 = vld [vmem:[%s1 + $0x440] sm:$0xff]
  %v162 = vld [vmem:[%s1 + $0x448] sm:$0xff]
  %v163 = vld [vmem:[%s1 + $0x450] sm:$0xff]
  %v164 = vld [vmem:[%s1 + $0x458] sm:$0xff]
  %v165 = vld [vmem:[%s1 + $0x460] sm:$0xff]
  %v166 = vld [vmem:[%s1 + $0x468] sm:$0xff]
  %v167 = vld [vmem:[%s1 + $0x470] sm:$0xff]
  %v168 = vld [vmem:[%s1 + $0x478] sm:$0xff]
  %v169 = vld [vmem:[%s1 + $0x480] sm:$0xff]
  %v170 = vld [vmem:[%s1 + $0x488] sm:$0xff]
  %v171 = vld [vmem:[%s1 + $0x490] sm:$0xff]
  %v172 = vld [vmem:[%s1 + $0x498] sm:$0xff]
  %v173 = vld [vmem:[%s1 + $0x4a0] sm:$0xff]
  %v174 = vld [vmem:[%s1 + $0x4a8] sm:$0xff]
  %v175 = vld [vmem:[%s1 + $0x4b0] sm:$0xff]
  %v176 = vld [vmem:[%s1 + $0x4b8] sm:$0xff]
  %v177 = vld [vmem:[%s1 + $0x4c0] sm:$0xff]
  %v178 = vld [vmem:[%s1 + $0x4c8] sm:$0xff]
  %v179 = vld [vmem:[%s1 + $0x4d0] sm:$0xff]
  %v180 = vld [vmem:[%s1 + $0x4d8] sm:$0xff]
  %v181 = vld [vmem:[%s1 + $0x4e0] sm:$0xff]
  %v182 = vld [vmem:[%s1 + $0x4e8] sm:$0xff]
  %v183 = vld [vmem:[%s1 + $0x4f0] sm:$0xff]
  %v184 = vld [vmem:[%s1 + $0x4f8] sm:$0xff]
  %v185 = vld [vmem:[%s1 + $0x500] sm:$0xff]
  %v186 = vld [vmem:[%s1 + $0x508] sm:$0xff]
  %v187 = vld [vmem:[%s1 + $0x510] sm:$0xff]
  %v188 = vld [vmem:[%s1 + $0x518] sm:$0xff]
  %v189 = vld [vmem:[%s1 + $0x520] sm:$0xff]
  %v190 = vld [vmem:[%s1 + $0x528] sm:$0xff]
  %v191 = vld [vmem:[%s1 + $0x530] sm:$0xff]
  %v192 = vld [vmem:[%s1 + $0x538] sm:$0xff]
  %v193 = vld [vmem:[%s1 + $0x540] sm:$0xff]
  %v194 = vld [vmem:[%s1 + $0x548] sm:$0xff]
  %v195 = vld [vmem:[%s1 + $0x550] sm:$0xff]
  %v196 = vld [vmem:[%s1 + $0x558] sm:$0xff]
  %v197 = vld [vmem:[%s1 + $0x560] sm:$0xff]
  %v198 = vld [vmem:[%s1 + $0x568] sm:$0xff]
  %v199 = vld [vmem:[%s1 + $0x570] sm:$0xff]
  %v200 = vld [vmem:[%s1 + $0x578] sm:$0xff]
  %v201 = vld [vmem:[%s1 + $0x580] sm:$0xff]
  %v202 = vld [vmem:[%s1 + $0x588] sm:$0xff]
  %v203 = vld [vmem:[%s1 + $0x590] sm:$0xff]
  %v204 = vld [vmem:[%s1 + $0x598] sm:$0xff]
  %v205 = vld [vmem:[%s1 + $0x5a0] sm:$0xff]
  %v206 = vld [vmem:[%s1 + $0x5a8] sm:$0xff]
  %v207 = vld [vmem:[%s1 + $0x5b0] sm:$0xff]
  %v208 = vld [vmem:[%s1 + $0x5b8] sm:$0xff]
  %v209 = vld [vmem:[%s1 + $0x5c0] sm:$0xff]
  %v210 = vld [vmem:[%s1 + $0x5c8] sm:$0xff]
  %v211 = vld [vmem:[%s1 + $0x5d0] sm:$0xff]
  %v212 = vld [vmem:[%s1 + $0x5d8] sm:$0xff]
  %v213 = vld [vmem:[%s1 + $0x5e0] sm:$0xff]
  %v214 = vld [vmem:[%s1 + $0x5e8] sm:$0xff]
  %v215 = vld [vmem:[%s1 + $0x5f0] sm:$0xff]
  %v216 = vld [vmem:[%s1 + $0x5f8] sm:$0xff]
  %v217 = vld [vmem:[%s1 + $0x600] sm:$0xff]
  %v218 = vld [vmem:[%s1 + $0x608] sm:$0xff]
  %v219 = vld [vmem:[%s1 + $0x610] sm:$0xff]
  %v220 = vld [vmem:[%s1 + $0x618] sm:$0xff]
  %v221 = vld [vmem:[%s1 + $0x620] sm:$0xff]
  %v222 = vld [vmem:[%s1 + $0x628] sm:$0xff]
  %v223 = vld [vmem:[%s1 + $0x630] sm:$0xff]
  %v224 = vld [vmem:[%s1 + $0x638] sm:$0xff]
  %v225 = vld [vmem:[%s1 + $0x640] sm:$0xff]
  %v226 = vld [vmem:[%s1 + $0x648] sm:$0xff]
  %v227 = vld [vmem:[%s1 + $0x650] sm:$0xff]
  %v228 = vld [vmem:[%s1 + $0x658] sm:$0xff]
  %v229 = vld [vmem:[%s1 + $0x660] sm:$0xff]
  %v230 = vld [vmem:[%s1 + $0x668] sm:$0xff]
  %v231 = vld [vmem:[%s1 + $0x670] sm:$0xff]
  %v232 = vld [vmem:[%s1 + $0x678] sm:$0xff]
  %v233 = vld [vmem:[%s1 + $0x680] sm:$0xff]
  %v234 = vld [vmem:[%s1 + $0x688] sm:$0xff]
  %v235 = vld [vmem:[%s1 + $0x690] sm:$0xff]
  %v236 = vld [vmem:[%s1 + $0x698] sm:$0xff]
  %v237 = vld [vmem:[%s1 + $0x6a0] sm:$0xff]
  %v238 = vld [vmem:[%s1 + $0x6a8] sm:$0xff]
  %v239 = vld [vmem:[%s1 + $0x6b0] sm:$0xff]
  %v240 = vld [vmem:[%s1 + $0x6b8] sm:$0xff]
  %v241 = vld [vmem:[%s1 + $0x6c0] sm:$0xff]
  %v242 = vld [vmem:[%s1 + $0x6c8] sm:$0xff]
  %v243 = vld [vmem:[%s1 + $0x6d0] sm:$0xff]
  %v244 = vld [vmem:[%s1 + $0x6d8] sm:$0xff]
  %v245 = vld [vmem:[%s1 + $0x6e0] sm:$0xff]
  %v246 = vld [vmem:[%s1 + $0x6e8] sm:$0xff]
  %v247 = vld [vmem:[%s1 + $0x6f0] sm:$0xff]
  %v248 = vld [vmem:[%s1 + $0x6f8] sm:$0xff]
  %v249 = vld [vmem:[%s1 + $0x700] sm:$0xff]
  %v250 = vld [vmem:[%s1 + $0x708] sm:$0xff]
  %v251 = vld [vmem:[%s1 + $0x710] sm:$0xff]
  %v252 = vld [vmem:[%s1 + $0x718] sm:$0xff]
  %v253 = vld [vmem:[%s1 + $0x720] sm:$0xff]
  %v254 = vld [vmem:[%s1 + $0x728] sm:$0xff]
  %v255 = vld [vmem:[%s1 + $0x730] sm:$0xff]
  %v256 = vld [vmem:[%s1 + $0x738] sm:$0xff]
  %v257 = vld [vmem:[%s1 + $0x740] sm:$0xff]
  %v258 = vld [vmem:[%s1 + $0x748] sm:$0xff]
  %v259 = vld [vmem:[%s1 + $0x750] sm:$0xff]
  %v260 = vld [vmem:[%s1 + $0x758] sm:$0xff]
  %v261 = vld [vmem:[%s1 + $0x760] sm:$0xff]
  %v262 = vld [vmem:[%s1 + $0x768] sm:$0xff]
  %v263 = vld [vmem:[%s1 + $0x770] sm:$0xff]
  %v264 = vld [vmem:[%s1 + $0x778] sm:$0xff]
  %v265 = vld [vmem:[%s1 + $0x780] sm:$0xff]
  %v266 = vld [vmem:[%s1 + $0x788] sm:$0xff]
  %v267 = vld [vmem:[%s1 + $0x790] sm:$0xff]
  %v268 = vld [vmem:[%s1 + $0x798] sm:$0xff]
  %v269 = vld [vmem:[%s1 + $0x7a0] sm:$0xff]
  %v270 = vld [vmem:[%s1 + $0x7a8] sm:$0xff]
  %v271 = vld [vmem:[%s1 + $0x7b0] sm:$0xff]
  %v272 = vld [vmem:[%s1 + $0x7b8] sm:$0xff]
  %v273 = vld [vmem:[%s1 + $0x7c0] sm:$0xff]
  %v274 = vld [vmem:[%s1 + $0x7c8] sm:$0xff]
  %v275 = vld [vmem:[%s1 + $0x7d0] sm:$0xff]
  %v276 = vld [vmem:[%s1 + $0x7d8] sm:$0xff]
  %v277 = vld [vmem:[%s1 + $0x7e0] sm:$0xff]
  %v278 = vld [vmem:[%s1 + $0x7e8] sm:$0xff]
  %v279 = vld [vmem:[%s1 + $0x7f0] sm:$0xff]
  %v280 = vld [vmem:[%s1 + $0x7f8] sm:$0xff]
  %v281 = vld [vmem:[%s1 + $0x800] sm:$0xff]
  %v282 = vld [vmem:[%s1 + $0x808] sm:$0xff]
  %v283 = vld [vmem:[%s1 + $0x810] sm:$0xff]
  %v284 = vld [vmem:[%s1 + $0x818] sm:$0xff]
  %v285 = vld [vmem:[%s1 + $0x820] sm:$0xff]
  %v286 = vld [vmem:[%s1 + $0x828] sm:$0xff]
  %v287 = vld [vmem:[%s1 + $0x830] sm:$0xff]
  %v288 = vld [vmem:[%s1 + $0x838] sm:$0xff]
  %v289 = vld [vmem:[%s1 + $0x840] sm:$0xff]
  %v290 = vld [vmem:[%s1 + $0x848] sm:$0xff]
  %v291 = vld [vmem:[%s1 + $0x850] sm:$0xff]
  %v292 = vld [vmem:[%s1 + $0x858] sm:$0xff]
  %v293 = vld [vmem:[%s1 + $0x860] sm:$0xff]
  %v294 = vld [vmem:[%s1 + $0x868] sm:$0xff]
  %v295 = vld [vmem:[%s1 + $0x870] sm:$0xff]
  %v296 = vld [vmem:[%s1 + $0x878] sm:$0xff]
  %v297 = vld [vmem:[%s1 + $0x880] sm:$0xff]
  %v298 = vld [vmem:[%s1 + $0x888] sm:$0xff]
  %v299 = vld [vmem:[%s1 + $0x890] sm:$0xff]
  %v300 = vld [vmem:[%s1 + $0x898] sm:$0xff]
  %v301 = vld [vmem:[%s1 + $0x8a0] sm:$0xff]
  %v302 = vld [vmem:[%s1 + $0x8a8] sm:$0xff]
  %v303 = vld [vmem:[%s1 + $0x8b0] sm:$0xff]
  %v304 = vld [vmem:[%s1 + $0x8b8] sm:$0xff]
  %v305 = vld [vmem:[%s1 + $0x8c0] sm:$0xff]
  %v306 = vld [vmem:[%s1 + $0x8c8] sm:$0xff]
  %v307 = vld [vmem:[%s1 + $0x8d0] sm:$0xff]
  %v308 = vld [vmem:[%s1 + $0x8d8] sm:$0xff]
  %v309 = vld [vmem:[%s1 + $0x8e0] sm:$0xff]
  %v310 = vld [vmem:[%s1 + $0x8e8] sm:$0xff]
  %v311 = vld [vmem:[%s1 + $0x8f0] sm:$0xff]
  %v312 = vld [vmem:[%s1 + $0x8f8] sm:$0xff]
  %v313 = vld [vmem:[%s1 + $0x900] sm:$0xff]
  %v314 = vld [vmem:[%s1 + $0x908] sm:$0xff]
  %v315 = vld [vmem:[%s1 + $0x910] sm:$0xff]
  %v316 = vld [vmem:[%s1 + $0x918] sm:$0xff]
  %v317 = vld [vmem:[%s1 + $0x920] sm:$0xff]
  %v318 = vld [vmem:[%s1 + $0x928] sm:$0xff]
  %v319 = vld [vmem:[%s1 + $0x930] sm:$0xff]
  %v320 = vld [vmem:[%s1 + $0x938] sm:$0xff]
  %v321 = vld [vmem:[%s1 + $0x940] sm:$0xff]
  %v322 = vld [vmem:[%s1 + $0x948] sm:$0xff]
  %v323 = vld [vmem:[%s1 + $0x950] sm:$0xff]
  %v324 = vld [vmem:[%s1 + $0x958] sm:$0xff]
  %v325 = vld [vmem:[%s1 + $0x960] sm:$0xff]
  %v326 = vld [vmem:[%s1 + $0x968] sm:$0xff]
  %v327 = vld [vmem:[%s1 + $0x970] sm:$0xff]
  %v328 = vld [vmem:[%s1 + $0x978] sm:$0xff]
  %v329 = vld [vmem:[%s1 + $0x980] sm:$0xff]
  %v330 = vld [vmem:[%s1 + $0x988] sm:$0xff]
  %v331 = vld [vmem:[%s1 + $0x990] sm:$0xff]
  %v332 = vld [vmem:[%s1 + $0x998] sm:$0xff]
  %v333 = vld [vmem:[%s1 + $0x9a0] sm:$0xff]
  %v334 = vld [vmem:[%s1 + $0x9a8] sm:$0xff]
  %v335 = vld [vmem:[%s1 + $0x9b0] sm:$0xff]
  %v336 = vld [vmem:[%s1 + $0x9b8] sm:$0xff]
  %v337 = vld [vmem:[%s1 + $0x9c0] sm:$0xff]
  %v338 = vld [vmem:[%s1 + $0x9c8] sm:$0xff]
  %v339 = vld [vmem:[%s1 + $0x9d0] sm:$0xff]
  %v340 = vld [vmem:[%s1 + $0x9d8] sm:$0xff]
  %v341 = vld [vmem:[%s1 + $0x9e0] sm:$0xff]
  %v342 = vld [vmem:[%s1 + $0x9e8] sm:$0xff]
  %v343 = vld [vmem:[%s1 + $0x9f0] sm:$0xff]
  %v344 = vld [vmem:[%s1 + $0x9f8] sm:$0xff]
  %v345 = vld [vmem:[%s1 + $0xa00] sm:$0xff]
  %v346 = vld [vmem:[%s1 + $0xa08] sm:$0xff]
  %v347 = vld [vmem:[%s1 + $0xa10] sm:$0xff]
  %v348 = vld [vmem:[%s1 + $0xa18] sm:$0xff]
  %v349 = vld [vmem:[%s1 + $0xa20] sm:$0xff]
  %v350 = vld [vmem:[%s1 + $0xa28] sm:$0xff]
  %v351 = vld [vmem:[%s1 + $0xa30] sm:$0xff]
  %v352 = vld [vmem:[%s1 + $0xa38] sm:$0xff]
  %v353 = vld [vmem:[%s1 + $0xa40] sm:$0xff]
  %v354 = vld [vmem:[%s1 + $0xa48] sm:$0xff]
  %v355 = vld [vmem:[%s1 + $0xa50] sm:$0xff]
  %v356 = vld [vmem:[%s1 + $0xa58] sm:$0xff]
  %v357 = vld [vmem:[%s1 + $0xa60] sm:$0xff]
  %v358 = vld [vmem:[%s1 + $0xa68] sm:$0xff]
  %v359 = vld [vmem:[%s1 + $0xa70] sm:$0xff]
  %v360 = vld [vmem:[%s1 + $0xa78] sm:$0xff]
  %v361 = vld [vmem:[%s1 + $0xa80] sm:$0xff]
  %v362 = vld [vmem:[%s1 + $0xa88] sm:$0xff]
  %v363 = vld [vmem:[%s1 + $0xa90] sm:$0xff]
  %v364 = vld [vmem:[%s1 + $0xa98] sm:$0xff]
  %v365 = vld [vmem:[%s1 + $0xaa0] sm:$0xff]
  %v366 = vld [vmem:[%s1 + $0xaa8] sm:$0xff]
  %v367 = vld [vmem:[%s1 + $0xab0] sm:$0xff]
  %v368 = vld [vmem:[%s1 + $0xab8] sm:$0xff]
  %v369 = vld [vmem:[%s1 + $0xac0] sm:$0xff]
  %v370 = vld [vmem:[%s1 + $0xac8] sm:$0xff]
  %v371 = vld [vmem:[%s1 + $0xad0] sm:$0xff]
  %v372 = vld [vmem:[%s1 + $0xad8] sm:$0xff]
  %v373 = vld [vmem:[%s1 + $0xae0] sm:$0xff]
  %v374 = vld [vmem:[%s1 + $0xae8] sm:$0xff]
  %v375 = vld [vmem:[%s1 + $0xaf0] sm:$0xff]
  %v376 = vld [vmem:[%s1 + $0xaf8] sm:$0xff]
  %v377 = vld [vmem:[%s1 + $0xb00] sm:$0xff]
  %v378 = vld [vmem:[%s1 + $0xb08] sm:$0xff]
  %v379 = vld [vmem:[%s1 + $0xb10] sm:$0xff]
  %v380 = vld [vmem:[%s1 + $0xb18] sm:$0xff]
  %v381 = vld [vmem:[%s1 + $0xb20] sm:$0xff]
  %v382 = vld [vmem:[%s1 + $0xb28] sm:$0xff]
  %v383 = vld [vmem:[%s1 + $0xb30] sm:$0xff]
  %v384 = vld [vmem:[%s1 + $0xb38] sm:$0xff]
  %v385 = vld [vmem:[%s1 + $0xb40] sm:$0xff]
  %v386 = vld [vmem:[%s1 + $0xb48] sm:$0xff]
  %v387 = vld [vmem:[%s1 + $0xb50] sm:$0xff]
  %v388 = vld [vmem:[%s1 + $0xb58] sm:$0xff]
  %v389 = vld [vmem:[%s1 + $0xb60] sm:$0xff]
  %v390 = vld [vmem:[%s1 + $0xb68] sm:$0xff]
  %v391 = vld [vmem:[%s1 + $0xb70] sm:$0xff]
  %v392 = vld [vmem:[%s1 + $0xb78] sm:$0xff]
  %v393 = vld [vmem:[%s1 + $0xb80] sm:$0xff]
  %v394 = vld [vmem:[%s1 + $0xb88] sm:$0xff]
  %v395 = vld [vmem:[%s1 + $0xb90] sm:$0xff]
  %v396 = vld [vmem:[%s1 + $0xb98] sm:$0xff]
  %v397 = vld [vmem:[%s1 + $0xba0] sm:$0xff]
  %v398 = vld [vmem:[%s1 + $0xba8] sm:$0xff]
  %v399 = vld [vmem:[%s1 + $0xbb0] sm:$0xff]
  %v400 = vld [vmem:[%s1 + $0xbb8] sm:$0xff]
  %v401 = vld [vmem:[%s1 + $0xbc0] sm:$0xff]
  %v402 = vld [vmem:[%s1 + $0xbc8] sm:$0xff]
  %v403 = vld [vmem:[%s1 + $0xbd0] sm:$0xff]
  %v404 = vld [vmem:[%s1 + $0xbd8] sm:$0xff]
  %v405 = vld [vmem:[%s1 + $0xbe0] sm:$0xff]
  %v406 = vld [vmem:[%s1 + $0xbe8] sm:$0xff]
  %v407 = vld [vmem:[%s1 + $0xbf0] sm:$0xff]
  %v408 = vld [vmem:[%s1 + $0xbf8] sm:$0xff]
  %v409 = vld [vmem:[%s1 + $0xc00] sm:$0xff]
  %v410 = vld [vmem:[%s1 + $0xc08] sm:$0xff]
  %v411 = vld [vmem:[%s1 + $0xc10] sm:$0xff]
  %v412 = vld [vmem:[%s1 + $0xc18] sm:$0xff]
  %v413 = vld [vmem:[%s1 + $0xc20] sm:$0xff]
  %v414 = vld [vmem:[%s1 + $0xc28] sm:$0xff]
  %v415 = vld [vmem:[%s1 + $0xc30] sm:$0xff]
  %v416 = vld [vmem:[%s1 + $0xc38] sm:$0xff]
  %v417 = vld [vmem:[%s1 + $0xc40] sm:$0xff]
  %v418 = vld [vmem:[%s1 + $0xc48] sm:$0xff]
  %v419 = vld [vmem:[%s1 + $0xc50] sm:$0xff]
  %v420 = vld [vmem:[%s1 + $0xc58] sm:$0xff]
  %v421 = vld [vmem:[%s1 + $0xc60] sm:$0xff]
  %v422 = vld [vmem:[%s1 + $0xc68] sm:$0xff]
  %v423 = vld [vmem:[%s1 + $0xc70] sm:$0xff]
  %v424 = vld [vmem:[%s1 + $0xc78] sm:$0xff]
  %v425 = vld [vmem:[%s1 + $0xc80] sm:$0xff]
  %v426 = vld [vmem:[%s1 + $0xc88] sm:$0xff]
  %v427 = vld [vmem:[%s1 + $0xc90] sm:$0xff]
  %v428 = vld [vmem:[%s1 + $0xc98] sm:$0xff]
  %v429 = vld [vmem:[%s1 + $0xca0] sm:$0xff]
  %v430 = vld [vmem:[%s1 + $0xca8] sm:$0xff]
  %v431 = vld [vmem:[%s1 + $0xcb0] sm:$0xff]
  %v432 = vld [vmem:[%s1 + $0xcb8] sm:$0xff]
  %v433 = vld [vmem:[%s1 + $0xcc0] sm:$0xff]
  %v434 = vld [vmem:[%s1 + $0xcc8] sm:$0xff]
  %v435 = vld [vmem:[%s1 + $0xcd0] sm:$0xff]
  %v436 = vld [vmem:[%s1 + $0xcd8] sm:$0xff]
  %v437 = vld [vmem:[%s1 + $0xce0] sm:$0xff]
  %v438 = vld [vmem:[%s1 + $0xce8] sm:$0xff]
  %v439 = vld [vmem:[%s1 + $0xcf0] sm:$0xff]
  %v440 = vld [vmem:[%s1 + $0xcf8] sm:$0xff]
  %v441 = vld [vmem:[%s1 + $0xd00] sm:$0xff]
  %v442 = vld [vmem:[%s1 + $0xd08] sm:$0xff]
  %v443 = vld [vmem:[%s1 + $0xd10] sm:$0xff]
  %v444 = vld [vmem:[%s1 + $0xd18] sm:$0xff]
  %v445 = vld [vmem:[%s1 + $0xd20] sm:$0xff]
  %v446 = vld [vmem:[%s1 + $0xd28] sm:$0xff]
  %v447 = vld [vmem:[%s1 + $0xd30] sm:$0xff]
  %v448 = vld [vmem:[%s1 + $0xd38] sm:$0xff]
  %v449 = vld [vmem:[%s1 + $0xd40] sm:$0xff]
  %v450 = vld [vmem:[%s1 + $0xd48] sm:$0xff]
  %v451 = vld [vmem:[%s1 + $0xd50] sm:$0xff]
  %v452 = vld [vmem:[%s1 + $0xd58] sm:$0xff]
  %v453 = vld [vmem:[%s1 + $0xd60] sm:$0xff]
  %v454 = vld [vmem:[%s1 + $0xd68] sm:$0xff]
  %v455 = vld [vmem:[%s1 + $0xd70] sm:$0xff]
  %v456 = vld [vmem:[%s1 + $0xd78] sm:$0xff]
  %v457 = vld [vmem:[%s1 + $0xd80] sm:$0xff]
  %v458 = vld [vmem:[%s1 + $0xd88] sm:$0xff]
  %v459 = vld [vmem:[%s1 + $0xd90] sm:$0xff]
  %v460 = vld [vmem:[%s1 + $0xd98] sm:$0xff]
  %v461 = vld [vmem:[%s1 + $0xda0] sm:$0xff]
  %v462 = vld [vmem:[%s1 + $0xda8] sm:$0xff]
  %v463 = vld [vmem:[%s1 + $0xdb0] sm:$0xff]
  %v464 = vld [vmem:[%s1 + $0xdb8] sm:$0xff]
  %v465 = vld [vmem:[%s1 + $0xdc0] sm:$0xff]
  %v466 = vld [vmem:[%s1 + $0xdc8] sm:$0xff]
  %v467 = vld [vmem:[%s1 + $0xdd0] sm:$0xff]
  %v468 = vld [vmem:[%s1 + $0xdd8] sm:$0xff]
  %v469 = vld [vmem:[%s1 + $0xde0] sm:$0xff]
  %v470 = vld [vmem:[%s1 + $0xde8] sm:$0xff]
  %v471 = vld [vmem:[%s1 + $0xdf0] sm:$0xff]
  %v472 = vld [vmem:[%s1 + $0xdf8] sm:$0xff]
  %v473 = vld [vmem:[%s1 + $0xe00] sm:$0xff]
  %v474 = vld [vmem:[%s1 + $0xe08] sm:$0xff]
  %v475 = vld [vmem:[%s1 + $0xe10] sm:$0xff]
  %v476 = vld [vmem:[%s1 + $0xe18] sm:$0xff]
  %v477 = vld [vmem:[%s1 + $0xe20] sm:$0xff]
  %v478 = vld [vmem:[%s1 + $0xe28] sm:$0xff]
  %v479 = vld [vmem:[%s1 + $0xe30] sm:$0xff]
  %v480 = vld [vmem:[%s1 + $0xe38] sm:$0xff]
  %v481 = vld [vmem:[%s1 + $0xe40] sm:$0xff]
  %v482 = vld [vmem:[%s1 + $0xe48] sm:$0xff]
  %v483 = vld [vmem:[%s1 + $0xe50] sm:$0xff]
  %v484 = vld [vmem:[%s1 + $0xe58] sm:$0xff]
  %v485 = vld [vmem:[%s1 + $0xe60] sm:$0xff]
  %v486 = vld [vmem:[%s1 + $0xe68] sm:$0xff]
  %v487 = vld [vmem:[%s1 + $0xe70] sm:$0xff]
  %v488 = vld [vmem:[%s1 + $0xe78] sm:$0xff]
  %v489 = vld [vmem:[%s1 + $0xe80] sm:$0xff]
  %v490 = vld [vmem:[%s1 + $0xe88] sm:$0xff]
  %v491 = vld [vmem:[%s1 + $0xe90] sm:$0xff]
  %v492 = vld [vmem:[%s1 + $0xe98] sm:$0xff]
  %v493 = vld [vmem:[%s1 + $0xea0] sm:$0xff]
  %v494 = vld [vmem:[%s1 + $0xea8] sm:$0xff]
  %v495 = vld [vmem:[%s1 + $0xeb0] sm:$0xff]
  %v496 = vld [vmem:[%s1 + $0xeb8] sm:$0xff]
  %v497 = vld [vmem:[%s1 + $0xec0] sm:$0xff]
  %v498 = vld [vmem:[%s1 + $0xec8] sm:$0xff]
  %v499 = vld [vmem:[%s1 + $0xed0] sm:$0xff]
  %v500 = vld [vmem:[%s1 + $0xed8] sm:$0xff]
  %v501 = vld [vmem:[%s1 + $0xee0] sm:$0xff]
  %v502 = vld [vmem:[%s1 + $0xee8] sm:$0xff]
  %v503 = vld [vmem:[%s1 + $0xef0] sm:$0xff]
  %v504 = vld [vmem:[%s1 + $0xef8] sm:$0xff]
  %v505 = vld [vmem:[%s1 + $0xf00] sm:$0xff]
  %v506 = vld [vmem:[%s1 + $0xf08] sm:$0xff]
  %v507 = vld [vmem:[%s1 + $0xf10] sm:$0xff]
  %v508 = vld [vmem:[%s1 + $0xf18] sm:$0xff]
  %v509 = vld [vmem:[%s1 + $0xf20] sm:$0xff]
  %v510 = vld [vmem:[%s1 + $0xf28] sm:$0xff]
  %v511 = vld [vmem:[%s1 + $0xf30] sm:$0xff]
  %v512 = vld [vmem:[%s1 + $0xf38] sm:$0xff]
  %v513 = vld [vmem:[%s1 + $0xf40] sm:$0xff]
  %v514 = vld [vmem:[%s1 + $0xf48] sm:$0xff]
  %v515 = vld [vmem:[%s1 + $0xf50] sm:$0xff]
  %v516 = vld [vmem:[%s1 + $0xf58] sm:$0xff]
  %v517 = vld [vmem:[%s1 + $0xf60] sm:$0xff]
  %v518 = vld [vmem:[%s1 + $0xf68] sm:$0xff]
  %v519 = vld [vmem:[%s1 + $0xf70] sm:$0xff]
  %v520 = vld [vmem:[%s1 + $0xf78] sm:$0xff]
  %v521 = vld [vmem:[%s1 + $0xf80] sm:$0xff]
  %v522 = vld [vmem:[%s1 + $0xf88] sm:$0xff]
  %v523 = vld [vmem:[%s1 + $0xf90] sm:$0xff]
  %v524 = vld [vmem:[%s1 + $0xf98] sm:$0xff]
  %v525 = vld [vmem:[%s1 + $0xfa0] sm:$0xff]
  %v526 = vld [vmem:[%s1 + $0xfa8] sm:$0xff]
  %v527 = vld [vmem:[%s1 + $0xfb0] sm:$0xff]
  %v528 = vld [vmem:[%s1 + $0xfb8] sm:$0xff]
  %v529 = vld [vmem:[%s1 + $0xfc0] sm:$0xff]
  %v530 = vld [vmem:[%s1 + $0xfc8] sm:$0xff]
  %v531 = vld [vmem:[%s1 + $0xfd0] sm:$0xff]
  %v532 = vld [vmem:[%s1 + $0xfd8] sm:$0xff]
  %v533 = vld [vmem:[%s1 + $0xfe0] sm:$0xff]
  %v534 = vld [vmem:[%s1 + $0xfe8] sm:$0xff]
  %v535 = vld [vmem:[%s1 + $0xff0] sm:$0xff]
  %v536 = vld [vmem:[%s1 + $0xff8] sm:$0xff]
  %v537 = vld [vmem:[%s1 + $0x1000] sm:$0xff]
  %v538 = vld [vmem:[%s1 + $0x1008] sm:$0xff]
  %v539 = vld [vmem:[%s1 + $0x1010] sm:$0xff]
  %v540 = vld [vmem:[%s1 + $0x1018] sm:$0xff]
  %v541 = vld [vmem:[%s1 + $0x1020] sm:$0xff]
  %v542 = vld [vmem:[%s1 + $0x1028] sm:$0xff]
  %v543 = vld [vmem:[%s1 + $0x1030] sm:$0xff]
  %v544 = vld [vmem:[%s1 + $0x1038] sm:$0xff]
  %v545 = vld [vmem:[%s1 + $0x1040] sm:$0xff]
  %v546 = vld [vmem:[%s1 + $0x1048] sm:$0xff]
  %v547 = vld [vmem:[%s1 + $0x1050] sm:$0xff]
  %v548 = vld [vmem:[%s1 + $0x1058] sm:$0xff]
  %v549 = vld [vmem:[%s1 + $0x1060] sm:$0xff]
  %v550 = vld [vmem:[%s1 + $0x1068] sm:$0xff]
  %v551 = vld [vmem:[%s1 + $0x1070] sm:$0xff]
  %v552 = vld [vmem:[%s1 + $0x1078] sm:$0xff]
  %v553 = vld [vmem:[%s1 + $0x1080] sm:$0xff]
  %v554 = vld [vmem:[%s1 + $0x1088] sm:$0xff]
  %v555 = vld [vmem:[%s1 + $0x1090] sm:$0xff]
  %v556 = vld [vmem:[%s1 + $0x1098] sm:$0xff]
  %v557 = vld [vmem:[%s1 + $0x10a0] sm:$0xff]
  %v558 = vld [vmem:[%s1 + $0x10a8] sm:$0xff]
  %v559 = vld [vmem:[%s1 + $0x10b0] sm:$0xff]
  %v560 = vld [vmem:[%s1 + $0x10b8] sm:$0xff]
  %v561 = vld [vmem:[%s1 + $0x10c0] sm:$0xff]
  %v562 = vld [vmem:[%s1 + $0x10c8] sm:$0xff]
  %v563 = vld [vmem:[%s1 + $0x10d0] sm:$0xff]
  %v564 = vld [vmem:[%s1 + $0x10d8] sm:$0xff]
  %v565 = vld [vmem:[%s1 + $0x10e0] sm:$0xff]
  %v566 = vld [vmem:[%s1 + $0x10e8] sm:$0xff]
  %v567 = vld [vmem:[%s1 + $0x10f0] sm:$0xff]
  %v568 = vld [vmem:[%s1 + $0x10f8] sm:$0xff]
  %v569 = vld [vmem:[%s1 + $0x1100] sm:$0xff]
  %v570 = vld [vmem:[%s1 + $0x1108] sm:$0xff]
  %v571 = vld [vmem:[%s1 + $0x1110] sm:$0xff]
  %v572 = vld [vmem:[%s1 + $0x1118] sm:$0xff]
  %v573 = vld [vmem:[%s1 + $0x1120] sm:$0xff]
  %v574 = vld [vmem:[%s1 + $0x1128] sm:$0xff]
  %v575 = vld [vmem:[%s1 + $0x1130] sm:$0xff]
  %v576 = vld [vmem:[%s1 + $0x1138] sm:$0xff]
  %v577 = vld [vmem:[%s1 + $0x1140] sm:$0xff]
  %v578 = vld [vmem:[%s1 + $0x1148] sm:$0xff]
  %v579 = vld [vmem:[%s1 + $0x1150] sm:$0xff]
  %v580 = vld [vmem:[%s1 + $0x1158] sm:$0xff]
  %v581 = vld [vmem:[%s1 + $0x1160] sm:$0xff]
  %v582 = vld [vmem:[%s1 + $0x1168] sm:$0xff]
  %v583 = vld [vmem:[%s1 + $0x1170] sm:$0xff]
  %v584 = vld [vmem:[%s1 + $0x1178] sm:$0xff]
  %v585 = vld [vmem:[%s1 + $0x1180] sm:$0xff]
  %v586 = vld [vmem:[%s1 + $0x1188] sm:$0xff]
  %v587 = vld [vmem:[%s1 + $0x1190] sm:$0xff]
  %v588 = vld [vmem:[%s1 + $0x1198] sm:$0xff]
  %v589 = vld [vmem:[%s1 + $0x11a0] sm:$0xff]
  %v590 = vld [vmem:[%s1 + $0x11a8] sm:$0xff]
  %v591 = vld [vmem:[%s1 + $0x11b0] sm:$0xff]
  %v592 = vld [vmem:[%s1 + $0x11b8] sm:$0xff]
  %v593 = vld [vmem:[%s1 + $0x11c0] sm:$0xff]
  %v594 = vld [vmem:[%s1 + $0x11c8] sm:$0xff]
  %v595 = vld [vmem:[%s1 + $0x11d0] sm:$0xff]
  %v596 = vld [vmem:[%s1 + $0x11d8] sm:$0xff]
  %v597 = vld [vmem:[%s1 + $0x11e0] sm:$0xff]
  %v598 = vld [vmem:[%s1 + $0x11e8] sm:$0xff]
  %v599 = vld [vmem:[%s1 + $0x11f0] sm:$0xff]
  %v600 = vld [vmem:[%s1 + $0x11f8] sm:$0xff]
  %v601 = vld [vmem:[%s1 + $0x1200] sm:$0xff]
  %v602 = vld [vmem:[%s1 + $0x1208] sm:$0xff]
  %v603 = vld [vmem:[%s1 + $0x1210] sm:$0xff]
  %v604 = vld [vmem:[%s1 + $0x1218] sm:$0xff]
  %v605 = vld [vmem:[%s1 + $0x1220] sm:$0xff]
  %v606 = vld [vmem:[%s1 + $0x1228] sm:$0xff]
  %v607 = vld [vmem:[%s1 + $0x1230] sm:$0xff]
  %v608 = vld [vmem:[%s1 + $0x1238] sm:$0xff]
  %v609 = vld [vmem:[%s1 + $0x1240] sm:$0xff]
  %v610 = vld [vmem:[%s1 + $0x1248] sm:$0xff]
  %v611 = vld [vmem:[%s1 + $0x1250] sm:$0xff]
  %v612 = vld [vmem:[%s1 + $0x1258] sm:$0xff]
  %v613 = vld [vmem:[%s1 + $0x1260] sm:$0xff]
  %v614 = vld [vmem:[%s1 + $0x1268] sm:$0xff]
  %v615 = vld [vmem:[%s1 + $0x1270] sm:$0xff]
  %v616 = vld [vmem:[%s1 + $0x1278] sm:$0xff]
  %v617 = vld [vmem:[%s1 + $0x1280] sm:$0xff]
  %v618 = vld [vmem:[%s1 + $0x1288] sm:$0xff]
  %v619 = vld [vmem:[%s1 + $0x1290] sm:$0xff]
  %v620 = vld [vmem:[%s1 + $0x1298] sm:$0xff]
  %v621 = vld [vmem:[%s1 + $0x12a0] sm:$0xff]
  %v622 = vld [vmem:[%s1 + $0x12a8] sm:$0xff]
  %v623 = vld [vmem:[%s1 + $0x12b0] sm:$0xff]
  %v624 = vld [vmem:[%s1 + $0x12b8] sm:$0xff]
  %v625 = vld [vmem:[%s1 + $0x12c0] sm:$0xff]
  %v626 = vld [vmem:[%s1 + $0x12c8] sm:$0xff]
  %v627 = vld [vmem:[%s1 + $0x12d0] sm:$0xff]
  %v628 = vld [vmem:[%s1 + $0x12d8] sm:$0xff]
  %v629 = vld [vmem:[%s1 + $0x12e0] sm:$0xff]
  %v630 = vld [vmem:[%s1 + $0x12e8] sm:$0xff]
  %v631 = vld [vmem:[%s1 + $0x12f0] sm:$0xff]
  %v632 = vld [vmem:[%s1 + $0x12f8] sm:$0xff]
  %v633 = vld [vmem:[%s1 + $0x1300] sm:$0xff]
  %v634 = vld [vmem:[%s1 + $0x1308] sm:$0xff]
  %v635 = vld [vmem:[%s1 + $0x1310] sm:$0xff]
  %v636 = vld [vmem:[%s1 + $0x1318] sm:$0xff]
  %v637 = vld [vmem:[%s1 + $0x1320] sm:$0xff]
  %v638 = vld [vmem:[%s1 + $0x1328] sm:$0xff]
  %v639 = vld [vmem:[%s1 + $0x1330] sm:$0xff]
  %v640 = vld [vmem:[%s1 + $0x1338] sm:$0xff]
  %v641 = vld [vmem:[%s1 + $0x1340] sm:$0xff]
  %v642 = vld [vmem:[%s1 + $0x1348] sm:$0xff]
  %v643 = vld [vmem:[%s1 + $0x1350] sm:$0xff]
  %v644 = vld [vmem:[%s1 + $0x1358] sm:$0xff]
  %v645 = vld [vmem:[%s1 + $0x1360] sm:$0xff]
  %v646 = vld [vmem:[%s1 + $0x1368] sm:$0xff]
  %v647 = vld [vmem:[%s1 + $0x1370] sm:$0xff]
  %v648 = vld [vmem:[%s1 + $0x1378] sm:$0xff]
  %v649 = vld [vmem:[%s1 + $0x1380] sm:$0xff]
  %v650 = vld [vmem:[%s1 + $0x1388] sm:$0xff]
  %v651 = vld [vmem:[%s1 + $0x1390] sm:$0xff]
  %v652 = vld [vmem:[%s1 + $0x1398] sm:$0xff]
  %v653 = vld [vmem:[%s1 + $0x13a0] sm:$0xff]
  %v654 = vld [vmem:[%s1 + $0x13a8] sm:$0xff]
  %v655 = vld [vmem:[%s1 + $0x13b0] sm:$0xff]
  %v656 = vld [vmem:[%s1 + $0x13b8] sm:$0xff]
  %v657 = vld [vmem:[%s1 + $0x13c0] sm:$0xff]
  %v658 = vld [vmem:[%s1 + $0x13c8] sm:$0xff]
  %v659 = vld [vmem:[%s1 + $0x13d0] sm:$0xff]
  %v660 = vld [vmem:[%s1 + $0x13d8] sm:$0xff]
  %v661 = vld [vmem:[%s1 + $0x13e0] sm:$0xff]
  %v662 = vld [vmem:[%s1 + $0x13e8] sm:$0xff]
  %v663 = vld [vmem:[%s1 + $0x13f0] sm:$0xff]
  %v664 = vld [vmem:[%s1 + $0x13f8] sm:$0xff]
  %v665 = vld [vmem:[%s1 + $0x1400] sm:$0xff]
  %v666 = vld [vmem:[%s1 + $0x1408] sm:$0xff]
  %v667 = vld [vmem:[%s1 + $0x1410] sm:$0xff]
  %v668 = vld [vmem:[%s1 + $0x1418] sm:$0xff]
  %v669 = vld [vmem:[%s1 + $0x1420] sm:$0xff]
  %v670 = vld [vmem:[%s1 + $0x1428] sm:$0xff]
  %v671 = vld [vmem:[%s1 + $0x1430] sm:$0xff]
  %v672 = vld [vmem:[%s1 + $0x1438] sm:$0xff]
  %v673 = vld [vmem:[%s1 + $0x1440] sm:$0xff]
  %v674 = vld [vmem:[%s1 + $0x1448] sm:$0xff]
  %v675 = vld [vmem:[%s1 + $0x1450] sm:$0xff]
  %v676 = vld [vmem:[%s1 + $0x1458] sm:$0xff]
  %v677 = vld [vmem:[%s1 + $0x1460] sm:$0xff]
  %v678 = vld [vmem:[%s1 + $0x1468] sm:$0xff]
  %v679 = vld [vmem:[%s1 + $0x1470] sm:$0xff]
  %v680 = vld [vmem:[%s1 + $0x1478] sm:$0xff]
  %v681 = vld [vmem:[%s1 + $0x1480] sm:$0xff]
  %v682 = vld [vmem:[%s1 + $0x1488] sm:$0xff]
  %v683 = vld [vmem:[%s1 + $0x1490] sm:$0xff]
  %v684 = vld [vmem:[%s1 + $0x1498] sm:$0xff]
  %v685 = vld [vmem:[%s1 + $0x14a0] sm:$0xff]
  %v686 = vld [vmem:[%s1 + $0x14a8] sm:$0xff]
  %v687 = vld [vmem:[%s1 + $0x14b0] sm:$0xff]
  %v688 = vld [vmem:[%s1 + $0x14b8] sm:$0xff]
  %v689 = vld [vmem:[%s1 + $0x14c0] sm:$0xff]
  %v690 = vld [vmem:[%s1 + $0x14c8] sm:$0xff]
  %v691 = vld [vmem:[%s1 + $0x14d0] sm:$0xff]
  %v692 = vld [vmem:[%s1 + $0x14d8] sm:$0xff]
  %v693 = vld [vmem:[%s1 + $0x14e0] sm:$0xff]
  %v694 = vld [vmem:[%s1 + $0x14e8] sm:$0xff]
  %v695 = vld [vmem:[%s1 + $0x14f0] sm:$0xff]
  %v696 = vld [vmem:[%s1 + $0x14f8] sm:$0xff]
  %v697 = vld [vmem:[%s1 + $0x1500] sm:$0xff]
  %v698 = vld [vmem:[%s1 + $0x1508] sm:$0xff]
  %v699 = vld [vmem:[%s1 + $0x1510] sm:$0xff]
  %v700 = vld [vmem:[%s1 + $0x1518] sm:$0xff]
  %v701 = vld [vmem:[%s1 + $0x1520] sm:$0xff]
  %v702 = vld [vmem:[%s1 + $0x1528] sm:$0xff]
  %v703 = vld [vmem:[%s1 + $0x1530] sm:$0xff]
  %v704 = vld [vmem:[%s1 + $0x1538] sm:$0xff]
  %v705 = vld [vmem:[%s1 + $0x1540] sm:$0xff]
  %v706 = vld [vmem:[%s1 + $0x1548] sm:$0xff]
  %v707 = vld [vmem:[%s1 + $0x1550] sm:$0xff]
  %v708 = vld [vmem:[%s1 + $0x1558] sm:$0xff]
  %v709 = vld [vmem:[%s1 + $0x1560] sm:$0xff]
  %v710 = vld [vmem:[%s1 + $0x1568] sm:$0xff]
  %v711 = vld [vmem:[%s1 + $0x1570] sm:$0xff]
  %v712 = vld [vmem:[%s1 + $0x1578] sm:$0xff]
  %v713 = vld [vmem:[%s1 + $0x1580] sm:$0xff]
  %v714 = vld [vmem:[%s1 + $0x1588] sm:$0xff]
  %v715 = vld [vmem:[%s1 + $0x1590] sm:$0xff]
  %v716 = vld [vmem:[%s1 + $0x1598] sm:$0xff]
  %v717 = vld [vmem:[%s1 + $0x15a0] sm:$0xff]
  %v718 = vld [vmem:[%s1 + $0x15a8] sm:$0xff]
  %v719 = vld [vmem:[%s1 + $0x15b0] sm:$0xff]
  %v720 = vld [vmem:[%s1 + $0x15b8] sm:$0xff]
  %v721 = vld [vmem:[%s1 + $0x15c0] sm:$0xff]
  %v722 = vld [vmem:[%s1 + $0x15c8] sm:$0xff]
  %v723 = vld [vmem:[%s1 + $0x15d0] sm:$0xff]
  %v724 = vld [vmem:[%s1 + $0x15d8] sm:$0xff]
  %v725 = vld [vmem:[%s1 + $0x15e0] sm:$0xff]
  %v726 = vld [vmem:[%s1 + $0x15e8] sm:$0xff]
  %v727 = vld [vmem:[%s1 + $0x15f0] sm:$0xff]
  %v728 = vld [vmem:[%s1 + $0x15f8] sm:$0xff]
  %v729 = vld [vmem:[%s1 + $0x1600] sm:$0xff]
  %v730 = vld [vmem:[%s1 + $0x1608] sm:$0xff]
  %v731 = vld [vmem:[%s1 + $0x1610] sm:$0xff]
  %v732 = vld [vmem:[%s1 + $0x1618] sm:$0xff]
  %v733 = vld [vmem:[%s1 + $0x1620] sm:$0xff]
  %v734 = vld [vmem:[%s1 + $0x1628] sm:$0xff]
  %v735 = vld [vmem:[%s1 + $0x1630] sm:$0xff]
  %v736 = vld [vmem:[%s1 + $0x1638] sm:$0xff]
  %v737 = vld [vmem:[%s1 + $0x1640] sm:$0xff]
  %v738 = vld [vmem:[%s1 + $0x1648] sm:$0xff]
  %v739 = vld [vmem:[%s1 + $0x1650] sm:$0xff]
  %v740 = vld [vmem:[%s1 + $0x1658] sm:$0xff]
  %v741 = vld [vmem:[%s1 + $0x1660] sm:$0xff]
  %v742 = vld [vmem:[%s1 + $0x1668] sm:$0xff]
  %v743 = vld [vmem:[%s1 + $0x1670] sm:$0xff]
  %v744 = vld [vmem:[%s1 + $0x1678] sm:$0xff]
  %v745 = vld [vmem:[%s1 + $0x1680] sm:$0xff]
  %v746 = vld [vmem:[%s1 + $0x1688] sm:$0xff]
  %v747 = vld [vmem:[%s1 + $0x1690] sm:$0xff]
  %v748 = vld [vmem:[%s1 + $0x1698] sm:$0xff]
  %v749 = vld [vmem:[%s1 + $0x16a0] sm:$0xff]
  %v750 = vld [vmem:[%s1 + $0x16a8] sm:$0xff]
  %v751 = vld [vmem:[%s1 + $0x16b0] sm:$0xff]
  %v752 = vld [vmem:[%s1 + $0x16b8] sm:$0xff]
  %v753 = vld [vmem:[%s1 + $0x16c0] sm:$0xff]
  %v754 = vld [vmem:[%s1 + $0x16c8] sm:$0xff]
  %v755 = vld [vmem:[%s1 + $0x16d0] sm:$0xff]
  %v756 = vld [vmem:[%s1 + $0x16d8] sm:$0xff]
  %v757 = vld [vmem:[%s1 + $0x16e0] sm:$0xff]
  %v758 = vld [vmem:[%s1 + $0x16e8] sm:$0xff]
  %v759 = vld [vmem:[%s1 + $0x16f0] sm:$0xff]
  %v760 = vld [vmem:[%s1 + $0x16f8] sm:$0xff]
  %v761 = vld [vmem:[%s1 + $0x1700] sm:$0xff]
  %v762 = vld [vmem:[%s1 + $0x1708] sm:$0xff]
  %v763 = vld [vmem:[%s1 + $0x1710] sm:$0xff]
  %v764 = vld [vmem:[%s1 + $0x1718] sm:$0xff]
  %v765 = vld [vmem:[%s1 + $0x1720] sm:$0xff]
  %v766 = vld [vmem:[%s1 + $0x1728] sm:$0xff]
  %v767 = vld [vmem:[%s1 + $0x1730] sm:$0xff]
  %v768 = vld [vmem:[%s1 + $0x1738] sm:$0xff]
  %v769 = vld [vmem:[%s1 + $0x1740] sm:$0xff]
  %v770 = vld [vmem:[%s1 + $0x1748] sm:$0xff]
  %v771 = vld [vmem:[%s1 + $0x1750] sm:$0xff]
  %v772 = vld [vmem:[%s1 + $0x1758] sm:$0xff]
  %v773 = vld [vmem:[%s1 + $0x1760] sm:$0xff]
  %v774 = vld [vmem:[%s1 + $0x1768] sm:$0xff]
  %v775 = vld [vmem:[%s1 + $0x1770] sm:$0xff]
  %v776 = vld [vmem:[%s1 + $0x1778] sm:$0xff]
  %v777 = vld [vmem:[%s1 + $0x1780] sm:$0xff]
  %v778 = vld [vmem:[%s1 + $0x1788] sm:$0xff]
  %v779 = vld [vmem:[%s1 + $0x1790] sm:$0xff]
  %v780 = vld [vmem:[%s1 + $0x1798] sm:$0xff]
  %v781 = vld [vmem:[%s1 + $0x17a0] sm:$0xff]
  %v782 = vld [vmem:[%s1 + $0x17a8] sm:$0xff]
  %v783 = vld [vmem:[%s1 + $0x17b0] sm:$0xff]
  %v784 = vld [vmem:[%s1 + $0x17b8] sm:$0xff]
  %v785 = vld [vmem:[%s1 + $0x17c0] sm:$0xff]
  %v786 = vld [vmem:[%s1 + $0x17c8] sm:$0xff]
  %v787 = vld [vmem:[%s1 + $0x17d0] sm:$0xff]
  %v788 = vld [vmem:[%s1 + $0x17d8] sm:$0xff]
  %v789 = vld [vmem:[%s1 + $0x17e0] sm:$0xff]
  %v790 = vld [vmem:[%s1 + $0x17e8] sm:$0xff]
  %v791 = vld [vmem:[%s1 + $0x17f0] sm:$0xff]
  %v792 = vld [vmem:[%s1 + $0x17f8] sm:$0xff]
  %v793 = vld [vmem:[%s1 + $0x1800] sm:$0xff]
  %v794 = vld [vmem:[%s1 + $0x1808] sm:$0xff]
  %v795 = vld [vmem:[%s1 + $0x1810] sm:$0xff]
  %v796 = vld [vmem:[%s1 + $0x1818] sm:$0xff]
  %v797 = vld [vmem:[%s1 + $0x1820] sm:$0xff]
  %v798 = vld [vmem:[%s1 + $0x1828] sm:$0xff]
  %v799 = vld [vmem:[%s1 + $0x1830] sm:$0xff]
  %v800 = vld [vmem:[%s1 + $0x1838] sm:$0xff]
  %v801 = vld [vmem:[%s1 + $0x1840] sm:$0xff]
  %v802 = vld [vmem:[%s1 + $0x1848] sm:$0xff]
  %v803 = vld [vmem:[%s1 + $0x1850] sm:$0xff]
  %v804 = vld [vmem:[%s1 + $0x1858] sm:$0xff]
  %v805 = vld [vmem:[%s1 + $0x1860] sm:$0xff]
  %v806 = vld [vmem:[%s1 + $0x1868] sm:$0xff]
  %v807 = vld [vmem:[%s1 + $0x1870] sm:$0xff]
  %v808 = vld [vmem:[%s1 + $0x1878] sm:$0xff]
  %v809 = vld [vmem:[%s2] sm:$0xf]
  %v811 = vperm.slane %v809, 0
  %v812 = vperm.slane %v809, 1
  %v813 = vperm.slane %v809, 2
  %v814 = vperm.slane %v809, 3
  %820 = vst [vmem:[#allocation1] ss:$9 sm:$0xff] %v21
  %v821 = vld [vmem:[#allocation1] sm:$0xff]
  %v822 = vld [vmem:[#allocation1 + $0x9] sm:$0xff]
  %v823 = vld [vmem:[#allocation1 + $0x12] sm:$0xff]
  %v824 = vld [vmem:[#allocation1 + $0x1b] sm:$0xff]
  %v825 = vld [vmem:[#allocation1 + $0x24] sm:$0xff]
  %v826 = vld [vmem:[#allocation1 + $0x2d] sm:$0xff]
  %v827 = vld [vmem:[#allocation1 + $0x36] sm:$0xff]
  %v828 = vld [vmem:[#allocation1 + $0x3f] sm:$0xff]
  %830 = vst [vmem:[#allocation1] ss:$9 sm:$0xff] %v22
  %v831 = vld [vmem:[#allocation1] sm:$0xff]
  %v832 = vld [vmem:[#allocation1 + $0x9] sm:$0xff]
  %v833 = vld [vmem:[#allocation1 + $0x12] sm:$0xff]
  %v834 = vld [vmem:[#allocation1 + $0x1b] sm:$0xff]
  %v835 = vld [vmem:[#allocation1 + $0x24] sm:$0xff]
  %v836 = vld [vmem:[#allocation1 + $0x2d] sm:$0xff]
  %v837 = vld [vmem:[#allocation1 + $0x36] sm:$0xff]
  %v838 = vld [vmem:[#allocation1 + $0x3f] sm:$0xff]
  %840 = vst [vmem:[#allocation1] ss:$9 sm:$0xff] %v23
  %v841 = vld [vmem:[#allocation1] sm:$0xff]
  %v842 = vld [vmem:[#allocation1 + $0x9] sm:$0xff]
  %v843 = vld [vmem:[#allocation1 + $0x12] sm:$0xff]
  %v844 = vld [vmem:[#allocation1 + $0x1b] sm:$0xff]
  %v845 = vld [vmem:[#allocation1 + $0x24] sm:$0xff]
  %v846 = vld [vmem:[#allocation1 + $0x2d] sm:$0xff]
  %v847 = vld [vmem:[#allocation1 + $0x36] sm:$0xff]
  %v848 = vld [vmem:[#allocation1 + $0x3f] sm:$0xff]
  %850 = vst [vmem:[#allocation1] ss:$9 sm:$0xff] %v24
  %v851 = vld [vmem:[#allocation1] sm:$0xff]
  %v1660 = vunpack.c.l.b16 %v25
  %v1661 = vunpack.c.h.b16 %v25
  %v1662 = vunpack.c.l.b16 %v26
  %v1663 = vunpack.c.h.b16 %v26
  %v1664 = vunpack.c.l.b16 %v27
  %v1665 = vunpack.c.h.b16 %v27
  %v1666 = vunpack.c.l.b16 %v28
  %v1667 = vunpack.c.h.b16 %v28
  %v1668 = vunpack.c.l.b16 %v29
  %v1669 = vunpack.c.h.b16 %v29
  %v1670 = vunpack.c.l.b16 %v30
  %v1671 = vunpack.c.h.b16 %v30
  %v1672 = vunpack.c.l.b16 %v31
  %v1673 = vunpack.c.h.b16 %v31
  %v1674 = vunpack.c.l.b16 %v32
  %v1675 = vunpack.c.h.b16 %v32
  %v1676 = vunpack.c.l.b16 %v33
  %v1677 = vunpack.c.h.b16 %v33
  %v1678 = vunpack.c.l.b16 %v34
  %v1679 = vunpack.c.h.b16 %v34
  %v1680 = vunpack.c.l.b16 %v35
  %v1681 = vunpack.c.h.b16 %v35
  %v1682 = vunpack.c.l.b16 %v36
  %v1683 = vunpack.c.h.b16 %v36
  %v1684 = vunpack.c.l.b16 %v37
  %v1685 = vunpack.c.h.b16 %v37
  %v1686 = vunpack.c.l.b16 %v38
  %v1687 = vunpack.c.h.b16 %v38
  %v1688 = vunpack.c.l.b16 %v39
  %v1689 = vunpack.c.h.b16 %v39
  %v1690 = vunpack.c.l.b16 %v40
  %v1691 = vunpack.c.h.b16 %v40
  %v1692 = vunpack.c.l.b16 %v41
  %v1693 = vunpack.c.h.b16 %v41
  %v1694 = vunpack.c.l.b16 %v42
  %v1695 = vunpack.c.h.b16 %v42
  %v1696 = vunpack.c.l.b16 %v43
  %v1697 = vunpack.c.h.b16 %v43
  %v1698 = vunpack.c.l.b16 %v44
  %v1699 = vunpack.c.h.b16 %v44
  %v1700 = vunpack.c.l.b16 %v45
  %v1701 = vunpack.c.h.b16 %v45
  %v1702 = vunpack.c.l.b16 %v46
  %v1703 = vunpack.c.h.b16 %v46
  %v1704 = vunpack.c.l.b16 %v47
  %v1705 = vunpack.c.h.b16 %v47
  %v1706 = vunpack.c.l.b16 %v48
  %v1707 = vunpack.c.h.b16 %v48
  %v1708 = vunpack.c.l.b16 %v49
  %v1709 = vunpack.c.h.b16 %v49
  %v1710 = vunpack.c.l.b16 %v50
  %v1711 = vunpack.c.h.b16 %v50
  %v1712 = vunpack.c.l.b16 %v51
  %v1713 = vunpack.c.h.b16 %v51
  %v1714 = vunpack.c.l.b16 %v52
  %v1715 = vunpack.c.h.b16 %v52
  %v1716 = vunpack.c.l.b16 %v53
  %v1717 = vunpack.c.h.b16 %v53
  %v1718 = vunpack.c.l.b16 %v54
  %v1719 = vunpack.c.h.b16 %v54
  %v1720 = vunpack.c.l.b16 %v55
  %v1721 = vunpack.c.h.b16 %v55
  %v1722 = vunpack.c.l.b16 %v56
  %v1723 = vunpack.c.h.b16 %v56
  %v1724 = vunpack.c.l.b16 %v57
  %v1725 = vunpack.c.h.b16 %v57
  %v1726 = vunpack.c.l.b16 %v58
  %v1727 = vunpack.c.h.b16 %v58
  %v1728 = vunpack.c.l.b16 %v59
  %v1729 = vunpack.c.h.b16 %v59
  %v1730 = vunpack.c.l.b16 %v60
  %v1731 = vunpack.c.h.b16 %v60
  %v1732 = vunpack.c.l.b16 %v61
  %v1733 = vunpack.c.h.b16 %v61
  %v1734 = vunpack.c.l.b16 %v62
  %v1735 = vunpack.c.h.b16 %v62
  %v1736 = vunpack.c.l.b16 %v63
  %v1737 = vunpack.c.h.b16 %v63
  %v1738 = vunpack.c.l.b16 %v64
  %v1739 = vunpack.c.h.b16 %v64
  %v1740 = vunpack.c.l.b16 %v65
  %v1741 = vunpack.c.h.b16 %v65
  %v1742 = vunpack.c.l.b16 %v66
  %v1743 = vunpack.c.h.b16 %v66
  %v1744 = vunpack.c.l.b16 %v67
  %v1745 = vunpack.c.h.b16 %v67
  %v1746 = vunpack.c.l.b16 %v68
  %v1747 = vunpack.c.h.b16 %v68
  %v1748 = vunpack.c.l.b16 %v69
  %v1749 = vunpack.c.h.b16 %v69
  %v1750 = vunpack.c.l.b16 %v70
  %v1751 = vunpack.c.h.b16 %v70
  %v1752 = vunpack.c.l.b16 %v71
  %v1753 = vunpack.c.h.b16 %v71
  %v1754 = vunpack.c.l.b16 %v72
  %v1755 = vunpack.c.h.b16 %v72
  %v1756 = vunpack.c.l.b16 %v73
  %v1757 = vunpack.c.h.b16 %v73
  %v1758 = vunpack.c.l.b16 %v74
  %v1759 = vunpack.c.h.b16 %v74
  %v1760 = vunpack.c.l.b16 %v75
  %v1761 = vunpack.c.h.b16 %v75
  %v1762 = vunpack.c.l.b16 %v76
  %v1763 = vunpack.c.h.b16 %v76
  %v1764 = vunpack.c.l.b16 %v77
  %v1765 = vunpack.c.h.b16 %v77
  %v1766 = vunpack.c.l.b16 %v78
  %v1767 = vunpack.c.h.b16 %v78
  %v1768 = vunpack.c.l.b16 %v79
  %v1769 = vunpack.c.h.b16 %v79
  %v1770 = vunpack.c.l.b16 %v80
  %v1771 = vunpack.c.h.b16 %v80
  %v1772 = vunpack.c.l.b16 %v81
  %v1773 = vunpack.c.h.b16 %v81
  %v1774 = vunpack.c.l.b16 %v82
  %v1775 = vunpack.c.h.b16 %v82
  %v1776 = vunpack.c.l.b16 %v83
  %v1777 = vunpack.c.h.b16 %v83
  %v1778 = vunpack.c.l.b16 %v84
  %v1779 = vunpack.c.h.b16 %v84
  %v1780 = vunpack.c.l.b16 %v85
  %v1781 = vunpack.c.h.b16 %v85
  %v1782 = vunpack.c.l.b16 %v86
  %v1783 = vunpack.c.h.b16 %v86
  %v1784 = vunpack.c.l.b16 %v87
  %v1785 = vunpack.c.h.b16 %v87
  %v1786 = vunpack.c.l.b16 %v88
  %v1787 = vunpack.c.h.b16 %v88
  %v1788 = vunpack.c.l.b16 %v89
  %v1789 = vunpack.c.h.b16 %v89
  %v1790 = vunpack.c.l.b16 %v90
  %v1791 = vunpack.c.h.b16 %v90
  %v1792 = vunpack.c.l.b16 %v91
  %v1793 = vunpack.c.h.b16 %v91
  %v1794 = vunpack.c.l.b16 %v92
  %v1795 = vunpack.c.h.b16 %v92
  %v1796 = vunpack.c.l.b16 %v93
  %v1797 = vunpack.c.h.b16 %v93
  %v1798 = vunpack.c.l.b16 %v94
  %v1799 = vunpack.c.h.b16 %v94
  %v1800 = vunpack.c.l.b16 %v95
  %v1801 = vunpack.c.h.b16 %v95
  %v1802 = vunpack.c.l.b16 %v96
  %v1803 = vunpack.c.h.b16 %v96
  %v1804 = vunpack.c.l.b16 %v97
  %v1805 = vunpack.c.h.b16 %v97
  %v1806 = vunpack.c.l.b16 %v98
  %v1807 = vunpack.c.h.b16 %v98
  %v1808 = vunpack.c.l.b16 %v99
  %v1809 = vunpack.c.h.b16 %v99
  %v1810 = vunpack.c.l.b16 %v100
  %v1811 = vunpack.c.h.b16 %v100
  %v1812 = vunpack.c.l.b16 %v101
  %v1813 = vunpack.c.h.b16 %v101
  %v1814 = vunpack.c.l.b16 %v102
  %v1815 = vunpack.c.h.b16 %v102
  %v1816 = vunpack.c.l.b16 %v103
  %v1817 = vunpack.c.h.b16 %v103
  %v1818 = vunpack.c.l.b16 %v104
  %v1819 = vunpack.c.h.b16 %v104
  %v1820 = vunpack.c.l.b16 %v105
  %v1821 = vunpack.c.h.b16 %v105
  %v1822 = vunpack.c.l.b16 %v106
  %v1823 = vunpack.c.h.b16 %v106
  %v1824 = vunpack.c.l.b16 %v107
  %v1825 = vunpack.c.h.b16 %v107
  %v1826 = vunpack.c.l.b16 %v108
  %v1827 = vunpack.c.h.b16 %v108
  %v1828 = vunpack.c.l.b16 %v109
  %v1829 = vunpack.c.h.b16 %v109
  %v1830 = vunpack.c.l.b16 %v110
  %v1831 = vunpack.c.h.b16 %v110
  %v1832 = vunpack.c.l.b16 %v111
  %v1833 = vunpack.c.h.b16 %v111
  %v1834 = vunpack.c.l.b16 %v112
  %v1835 = vunpack.c.h.b16 %v112
  %v1836 = vunpack.c.l.b16 %v113
  %v1837 = vunpack.c.h.b16 %v113
  %v1838 = vunpack.c.l.b16 %v114
  %v1839 = vunpack.c.h.b16 %v114
  %v1840 = vunpack.c.l.b16 %v115
  %v1841 = vunpack.c.h.b16 %v115
  %v1842 = vunpack.c.l.b16 %v116
  %v1843 = vunpack.c.h.b16 %v116
  %v1844 = vunpack.c.l.b16 %v117
  %v1845 = vunpack.c.h.b16 %v117
  %v1846 = vunpack.c.l.b16 %v118
  %v1847 = vunpack.c.h.b16 %v118
  %v1848 = vunpack.c.l.b16 %v119
  %v1849 = vunpack.c.h.b16 %v119
  %v1850 = vunpack.c.l.b16 %v120
  %v1851 = vunpack.c.h.b16 %v120
  %v1852 = vunpack.c.l.b16 %v121
  %v1853 = vunpack.c.h.b16 %v121
  %v1854 = vunpack.c.l.b16 %v122
  %v1855 = vunpack.c.h.b16 %v122
  %v1856 = vunpack.c.l.b16 %v123
  %v1857 = vunpack.c.h.b16 %v123
  %v1858 = vunpack.c.l.b16 %v124
  %v1859 = vunpack.c.h.b16 %v124
  %v1860 = vunpack.c.l.b16 %v125
  %v1861 = vunpack.c.h.b16 %v125
  %v1862 = vunpack.c.l.b16 %v126
  %v1863 = vunpack.c.h.b16 %v126
  %v1864 = vunpack.c.l.b16 %v127
  %v1865 = vunpack.c.h.b16 %v127
  %v1866 = vunpack.c.l.b16 %v128
  %v1867 = vunpack.c.h.b16 %v128
  %v1868 = vunpack.c.l.b16 %v129
  %v1869 = vunpack.c.h.b16 %v129
  %v1870 = vunpack.c.l.b16 %v130
  %v1871 = vunpack.c.h.b16 %v130
  %v1872 = vunpack.c.l.b16 %v131
  %v1873 = vunpack.c.h.b16 %v131
  %v1874 = vunpack.c.l.b16 %v132
  %v1875 = vunpack.c.h.b16 %v132
  %v1876 = vunpack.c.l.b16 %v133
  %v1877 = vunpack.c.h.b16 %v133
  %v1878 = vunpack.c.l.b16 %v134
  %v1879 = vunpack.c.h.b16 %v134
  %v1880 = vunpack.c.l.b16 %v135
  %v1881 = vunpack.c.h.b16 %v135
  %v1882 = vunpack.c.l.b16 %v136
  %v1883 = vunpack.c.h.b16 %v136
  %v1884 = vunpack.c.l.b16 %v137
  %v1885 = vunpack.c.h.b16 %v137
  %v1886 = vunpack.c.l.b16 %v138
  %v1887 = vunpack.c.h.b16 %v138
  %v1888 = vunpack.c.l.b16 %v139
  %v1889 = vunpack.c.h.b16 %v139
  %v1890 = vunpack.c.l.b16 %v140
  %v1891 = vunpack.c.h.b16 %v140
  %v1892 = vunpack.c.l.b16 %v141
  %v1893 = vunpack.c.h.b16 %v141
  %v1894 = vunpack.c.l.b16 %v142
  %v1895 = vunpack.c.h.b16 %v142
  %v1896 = vunpack.c.l.b16 %v143
  %v1897 = vunpack.c.h.b16 %v143
  %v1898 = vunpack.c.l.b16 %v144
  %v1899 = vunpack.c.h.b16 %v144
  %v1900 = vunpack.c.l.b16 %v145
  %v1901 = vunpack.c.h.b16 %v145
  %v1902 = vunpack.c.l.b16 %v146
  %v1903 = vunpack.c.h.b16 %v146
  %v1904 = vunpack.c.l.b16 %v147
  %v1905 = vunpack.c.h.b16 %v147
  %v1906 = vunpack.c.l.b16 %v148
  %v1907 = vunpack.c.h.b16 %v148
  %v1908 = vunpack.c.l.b16 %v149
  %v1909 = vunpack.c.h.b16 %v149
  %v1910 = vunpack.c.l.b16 %v150
  %v1911 = vunpack.c.h.b16 %v150
  %v1912 = vunpack.c.l.b16 %v151
  %v1913 = vunpack.c.h.b16 %v151
  %v1914 = vunpack.c.l.b16 %v152
  %v1915 = vunpack.c.h.b16 %v152
  %v1916 = vunpack.c.l.b16 %v153
  %v1917 = vunpack.c.h.b16 %v153
  %v1918 = vunpack.c.l.b16 %v154
  %v1919 = vunpack.c.h.b16 %v154
  %v1920 = vunpack.c.l.b16 %v155
  %v1921 = vunpack.c.h.b16 %v155
  %v1922 = vunpack.c.l.b16 %v156
  %v1923 = vunpack.c.h.b16 %v156
  %v1924 = vunpack.c.l.b16 %v157
  %v1925 = vunpack.c.h.b16 %v157
  %v1926 = vunpack.c.l.b16 %v158
  %v1927 = vunpack.c.h.b16 %v158
  %v1928 = vunpack.c.l.b16 %v159
  %v1929 = vunpack.c.h.b16 %v159
  %v1930 = vunpack.c.l.b16 %v160
  %v1931 = vunpack.c.h.b16 %v160
  %v1932 = vunpack.c.l.b16 %v161
  %v1933 = vunpack.c.h.b16 %v161
  %v1934 = vunpack.c.l.b16 %v162
  %v1935 = vunpack.c.h.b16 %v162
  %v1936 = vunpack.c.l.b16 %v163
  %v1937 = vunpack.c.h.b16 %v163
  %v1938 = vunpack.c.l.b16 %v164
  %v1939 = vunpack.c.h.b16 %v164
  %v1940 = vunpack.c.l.b16 %v165
  %v1941 = vunpack.c.h.b16 %v165
  %v1942 = vunpack.c.l.b16 %v166
  %v1943 = vunpack.c.h.b16 %v166
  %v1944 = vunpack.c.l.b16 %v167
  %v1945 = vunpack.c.h.b16 %v167
  %v1946 = vunpack.c.l.b16 %v168
  %v1947 = vunpack.c.h.b16 %v168
  %v1948 = vunpack.c.l.b16 %v169
  %v1949 = vunpack.c.h.b16 %v169
  %v1950 = vunpack.c.l.b16 %v170
  %v1951 = vunpack.c.h.b16 %v170
  %v1952 = vunpack.c.l.b16 %v171
  %v1953 = vunpack.c.h.b16 %v171
  %v1954 = vunpack.c.l.b16 %v172
  %v1955 = vunpack.c.h.b16 %v172
  %v1956 = vunpack.c.l.b16 %v173
  %v1957 = vunpack.c.h.b16 %v173
  %v1958 = vunpack.c.l.b16 %v174
  %v1959 = vunpack.c.h.b16 %v174
  %v1960 = vunpack.c.l.b16 %v175
  %v1961 = vunpack.c.h.b16 %v175
  %v1962 = vunpack.c.l.b16 %v176
  %v1963 = vunpack.c.h.b16 %v176
  %v1964 = vunpack.c.l.b16 %v177
  %v1965 = vunpack.c.h.b16 %v177
  %v1966 = vunpack.c.l.b16 %v178
  %v1967 = vunpack.c.h.b16 %v178
  %v1968 = vunpack.c.l.b16 %v179
  %v1969 = vunpack.c.h.b16 %v179
  %v1970 = vunpack.c.l.b16 %v180
  %v1971 = vunpack.c.h.b16 %v180
  %v1972 = vunpack.c.l.b16 %v181
  %v1973 = vunpack.c.h.b16 %v181
  %v1974 = vunpack.c.l.b16 %v182
  %v1975 = vunpack.c.h.b16 %v182
  %v1976 = vunpack.c.l.b16 %v183
  %v1977 = vunpack.c.h.b16 %v183
  %v1978 = vunpack.c.l.b16 %v184
  %v1979 = vunpack.c.h.b16 %v184
  %v1980 = vunpack.c.l.b16 %v185
  %v1981 = vunpack.c.h.b16 %v185
  %v1982 = vunpack.c.l.b16 %v186
  %v1983 = vunpack.c.h.b16 %v186
  %v1984 = vunpack.c.l.b16 %v187
  %v1985 = vunpack.c.h.b16 %v187
  %v1986 = vunpack.c.l.b16 %v188
  %v1987 = vunpack.c.h.b16 %v188
  %v1988 = vunpack.c.l.b16 %v189
  %v1989 = vunpack.c.h.b16 %v189
  %v1990 = vunpack.c.l.b16 %v190
  %v1991 = vunpack.c.h.b16 %v190
  %v1992 = vunpack.c.l.b16 %v191
  %v1993 = vunpack.c.h.b16 %v191
  %v1994 = vunpack.c.l.b16 %v192
  %v1995 = vunpack.c.h.b16 %v192
  %v1996 = vunpack.c.l.b16 %v193
  %v1997 = vunpack.c.h.b16 %v193
  %v1998 = vunpack.c.l.b16 %v194
  %v1999 = vunpack.c.h.b16 %v194
  %v2000 = vunpack.c.l.b16 %v195
  %v2001 = vunpack.c.h.b16 %v195
  %v2002 = vunpack.c.l.b16 %v196
  %v2003 = vunpack.c.h.b16 %v196
  %v2004 = vunpack.c.l.b16 %v197
  %v2005 = vunpack.c.h.b16 %v197
  %v2006 = vunpack.c.l.b16 %v198
  %v2007 = vunpack.c.h.b16 %v198
  %v2008 = vunpack.c.l.b16 %v199
  %v2009 = vunpack.c.h.b16 %v199
  %v2010 = vunpack.c.l.b16 %v200
  %v2011 = vunpack.c.h.b16 %v200
  %v2012 = vunpack.c.l.b16 %v201
  %v2013 = vunpack.c.h.b16 %v201
  %v2014 = vunpack.c.l.b16 %v202
  %v2015 = vunpack.c.h.b16 %v202
  %v2016 = vunpack.c.l.b16 %v203
  %v2017 = vunpack.c.h.b16 %v203
  %v2018 = vunpack.c.l.b16 %v204
  %v2019 = vunpack.c.h.b16 %v204
  %v2020 = vunpack.c.l.b16 %v205
  %v2021 = vunpack.c.h.b16 %v205
  %v2022 = vunpack.c.l.b16 %v206
  %v2023 = vunpack.c.h.b16 %v206
  %v2024 = vunpack.c.l.b16 %v207
  %v2025 = vunpack.c.h.b16 %v207
  %v2026 = vunpack.c.l.b16 %v208
  %v2027 = vunpack.c.h.b16 %v208
  %v2028 = vunpack.c.l.b16 %v209
  %v2029 = vunpack.c.h.b16 %v209
  %v2030 = vunpack.c.l.b16 %v210
  %v2031 = vunpack.c.h.b16 %v210
  %v2032 = vunpack.c.l.b16 %v211
  %v2033 = vunpack.c.h.b16 %v211
  %v2034 = vunpack.c.l.b16 %v212
  %v2035 = vunpack.c.h.b16 %v212
  %v2036 = vunpack.c.l.b16 %v213
  %v2037 = vunpack.c.h.b16 %v213
  %v2038 = vunpack.c.l.b16 %v214
  %v2039 = vunpack.c.h.b16 %v214
  %v2040 = vunpack.c.l.b16 %v215
  %v2041 = vunpack.c.h.b16 %v215
  %v2042 = vunpack.c.l.b16 %v216
  %v2043 = vunpack.c.h.b16 %v216
  %v2044 = vunpack.c.l.b16 %v217
  %v2045 = vunpack.c.h.b16 %v217
  %v2046 = vunpack.c.l.b16 %v218
  %v2047 = vunpack.c.h.b16 %v218
  %v2048 = vunpack.c.l.b16 %v219
  %v2049 = vunpack.c.h.b16 %v219
  %v2050 = vunpack.c.l.b16 %v220
  %v2051 = vunpack.c.h.b16 %v220
  %v2052 = vunpack.c.l.b16 %v221
  %v2053 = vunpack.c.h.b16 %v221
  %v2054 = vunpack.c.l.b16 %v222
  %v2055 = vunpack.c.h.b16 %v222
  %v2056 = vunpack.c.l.b16 %v223
  %v2057 = vunpack.c.h.b16 %v223
  %v2058 = vunpack.c.l.b16 %v224
  %v2059 = vunpack.c.h.b16 %v224
  %v2060 = vunpack.c.l.b16 %v225
  %v2061 = vunpack.c.h.b16 %v225
  %v2062 = vunpack.c.l.b16 %v226
  %v2063 = vunpack.c.h.b16 %v226
  %v2064 = vunpack.c.l.b16 %v227
  %v2065 = vunpack.c.h.b16 %v227
  %v2066 = vunpack.c.l.b16 %v228
  %v2067 = vunpack.c.h.b16 %v228
  %v2068 = vunpack.c.l.b16 %v229
  %v2069 = vunpack.c.h.b16 %v229
  %v2070 = vunpack.c.l.b16 %v230
  %v2071 = vunpack.c.h.b16 %v230
  %v2072 = vunpack.c.l.b16 %v231
  %v2073 = vunpack.c.h.b16 %v231
  %v2074 = vunpack.c.l.b16 %v232
  %v2075 = vunpack.c.h.b16 %v232
  %v2076 = vunpack.c.l.b16 %v233
  %v2077 = vunpack.c.h.b16 %v233
  %v2078 = vunpack.c.l.b16 %v234
  %v2079 = vunpack.c.h.b16 %v234
  %v2080 = vunpack.c.l.b16 %v235
  %v2081 = vunpack.c.h.b16 %v235
  %v2082 = vunpack.c.l.b16 %v236
  %v2083 = vunpack.c.h.b16 %v236
  %v2084 = vunpack.c.l.b16 %v237
  %v2085 = vunpack.c.h.b16 %v237
  %v2086 = vunpack.c.l.b16 %v238
  %v2087 = vunpack.c.h.b16 %v238
  %v2088 = vunpack.c.l.b16 %v239
  %v2089 = vunpack.c.h.b16 %v239
  %v2090 = vunpack.c.l.b16 %v240
  %v2091 = vunpack.c.h.b16 %v240
  %v2092 = vunpack.c.l.b16 %v241
  %v2093 = vunpack.c.h.b16 %v241
  %v2094 = vunpack.c.l.b16 %v242
  %v2095 = vunpack.c.h.b16 %v242
  %v2096 = vunpack.c.l.b16 %v243
  %v2097 = vunpack.c.h.b16 %v243
  %v2098 = vunpack.c.l.b16 %v244
  %v2099 = vunpack.c.h.b16 %v244
  %v2100 = vunpack.c.l.b16 %v245
  %v2101 = vunpack.c.h.b16 %v245
  %v2102 = vunpack.c.l.b16 %v246
  %v2103 = vunpack.c.h.b16 %v246
  %v2104 = vunpack.c.l.b16 %v247
  %v2105 = vunpack.c.h.b16 %v247
  %v2106 = vunpack.c.l.b16 %v248
  %v2107 = vunpack.c.h.b16 %v248
  %v2108 = vunpack.c.l.b16 %v249
  %v2109 = vunpack.c.h.b16 %v249
  %v2110 = vunpack.c.l.b16 %v250
  %v2111 = vunpack.c.h.b16 %v250
  %v2112 = vunpack.c.l.b16 %v251
  %v2113 = vunpack.c.h.b16 %v251
  %v2114 = vunpack.c.l.b16 %v252
  %v2115 = vunpack.c.h.b16 %v252
  %v2116 = vunpack.c.l.b16 %v253
  %v2117 = vunpack.c.h.b16 %v253
  %v2118 = vunpack.c.l.b16 %v254
  %v2119 = vunpack.c.h.b16 %v254
  %v2120 = vunpack.c.l.b16 %v255
  %v2121 = vunpack.c.h.b16 %v255
  %v2122 = vunpack.c.l.b16 %v256
  %v2123 = vunpack.c.h.b16 %v256
  %v2124 = vunpack.c.l.b16 %v257
  %v2125 = vunpack.c.h.b16 %v257
  %v2126 = vunpack.c.l.b16 %v258
  %v2127 = vunpack.c.h.b16 %v258
  %v2128 = vunpack.c.l.b16 %v259
  %v2129 = vunpack.c.h.b16 %v259
  %v2130 = vunpack.c.l.b16 %v260
  %v2131 = vunpack.c.h.b16 %v260
  %v2132 = vunpack.c.l.b16 %v261
  %v2133 = vunpack.c.h.b16 %v261
  %v2134 = vunpack.c.l.b16 %v262
  %v2135 = vunpack.c.h.b16 %v262
  %v2136 = vunpack.c.l.b16 %v263
  %v2137 = vunpack.c.h.b16 %v263
  %v2138 = vunpack.c.l.b16 %v264
  %v2139 = vunpack.c.h.b16 %v264
  %v2140 = vunpack.c.l.b16 %v265
  %v2141 = vunpack.c.h.b16 %v265
  %v2142 = vunpack.c.l.b16 %v266
  %v2143 = vunpack.c.h.b16 %v266
  %v2144 = vunpack.c.l.b16 %v267
  %v2145 = vunpack.c.h.b16 %v267
  %v2146 = vunpack.c.l.b16 %v268
  %v2147 = vunpack.c.h.b16 %v268
  %v2148 = vunpack.c.l.b16 %v269
  %v2149 = vunpack.c.h.b16 %v269
  %v2150 = vunpack.c.l.b16 %v270
  %v2151 = vunpack.c.h.b16 %v270
  %v2152 = vunpack.c.l.b16 %v271
  %v2153 = vunpack.c.h.b16 %v271
  %v2154 = vunpack.c.l.b16 %v272
  %v2155 = vunpack.c.h.b16 %v272
  %v2156 = vunpack.c.l.b16 %v273
  %v2157 = vunpack.c.h.b16 %v273
  %v2158 = vunpack.c.l.b16 %v274
  %v2159 = vunpack.c.h.b16 %v274
  %v2160 = vunpack.c.l.b16 %v275
  %v2161 = vunpack.c.h.b16 %v275
  %v2162 = vunpack.c.l.b16 %v276
  %v2163 = vunpack.c.h.b16 %v276
  %v2164 = vunpack.c.l.b16 %v277
  %v2165 = vunpack.c.h.b16 %v277
  %v2166 = vunpack.c.l.b16 %v278
  %v2167 = vunpack.c.h.b16 %v278
  %v2168 = vunpack.c.l.b16 %v279
  %v2169 = vunpack.c.h.b16 %v279
  %v2170 = vunpack.c.l.b16 %v280
  %v2171 = vunpack.c.h.b16 %v280
  %v2172 = vunpack.c.l.b16 %v281
  %v2173 = vunpack.c.h.b16 %v281
  %v2174 = vunpack.c.l.b16 %v282
  %v2175 = vunpack.c.h.b16 %v282
  %v2176 = vunpack.c.l.b16 %v283
  %v2177 = vunpack.c.h.b16 %v283
  %v2178 = vunpack.c.l.b16 %v284
  %v2179 = vunpack.c.h.b16 %v284
  %v2180 = vunpack.c.l.b16 %v285
  %v2181 = vunpack.c.h.b16 %v285
  %v2182 = vunpack.c.l.b16 %v286
  %v2183 = vunpack.c.h.b16 %v286
  %v2184 = vunpack.c.l.b16 %v287
  %v2185 = vunpack.c.h.b16 %v287
  %v2186 = vunpack.c.l.b16 %v288
  %v2187 = vunpack.c.h.b16 %v288
  %v2188 = vunpack.c.l.b16 %v289
  %v2189 = vunpack.c.h.b16 %v289
  %v2190 = vunpack.c.l.b16 %v290
  %v2191 = vunpack.c.h.b16 %v290
  %v2192 = vunpack.c.l.b16 %v291
  %v2193 = vunpack.c.h.b16 %v291
  %v2194 = vunpack.c.l.b16 %v292
  %v2195 = vunpack.c.h.b16 %v292
  %v2196 = vunpack.c.l.b16 %v293
  %v2197 = vunpack.c.h.b16 %v293
  %v2198 = vunpack.c.l.b16 %v294
  %v2199 = vunpack.c.h.b16 %v294
  %v2200 = vunpack.c.l.b16 %v295
  %v2201 = vunpack.c.h.b16 %v295
  %v2202 = vunpack.c.l.b16 %v296
  %v2203 = vunpack.c.h.b16 %v296
  %v2204 = vunpack.c.l.b16 %v297
  %v2205 = vunpack.c.h.b16 %v297
  %v2206 = vunpack.c.l.b16 %v298
  %v2207 = vunpack.c.h.b16 %v298
  %v2208 = vunpack.c.l.b16 %v299
  %v2209 = vunpack.c.h.b16 %v299
  %v2210 = vunpack.c.l.b16 %v300
  %v2211 = vunpack.c.h.b16 %v300
  %v2212 = vunpack.c.l.b16 %v301
  %v2213 = vunpack.c.h.b16 %v301
  %v2214 = vunpack.c.l.b16 %v302
  %v2215 = vunpack.c.h.b16 %v302
  %v2216 = vunpack.c.l.b16 %v303
  %v2217 = vunpack.c.h.b16 %v303
  %v2218 = vunpack.c.l.b16 %v304
  %v2219 = vunpack.c.h.b16 %v304
  %v2220 = vunpack.c.l.b16 %v305
  %v2221 = vunpack.c.h.b16 %v305
  %v2222 = vunpack.c.l.b16 %v306
  %v2223 = vunpack.c.h.b16 %v306
  %v2224 = vunpack.c.l.b16 %v307
  %v2225 = vunpack.c.h.b16 %v307
  %v2226 = vunpack.c.l.b16 %v308
  %v2227 = vunpack.c.h.b16 %v308
  %v2228 = vunpack.c.l.b16 %v309
  %v2229 = vunpack.c.h.b16 %v309
  %v2230 = vunpack.c.l.b16 %v310
  %v2231 = vunpack.c.h.b16 %v310
  %v2232 = vunpack.c.l.b16 %v311
  %v2233 = vunpack.c.h.b16 %v311
  %v2234 = vunpack.c.l.b16 %v312
  %v2235 = vunpack.c.h.b16 %v312
  %v2236 = vunpack.c.l.b16 %v313
  %v2237 = vunpack.c.h.b16 %v313
  %v2238 = vunpack.c.l.b16 %v314
  %v2239 = vunpack.c.h.b16 %v314
  %v2240 = vunpack.c.l.b16 %v315
  %v2241 = vunpack.c.h.b16 %v315
  %v2242 = vunpack.c.l.b16 %v316
  %v2243 = vunpack.c.h.b16 %v316
  %v2244 = vunpack.c.l.b16 %v317
  %v2245 = vunpack.c.h.b16 %v317
  %v2246 = vunpack.c.l.b16 %v318
  %v2247 = vunpack.c.h.b16 %v318
  %v2248 = vunpack.c.l.b16 %v319
  %v2249 = vunpack.c.h.b16 %v319
  %v2250 = vunpack.c.l.b16 %v320
  %v2251 = vunpack.c.h.b16 %v320
  %v2252 = vunpack.c.l.b16 %v321
  %v2253 = vunpack.c.h.b16 %v321
  %v2254 = vunpack.c.l.b16 %v322
  %v2255 = vunpack.c.h.b16 %v322
  %v2256 = vunpack.c.l.b16 %v323
  %v2257 = vunpack.c.h.b16 %v323
  %v2258 = vunpack.c.l.b16 %v324
  %v2259 = vunpack.c.h.b16 %v324
  %v2260 = vunpack.c.l.b16 %v325
  %v2261 = vunpack.c.h.b16 %v325
  %v2262 = vunpack.c.l.b16 %v326
  %v2263 = vunpack.c.h.b16 %v326
  %v2264 = vunpack.c.l.b16 %v327
  %v2265 = vunpack.c.h.b16 %v327
  %v2266 = vunpack.c.l.b16 %v328
  %v2267 = vunpack.c.h.b16 %v328
  %v2268 = vunpack.c.l.b16 %v329
  %v2269 = vunpack.c.h.b16 %v329
  %v2270 = vunpack.c.l.b16 %v330
  %v2271 = vunpack.c.h.b16 %v330
  %v2272 = vunpack.c.l.b16 %v331
  %v2273 = vunpack.c.h.b16 %v331
  %v2274 = vunpack.c.l.b16 %v332
  %v2275 = vunpack.c.h.b16 %v332
  %v2276 = vunpack.c.l.b16 %v333
  %v2277 = vunpack.c.h.b16 %v333
  %v2278 = vunpack.c.l.b16 %v334
  %v2279 = vunpack.c.h.b16 %v334
  %v2280 = vunpack.c.l.b16 %v335
  %v2281 = vunpack.c.h.b16 %v335
  %v2282 = vunpack.c.l.b16 %v336
  %v2283 = vunpack.c.h.b16 %v336
  %v2284 = vunpack.c.l.b16 %v337
  %v2285 = vunpack.c.h.b16 %v337
  %v2286 = vunpack.c.l.b16 %v338
  %v2287 = vunpack.c.h.b16 %v338
  %v2288 = vunpack.c.l.b16 %v339
  %v2289 = vunpack.c.h.b16 %v339
  %v2290 = vunpack.c.l.b16 %v340
  %v2291 = vunpack.c.h.b16 %v340
  %v2292 = vunpack.c.l.b16 %v341
  %v2293 = vunpack.c.h.b16 %v341
  %v2294 = vunpack.c.l.b16 %v342
  %v2295 = vunpack.c.h.b16 %v342
  %v2296 = vunpack.c.l.b16 %v343
  %v2297 = vunpack.c.h.b16 %v343
  %v2298 = vunpack.c.l.b16 %v344
  %v2299 = vunpack.c.h.b16 %v344
  %v2300 = vunpack.c.l.b16 %v345
  %v2301 = vunpack.c.h.b16 %v345
  %v2302 = vunpack.c.l.b16 %v346
  %v2303 = vunpack.c.h.b16 %v346
  %v2304 = vunpack.c.l.b16 %v347
  %v2305 = vunpack.c.h.b16 %v347
  %v2306 = vunpack.c.l.b16 %v348
  %v2307 = vunpack.c.h.b16 %v348
  %v2308 = vunpack.c.l.b16 %v349
  %v2309 = vunpack.c.h.b16 %v349
  %v2310 = vunpack.c.l.b16 %v350
  %v2311 = vunpack.c.h.b16 %v350
  %v2312 = vunpack.c.l.b16 %v351
  %v2313 = vunpack.c.h.b16 %v351
  %v2314 = vunpack.c.l.b16 %v352
  %v2315 = vunpack.c.h.b16 %v352
  %v2316 = vunpack.c.l.b16 %v353
  %v2317 = vunpack.c.h.b16 %v353
  %v2318 = vunpack.c.l.b16 %v354
  %v2319 = vunpack.c.h.b16 %v354
  %v2320 = vunpack.c.l.b16 %v355
  %v2321 = vunpack.c.h.b16 %v355
  %v2322 = vunpack.c.l.b16 %v356
  %v2323 = vunpack.c.h.b16 %v356
  %v2324 = vunpack.c.l.b16 %v357
  %v2325 = vunpack.c.h.b16 %v357
  %v2326 = vunpack.c.l.b16 %v358
  %v2327 = vunpack.c.h.b16 %v358
  %v2328 = vunpack.c.l.b16 %v359
  %v2329 = vunpack.c.h.b16 %v359
  %v2330 = vunpack.c.l.b16 %v360
  %v2331 = vunpack.c.h.b16 %v360
  %v2332 = vunpack.c.l.b16 %v361
  %v2333 = vunpack.c.h.b16 %v361
  %v2334 = vunpack.c.l.b16 %v362
  %v2335 = vunpack.c.h.b16 %v362
  %v2336 = vunpack.c.l.b16 %v363
  %v2337 = vunpack.c.h.b16 %v363
  %v2338 = vunpack.c.l.b16 %v364
  %v2339 = vunpack.c.h.b16 %v364
  %v2340 = vunpack.c.l.b16 %v365
  %v2341 = vunpack.c.h.b16 %v365
  %v2342 = vunpack.c.l.b16 %v366
  %v2343 = vunpack.c.h.b16 %v366
  %v2344 = vunpack.c.l.b16 %v367
  %v2345 = vunpack.c.h.b16 %v367
  %v2346 = vunpack.c.l.b16 %v368
  %v2347 = vunpack.c.h.b16 %v368
  %v2348 = vunpack.c.l.b16 %v369
  %v2349 = vunpack.c.h.b16 %v369
  %v2350 = vunpack.c.l.b16 %v370
  %v2351 = vunpack.c.h.b16 %v370
  %v2352 = vunpack.c.l.b16 %v371
  %v2353 = vunpack.c.h.b16 %v371
  %v2354 = vunpack.c.l.b16 %v372
  %v2355 = vunpack.c.h.b16 %v372
  %v2356 = vunpack.c.l.b16 %v373
  %v2357 = vunpack.c.h.b16 %v373
  %v2358 = vunpack.c.l.b16 %v374
  %v2359 = vunpack.c.h.b16 %v374
  %v2360 = vunpack.c.l.b16 %v375
  %v2361 = vunpack.c.h.b16 %v375
  %v2362 = vunpack.c.l.b16 %v376
  %v2363 = vunpack.c.h.b16 %v376
  %v2364 = vunpack.c.l.b16 %v377
  %v2365 = vunpack.c.h.b16 %v377
  %v2366 = vunpack.c.l.b16 %v378
  %v2367 = vunpack.c.h.b16 %v378
  %v2368 = vunpack.c.l.b16 %v379
  %v2369 = vunpack.c.h.b16 %v379
  %v2370 = vunpack.c.l.b16 %v380
  %v2371 = vunpack.c.h.b16 %v380
  %v2372 = vunpack.c.l.b16 %v381
  %v2373 = vunpack.c.h.b16 %v381
  %v2374 = vunpack.c.l.b16 %v382
  %v2375 = vunpack.c.h.b16 %v382
  %v2376 = vunpack.c.l.b16 %v383
  %v2377 = vunpack.c.h.b16 %v383
  %v2378 = vunpack.c.l.b16 %v384
  %v2379 = vunpack.c.h.b16 %v384
  %v2380 = vunpack.c.l.b16 %v385
  %v2381 = vunpack.c.h.b16 %v385
  %v2382 = vunpack.c.l.b16 %v386
  %v2383 = vunpack.c.h.b16 %v386
  %v2384 = vunpack.c.l.b16 %v387
  %v2385 = vunpack.c.h.b16 %v387
  %v2386 = vunpack.c.l.b16 %v388
  %v2387 = vunpack.c.h.b16 %v388
  %v2388 = vunpack.c.l.b16 %v389
  %v2389 = vunpack.c.h.b16 %v389
  %v2390 = vunpack.c.l.b16 %v390
  %v2391 = vunpack.c.h.b16 %v390
  %v2392 = vunpack.c.l.b16 %v391
  %v2393 = vunpack.c.h.b16 %v391
  %v2394 = vunpack.c.l.b16 %v392
  %v2395 = vunpack.c.h.b16 %v392
  %v2396 = vunpack.c.l.b16 %v393
  %v2397 = vunpack.c.h.b16 %v393
  %v2398 = vunpack.c.l.b16 %v394
  %v2399 = vunpack.c.h.b16 %v394
  %v2400 = vunpack.c.l.b16 %v395
  %v2401 = vunpack.c.h.b16 %v395
  %v2402 = vunpack.c.l.b16 %v396
  %v2403 = vunpack.c.h.b16 %v396
  %v2404 = vunpack.c.l.b16 %v397
  %v2405 = vunpack.c.h.b16 %v397
  %v2406 = vunpack.c.l.b16 %v398
  %v2407 = vunpack.c.h.b16 %v398
  %v2408 = vunpack.c.l.b16 %v399
  %v2409 = vunpack.c.h.b16 %v399
  %v2410 = vunpack.c.l.b16 %v400
  %v2411 = vunpack.c.h.b16 %v400
  %v2412 = vunpack.c.l.b16 %v401
  %v2413 = vunpack.c.h.b16 %v401
  %v2414 = vunpack.c.l.b16 %v402
  %v2415 = vunpack.c.h.b16 %v402
  %v2416 = vunpack.c.l.b16 %v403
  %v2417 = vunpack.c.h.b16 %v403
  %v2418 = vunpack.c.l.b16 %v404
  %v2419 = vunpack.c.h.b16 %v404
  %v2420 = vunpack.c.l.b16 %v405
  %v2421 = vunpack.c.h.b16 %v405
  %v2422 = vunpack.c.l.b16 %v406
  %v2423 = vunpack.c.h.b16 %v406
  %v2424 = vunpack.c.l.b16 %v407
  %v2425 = vunpack.c.h.b16 %v407
  %v2426 = vunpack.c.l.b16 %v408
  %v2427 = vunpack.c.h.b16 %v408
  %v2428 = vunpack.c.l.b16 %v409
  %v2429 = vunpack.c.h.b16 %v409
  %v2430 = vunpack.c.l.b16 %v410
  %v2431 = vunpack.c.h.b16 %v410
  %v2432 = vunpack.c.l.b16 %v411
  %v2433 = vunpack.c.h.b16 %v411
  %v2434 = vunpack.c.l.b16 %v412
  %v2435 = vunpack.c.h.b16 %v412
  %v2436 = vunpack.c.l.b16 %v413
  %v2437 = vunpack.c.h.b16 %v413
  %v2438 = vunpack.c.l.b16 %v414
  %v2439 = vunpack.c.h.b16 %v414
  %v2440 = vunpack.c.l.b16 %v415
  %v2441 = vunpack.c.h.b16 %v415
  %v2442 = vunpack.c.l.b16 %v416
  %v2443 = vunpack.c.h.b16 %v416
  %v2444 = vunpack.c.l.b16 %v417
  %v2445 = vunpack.c.h.b16 %v417
  %v2446 = vunpack.c.l.b16 %v418
  %v2447 = vunpack.c.h.b16 %v418
  %v2448 = vunpack.c.l.b16 %v419
  %v2449 = vunpack.c.h.b16 %v419
  %v2450 = vunpack.c.l.b16 %v420
  %v2451 = vunpack.c.h.b16 %v420
  %v2452 = vunpack.c.l.b16 %v421
  %v2453 = vunpack.c.h.b16 %v421
  %v2454 = vunpack.c.l.b16 %v422
  %v2455 = vunpack.c.h.b16 %v422
  %v2456 = vunpack.c.l.b16 %v423
  %v2457 = vunpack.c.h.b16 %v423
  %v2458 = vunpack.c.l.b16 %v424
  %v2459 = vunpack.c.h.b16 %v424
  %v2460 = vunpack.c.l.b16 %v425
  %v2461 = vunpack.c.h.b16 %v425
  %v2462 = vunpack.c.l.b16 %v426
  %v2463 = vunpack.c.h.b16 %v426
  %v2464 = vunpack.c.l.b16 %v427
  %v2465 = vunpack.c.h.b16 %v427
  %v2466 = vunpack.c.l.b16 %v428
  %v2467 = vunpack.c.h.b16 %v428
  %v2468 = vunpack.c.l.b16 %v429
  %v2469 = vunpack.c.h.b16 %v429
  %v2470 = vunpack.c.l.b16 %v430
  %v2471 = vunpack.c.h.b16 %v430
  %v2472 = vunpack.c.l.b16 %v431
  %v2473 = vunpack.c.h.b16 %v431
  %v2474 = vunpack.c.l.b16 %v432
  %v2475 = vunpack.c.h.b16 %v432
  %v2476 = vunpack.c.l.b16 %v433
  %v2477 = vunpack.c.h.b16 %v433
  %v2478 = vunpack.c.l.b16 %v434
  %v2479 = vunpack.c.h.b16 %v434
  %v2480 = vunpack.c.l.b16 %v435
  %v2481 = vunpack.c.h.b16 %v435
  %v2482 = vunpack.c.l.b16 %v436
  %v2483 = vunpack.c.h.b16 %v436
  %v2484 = vunpack.c.l.b16 %v437
  %v2485 = vunpack.c.h.b16 %v437
  %v2486 = vunpack.c.l.b16 %v438
  %v2487 = vunpack.c.h.b16 %v438
  %v2488 = vunpack.c.l.b16 %v439
  %v2489 = vunpack.c.h.b16 %v439
  %v2490 = vunpack.c.l.b16 %v440
  %v2491 = vunpack.c.h.b16 %v440
  %v2492 = vunpack.c.l.b16 %v441
  %v2493 = vunpack.c.h.b16 %v441
  %v2494 = vunpack.c.l.b16 %v442
  %v2495 = vunpack.c.h.b16 %v442
  %v2496 = vunpack.c.l.b16 %v443
  %v2497 = vunpack.c.h.b16 %v443
  %v2498 = vunpack.c.l.b16 %v444
  %v2499 = vunpack.c.h.b16 %v444
  %v2500 = vunpack.c.l.b16 %v445
  %v2501 = vunpack.c.h.b16 %v445
  %v2502 = vunpack.c.l.b16 %v446
  %v2503 = vunpack.c.h.b16 %v446
  %v2504 = vunpack.c.l.b16 %v447
  %v2505 = vunpack.c.h.b16 %v447
  %v2506 = vunpack.c.l.b16 %v448
  %v2507 = vunpack.c.h.b16 %v448
  %v2508 = vunpack.c.l.b16 %v449
  %v2509 = vunpack.c.h.b16 %v449
  %v2510 = vunpack.c.l.b16 %v450
  %v2511 = vunpack.c.h.b16 %v450
  %v2512 = vunpack.c.l.b16 %v451
  %v2513 = vunpack.c.h.b16 %v451
  %v2514 = vunpack.c.l.b16 %v452
  %v2515 = vunpack.c.h.b16 %v452
  %v2516 = vunpack.c.l.b16 %v453
  %v2517 = vunpack.c.h.b16 %v453
  %v2518 = vunpack.c.l.b16 %v454
  %v2519 = vunpack.c.h.b16 %v454
  %v2520 = vunpack.c.l.b16 %v455
  %v2521 = vunpack.c.h.b16 %v455
  %v2522 = vunpack.c.l.b16 %v456
  %v2523 = vunpack.c.h.b16 %v456
  %v2524 = vunpack.c.l.b16 %v457
  %v2525 = vunpack.c.h.b16 %v457
  %v2526 = vunpack.c.l.b16 %v458
  %v2527 = vunpack.c.h.b16 %v458
  %v2528 = vunpack.c.l.b16 %v459
  %v2529 = vunpack.c.h.b16 %v459
  %v2530 = vunpack.c.l.b16 %v460
  %v2531 = vunpack.c.h.b16 %v460
  %v2532 = vunpack.c.l.b16 %v461
  %v2533 = vunpack.c.h.b16 %v461
  %v2534 = vunpack.c.l.b16 %v462
  %v2535 = vunpack.c.h.b16 %v462
  %v2536 = vunpack.c.l.b16 %v463
  %v2537 = vunpack.c.h.b16 %v463
  %v2538 = vunpack.c.l.b16 %v464
  %v2539 = vunpack.c.h.b16 %v464
  %v2540 = vunpack.c.l.b16 %v465
  %v2541 = vunpack.c.h.b16 %v465
  %v2542 = vunpack.c.l.b16 %v466
  %v2543 = vunpack.c.h.b16 %v466
  %v2544 = vunpack.c.l.b16 %v467
  %v2545 = vunpack.c.h.b16 %v467
  %v2546 = vunpack.c.l.b16 %v468
  %v2547 = vunpack.c.h.b16 %v468
  %v2548 = vunpack.c.l.b16 %v469
  %v2549 = vunpack.c.h.b16 %v469
  %v2550 = vunpack.c.l.b16 %v470
  %v2551 = vunpack.c.h.b16 %v470
  %v2552 = vunpack.c.l.b16 %v471
  %v2553 = vunpack.c.h.b16 %v471
  %v2554 = vunpack.c.l.b16 %v472
  %v2555 = vunpack.c.h.b16 %v472
  %v2556 = vunpack.c.l.b16 %v473
  %v2557 = vunpack.c.h.b16 %v473
  %v2558 = vunpack.c.l.b16 %v474
  %v2559 = vunpack.c.h.b16 %v474
  %v2560 = vunpack.c.l.b16 %v475
  %v2561 = vunpack.c.h.b16 %v475
  %v2562 = vunpack.c.l.b16 %v476
  %v2563 = vunpack.c.h.b16 %v476
  %v2564 = vunpack.c.l.b16 %v477
  %v2565 = vunpack.c.h.b16 %v477
  %v2566 = vunpack.c.l.b16 %v478
  %v2567 = vunpack.c.h.b16 %v478
  %v2568 = vunpack.c.l.b16 %v479
  %v2569 = vunpack.c.h.b16 %v479
  %v2570 = vunpack.c.l.b16 %v480
  %v2571 = vunpack.c.h.b16 %v480
  %v2572 = vunpack.c.l.b16 %v481
  %v2573 = vunpack.c.h.b16 %v481
  %v2574 = vunpack.c.l.b16 %v482
  %v2575 = vunpack.c.h.b16 %v482
  %v2576 = vunpack.c.l.b16 %v483
  %v2577 = vunpack.c.h.b16 %v483
  %v2578 = vunpack.c.l.b16 %v484
  %v2579 = vunpack.c.h.b16 %v484
  %v2580 = vunpack.c.l.b16 %v485
  %v2581 = vunpack.c.h.b16 %v485
  %v2582 = vunpack.c.l.b16 %v486
  %v2583 = vunpack.c.h.b16 %v486
  %v2584 = vunpack.c.l.b16 %v487
  %v2585 = vunpack.c.h.b16 %v487
  %v2586 = vunpack.c.l.b16 %v488
  %v2587 = vunpack.c.h.b16 %v488
  %v2588 = vunpack.c.l.b16 %v489
  %v2589 = vunpack.c.h.b16 %v489
  %v2590 = vunpack.c.l.b16 %v490
  %v2591 = vunpack.c.h.b16 %v490
  %v2592 = vunpack.c.l.b16 %v491
  %v2593 = vunpack.c.h.b16 %v491
  %v2594 = vunpack.c.l.b16 %v492
  %v2595 = vunpack.c.h.b16 %v492
  %v2596 = vunpack.c.l.b16 %v493
  %v2597 = vunpack.c.h.b16 %v493
  %v2598 = vunpack.c.l.b16 %v494
  %v2599 = vunpack.c.h.b16 %v494
  %v2600 = vunpack.c.l.b16 %v495
  %v2601 = vunpack.c.h.b16 %v495
  %v2602 = vunpack.c.l.b16 %v496
  %v2603 = vunpack.c.h.b16 %v496
  %v2604 = vunpack.c.l.b16 %v497
  %v2605 = vunpack.c.h.b16 %v497
  %v2606 = vunpack.c.l.b16 %v498
  %v2607 = vunpack.c.h.b16 %v498
  %v2608 = vunpack.c.l.b16 %v499
  %v2609 = vunpack.c.h.b16 %v499
  %v2610 = vunpack.c.l.b16 %v500
  %v2611 = vunpack.c.h.b16 %v500
  %v2612 = vunpack.c.l.b16 %v501
  %v2613 = vunpack.c.h.b16 %v501
  %v2614 = vunpack.c.l.b16 %v502
  %v2615 = vunpack.c.h.b16 %v502
  %v2616 = vunpack.c.l.b16 %v503
  %v2617 = vunpack.c.h.b16 %v503
  %v2618 = vunpack.c.l.b16 %v504
  %v2619 = vunpack.c.h.b16 %v504
  %v2620 = vunpack.c.l.b16 %v505
  %v2621 = vunpack.c.h.b16 %v505
  %v2622 = vunpack.c.l.b16 %v506
  %v2623 = vunpack.c.h.b16 %v506
  %v2624 = vunpack.c.l.b16 %v507
  %v2625 = vunpack.c.h.b16 %v507
  %v2626 = vunpack.c.l.b16 %v508
  %v2627 = vunpack.c.h.b16 %v508
  %v2628 = vunpack.c.l.b16 %v509
  %v2629 = vunpack.c.h.b16 %v509
  %v2630 = vunpack.c.l.b16 %v510
  %v2631 = vunpack.c.h.b16 %v510
  %v2632 = vunpack.c.l.b16 %v511
  %v2633 = vunpack.c.h.b16 %v511
  %v2634 = vunpack.c.l.b16 %v512
  %v2635 = vunpack.c.h.b16 %v512
  %v2636 = vunpack.c.l.b16 %v513
  %v2637 = vunpack.c.h.b16 %v513
  %v2638 = vunpack.c.l.b16 %v514
  %v2639 = vunpack.c.h.b16 %v514
  %v2640 = vunpack.c.l.b16 %v515
  %v2641 = vunpack.c.h.b16 %v515
  %v2642 = vunpack.c.l.b16 %v516
  %v2643 = vunpack.c.h.b16 %v516
  %v2644 = vunpack.c.l.b16 %v517
  %v2645 = vunpack.c.h.b16 %v517
  %v2646 = vunpack.c.l.b16 %v518
  %v2647 = vunpack.c.h.b16 %v518
  %v2648 = vunpack.c.l.b16 %v519
  %v2649 = vunpack.c.h.b16 %v519
  %v2650 = vunpack.c.l.b16 %v520
  %v2651 = vunpack.c.h.b16 %v520
  %v2652 = vunpack.c.l.b16 %v521
  %v2653 = vunpack.c.h.b16 %v521
  %v2654 = vunpack.c.l.b16 %v522
  %v2655 = vunpack.c.h.b16 %v522
  %v2656 = vunpack.c.l.b16 %v523
  %v2657 = vunpack.c.h.b16 %v523
  %v2658 = vunpack.c.l.b16 %v524
  %v2659 = vunpack.c.h.b16 %v524
  %v2660 = vunpack.c.l.b16 %v525
  %v2661 = vunpack.c.h.b16 %v525
  %v2662 = vunpack.c.l.b16 %v526
  %v2663 = vunpack.c.h.b16 %v526
  %v2664 = vunpack.c.l.b16 %v527
  %v2665 = vunpack.c.h.b16 %v527
  %v2666 = vunpack.c.l.b16 %v528
  %v2667 = vunpack.c.h.b16 %v528
  %v2668 = vunpack.c.l.b16 %v529
  %v2669 = vunpack.c.h.b16 %v529
  %v2670 = vunpack.c.l.b16 %v530
  %v2671 = vunpack.c.h.b16 %v530
  %v2672 = vunpack.c.l.b16 %v531
  %v2673 = vunpack.c.h.b16 %v531
  %v2674 = vunpack.c.l.b16 %v532
  %v2675 = vunpack.c.h.b16 %v532
  %v2676 = vunpack.c.l.b16 %v533
  %v2677 = vunpack.c.h.b16 %v533
  %v2678 = vunpack.c.l.b16 %v534
  %v2679 = vunpack.c.h.b16 %v534
  %v2680 = vunpack.c.l.b16 %v535
  %v2681 = vunpack.c.h.b16 %v535
  %v2682 = vunpack.c.l.b16 %v536
  %v2683 = vunpack.c.h.b16 %v536
  %v2684 = vunpack.c.l.b16 %v537
  %v2685 = vunpack.c.h.b16 %v537
  %v2686 = vunpack.c.l.b16 %v538
  %v2687 = vunpack.c.h.b16 %v538
  %v2688 = vunpack.c.l.b16 %v539
  %v2689 = vunpack.c.h.b16 %v539
  %v2690 = vunpack.c.l.b16 %v540
  %v2691 = vunpack.c.h.b16 %v540
  %v2692 = vunpack.c.l.b16 %v541
  %v2693 = vunpack.c.h.b16 %v541
  %v2694 = vunpack.c.l.b16 %v542
  %v2695 = vunpack.c.h.b16 %v542
  %v2696 = vunpack.c.l.b16 %v543
  %v2697 = vunpack.c.h.b16 %v543
  %v2698 = vunpack.c.l.b16 %v544
  %v2699 = vunpack.c.h.b16 %v544
  %v2700 = vunpack.c.l.b16 %v545
  %v2701 = vunpack.c.h.b16 %v545
  %v2702 = vunpack.c.l.b16 %v546
  %v2703 = vunpack.c.h.b16 %v546
  %v2704 = vunpack.c.l.b16 %v547
  %v2705 = vunpack.c.h.b16 %v547
  %v2706 = vunpack.c.l.b16 %v548
  %v2707 = vunpack.c.h.b16 %v548
  %v2708 = vunpack.c.l.b16 %v549
  %v2709 = vunpack.c.h.b16 %v549
  %v2710 = vunpack.c.l.b16 %v550
  %v2711 = vunpack.c.h.b16 %v550
  %v2712 = vunpack.c.l.b16 %v551
  %v2713 = vunpack.c.h.b16 %v551
  %v2714 = vunpack.c.l.b16 %v552
  %v2715 = vunpack.c.h.b16 %v552
  %v2716 = vunpack.c.l.b16 %v553
  %v2717 = vunpack.c.h.b16 %v553
  %v2718 = vunpack.c.l.b16 %v554
  %v2719 = vunpack.c.h.b16 %v554
  %v2720 = vunpack.c.l.b16 %v555
  %v2721 = vunpack.c.h.b16 %v555
  %v2722 = vunpack.c.l.b16 %v556
  %v2723 = vunpack.c.h.b16 %v556
  %v2724 = vunpack.c.l.b16 %v557
  %v2725 = vunpack.c.h.b16 %v557
  %v2726 = vunpack.c.l.b16 %v558
  %v2727 = vunpack.c.h.b16 %v558
  %v2728 = vunpack.c.l.b16 %v559
  %v2729 = vunpack.c.h.b16 %v559
  %v2730 = vunpack.c.l.b16 %v560
  %v2731 = vunpack.c.h.b16 %v560
  %v2732 = vunpack.c.l.b16 %v561
  %v2733 = vunpack.c.h.b16 %v561
  %v2734 = vunpack.c.l.b16 %v562
  %v2735 = vunpack.c.h.b16 %v562
  %v2736 = vunpack.c.l.b16 %v563
  %v2737 = vunpack.c.h.b16 %v563
  %v2738 = vunpack.c.l.b16 %v564
  %v2739 = vunpack.c.h.b16 %v564
  %v2740 = vunpack.c.l.b16 %v565
  %v2741 = vunpack.c.h.b16 %v565
  %v2742 = vunpack.c.l.b16 %v566
  %v2743 = vunpack.c.h.b16 %v566
  %v2744 = vunpack.c.l.b16 %v567
  %v2745 = vunpack.c.h.b16 %v567
  %v2746 = vunpack.c.l.b16 %v568
  %v2747 = vunpack.c.h.b16 %v568
  %v2748 = vunpack.c.l.b16 %v569
  %v2749 = vunpack.c.h.b16 %v569
  %v2750 = vunpack.c.l.b16 %v570
  %v2751 = vunpack.c.h.b16 %v570
  %v2752 = vunpack.c.l.b16 %v571
  %v2753 = vunpack.c.h.b16 %v571
  %v2754 = vunpack.c.l.b16 %v572
  %v2755 = vunpack.c.h.b16 %v572
  %v2756 = vunpack.c.l.b16 %v573
  %v2757 = vunpack.c.h.b16 %v573
  %v2758 = vunpack.c.l.b16 %v574
  %v2759 = vunpack.c.h.b16 %v574
  %v2760 = vunpack.c.l.b16 %v575
  %v2761 = vunpack.c.h.b16 %v575
  %v2762 = vunpack.c.l.b16 %v576
  %v2763 = vunpack.c.h.b16 %v576
  %v2764 = vunpack.c.l.b16 %v577
  %v2765 = vunpack.c.h.b16 %v577
  %v2766 = vunpack.c.l.b16 %v578
  %v2767 = vunpack.c.h.b16 %v578
  %v2768 = vunpack.c.l.b16 %v579
  %v2769 = vunpack.c.h.b16 %v579
  %v2770 = vunpack.c.l.b16 %v580
  %v2771 = vunpack.c.h.b16 %v580
  %v2772 = vunpack.c.l.b16 %v581
  %v2773 = vunpack.c.h.b16 %v581
  %v2774 = vunpack.c.l.b16 %v582
  %v2775 = vunpack.c.h.b16 %v582
  %v2776 = vunpack.c.l.b16 %v583
  %v2777 = vunpack.c.h.b16 %v583
  %v2778 = vunpack.c.l.b16 %v584
  %v2779 = vunpack.c.h.b16 %v584
  %v2780 = vunpack.c.l.b16 %v585
  %v2781 = vunpack.c.h.b16 %v585
  %v2782 = vunpack.c.l.b16 %v586
  %v2783 = vunpack.c.h.b16 %v586
  %v2784 = vunpack.c.l.b16 %v587
  %v2785 = vunpack.c.h.b16 %v587
  %v2786 = vunpack.c.l.b16 %v588
  %v2787 = vunpack.c.h.b16 %v588
  %v2788 = vunpack.c.l.b16 %v589
  %v2789 = vunpack.c.h.b16 %v589
  %v2790 = vunpack.c.l.b16 %v590
  %v2791 = vunpack.c.h.b16 %v590
  %v2792 = vunpack.c.l.b16 %v591
  %v2793 = vunpack.c.h.b16 %v591
  %v2794 = vunpack.c.l.b16 %v592
  %v2795 = vunpack.c.h.b16 %v592
  %v2796 = vunpack.c.l.b16 %v593
  %v2797 = vunpack.c.h.b16 %v593
  %v2798 = vunpack.c.l.b16 %v594
  %v2799 = vunpack.c.h.b16 %v594
  %v2800 = vunpack.c.l.b16 %v595
  %v2801 = vunpack.c.h.b16 %v595
  %v2802 = vunpack.c.l.b16 %v596
  %v2803 = vunpack.c.h.b16 %v596
  %v2804 = vunpack.c.l.b16 %v597
  %v2805 = vunpack.c.h.b16 %v597
  %v2806 = vunpack.c.l.b16 %v598
  %v2807 = vunpack.c.h.b16 %v598
  %v2808 = vunpack.c.l.b16 %v599
  %v2809 = vunpack.c.h.b16 %v599
  %v2810 = vunpack.c.l.b16 %v600
  %v2811 = vunpack.c.h.b16 %v600
  %v2812 = vunpack.c.l.b16 %v601
  %v2813 = vunpack.c.h.b16 %v601
  %v2814 = vunpack.c.l.b16 %v602
  %v2815 = vunpack.c.h.b16 %v602
  %v2816 = vunpack.c.l.b16 %v603
  %v2817 = vunpack.c.h.b16 %v603
  %v2818 = vunpack.c.l.b16 %v604
  %v2819 = vunpack.c.h.b16 %v604
  %v2820 = vunpack.c.l.b16 %v605
  %v2821 = vunpack.c.h.b16 %v605
  %v2822 = vunpack.c.l.b16 %v606
  %v2823 = vunpack.c.h.b16 %v606
  %v2824 = vunpack.c.l.b16 %v607
  %v2825 = vunpack.c.h.b16 %v607
  %v2826 = vunpack.c.l.b16 %v608
  %v2827 = vunpack.c.h.b16 %v608
  %v2828 = vunpack.c.l.b16 %v609
  %v2829 = vunpack.c.h.b16 %v609
  %v2830 = vunpack.c.l.b16 %v610
  %v2831 = vunpack.c.h.b16 %v610
  %v2832 = vunpack.c.l.b16 %v611
  %v2833 = vunpack.c.h.b16 %v611
  %v2834 = vunpack.c.l.b16 %v612
  %v2835 = vunpack.c.h.b16 %v612
  %v2836 = vunpack.c.l.b16 %v613
  %v2837 = vunpack.c.h.b16 %v613
  %v2838 = vunpack.c.l.b16 %v614
  %v2839 = vunpack.c.h.b16 %v614
  %v2840 = vunpack.c.l.b16 %v615
  %v2841 = vunpack.c.h.b16 %v615
  %v2842 = vunpack.c.l.b16 %v616
  %v2843 = vunpack.c.h.b16 %v616
  %v2844 = vunpack.c.l.b16 %v617
  %v2845 = vunpack.c.h.b16 %v617
  %v2846 = vunpack.c.l.b16 %v618
  %v2847 = vunpack.c.h.b16 %v618
  %v2848 = vunpack.c.l.b16 %v619
  %v2849 = vunpack.c.h.b16 %v619
  %v2850 = vunpack.c.l.b16 %v620
  %v2851 = vunpack.c.h.b16 %v620
  %v2852 = vunpack.c.l.b16 %v621
  %v2853 = vunpack.c.h.b16 %v621
  %v2854 = vunpack.c.l.b16 %v622
  %v2855 = vunpack.c.h.b16 %v622
  %v2856 = vunpack.c.l.b16 %v623
  %v2857 = vunpack.c.h.b16 %v623
  %v2858 = vunpack.c.l.b16 %v624
  %v2859 = vunpack.c.h.b16 %v624
  %v2860 = vunpack.c.l.b16 %v625
  %v2861 = vunpack.c.h.b16 %v625
  %v2862 = vunpack.c.l.b16 %v626
  %v2863 = vunpack.c.h.b16 %v626
  %v2864 = vunpack.c.l.b16 %v627
  %v2865 = vunpack.c.h.b16 %v627
  %v2866 = vunpack.c.l.b16 %v628
  %v2867 = vunpack.c.h.b16 %v628
  %v2868 = vunpack.c.l.b16 %v629
  %v2869 = vunpack.c.h.b16 %v629
  %v2870 = vunpack.c.l.b16 %v630
  %v2871 = vunpack.c.h.b16 %v630
  %v2872 = vunpack.c.l.b16 %v631
  %v2873 = vunpack.c.h.b16 %v631
  %v2874 = vunpack.c.l.b16 %v632
  %v2875 = vunpack.c.h.b16 %v632
  %v2876 = vunpack.c.l.b16 %v633
  %v2877 = vunpack.c.h.b16 %v633
  %v2878 = vunpack.c.l.b16 %v634
  %v2879 = vunpack.c.h.b16 %v634
  %v2880 = vunpack.c.l.b16 %v635
  %v2881 = vunpack.c.h.b16 %v635
  %v2882 = vunpack.c.l.b16 %v636
  %v2883 = vunpack.c.h.b16 %v636
  %v2884 = vunpack.c.l.b16 %v637
  %v2885 = vunpack.c.h.b16 %v637
  %v2886 = vunpack.c.l.b16 %v638
  %v2887 = vunpack.c.h.b16 %v638
  %v2888 = vunpack.c.l.b16 %v639
  %v2889 = vunpack.c.h.b16 %v639
  %v2890 = vunpack.c.l.b16 %v640
  %v2891 = vunpack.c.h.b16 %v640
  %v2892 = vunpack.c.l.b16 %v641
  %v2893 = vunpack.c.h.b16 %v641
  %v2894 = vunpack.c.l.b16 %v642
  %v2895 = vunpack.c.h.b16 %v642
  %v2896 = vunpack.c.l.b16 %v643
  %v2897 = vunpack.c.h.b16 %v643
  %v2898 = vunpack.c.l.b16 %v644
  %v2899 = vunpack.c.h.b16 %v644
  %v2900 = vunpack.c.l.b16 %v645
  %v2901 = vunpack.c.h.b16 %v645
  %v2902 = vunpack.c.l.b16 %v646
  %v2903 = vunpack.c.h.b16 %v646
  %v2904 = vunpack.c.l.b16 %v647
  %v2905 = vunpack.c.h.b16 %v647
  %v2906 = vunpack.c.l.b16 %v648
  %v2907 = vunpack.c.h.b16 %v648
  %v2908 = vunpack.c.l.b16 %v649
  %v2909 = vunpack.c.h.b16 %v649
  %v2910 = vunpack.c.l.b16 %v650
  %v2911 = vunpack.c.h.b16 %v650
  %v2912 = vunpack.c.l.b16 %v651
  %v2913 = vunpack.c.h.b16 %v651
  %v2914 = vunpack.c.l.b16 %v652
  %v2915 = vunpack.c.h.b16 %v652
  %v2916 = vunpack.c.l.b16 %v653
  %v2917 = vunpack.c.h.b16 %v653
  %v2918 = vunpack.c.l.b16 %v654
  %v2919 = vunpack.c.h.b16 %v654
  %v2920 = vunpack.c.l.b16 %v655
  %v2921 = vunpack.c.h.b16 %v655
  %v2922 = vunpack.c.l.b16 %v656
  %v2923 = vunpack.c.h.b16 %v656
  %v2924 = vunpack.c.l.b16 %v657
  %v2925 = vunpack.c.h.b16 %v657
  %v2926 = vunpack.c.l.b16 %v658
  %v2927 = vunpack.c.h.b16 %v658
  %v2928 = vunpack.c.l.b16 %v659
  %v2929 = vunpack.c.h.b16 %v659
  %v2930 = vunpack.c.l.b16 %v660
  %v2931 = vunpack.c.h.b16 %v660
  %v2932 = vunpack.c.l.b16 %v661
  %v2933 = vunpack.c.h.b16 %v661
  %v2934 = vunpack.c.l.b16 %v662
  %v2935 = vunpack.c.h.b16 %v662
  %v2936 = vunpack.c.l.b16 %v663
  %v2937 = vunpack.c.h.b16 %v663
  %v2938 = vunpack.c.l.b16 %v664
  %v2939 = vunpack.c.h.b16 %v664
  %v2940 = vunpack.c.l.b16 %v665
  %v2941 = vunpack.c.h.b16 %v665
  %v2942 = vunpack.c.l.b16 %v666
  %v2943 = vunpack.c.h.b16 %v666
  %v2944 = vunpack.c.l.b16 %v667
  %v2945 = vunpack.c.h.b16 %v667
  %v2946 = vunpack.c.l.b16 %v668
  %v2947 = vunpack.c.h.b16 %v668
  %v2948 = vunpack.c.l.b16 %v669
  %v2949 = vunpack.c.h.b16 %v669
  %v2950 = vunpack.c.l.b16 %v670
  %v2951 = vunpack.c.h.b16 %v670
  %v2952 = vunpack.c.l.b16 %v671
  %v2953 = vunpack.c.h.b16 %v671
  %v2954 = vunpack.c.l.b16 %v672
  %v2955 = vunpack.c.h.b16 %v672
  %v2956 = vunpack.c.l.b16 %v673
  %v2957 = vunpack.c.h.b16 %v673
  %v2958 = vunpack.c.l.b16 %v674
  %v2959 = vunpack.c.h.b16 %v674
  %v2960 = vunpack.c.l.b16 %v675
  %v2961 = vunpack.c.h.b16 %v675
  %v2962 = vunpack.c.l.b16 %v676
  %v2963 = vunpack.c.h.b16 %v676
  %v2964 = vunpack.c.l.b16 %v677
  %v2965 = vunpack.c.h.b16 %v677
  %v2966 = vunpack.c.l.b16 %v678
  %v2967 = vunpack.c.h.b16 %v678
  %v2968 = vunpack.c.l.b16 %v679
  %v2969 = vunpack.c.h.b16 %v679
  %v2970 = vunpack.c.l.b16 %v680
  %v2971 = vunpack.c.h.b16 %v680
  %v2972 = vunpack.c.l.b16 %v681
  %v2973 = vunpack.c.h.b16 %v681
  %v2974 = vunpack.c.l.b16 %v682
  %v2975 = vunpack.c.h.b16 %v682
  %v2976 = vunpack.c.l.b16 %v683
  %v2977 = vunpack.c.h.b16 %v683
  %v2978 = vunpack.c.l.b16 %v684
  %v2979 = vunpack.c.h.b16 %v684
  %v2980 = vunpack.c.l.b16 %v685
  %v2981 = vunpack.c.h.b16 %v685
  %v2982 = vunpack.c.l.b16 %v686
  %v2983 = vunpack.c.h.b16 %v686
  %v2984 = vunpack.c.l.b16 %v687
  %v2985 = vunpack.c.h.b16 %v687
  %v2986 = vunpack.c.l.b16 %v688
  %v2987 = vunpack.c.h.b16 %v688
  %v2988 = vunpack.c.l.b16 %v689
  %v2989 = vunpack.c.h.b16 %v689
  %v2990 = vunpack.c.l.b16 %v690
  %v2991 = vunpack.c.h.b16 %v690
  %v2992 = vunpack.c.l.b16 %v691
  %v2993 = vunpack.c.h.b16 %v691
  %v2994 = vunpack.c.l.b16 %v692
  %v2995 = vunpack.c.h.b16 %v692
  %v2996 = vunpack.c.l.b16 %v693
  %v2997 = vunpack.c.h.b16 %v693
  %v2998 = vunpack.c.l.b16 %v694
  %v2999 = vunpack.c.h.b16 %v694
  %v3000 = vunpack.c.l.b16 %v695
  %v3001 = vunpack.c.h.b16 %v695
  %v3002 = vunpack.c.l.b16 %v696
  %v3003 = vunpack.c.h.b16 %v696
  %v3004 = vunpack.c.l.b16 %v697
  %v3005 = vunpack.c.h.b16 %v697
  %v3006 = vunpack.c.l.b16 %v698
  %v3007 = vunpack.c.h.b16 %v698
  %v3008 = vunpack.c.l.b16 %v699
  %v3009 = vunpack.c.h.b16 %v699
  %v3010 = vunpack.c.l.b16 %v700
  %v3011 = vunpack.c.h.b16 %v700
  %v3012 = vunpack.c.l.b16 %v701
  %v3013 = vunpack.c.h.b16 %v701
  %v3014 = vunpack.c.l.b16 %v702
  %v3015 = vunpack.c.h.b16 %v702
  %v3016 = vunpack.c.l.b16 %v703
  %v3017 = vunpack.c.h.b16 %v703
  %v3018 = vunpack.c.l.b16 %v704
  %v3019 = vunpack.c.h.b16 %v704
  %v3020 = vunpack.c.l.b16 %v705
  %v3021 = vunpack.c.h.b16 %v705
  %v3022 = vunpack.c.l.b16 %v706
  %v3023 = vunpack.c.h.b16 %v706
  %v3024 = vunpack.c.l.b16 %v707
  %v3025 = vunpack.c.h.b16 %v707
  %v3026 = vunpack.c.l.b16 %v708
  %v3027 = vunpack.c.h.b16 %v708
  %v3028 = vunpack.c.l.b16 %v709
  %v3029 = vunpack.c.h.b16 %v709
  %v3030 = vunpack.c.l.b16 %v710
  %v3031 = vunpack.c.h.b16 %v710
  %v3032 = vunpack.c.l.b16 %v711
  %v3033 = vunpack.c.h.b16 %v711
  %v3034 = vunpack.c.l.b16 %v712
  %v3035 = vunpack.c.h.b16 %v712
  %v3036 = vunpack.c.l.b16 %v713
  %v3037 = vunpack.c.h.b16 %v713
  %v3038 = vunpack.c.l.b16 %v714
  %v3039 = vunpack.c.h.b16 %v714
  %v3040 = vunpack.c.l.b16 %v715
  %v3041 = vunpack.c.h.b16 %v715
  %v3042 = vunpack.c.l.b16 %v716
  %v3043 = vunpack.c.h.b16 %v716
  %v3044 = vunpack.c.l.b16 %v717
  %v3045 = vunpack.c.h.b16 %v717
  %v3046 = vunpack.c.l.b16 %v718
  %v3047 = vunpack.c.h.b16 %v718
  %v3048 = vunpack.c.l.b16 %v719
  %v3049 = vunpack.c.h.b16 %v719
  %v3050 = vunpack.c.l.b16 %v720
  %v3051 = vunpack.c.h.b16 %v720
  %v3052 = vunpack.c.l.b16 %v721
  %v3053 = vunpack.c.h.b16 %v721
  %v3054 = vunpack.c.l.b16 %v722
  %v3055 = vunpack.c.h.b16 %v722
  %v3056 = vunpack.c.l.b16 %v723
  %v3057 = vunpack.c.h.b16 %v723
  %v3058 = vunpack.c.l.b16 %v724
  %v3059 = vunpack.c.h.b16 %v724
  %v3060 = vunpack.c.l.b16 %v725
  %v3061 = vunpack.c.h.b16 %v725
  %v3062 = vunpack.c.l.b16 %v726
  %v3063 = vunpack.c.h.b16 %v726
  %v3064 = vunpack.c.l.b16 %v727
  %v3065 = vunpack.c.h.b16 %v727
  %v3066 = vunpack.c.l.b16 %v728
  %v3067 = vunpack.c.h.b16 %v728
  %v3068 = vunpack.c.l.b16 %v729
  %v3069 = vunpack.c.h.b16 %v729
  %v3070 = vunpack.c.l.b16 %v730
  %v3071 = vunpack.c.h.b16 %v730
  %v3072 = vunpack.c.l.b16 %v731
  %v3073 = vunpack.c.h.b16 %v731
  %v3074 = vunpack.c.l.b16 %v732
  %v3075 = vunpack.c.h.b16 %v732
  %v3076 = vunpack.c.l.b16 %v733
  %v3077 = vunpack.c.h.b16 %v733
  %v3078 = vunpack.c.l.b16 %v734
  %v3079 = vunpack.c.h.b16 %v734
  %v3080 = vunpack.c.l.b16 %v735
  %v3081 = vunpack.c.h.b16 %v735
  %v3082 = vunpack.c.l.b16 %v736
  %v3083 = vunpack.c.h.b16 %v736
  %v3084 = vunpack.c.l.b16 %v737
  %v3085 = vunpack.c.h.b16 %v737
  %v3086 = vunpack.c.l.b16 %v738
  %v3087 = vunpack.c.h.b16 %v738
  %v3088 = vunpack.c.l.b16 %v739
  %v3089 = vunpack.c.h.b16 %v739
  %v3090 = vunpack.c.l.b16 %v740
  %v3091 = vunpack.c.h.b16 %v740
  %v3092 = vunpack.c.l.b16 %v741
  %v3093 = vunpack.c.h.b16 %v741
  %v3094 = vunpack.c.l.b16 %v742
  %v3095 = vunpack.c.h.b16 %v742
  %v3096 = vunpack.c.l.b16 %v743
  %v3097 = vunpack.c.h.b16 %v743
  %v3098 = vunpack.c.l.b16 %v744
  %v3099 = vunpack.c.h.b16 %v744
  %v3100 = vunpack.c.l.b16 %v745
  %v3101 = vunpack.c.h.b16 %v745
  %v3102 = vunpack.c.l.b16 %v746
  %v3103 = vunpack.c.h.b16 %v746
  %v3104 = vunpack.c.l.b16 %v747
  %v3105 = vunpack.c.h.b16 %v747
  %v3106 = vunpack.c.l.b16 %v748
  %v3107 = vunpack.c.h.b16 %v748
  %v3108 = vunpack.c.l.b16 %v749
  %v3109 = vunpack.c.h.b16 %v749
  %v3110 = vunpack.c.l.b16 %v750
  %v3111 = vunpack.c.h.b16 %v750
  %v3112 = vunpack.c.l.b16 %v751
  %v3113 = vunpack.c.h.b16 %v751
  %v3114 = vunpack.c.l.b16 %v752
  %v3115 = vunpack.c.h.b16 %v752
  %v3116 = vunpack.c.l.b16 %v753
  %v3117 = vunpack.c.h.b16 %v753
  %v3118 = vunpack.c.l.b16 %v754
  %v3119 = vunpack.c.h.b16 %v754
  %v3120 = vunpack.c.l.b16 %v755
  %v3121 = vunpack.c.h.b16 %v755
  %v3122 = vunpack.c.l.b16 %v756
  %v3123 = vunpack.c.h.b16 %v756
  %v3124 = vunpack.c.l.b16 %v757
  %v3125 = vunpack.c.h.b16 %v757
  %v3126 = vunpack.c.l.b16 %v758
  %v3127 = vunpack.c.h.b16 %v758
  %v3128 = vunpack.c.l.b16 %v759
  %v3129 = vunpack.c.h.b16 %v759
  %v3130 = vunpack.c.l.b16 %v760
  %v3131 = vunpack.c.h.b16 %v760
  %v3132 = vunpack.c.l.b16 %v761
  %v3133 = vunpack.c.h.b16 %v761
  %v3134 = vunpack.c.l.b16 %v762
  %v3135 = vunpack.c.h.b16 %v762
  %v3136 = vunpack.c.l.b16 %v763
  %v3137 = vunpack.c.h.b16 %v763
  %v3138 = vunpack.c.l.b16 %v764
  %v3139 = vunpack.c.h.b16 %v764
  %v3140 = vunpack.c.l.b16 %v765
  %v3141 = vunpack.c.h.b16 %v765
  %v3142 = vunpack.c.l.b16 %v766
  %v3143 = vunpack.c.h.b16 %v766
  %v3144 = vunpack.c.l.b16 %v767
  %v3145 = vunpack.c.h.b16 %v767
  %v3146 = vunpack.c.l.b16 %v768
  %v3147 = vunpack.c.h.b16 %v768
  %v3148 = vunpack.c.l.b16 %v769
  %v3149 = vunpack.c.h.b16 %v769
  %v3150 = vunpack.c.l.b16 %v770
  %v3151 = vunpack.c.h.b16 %v770
  %v3152 = vunpack.c.l.b16 %v771
  %v3153 = vunpack.c.h.b16 %v771
  %v3154 = vunpack.c.l.b16 %v772
  %v3155 = vunpack.c.h.b16 %v772
  %v3156 = vunpack.c.l.b16 %v773
  %v3157 = vunpack.c.h.b16 %v773
  %v3158 = vunpack.c.l.b16 %v774
  %v3159 = vunpack.c.h.b16 %v774
  %v3160 = vunpack.c.l.b16 %v775
  %v3161 = vunpack.c.h.b16 %v775
  %v3162 = vunpack.c.l.b16 %v776
  %v3163 = vunpack.c.h.b16 %v776
  %v3164 = vunpack.c.l.b16 %v777
  %v3165 = vunpack.c.h.b16 %v777
  %v3166 = vunpack.c.l.b16 %v778
  %v3167 = vunpack.c.h.b16 %v778
  %v3168 = vunpack.c.l.b16 %v779
  %v3169 = vunpack.c.h.b16 %v779
  %v3170 = vunpack.c.l.b16 %v780
  %v3171 = vunpack.c.h.b16 %v780
  %v3172 = vunpack.c.l.b16 %v781
  %v3173 = vunpack.c.h.b16 %v781
  %v3174 = vunpack.c.l.b16 %v782
  %v3175 = vunpack.c.h.b16 %v782
  %v3176 = vunpack.c.l.b16 %v783
  %v3177 = vunpack.c.h.b16 %v783
  %v3178 = vunpack.c.l.b16 %v784
  %v3179 = vunpack.c.h.b16 %v784
  %v3180 = vunpack.c.l.b16 %v785
  %v3181 = vunpack.c.h.b16 %v785
  %v3182 = vunpack.c.l.b16 %v786
  %v3183 = vunpack.c.h.b16 %v786
  %v3184 = vunpack.c.l.b16 %v787
  %v3185 = vunpack.c.h.b16 %v787
  %v3186 = vunpack.c.l.b16 %v788
  %v3187 = vunpack.c.h.b16 %v788
  %v3188 = vunpack.c.l.b16 %v789
  %v3189 = vunpack.c.h.b16 %v789
  %v3190 = vunpack.c.l.b16 %v790
  %v3191 = vunpack.c.h.b16 %v790
  %v3192 = vunpack.c.l.b16 %v791
  %v3193 = vunpack.c.h.b16 %v791
  %v3194 = vunpack.c.l.b16 %v792
  %v3195 = vunpack.c.h.b16 %v792
  %v3196 = vunpack.c.l.b16 %v793
  %v3197 = vunpack.c.h.b16 %v793
  %v3198 = vunpack.c.l.b16 %v794
  %v3199 = vunpack.c.h.b16 %v794
  %v3200 = vunpack.c.l.b16 %v795
  %v3201 = vunpack.c.h.b16 %v795
  %v3202 = vunpack.c.l.b16 %v796
  %v3203 = vunpack.c.h.b16 %v796
  %v3204 = vunpack.c.l.b16 %v797
  %v3205 = vunpack.c.h.b16 %v797
  %v3206 = vunpack.c.l.b16 %v798
  %v3207 = vunpack.c.h.b16 %v798
  %v3208 = vunpack.c.l.b16 %v799
  %v3209 = vunpack.c.h.b16 %v799
  %v3210 = vunpack.c.l.b16 %v800
  %v3211 = vunpack.c.h.b16 %v800
  %v3212 = vunpack.c.l.b16 %v801
  %v3213 = vunpack.c.h.b16 %v801
  %v3214 = vunpack.c.l.b16 %v802
  %v3215 = vunpack.c.h.b16 %v802
  %v3216 = vunpack.c.l.b16 %v803
  %v3217 = vunpack.c.h.b16 %v803
  %v3218 = vunpack.c.l.b16 %v804
  %v3219 = vunpack.c.h.b16 %v804
  %v3220 = vunpack.c.l.b16 %v805
  %v3221 = vunpack.c.h.b16 %v805
  %v3222 = vunpack.c.l.b16 %v806
  %v3223 = vunpack.c.h.b16 %v806
  %v3224 = vunpack.c.l.b16 %v807
  %v3225 = vunpack.c.h.b16 %v807
  %v3226 = vunpack.c.l.b16 %v808
  %v3227 = vunpack.c.h.b16 %v808
  %v3228 = vpack.c.b16 %v1664, %v1660
  %v3229 = vpack.c.b16 %v1665, %v1661
  %v3230 = vpack.c.b16 %v1666, %v1662
  %v3231 = vpack.c.b16 %v1667, %v1663
  %v3232 = vpack.c.b16 %v1672, %v1668
  %v3233 = vpack.c.b16 %v1673, %v1669
  %v3234 = vpack.c.b16 %v1674, %v1670
  %v3235 = vpack.c.b16 %v1675, %v1671
  %v3236 = vpack.c.b16 %v1680, %v1676
  %v3237 = vpack.c.b16 %v1681, %v1677
  %v3238 = vpack.c.b16 %v1682, %v1678
  %v3239 = vpack.c.b16 %v1683, %v1679
  %v3240 = vpack.c.b16 %v1688, %v1684
  %v3241 = vpack.c.b16 %v1689, %v1685
  %v3242 = vpack.c.b16 %v1690, %v1686
  %v3243 = vpack.c.b16 %v1691, %v1687
  %v3244 = vpack.c.b16 %v1696, %v1692
  %v3245 = vpack.c.b16 %v1697, %v1693
  %v3246 = vpack.c.b16 %v1698, %v1694
  %v3247 = vpack.c.b16 %v1699, %v1695
  %v3248 = vpack.c.b16 %v1704, %v1700
  %v3249 = vpack.c.b16 %v1705, %v1701
  %v3250 = vpack.c.b16 %v1706, %v1702
  %v3251 = vpack.c.b16 %v1707, %v1703
  %v3252 = vpack.c.b16 %v1712, %v1708
  %v3253 = vpack.c.b16 %v1713, %v1709
  %v3254 = vpack.c.b16 %v1714, %v1710
  %v3255 = vpack.c.b16 %v1715, %v1711
  %v3256 = vpack.c.b16 %v1720, %v1716
  %v3257 = vpack.c.b16 %v1721, %v1717
  %v3258 = vpack.c.b16 %v1722, %v1718
  %v3259 = vpack.c.b16 %v1723, %v1719
  %v3260 = vpack.c.b16 %v1728, %v1724
  %v3261 = vpack.c.b16 %v1729, %v1725
  %v3262 = vpack.c.b16 %v1730, %v1726
  %v3263 = vpack.c.b16 %v1731, %v1727
  %v3264 = vpack.c.b16 %v1736, %v1732
  %v3265 = vpack.c.b16 %v1737, %v1733
  %v3266 = vpack.c.b16 %v1738, %v1734
  %v3267 = vpack.c.b16 %v1739, %v1735
  %v3268 = vpack.c.b16 %v1744, %v1740
  %v3269 = vpack.c.b16 %v1745, %v1741
  %v3270 = vpack.c.b16 %v1746, %v1742
  %v3271 = vpack.c.b16 %v1747, %v1743
  %v3272 = vpack.c.b16 %v1752, %v1748
  %v3273 = vpack.c.b16 %v1753, %v1749
  %v3274 = vpack.c.b16 %v1754, %v1750
  %v3275 = vpack.c.b16 %v1755, %v1751
  %v3276 = vpack.c.b16 %v1760, %v1756
  %v3277 = vpack.c.b16 %v1761, %v1757
  %v3278 = vpack.c.b16 %v1762, %v1758
  %v3279 = vpack.c.b16 %v1763, %v1759
  %v3280 = vpack.c.b16 %v1768, %v1764
  %v3281 = vpack.c.b16 %v1769, %v1765
  %v3282 = vpack.c.b16 %v1770, %v1766
  %v3283 = vpack.c.b16 %v1771, %v1767
  %v3284 = vpack.c.b16 %v1776, %v1772
  %v3285 = vpack.c.b16 %v1777, %v1773
  %v3286 = vpack.c.b16 %v1778, %v1774
  %v3287 = vpack.c.b16 %v1779, %v1775
  %v3288 = vpack.c.b16 %v1784, %v1780
  %v3289 = vpack.c.b16 %v1785, %v1781
  %v3290 = vpack.c.b16 %v1786, %v1782
  %v3291 = vpack.c.b16 %v1787, %v1783
  %v3292 = vpack.c.b16 %v1792, %v1788
  %v3293 = vpack.c.b16 %v1793, %v1789
  %v3294 = vpack.c.b16 %v1794, %v1790
  %v3295 = vpack.c.b16 %v1795, %v1791
  %v3296 = vpack.c.b16 %v1800, %v1796
  %v3297 = vpack.c.b16 %v1801, %v1797
  %v3298 = vpack.c.b16 %v1802, %v1798
  %v3299 = vpack.c.b16 %v1803, %v1799
  %v3300 = vpack.c.b16 %v1808, %v1804
  %v3301 = vpack.c.b16 %v1809, %v1805
  %v3302 = vpack.c.b16 %v1810, %v1806
  %v3303 = vpack.c.b16 %v1811, %v1807
  %v3304 = vpack.c.b16 %v1816, %v1812
  %v3305 = vpack.c.b16 %v1817, %v1813
  %v3306 = vpack.c.b16 %v1818, %v1814
  %v3307 = vpack.c.b16 %v1819, %v1815
  %v3308 = vpack.c.b16 %v1824, %v1820
  %v3309 = vpack.c.b16 %v1825, %v1821
  %v3310 = vpack.c.b16 %v1826, %v1822
  %v3311 = vpack.c.b16 %v1827, %v1823
  %v3312 = vpack.c.b16 %v1832, %v1828
  %v3313 = vpack.c.b16 %v1833, %v1829
  %v3314 = vpack.c.b16 %v1834, %v1830
  %v3315 = vpack.c.b16 %v1835, %v1831
  %v3316 = vpack.c.b16 %v1840, %v1836
  %v3317 = vpack.c.b16 %v1841, %v1837
  %v3318 = vpack.c.b16 %v1842, %v1838
  %v3319 = vpack.c.b16 %v1843, %v1839
  %v3320 = vpack.c.b16 %v1848, %v1844
  %v3321 = vpack.c.b16 %v1849, %v1845
  %v3322 = vpack.c.b16 %v1850, %v1846
  %v3323 = vpack.c.b16 %v1851, %v1847
  %v3324 = vpack.c.b16 %v1856, %v1852
  %v3325 = vpack.c.b16 %v1857, %v1853
  %v3326 = vpack.c.b16 %v1858, %v1854
  %v3327 = vpack.c.b16 %v1859, %v1855
  %v3328 = vpack.c.b16 %v1864, %v1860
  %v3329 = vpack.c.b16 %v1865, %v1861
  %v3330 = vpack.c.b16 %v1866, %v1862
  %v3331 = vpack.c.b16 %v1867, %v1863
  %v3332 = vpack.c.b16 %v1872, %v1868
  %v3333 = vpack.c.b16 %v1873, %v1869
  %v3334 = vpack.c.b16 %v1874, %v1870
  %v3335 = vpack.c.b16 %v1875, %v1871
  %v3336 = vpack.c.b16 %v1880, %v1876
  %v3337 = vpack.c.b16 %v1881, %v1877
  %v3338 = vpack.c.b16 %v1882, %v1878
  %v3339 = vpack.c.b16 %v1883, %v1879
  %v3340 = vpack.c.b16 %v1888, %v1884
  %v3341 = vpack.c.b16 %v1889, %v1885
  %v3342 = vpack.c.b16 %v1890, %v1886
  %v3343 = vpack.c.b16 %v1891, %v1887
  %v3344 = vpack.c.b16 %v1896, %v1892
  %v3345 = vpack.c.b16 %v1897, %v1893
  %v3346 = vpack.c.b16 %v1898, %v1894
  %v3347 = vpack.c.b16 %v1899, %v1895
  %v3348 = vpack.c.b16 %v1904, %v1900
  %v3349 = vpack.c.b16 %v1905, %v1901
  %v3350 = vpack.c.b16 %v1906, %v1902
  %v3351 = vpack.c.b16 %v1907, %v1903
  %v3352 = vpack.c.b16 %v1912, %v1908
  %v3353 = vpack.c.b16 %v1913, %v1909
  %v3354 = vpack.c.b16 %v1914, %v1910
  %v3355 = vpack.c.b16 %v1915, %v1911
  %v3356 = vpack.c.b16 %v1920, %v1916
  %v3357 = vpack.c.b16 %v1921, %v1917
  %v3358 = vpack.c.b16 %v1922, %v1918
  %v3359 = vpack.c.b16 %v1923, %v1919
  %v3360 = vpack.c.b16 %v1928, %v1924
  %v3361 = vpack.c.b16 %v1929, %v1925
  %v3362 = vpack.c.b16 %v1930, %v1926
  %v3363 = vpack.c.b16 %v1931, %v1927
  %v3364 = vpack.c.b16 %v1936, %v1932
  %v3365 = vpack.c.b16 %v1937, %v1933
  %v3366 = vpack.c.b16 %v1938, %v1934
  %v3367 = vpack.c.b16 %v1939, %v1935
  %v3368 = vpack.c.b16 %v1944, %v1940
  %v3369 = vpack.c.b16 %v1945, %v1941
  %v3370 = vpack.c.b16 %v1946, %v1942
  %v3371 = vpack.c.b16 %v1947, %v1943
  %v3372 = vpack.c.b16 %v1952, %v1948
  %v3373 = vpack.c.b16 %v1953, %v1949
  %v3374 = vpack.c.b16 %v1954, %v1950
  %v3375 = vpack.c.b16 %v1955, %v1951
  %v3376 = vpack.c.b16 %v1960, %v1956
  %v3377 = vpack.c.b16 %v1961, %v1957
  %v3378 = vpack.c.b16 %v1962, %v1958
  %v3379 = vpack.c.b16 %v1963, %v1959
  %v3380 = vpack.c.b16 %v1968, %v1964
  %v3381 = vpack.c.b16 %v1969, %v1965
  %v3382 = vpack.c.b16 %v1970, %v1966
  %v3383 = vpack.c.b16 %v1971, %v1967
  %v3384 = vpack.c.b16 %v1976, %v1972
  %v3385 = vpack.c.b16 %v1977, %v1973
  %v3386 = vpack.c.b16 %v1978, %v1974
  %v3387 = vpack.c.b16 %v1979, %v1975
  %v3388 = vpack.c.b16 %v1984, %v1980
  %v3389 = vpack.c.b16 %v1985, %v1981
  %v3390 = vpack.c.b16 %v1986, %v1982
  %v3391 = vpack.c.b16 %v1987, %v1983
  %v3392 = vpack.c.b16 %v1992, %v1988
  %v3393 = vpack.c.b16 %v1993, %v1989
  %v3394 = vpack.c.b16 %v1994, %v1990
  %v3395 = vpack.c.b16 %v1995, %v1991
  %v3396 = vpack.c.b16 %v2000, %v1996
  %v3397 = vpack.c.b16 %v2001, %v1997
  %v3398 = vpack.c.b16 %v2002, %v1998
  %v3399 = vpack.c.b16 %v2003, %v1999
  %v3400 = vpack.c.b16 %v2008, %v2004
  %v3401 = vpack.c.b16 %v2009, %v2005
  %v3402 = vpack.c.b16 %v2010, %v2006
  %v3403 = vpack.c.b16 %v2011, %v2007
  %v3404 = vpack.c.b16 %v2016, %v2012
  %v3405 = vpack.c.b16 %v2017, %v2013
  %v3406 = vpack.c.b16 %v2018, %v2014
  %v3407 = vpack.c.b16 %v2019, %v2015
  %v3408 = vpack.c.b16 %v2024, %v2020
  %v3409 = vpack.c.b16 %v2025, %v2021
  %v3410 = vpack.c.b16 %v2026, %v2022
  %v3411 = vpack.c.b16 %v2027, %v2023
  %v3412 = vpack.c.b16 %v2032, %v2028
  %v3413 = vpack.c.b16 %v2033, %v2029
  %v3414 = vpack.c.b16 %v2034, %v2030
  %v3415 = vpack.c.b16 %v2035, %v2031
  %v3416 = vpack.c.b16 %v2040, %v2036
  %v3417 = vpack.c.b16 %v2041, %v2037
  %v3418 = vpack.c.b16 %v2042, %v2038
  %v3419 = vpack.c.b16 %v2043, %v2039
  %v3420 = vpack.c.b16 %v2048, %v2044
  %v3421 = vpack.c.b16 %v2049, %v2045
  %v3422 = vpack.c.b16 %v2050, %v2046
  %v3423 = vpack.c.b16 %v2051, %v2047
  %v3424 = vpack.c.b16 %v2056, %v2052
  %v3425 = vpack.c.b16 %v2057, %v2053
  %v3426 = vpack.c.b16 %v2058, %v2054
  %v3427 = vpack.c.b16 %v2059, %v2055
  %v3428 = vpack.c.b16 %v2064, %v2060
  %v3429 = vpack.c.b16 %v2065, %v2061
  %v3430 = vpack.c.b16 %v2066, %v2062
  %v3431 = vpack.c.b16 %v2067, %v2063
  %v3432 = vpack.c.b16 %v2072, %v2068
  %v3433 = vpack.c.b16 %v2073, %v2069
  %v3434 = vpack.c.b16 %v2074, %v2070
  %v3435 = vpack.c.b16 %v2075, %v2071
  %v3436 = vpack.c.b16 %v2080, %v2076
  %v3437 = vpack.c.b16 %v2081, %v2077
  %v3438 = vpack.c.b16 %v2082, %v2078
  %v3439 = vpack.c.b16 %v2083, %v2079
  %v3440 = vpack.c.b16 %v2088, %v2084
  %v3441 = vpack.c.b16 %v2089, %v2085
  %v3442 = vpack.c.b16 %v2090, %v2086
  %v3443 = vpack.c.b16 %v2091, %v2087
  %v3444 = vpack.c.b16 %v2096, %v2092
  %v3445 = vpack.c.b16 %v2097, %v2093
  %v3446 = vpack.c.b16 %v2098, %v2094
  %v3447 = vpack.c.b16 %v2099, %v2095
  %v3448 = vpack.c.b16 %v2104, %v2100
  %v3449 = vpack.c.b16 %v2105, %v2101
  %v3450 = vpack.c.b16 %v2106, %v2102
  %v3451 = vpack.c.b16 %v2107, %v2103
  %v3452 = vpack.c.b16 %v2112, %v2108
  %v3453 = vpack.c.b16 %v2113, %v2109
  %v3454 = vpack.c.b16 %v2114, %v2110
  %v3455 = vpack.c.b16 %v2115, %v2111
  %v3456 = vpack.c.b16 %v2120, %v2116
  %v3457 = vpack.c.b16 %v2121, %v2117
  %v3458 = vpack.c.b16 %v2122, %v2118
  %v3459 = vpack.c.b16 %v2123, %v2119
  %v3460 = vpack.c.b16 %v2128, %v2124
  %v3461 = vpack.c.b16 %v2129, %v2125
  %v3462 = vpack.c.b16 %v2130, %v2126
  %v3463 = vpack.c.b16 %v2131, %v2127
  %v3464 = vpack.c.b16 %v2136, %v2132
  %v3465 = vpack.c.b16 %v2137, %v2133
  %v3466 = vpack.c.b16 %v2138, %v2134
  %v3467 = vpack.c.b16 %v2139, %v2135
  %v3468 = vpack.c.b16 %v2144, %v2140
  %v3469 = vpack.c.b16 %v2145, %v2141
  %v3470 = vpack.c.b16 %v2146, %v2142
  %v3471 = vpack.c.b16 %v2147, %v2143
  %v3472 = vpack.c.b16 %v2152, %v2148
  %v3473 = vpack.c.b16 %v2153, %v2149
  %v3474 = vpack.c.b16 %v2154, %v2150
  %v3475 = vpack.c.b16 %v2155, %v2151
  %v3476 = vpack.c.b16 %v2160, %v2156
  %v3477 = vpack.c.b16 %v2161, %v2157
  %v3478 = vpack.c.b16 %v2162, %v2158
  %v3479 = vpack.c.b16 %v2163, %v2159
  %v3480 = vpack.c.b16 %v2168, %v2164
  %v3481 = vpack.c.b16 %v2169, %v2165
  %v3482 = vpack.c.b16 %v2170, %v2166
  %v3483 = vpack.c.b16 %v2171, %v2167
  %v3484 = vpack.c.b16 %v2176, %v2172
  %v3485 = vpack.c.b16 %v2177, %v2173
  %v3486 = vpack.c.b16 %v2178, %v2174
  %v3487 = vpack.c.b16 %v2179, %v2175
  %v3488 = vpack.c.b16 %v2184, %v2180
  %v3489 = vpack.c.b16 %v2185, %v2181
  %v3490 = vpack.c.b16 %v2186, %v2182
  %v3491 = vpack.c.b16 %v2187, %v2183
  %v3492 = vpack.c.b16 %v2192, %v2188
  %v3493 = vpack.c.b16 %v2193, %v2189
  %v3494 = vpack.c.b16 %v2194, %v2190
  %v3495 = vpack.c.b16 %v2195, %v2191
  %v3496 = vpack.c.b16 %v2200, %v2196
  %v3497 = vpack.c.b16 %v2201, %v2197
  %v3498 = vpack.c.b16 %v2202, %v2198
  %v3499 = vpack.c.b16 %v2203, %v2199
  %v3500 = vpack.c.b16 %v2208, %v2204
  %v3501 = vpack.c.b16 %v2209, %v2205
  %v3502 = vpack.c.b16 %v2210, %v2206
  %v3503 = vpack.c.b16 %v2211, %v2207
  %v3504 = vpack.c.b16 %v2216, %v2212
  %v3505 = vpack.c.b16 %v2217, %v2213
  %v3506 = vpack.c.b16 %v2218, %v2214
  %v3507 = vpack.c.b16 %v2219, %v2215
  %v3508 = vpack.c.b16 %v2224, %v2220
  %v3509 = vpack.c.b16 %v2225, %v2221
  %v3510 = vpack.c.b16 %v2226, %v2222
  %v3511 = vpack.c.b16 %v2227, %v2223
  %v3512 = vpack.c.b16 %v2232, %v2228
  %v3513 = vpack.c.b16 %v2233, %v2229
  %v3514 = vpack.c.b16 %v2234, %v2230
  %v3515 = vpack.c.b16 %v2235, %v2231
  %v3516 = vpack.c.b16 %v2240, %v2236
  %v3517 = vpack.c.b16 %v2241, %v2237
  %v3518 = vpack.c.b16 %v2242, %v2238
  %v3519 = vpack.c.b16 %v2243, %v2239
  %v3520 = vpack.c.b16 %v2248, %v2244
  %v3521 = vpack.c.b16 %v2249, %v2245
  %v3522 = vpack.c.b16 %v2250, %v2246
  %v3523 = vpack.c.b16 %v2251, %v2247
  %v3524 = vpack.c.b16 %v2256, %v2252
  %v3525 = vpack.c.b16 %v2257, %v2253
  %v3526 = vpack.c.b16 %v2258, %v2254
  %v3527 = vpack.c.b16 %v2259, %v2255
  %v3528 = vpack.c.b16 %v2264, %v2260
  %v3529 = vpack.c.b16 %v2265, %v2261
  %v3530 = vpack.c.b16 %v2266, %v2262
  %v3531 = vpack.c.b16 %v2267, %v2263
  %v3532 = vpack.c.b16 %v2272, %v2268
  %v3533 = vpack.c.b16 %v2273, %v2269
  %v3534 = vpack.c.b16 %v2274, %v2270
  %v3535 = vpack.c.b16 %v2275, %v2271
  %v3536 = vpack.c.b16 %v2280, %v2276
  %v3537 = vpack.c.b16 %v2281, %v2277
  %v3538 = vpack.c.b16 %v2282, %v2278
  %v3539 = vpack.c.b16 %v2283, %v2279
  %v3540 = vpack.c.b16 %v2288, %v2284
  %v3541 = vpack.c.b16 %v2289, %v2285
  %v3542 = vpack.c.b16 %v2290, %v2286
  %v3543 = vpack.c.b16 %v2291, %v2287
  %v3544 = vpack.c.b16 %v2296, %v2292
  %v3545 = vpack.c.b16 %v2297, %v2293
  %v3546 = vpack.c.b16 %v2298, %v2294
  %v3547 = vpack.c.b16 %v2299, %v2295
  %v3548 = vpack.c.b16 %v2304, %v2300
  %v3549 = vpack.c.b16 %v2305, %v2301
  %v3550 = vpack.c.b16 %v2306, %v2302
  %v3551 = vpack.c.b16 %v2307, %v2303
  %v3552 = vpack.c.b16 %v2312, %v2308
  %v3553 = vpack.c.b16 %v2313, %v2309
  %v3554 = vpack.c.b16 %v2314, %v2310
  %v3555 = vpack.c.b16 %v2315, %v2311
  %v3556 = vpack.c.b16 %v2320, %v2316
  %v3557 = vpack.c.b16 %v2321, %v2317
  %v3558 = vpack.c.b16 %v2322, %v2318
  %v3559 = vpack.c.b16 %v2323, %v2319
  %v3560 = vpack.c.b16 %v2328, %v2324
  %v3561 = vpack.c.b16 %v2329, %v2325
  %v3562 = vpack.c.b16 %v2330, %v2326
  %v3563 = vpack.c.b16 %v2331, %v2327
  %v3564 = vpack.c.b16 %v2336, %v2332
  %v3565 = vpack.c.b16 %v2337, %v2333
  %v3566 = vpack.c.b16 %v2338, %v2334
  %v3567 = vpack.c.b16 %v2339, %v2335
  %v3568 = vpack.c.b16 %v2344, %v2340
  %v3569 = vpack.c.b16 %v2345, %v2341
  %v3570 = vpack.c.b16 %v2346, %v2342
  %v3571 = vpack.c.b16 %v2347, %v2343
  %v3572 = vpack.c.b16 %v2352, %v2348
  %v3573 = vpack.c.b16 %v2353, %v2349
  %v3574 = vpack.c.b16 %v2354, %v2350
  %v3575 = vpack.c.b16 %v2355, %v2351
  %v3576 = vpack.c.b16 %v2360, %v2356
  %v3577 = vpack.c.b16 %v2361, %v2357
  %v3578 = vpack.c.b16 %v2362, %v2358
  %v3579 = vpack.c.b16 %v2363, %v2359
  %v3580 = vpack.c.b16 %v2368, %v2364
  %v3581 = vpack.c.b16 %v2369, %v2365
  %v3582 = vpack.c.b16 %v2370, %v2366
  %v3583 = vpack.c.b16 %v2371, %v2367
  %v3584 = vpack.c.b16 %v2376, %v2372
  %v3585 = vpack.c.b16 %v2377, %v2373
  %v3586 = vpack.c.b16 %v2378, %v2374
  %v3587 = vpack.c.b16 %v2379, %v2375
  %v3588 = vpack.c.b16 %v2384, %v2380
  %v3589 = vpack.c.b16 %v2385, %v2381
  %v3590 = vpack.c.b16 %v2386, %v2382
  %v3591 = vpack.c.b16 %v2387, %v2383
  %v3592 = vpack.c.b16 %v2392, %v2388
  %v3593 = vpack.c.b16 %v2393, %v2389
  %v3594 = vpack.c.b16 %v2394, %v2390
  %v3595 = vpack.c.b16 %v2395, %v2391
  %v3596 = vpack.c.b16 %v2400, %v2396
  %v3597 = vpack.c.b16 %v2401, %v2397
  %v3598 = vpack.c.b16 %v2402, %v2398
  %v3599 = vpack.c.b16 %v2403, %v2399
  %v3600 = vpack.c.b16 %v2408, %v2404
  %v3601 = vpack.c.b16 %v2409, %v2405
  %v3602 = vpack.c.b16 %v2410, %v2406
  %v3603 = vpack.c.b16 %v2411, %v2407
  %v3604 = vpack.c.b16 %v2416, %v2412
  %v3605 = vpack.c.b16 %v2417, %v2413
  %v3606 = vpack.c.b16 %v2418, %v2414
  %v3607 = vpack.c.b16 %v2419, %v2415
  %v3608 = vpack.c.b16 %v2424, %v2420
  %v3609 = vpack.c.b16 %v2425, %v2421
  %v3610 = vpack.c.b16 %v2426, %v2422
  %v3611 = vpack.c.b16 %v2427, %v2423
  %v3612 = vpack.c.b16 %v2432, %v2428
  %v3613 = vpack.c.b16 %v2433, %v2429
  %v3614 = vpack.c.b16 %v2434, %v2430
  %v3615 = vpack.c.b16 %v2435, %v2431
  %v3616 = vpack.c.b16 %v2440, %v2436
  %v3617 = vpack.c.b16 %v2441, %v2437
  %v3618 = vpack.c.b16 %v2442, %v2438
  %v3619 = vpack.c.b16 %v2443, %v2439
  %v3620 = vpack.c.b16 %v2448, %v2444
  %v3621 = vpack.c.b16 %v2449, %v2445
  %v3622 = vpack.c.b16 %v2450, %v2446
  %v3623 = vpack.c.b16 %v2451, %v2447
  %v3624 = vpack.c.b16 %v2456, %v2452
  %v3625 = vpack.c.b16 %v2457, %v2453
  %v3626 = vpack.c.b16 %v2458, %v2454
  %v3627 = vpack.c.b16 %v2459, %v2455
  %v3628 = vpack.c.b16 %v2464, %v2460
  %v3629 = vpack.c.b16 %v2465, %v2461
  %v3630 = vpack.c.b16 %v2466, %v2462
  %v3631 = vpack.c.b16 %v2467, %v2463
  %v3632 = vpack.c.b16 %v2472, %v2468
  %v3633 = vpack.c.b16 %v2473, %v2469
  %v3634 = vpack.c.b16 %v2474, %v2470
  %v3635 = vpack.c.b16 %v2475, %v2471
  %v3636 = vpack.c.b16 %v2480, %v2476
  %v3637 = vpack.c.b16 %v2481, %v2477
  %v3638 = vpack.c.b16 %v2482, %v2478
  %v3639 = vpack.c.b16 %v2483, %v2479
  %v3640 = vpack.c.b16 %v2488, %v2484
  %v3641 = vpack.c.b16 %v2489, %v2485
  %v3642 = vpack.c.b16 %v2490, %v2486
  %v3643 = vpack.c.b16 %v2491, %v2487
  %v3644 = vpack.c.b16 %v2496, %v2492
  %v3645 = vpack.c.b16 %v2497, %v2493
  %v3646 = vpack.c.b16 %v2498, %v2494
  %v3647 = vpack.c.b16 %v2499, %v2495
  %v3648 = vpack.c.b16 %v2504, %v2500
  %v3649 = vpack.c.b16 %v2505, %v2501
  %v3650 = vpack.c.b16 %v2506, %v2502
  %v3651 = vpack.c.b16 %v2507, %v2503
  %v3652 = vpack.c.b16 %v2512, %v2508
  %v3653 = vpack.c.b16 %v2513, %v2509
  %v3654 = vpack.c.b16 %v2514, %v2510
  %v3655 = vpack.c.b16 %v2515, %v2511
  %v3656 = vpack.c.b16 %v2520, %v2516
  %v3657 = vpack.c.b16 %v2521, %v2517
  %v3658 = vpack.c.b16 %v2522, %v2518
  %v3659 = vpack.c.b16 %v2523, %v2519
  %v3660 = vpack.c.b16 %v2528, %v2524
  %v3661 = vpack.c.b16 %v2529, %v2525
  %v3662 = vpack.c.b16 %v2530, %v2526
  %v3663 = vpack.c.b16 %v2531, %v2527
  %v3664 = vpack.c.b16 %v2536, %v2532
  %v3665 = vpack.c.b16 %v2537, %v2533
  %v3666 = vpack.c.b16 %v2538, %v2534
  %v3667 = vpack.c.b16 %v2539, %v2535
  %v3668 = vpack.c.b16 %v2544, %v2540
  %v3669 = vpack.c.b16 %v2545, %v2541
  %v3670 = vpack.c.b16 %v2546, %v2542
  %v3671 = vpack.c.b16 %v2547, %v2543
  %v3672 = vpack.c.b16 %v2552, %v2548
  %v3673 = vpack.c.b16 %v2553, %v2549
  %v3674 = vpack.c.b16 %v2554, %v2550
  %v3675 = vpack.c.b16 %v2555, %v2551
  %v3676 = vpack.c.b16 %v2560, %v2556
  %v3677 = vpack.c.b16 %v2561, %v2557
  %v3678 = vpack.c.b16 %v2562, %v2558
  %v3679 = vpack.c.b16 %v2563, %v2559
  %v3680 = vpack.c.b16 %v2568, %v2564
  %v3681 = vpack.c.b16 %v2569, %v2565
  %v3682 = vpack.c.b16 %v2570, %v2566
  %v3683 = vpack.c.b16 %v2571, %v2567
  %v3684 = vpack.c.b16 %v2576, %v2572
  %v3685 = vpack.c.b16 %v2577, %v2573
  %v3686 = vpack.c.b16 %v2578, %v2574
  %v3687 = vpack.c.b16 %v2579, %v2575
  %v3688 = vpack.c.b16 %v2584, %v2580
  %v3689 = vpack.c.b16 %v2585, %v2581
  %v3690 = vpack.c.b16 %v2586, %v2582
  %v3691 = vpack.c.b16 %v2587, %v2583
  %v3692 = vpack.c.b16 %v2592, %v2588
  %v3693 = vpack.c.b16 %v2593, %v2589
  %v3694 = vpack.c.b16 %v2594, %v2590
  %v3695 = vpack.c.b16 %v2595, %v2591
  %v3696 = vpack.c.b16 %v2600, %v2596
  %v3697 = vpack.c.b16 %v2601, %v2597
  %v3698 = vpack.c.b16 %v2602, %v2598
  %v3699 = vpack.c.b16 %v2603, %v2599
  %v3700 = vpack.c.b16 %v2608, %v2604
  %v3701 = vpack.c.b16 %v2609, %v2605
  %v3702 = vpack.c.b16 %v2610, %v2606
  %v3703 = vpack.c.b16 %v2611, %v2607
  %v3704 = vpack.c.b16 %v2616, %v2612
  %v3705 = vpack.c.b16 %v2617, %v2613
  %v3706 = vpack.c.b16 %v2618, %v2614
  %v3707 = vpack.c.b16 %v2619, %v2615
  %v3708 = vpack.c.b16 %v2624, %v2620
  %v3709 = vpack.c.b16 %v2625, %v2621
  %v3710 = vpack.c.b16 %v2626, %v2622
  %v3711 = vpack.c.b16 %v2627, %v2623
  %v3712 = vpack.c.b16 %v2632, %v2628
  %v3713 = vpack.c.b16 %v2633, %v2629
  %v3714 = vpack.c.b16 %v2634, %v2630
  %v3715 = vpack.c.b16 %v2635, %v2631
  %v3716 = vpack.c.b16 %v2640, %v2636
  %v3717 = vpack.c.b16 %v2641, %v2637
  %v3718 = vpack.c.b16 %v2642, %v2638
  %v3719 = vpack.c.b16 %v2643, %v2639
  %v3720 = vpack.c.b16 %v2648, %v2644
  %v3721 = vpack.c.b16 %v2649, %v2645
  %v3722 = vpack.c.b16 %v2650, %v2646
  %v3723 = vpack.c.b16 %v2651, %v2647
  %v3724 = vpack.c.b16 %v2656, %v2652
  %v3725 = vpack.c.b16 %v2657, %v2653
  %v3726 = vpack.c.b16 %v2658, %v2654
  %v3727 = vpack.c.b16 %v2659, %v2655
  %v3728 = vpack.c.b16 %v2664, %v2660
  %v3729 = vpack.c.b16 %v2665, %v2661
  %v3730 = vpack.c.b16 %v2666, %v2662
  %v3731 = vpack.c.b16 %v2667, %v2663
  %v3732 = vpack.c.b16 %v2672, %v2668
  %v3733 = vpack.c.b16 %v2673, %v2669
  %v3734 = vpack.c.b16 %v2674, %v2670
  %v3735 = vpack.c.b16 %v2675, %v2671
  %v3736 = vpack.c.b16 %v2680, %v2676
  %v3737 = vpack.c.b16 %v2681, %v2677
  %v3738 = vpack.c.b16 %v2682, %v2678
  %v3739 = vpack.c.b16 %v2683, %v2679
  %v3740 = vpack.c.b16 %v2688, %v2684
  %v3741 = vpack.c.b16 %v2689, %v2685
  %v3742 = vpack.c.b16 %v2690, %v2686
  %v3743 = vpack.c.b16 %v2691, %v2687
  %v3744 = vpack.c.b16 %v2696, %v2692
  %v3745 = vpack.c.b16 %v2697, %v2693
  %v3746 = vpack.c.b16 %v2698, %v2694
  %v3747 = vpack.c.b16 %v2699, %v2695
  %v3748 = vpack.c.b16 %v2704, %v2700
  %v3749 = vpack.c.b16 %v2705, %v2701
  %v3750 = vpack.c.b16 %v2706, %v2702
  %v3751 = vpack.c.b16 %v2707, %v2703
  %v3752 = vpack.c.b16 %v2712, %v2708
  %v3753 = vpack.c.b16 %v2713, %v2709
  %v3754 = vpack.c.b16 %v2714, %v2710
  %v3755 = vpack.c.b16 %v2715, %v2711
  %v3756 = vpack.c.b16 %v2720, %v2716
  %v3757 = vpack.c.b16 %v2721, %v2717
  %v3758 = vpack.c.b16 %v2722, %v2718
  %v3759 = vpack.c.b16 %v2723, %v2719
  %v3760 = vpack.c.b16 %v2728, %v2724
  %v3761 = vpack.c.b16 %v2729, %v2725
  %v3762 = vpack.c.b16 %v2730, %v2726
  %v3763 = vpack.c.b16 %v2731, %v2727
  %v3764 = vpack.c.b16 %v2736, %v2732
  %v3765 = vpack.c.b16 %v2737, %v2733
  %v3766 = vpack.c.b16 %v2738, %v2734
  %v3767 = vpack.c.b16 %v2739, %v2735
  %v3768 = vpack.c.b16 %v2744, %v2740
  %v3769 = vpack.c.b16 %v2745, %v2741
  %v3770 = vpack.c.b16 %v2746, %v2742
  %v3771 = vpack.c.b16 %v2747, %v2743
  %v3772 = vpack.c.b16 %v2752, %v2748
  %v3773 = vpack.c.b16 %v2753, %v2749
  %v3774 = vpack.c.b16 %v2754, %v2750
  %v3775 = vpack.c.b16 %v2755, %v2751
  %v3776 = vpack.c.b16 %v2760, %v2756
  %v3777 = vpack.c.b16 %v2761, %v2757
  %v3778 = vpack.c.b16 %v2762, %v2758
  %v3779 = vpack.c.b16 %v2763, %v2759
  %v3780 = vpack.c.b16 %v2768, %v2764
  %v3781 = vpack.c.b16 %v2769, %v2765
  %v3782 = vpack.c.b16 %v2770, %v2766
  %v3783 = vpack.c.b16 %v2771, %v2767
  %v3784 = vpack.c.b16 %v2776, %v2772
  %v3785 = vpack.c.b16 %v2777, %v2773
  %v3786 = vpack.c.b16 %v2778, %v2774
  %v3787 = vpack.c.b16 %v2779, %v2775
  %v3788 = vpack.c.b16 %v2784, %v2780
  %v3789 = vpack.c.b16 %v2785, %v2781
  %v3790 = vpack.c.b16 %v2786, %v2782
  %v3791 = vpack.c.b16 %v2787, %v2783
  %v3792 = vpack.c.b16 %v2792, %v2788
  %v3793 = vpack.c.b16 %v2793, %v2789
  %v3794 = vpack.c.b16 %v2794, %v2790
  %v3795 = vpack.c.b16 %v2795, %v2791
  %v3796 = vpack.c.b16 %v2800, %v2796
  %v3797 = vpack.c.b16 %v2801, %v2797
  %v3798 = vpack.c.b16 %v2802, %v2798
  %v3799 = vpack.c.b16 %v2803, %v2799
  %v3800 = vpack.c.b16 %v2808, %v2804
  %v3801 = vpack.c.b16 %v2809, %v2805
  %v3802 = vpack.c.b16 %v2810, %v2806
  %v3803 = vpack.c.b16 %v2811, %v2807
  %v3804 = vpack.c.b16 %v2816, %v2812
  %v3805 = vpack.c.b16 %v2817, %v2813
  %v3806 = vpack.c.b16 %v2818, %v2814
  %v3807 = vpack.c.b16 %v2819, %v2815
  %v3808 = vpack.c.b16 %v2824, %v2820
  %v3809 = vpack.c.b16 %v2825, %v2821
  %v3810 = vpack.c.b16 %v2826, %v2822
  %v3811 = vpack.c.b16 %v2827, %v2823
  %v3812 = vpack.c.b16 %v2832, %v2828
  %v3813 = vpack.c.b16 %v2833, %v2829
  %v3814 = vpack.c.b16 %v2834, %v2830
  %v3815 = vpack.c.b16 %v2835, %v2831
  %v3816 = vpack.c.b16 %v2840, %v2836
  %v3817 = vpack.c.b16 %v2841, %v2837
  %v3818 = vpack.c.b16 %v2842, %v2838
  %v3819 = vpack.c.b16 %v2843, %v2839
  %v3820 = vpack.c.b16 %v2848, %v2844
  %v3821 = vpack.c.b16 %v2849, %v2845
  %v3822 = vpack.c.b16 %v2850, %v2846
  %v3823 = vpack.c.b16 %v2851, %v2847
  %v3824 = vpack.c.b16 %v2856, %v2852
  %v3825 = vpack.c.b16 %v2857, %v2853
  %v3826 = vpack.c.b16 %v2858, %v2854
  %v3827 = vpack.c.b16 %v2859, %v2855
  %v3828 = vpack.c.b16 %v2864, %v2860
  %v3829 = vpack.c.b16 %v2865, %v2861
  %v3830 = vpack.c.b16 %v2866, %v2862
  %v3831 = vpack.c.b16 %v2867, %v2863
  %v3832 = vpack.c.b16 %v2872, %v2868
  %v3833 = vpack.c.b16 %v2873, %v2869
  %v3834 = vpack.c.b16 %v2874, %v2870
  %v3835 = vpack.c.b16 %v2875, %v2871
  %v3836 = vpack.c.b16 %v2880, %v2876
  %v3837 = vpack.c.b16 %v2881, %v2877
  %v3838 = vpack.c.b16 %v2882, %v2878
  %v3839 = vpack.c.b16 %v2883, %v2879
  %v3840 = vpack.c.b16 %v2888, %v2884
  %v3841 = vpack.c.b16 %v2889, %v2885
  %v3842 = vpack.c.b16 %v2890, %v2886
  %v3843 = vpack.c.b16 %v2891, %v2887
  %v3844 = vpack.c.b16 %v2896, %v2892
  %v3845 = vpack.c.b16 %v2897, %v2893
  %v3846 = vpack.c.b16 %v2898, %v2894
  %v3847 = vpack.c.b16 %v2899, %v2895
  %v3848 = vpack.c.b16 %v2904, %v2900
  %v3849 = vpack.c.b16 %v2905, %v2901
  %v3850 = vpack.c.b16 %v2906, %v2902
  %v3851 = vpack.c.b16 %v2907, %v2903
  %v3852 = vpack.c.b16 %v2912, %v2908
  %v3853 = vpack.c.b16 %v2913, %v2909
  %v3854 = vpack.c.b16 %v2914, %v2910
  %v3855 = vpack.c.b16 %v2915, %v2911
  %v3856 = vpack.c.b16 %v2920, %v2916
  %v3857 = vpack.c.b16 %v2921, %v2917
  %v3858 = vpack.c.b16 %v2922, %v2918
  %v3859 = vpack.c.b16 %v2923, %v2919
  %v3860 = vpack.c.b16 %v2928, %v2924
  %v3861 = vpack.c.b16 %v2929, %v2925
  %v3862 = vpack.c.b16 %v2930, %v2926
  %v3863 = vpack.c.b16 %v2931, %v2927
  %v3864 = vpack.c.b16 %v2936, %v2932
  %v3865 = vpack.c.b16 %v2937, %v2933
  %v3866 = vpack.c.b16 %v2938, %v2934
  %v3867 = vpack.c.b16 %v2939, %v2935
  %v3868 = vpack.c.b16 %v2944, %v2940
  %v3869 = vpack.c.b16 %v2945, %v2941
  %v3870 = vpack.c.b16 %v2946, %v2942
  %v3871 = vpack.c.b16 %v2947, %v2943
  %v3872 = vpack.c.b16 %v2952, %v2948
  %v3873 = vpack.c.b16 %v2953, %v2949
  %v3874 = vpack.c.b16 %v2954, %v2950
  %v3875 = vpack.c.b16 %v2955, %v2951
  %v3876 = vpack.c.b16 %v2960, %v2956
  %v3877 = vpack.c.b16 %v2961, %v2957
  %v3878 = vpack.c.b16 %v2962, %v2958
  %v3879 = vpack.c.b16 %v2963, %v2959
  %v3880 = vpack.c.b16 %v2968, %v2964
  %v3881 = vpack.c.b16 %v2969, %v2965
  %v3882 = vpack.c.b16 %v2970, %v2966
  %v3883 = vpack.c.b16 %v2971, %v2967
  %v3884 = vpack.c.b16 %v2976, %v2972
  %v3885 = vpack.c.b16 %v2977, %v2973
  %v3886 = vpack.c.b16 %v2978, %v2974
  %v3887 = vpack.c.b16 %v2979, %v2975
  %v3888 = vpack.c.b16 %v2984, %v2980
  %v3889 = vpack.c.b16 %v2985, %v2981
  %v3890 = vpack.c.b16 %v2986, %v2982
  %v3891 = vpack.c.b16 %v2987, %v2983
  %v3892 = vpack.c.b16 %v2992, %v2988
  %v3893 = vpack.c.b16 %v2993, %v2989
  %v3894 = vpack.c.b16 %v2994, %v2990
  %v3895 = vpack.c.b16 %v2995, %v2991
  %v3896 = vpack.c.b16 %v3000, %v2996
  %v3897 = vpack.c.b16 %v3001, %v2997
  %v3898 = vpack.c.b16 %v3002, %v2998
  %v3899 = vpack.c.b16 %v3003, %v2999
  %v3900 = vpack.c.b16 %v3008, %v3004
  %v3901 = vpack.c.b16 %v3009, %v3005
  %v3902 = vpack.c.b16 %v3010, %v3006
  %v3903 = vpack.c.b16 %v3011, %v3007
  %v3904 = vpack.c.b16 %v3016, %v3012
  %v3905 = vpack.c.b16 %v3017, %v3013
  %v3906 = vpack.c.b16 %v3018, %v3014
  %v3907 = vpack.c.b16 %v3019, %v3015
  %v3908 = vpack.c.b16 %v3024, %v3020
  %v3909 = vpack.c.b16 %v3025, %v3021
  %v3910 = vpack.c.b16 %v3026, %v3022
  %v3911 = vpack.c.b16 %v3027, %v3023
  %v3912 = vpack.c.b16 %v3032, %v3028
  %v3913 = vpack.c.b16 %v3033, %v3029
  %v3914 = vpack.c.b16 %v3034, %v3030
  %v3915 = vpack.c.b16 %v3035, %v3031
  %v3916 = vpack.c.b16 %v3040, %v3036
  %v3917 = vpack.c.b16 %v3041, %v3037
  %v3918 = vpack.c.b16 %v3042, %v3038
  %v3919 = vpack.c.b16 %v3043, %v3039
  %v3920 = vpack.c.b16 %v3048, %v3044
  %v3921 = vpack.c.b16 %v3049, %v3045
  %v3922 = vpack.c.b16 %v3050, %v3046
  %v3923 = vpack.c.b16 %v3051, %v3047
  %v3924 = vpack.c.b16 %v3056, %v3052
  %v3925 = vpack.c.b16 %v3057, %v3053
  %v3926 = vpack.c.b16 %v3058, %v3054
  %v3927 = vpack.c.b16 %v3059, %v3055
  %v3928 = vpack.c.b16 %v3064, %v3060
  %v3929 = vpack.c.b16 %v3065, %v3061
  %v3930 = vpack.c.b16 %v3066, %v3062
  %v3931 = vpack.c.b16 %v3067, %v3063
  %v3932 = vpack.c.b16 %v3072, %v3068
  %v3933 = vpack.c.b16 %v3073, %v3069
  %v3934 = vpack.c.b16 %v3074, %v3070
  %v3935 = vpack.c.b16 %v3075, %v3071
  %v3936 = vpack.c.b16 %v3080, %v3076
  %v3937 = vpack.c.b16 %v3081, %v3077
  %v3938 = vpack.c.b16 %v3082, %v3078
  %v3939 = vpack.c.b16 %v3083, %v3079
  %v3940 = vpack.c.b16 %v3088, %v3084
  %v3941 = vpack.c.b16 %v3089, %v3085
  %v3942 = vpack.c.b16 %v3090, %v3086
  %v3943 = vpack.c.b16 %v3091, %v3087
  %v3944 = vpack.c.b16 %v3096, %v3092
  %v3945 = vpack.c.b16 %v3097, %v3093
  %v3946 = vpack.c.b16 %v3098, %v3094
  %v3947 = vpack.c.b16 %v3099, %v3095
  %v3948 = vpack.c.b16 %v3104, %v3100
  %v3949 = vpack.c.b16 %v3105, %v3101
  %v3950 = vpack.c.b16 %v3106, %v3102
  %v3951 = vpack.c.b16 %v3107, %v3103
  %v3952 = vpack.c.b16 %v3112, %v3108
  %v3953 = vpack.c.b16 %v3113, %v3109
  %v3954 = vpack.c.b16 %v3114, %v3110
  %v3955 = vpack.c.b16 %v3115, %v3111
  %v3956 = vpack.c.b16 %v3120, %v3116
  %v3957 = vpack.c.b16 %v3121, %v3117
  %v3958 = vpack.c.b16 %v3122, %v3118
  %v3959 = vpack.c.b16 %v3123, %v3119
  %v3960 = vpack.c.b16 %v3128, %v3124
  %v3961 = vpack.c.b16 %v3129, %v3125
  %v3962 = vpack.c.b16 %v3130, %v3126
  %v3963 = vpack.c.b16 %v3131, %v3127
  %v3964 = vpack.c.b16 %v3136, %v3132
  %v3965 = vpack.c.b16 %v3137, %v3133
  %v3966 = vpack.c.b16 %v3138, %v3134
  %v3967 = vpack.c.b16 %v3139, %v3135
  %v3968 = vpack.c.b16 %v3144, %v3140
  %v3969 = vpack.c.b16 %v3145, %v3141
  %v3970 = vpack.c.b16 %v3146, %v3142
  %v3971 = vpack.c.b16 %v3147, %v3143
  %v3972 = vpack.c.b16 %v3152, %v3148
  %v3973 = vpack.c.b16 %v3153, %v3149
  %v3974 = vpack.c.b16 %v3154, %v3150
  %v3975 = vpack.c.b16 %v3155, %v3151
  %v3976 = vpack.c.b16 %v3160, %v3156
  %v3977 = vpack.c.b16 %v3161, %v3157
  %v3978 = vpack.c.b16 %v3162, %v3158
  %v3979 = vpack.c.b16 %v3163, %v3159
  %v3980 = vpack.c.b16 %v3168, %v3164
  %v3981 = vpack.c.b16 %v3169, %v3165
  %v3982 = vpack.c.b16 %v3170, %v3166
  %v3983 = vpack.c.b16 %v3171, %v3167
  %v3984 = vpack.c.b16 %v3176, %v3172
  %v3985 = vpack.c.b16 %v3177, %v3173
  %v3986 = vpack.c.b16 %v3178, %v3174
  %v3987 = vpack.c.b16 %v3179, %v3175
  %v3988 = vpack.c.b16 %v3184, %v3180
  %v3989 = vpack.c.b16 %v3185, %v3181
  %v3990 = vpack.c.b16 %v3186, %v3182
  %v3991 = vpack.c.b16 %v3187, %v3183
  %v3992 = vpack.c.b16 %v3192, %v3188
  %v3993 = vpack.c.b16 %v3193, %v3189
  %v3994 = vpack.c.b16 %v3194, %v3190
  %v3995 = vpack.c.b16 %v3195, %v3191
  %v3996 = vpack.c.b16 %v3200, %v3196
  %v3997 = vpack.c.b16 %v3201, %v3197
  %v3998 = vpack.c.b16 %v3202, %v3198
  %v3999 = vpack.c.b16 %v3203, %v3199
  %v4000 = vpack.c.b16 %v3208, %v3204
  %v4001 = vpack.c.b16 %v3209, %v3205
  %v4002 = vpack.c.b16 %v3210, %v3206
  %v4003 = vpack.c.b16 %v3211, %v3207
  %v4004 = vpack.c.b16 %v3216, %v3212
  %v4005 = vpack.c.b16 %v3217, %v3213
  %v4006 = vpack.c.b16 %v3218, %v3214
  %v4007 = vpack.c.b16 %v3219, %v3215
  %v4008 = vpack.c.b16 %v3224, %v3220
  %v4009 = vpack.c.b16 %v3225, %v3221
  %v4010 = vpack.c.b16 %v3226, %v3222
  %v4011 = vpack.c.b16 %v3227, %v3223
  %vm4796 = vcmask 523264
  %v4797 = vsel %vm4796, %v851, 0
  %4799 = vmatpush.bf16.msra.mxu0 %v3256
  %4800 = vmatpush.bf16.msra.mxu0 %v3252
  %4801 = vmatpush.bf16.msra.mxu0 %v3248
  %4802 = vmatpush.bf16.msra.mxu0 %v3244
  %4803 = vmatpush.bf16.msra.mxu0 %v3240
  %4804 = vmatpush.bf16.msra.mxu0 %v3236
  %4805 = vmatpush.bf16.msra.mxu0 %v3232
  %4806 = vmatpush.bf16.msra.mxu0 %v3228
  %4807 = vmatmul.bf16.gmra.mxu0 %v821
  %v4808 = vpop.f32.mrf.mxu0
  %v4809 = vadd.f32 %v811, %v4808
  %v4810 = vpop.f32.mrf.mxu0
  %4811 = vdwg.mxu0
  %4812 = vmatpush.bf16.msra.mxu0 %v3288
  %4813 = vmatpush.bf16.msra.mxu0 %v3284
  %4814 = vmatpush.bf16.msra.mxu0 %v3280
  %4815 = vmatpush.bf16.msra.mxu0 %v3276
  %4816 = vmatpush.bf16.msra.mxu0 %v3272
  %4817 = vmatpush.bf16.msra.mxu0 %v3268
  %4818 = vmatpush.bf16.msra.mxu0 %v3264
  %4819 = vmatpush.bf16.msra.mxu0 %v3260
  %4820 = vmatmul.bf16.gmra.mxu0 %v822
  %v4821 = vpop.f32.mrf.mxu0
  %v4822 = vadd.f32 %v4809, %v4821
  %v4823 = vpop.f32.mrf.mxu0
  %4824 = vdwg.mxu0
  %4825 = vmatpush.bf16.msra.mxu0 %v3320
  %4826 = vmatpush.bf16.msra.mxu0 %v3316
  %4827 = vmatpush.bf16.msra.mxu0 %v3312
  %4828 = vmatpush.bf16.msra.mxu0 %v3308
  %4829 = vmatpush.bf16.msra.mxu0 %v3304
  %4830 = vmatpush.bf16.msra.mxu0 %v3300
  %4831 = vmatpush.bf16.msra.mxu0 %v3296
  %4832 = vmatpush.bf16.msra.mxu0 %v3292
  %4833 = vmatmul.bf16.gmra.mxu0 %v823
  %v4834 = vpop.f32.mrf.mxu0
  %v4835 = vadd.f32 %v4822, %v4834
  %v4836 = vpop.f32.mrf.mxu0
  %4837 = vdwg.mxu0
  %4838 = vmatpush.bf16.msra.mxu0 %v3352
  %4839 = vmatpush.bf16.msra.mxu0 %v3348
  %4840 = vmatpush.bf16.msra.mxu0 %v3344
  %4841 = vmatpush.bf16.msra.mxu0 %v3340
  %4842 = vmatpush.bf16.msra.mxu0 %v3336
  %4843 = vmatpush.bf16.msra.mxu0 %v3332
  %4844 = vmatpush.bf16.msra.mxu0 %v3328
  %4845 = vmatpush.bf16.msra.mxu0 %v3324
  %4846 = vmatmul.bf16.gmra.mxu0 %v824
  %v4847 = vpop.f32.mrf.mxu0
  %v4848 = vadd.f32 %v4835, %v4847
  %v4849 = vpop.f32.mrf.mxu0
  %4850 = vdwg.mxu0
  %4851 = vmatpush.bf16.msra.mxu0 %v3384
  %4852 = vmatpush.bf16.msra.mxu0 %v3380
  %4853 = vmatpush.bf16.msra.mxu0 %v3376
  %4854 = vmatpush.bf16.msra.mxu0 %v3372
  %4855 = vmatpush.bf16.msra.mxu0 %v3368
  %4856 = vmatpush.bf16.msra.mxu0 %v3364
  %4857 = vmatpush.bf16.msra.mxu0 %v3360
  %4858 = vmatpush.bf16.msra.mxu0 %v3356
  %4859 = vmatmul.bf16.gmra.mxu0 %v825
  %v4860 = vpop.f32.mrf.mxu0
  %v4861 = vadd.f32 %v4848, %v4860
  %v4862 = vpop.f32.mrf.mxu0
  %4863 = vdwg.mxu0
  %4864 = vmatpush.bf16.msra.mxu0 %v3416
  %4865 = vmatpush.bf16.msra.mxu0 %v3412
  %4866 = vmatpush.bf16.msra.mxu0 %v3408
  %4867 = vmatpush.bf16.msra.mxu0 %v3404
  %4868 = vmatpush.bf16.msra.mxu0 %v3400
  %4869 = vmatpush.bf16.msra.mxu0 %v3396
  %4870 = vmatpush.bf16.msra.mxu0 %v3392
  %4871 = vmatpush.bf16.msra.mxu0 %v3388
  %4872 = vmatmul.bf16.gmra.mxu0 %v826
  %v4873 = vpop.f32.mrf.mxu0
  %v4874 = vadd.f32 %v4861, %v4873
  %v4875 = vpop.f32.mrf.mxu0
  %4876 = vdwg.mxu0
  %4877 = vmatpush.bf16.msra.mxu0 %v3448
  %4878 = vmatpush.bf16.msra.mxu0 %v3444
  %4879 = vmatpush.bf16.msra.mxu0 %v3440
  %4880 = vmatpush.bf16.msra.mxu0 %v3436
  %4881 = vmatpush.bf16.msra.mxu0 %v3432
  %4882 = vmatpush.bf16.msra.mxu0 %v3428
  %4883 = vmatpush.bf16.msra.mxu0 %v3424
  %4884 = vmatpush.bf16.msra.mxu0 %v3420
  %4885 = vmatmul.bf16.gmra.mxu0 %v827
  %v4886 = vpop.f32.mrf.mxu0
  %v4887 = vadd.f32 %v4874, %v4886
  %v4888 = vpop.f32.mrf.mxu0
  %4889 = vdwg.mxu0
  %4890 = vmatpush.bf16.msra.mxu0 %v3480
  %4891 = vmatpush.bf16.msra.mxu0 %v3476
  %4892 = vmatpush.bf16.msra.mxu0 %v3472
  %4893 = vmatpush.bf16.msra.mxu0 %v3468
  %4894 = vmatpush.bf16.msra.mxu0 %v3464
  %4895 = vmatpush.bf16.msra.mxu0 %v3460
  %4896 = vmatpush.bf16.msra.mxu0 %v3456
  %4897 = vmatpush.bf16.msra.mxu0 %v3452
  %4898 = vmatmul.bf16.gmra.mxu0 %v828
  %v4899 = vpop.f32.mrf.mxu0
  %v4900 = vadd.f32 %v4887, %v4899
  %v4901 = vpop.f32.mrf.mxu0
  %4902 = vdwg.mxu0
  %4903 = vmatpush.bf16.msra.mxu0 %v3512
  %4904 = vmatpush.bf16.msra.mxu0 %v3508
  %4905 = vmatpush.bf16.msra.mxu0 %v3504
  %4906 = vmatpush.bf16.msra.mxu0 %v3500
  %4907 = vmatpush.bf16.msra.mxu0 %v3496
  %4908 = vmatpush.bf16.msra.mxu0 %v3492
  %4909 = vmatpush.bf16.msra.mxu0 %v3488
  %4910 = vmatpush.bf16.msra.mxu0 %v3484
  %4911 = vmatmul.bf16.gmra.mxu0 %v831
  %v4912 = vpop.f32.mrf.mxu0
  %v4913 = vadd.f32 %v4900, %v4912
  %v4914 = vpop.f32.mrf.mxu0
  %4915 = vdwg.mxu0
  %4916 = vmatpush.bf16.msra.mxu0 %v3544
  %4917 = vmatpush.bf16.msra.mxu0 %v3540
  %4918 = vmatpush.bf16.msra.mxu0 %v3536
  %4919 = vmatpush.bf16.msra.mxu0 %v3532
  %4920 = vmatpush.bf16.msra.mxu0 %v3528
  %4921 = vmatpush.bf16.msra.mxu0 %v3524
  %4922 = vmatpush.bf16.msra.mxu0 %v3520
  %4923 = vmatpush.bf16.msra.mxu0 %v3516
  %4924 = vmatmul.bf16.gmra.mxu0 %v832
  %v4925 = vpop.f32.mrf.mxu0
  %v4926 = vadd.f32 %v4913, %v4925
  %v4927 = vpop.f32.mrf.mxu0
  %4928 = vdwg.mxu0
  %4929 = vmatpush.bf16.msra.mxu0 %v3576
  %4930 = vmatpush.bf16.msra.mxu0 %v3572
  %4931 = vmatpush.bf16.msra.mxu0 %v3568
  %4932 = vmatpush.bf16.msra.mxu0 %v3564
  %4933 = vmatpush.bf16.msra.mxu0 %v3560
  %4934 = vmatpush.bf16.msra.mxu0 %v3556
  %4935 = vmatpush.bf16.msra.mxu0 %v3552
  %4936 = vmatpush.bf16.msra.mxu0 %v3548
  %4937 = vmatmul.bf16.gmra.mxu0 %v833
  %v4938 = vpop.f32.mrf.mxu0
  %v4939 = vadd.f32 %v4926, %v4938
  %v4940 = vpop.f32.mrf.mxu0
  %4941 = vdwg.mxu0
  %4942 = vmatpush.bf16.msra.mxu0 %v3608
  %4943 = vmatpush.bf16.msra.mxu0 %v3604
  %4944 = vmatpush.bf16.msra.mxu0 %v3600
  %4945 = vmatpush.bf16.msra.mxu0 %v3596
  %4946 = vmatpush.bf16.msra.mxu0 %v3592
  %4947 = vmatpush.bf16.msra.mxu0 %v3588
  %4948 = vmatpush.bf16.msra.mxu0 %v3584
  %4949 = vmatpush.bf16.msra.mxu0 %v3580
  %4950 = vmatmul.bf16.gmra.mxu0 %v834
  %v4951 = vpop.f32.mrf.mxu0
  %v4952 = vadd.f32 %v4939, %v4951
  %v4953 = vpop.f32.mrf.mxu0
  %4954 = vdwg.mxu0
  %4955 = vmatpush.bf16.msra.mxu0 %v3640
  %4956 = vmatpush.bf16.msra.mxu0 %v3636
  %4957 = vmatpush.bf16.msra.mxu0 %v3632
  %4958 = vmatpush.bf16.msra.mxu0 %v3628
  %4959 = vmatpush.bf16.msra.mxu0 %v3624
  %4960 = vmatpush.bf16.msra.mxu0 %v3620
  %4961 = vmatpush.bf16.msra.mxu0 %v3616
  %4962 = vmatpush.bf16.msra.mxu0 %v3612
  %4963 = vmatmul.bf16.gmra.mxu0 %v835
  %v4964 = vpop.f32.mrf.mxu0
  %v4965 = vadd.f32 %v4952, %v4964
  %v4966 = vpop.f32.mrf.mxu0
  %4967 = vdwg.mxu0
  %4968 = vmatpush.bf16.msra.mxu0 %v3672
  %4969 = vmatpush.bf16.msra.mxu0 %v3668
  %4970 = vmatpush.bf16.msra.mxu0 %v3664
  %4971 = vmatpush.bf16.msra.mxu0 %v3660
  %4972 = vmatpush.bf16.msra.mxu0 %v3656
  %4973 = vmatpush.bf16.msra.mxu0 %v3652
  %4974 = vmatpush.bf16.msra.mxu0 %v3648
  %4975 = vmatpush.bf16.msra.mxu0 %v3644
  %4976 = vmatmul.bf16.gmra.mxu0 %v836
  %v4977 = vpop.f32.mrf.mxu0
  %v4978 = vadd.f32 %v4965, %v4977
  %v4979 = vpop.f32.mrf.mxu0
  %4980 = vdwg.mxu0
  %4981 = vmatpush.bf16.msra.mxu0 %v3704
  %4982 = vmatpush.bf16.msra.mxu0 %v3700
  %4983 = vmatpush.bf16.msra.mxu0 %v3696
  %4984 = vmatpush.bf16.msra.mxu0 %v3692
  %4985 = vmatpush.bf16.msra.mxu0 %v3688
  %4986 = vmatpush.bf16.msra.mxu0 %v3684
  %4987 = vmatpush.bf16.msra.mxu0 %v3680
  %4988 = vmatpush.bf16.msra.mxu0 %v3676
  %4989 = vmatmul.bf16.gmra.mxu0 %v837
  %v4990 = vpop.f32.mrf.mxu0
  %v4991 = vadd.f32 %v4978, %v4990
  %v4992 = vpop.f32.mrf.mxu0
  %4993 = vdwg.mxu0
  %4994 = vmatpush.bf16.msra.mxu0 %v3736
  %4995 = vmatpush.bf16.msra.mxu0 %v3732
  %4996 = vmatpush.bf16.msra.mxu0 %v3728
  %4997 = vmatpush.bf16.msra.mxu0 %v3724
  %4998 = vmatpush.bf16.msra.mxu0 %v3720
  %4999 = vmatpush.bf16.msra.mxu0 %v3716
  %5000 = vmatpush.bf16.msra.mxu0 %v3712
  %5001 = vmatpush.bf16.msra.mxu0 %v3708
  %5002 = vmatmul.bf16.gmra.mxu0 %v838
  %v5003 = vpop.f32.mrf.mxu0
  %v5004 = vadd.f32 %v4991, %v5003
  %v5005 = vpop.f32.mrf.mxu0
  %5006 = vdwg.mxu0
  %5007 = vmatpush.bf16.msra.mxu0 %v3768
  %5008 = vmatpush.bf16.msra.mxu0 %v3764
  %5009 = vmatpush.bf16.msra.mxu0 %v3760
  %5010 = vmatpush.bf16.msra.mxu0 %v3756
  %5011 = vmatpush.bf16.msra.mxu0 %v3752
  %5012 = vmatpush.bf16.msra.mxu0 %v3748
  %5013 = vmatpush.bf16.msra.mxu0 %v3744
  %5014 = vmatpush.bf16.msra.mxu0 %v3740
  %5015 = vmatmul.bf16.gmra.mxu0 %v841
  %v5016 = vpop.f32.mrf.mxu0
  %v5017 = vadd.f32 %v5004, %v5016
  %v5018 = vpop.f32.mrf.mxu0
  %5019 = vdwg.mxu0
  %5020 = vmatpush.bf16.msra.mxu0 %v3800
  %5021 = vmatpush.bf16.msra.mxu0 %v3796
  %5022 = vmatpush.bf16.msra.mxu0 %v3792
  %5023 = vmatpush.bf16.msra.mxu0 %v3788
  %5024 = vmatpush.bf16.msra.mxu0 %v3784
  %5025 = vmatpush.bf16.msra.mxu0 %v3780
  %5026 = vmatpush.bf16.msra.mxu0 %v3776
  %5027 = vmatpush.bf16.msra.mxu0 %v3772
  %5028 = vmatmul.bf16.gmra.mxu0 %v842
  %v5029 = vpop.f32.mrf.mxu0
  %v5030 = vadd.f32 %v5017, %v5029
  %v5031 = vpop.f32.mrf.mxu0
  %5032 = vdwg.mxu0
  %5033 = vmatpush.bf16.msra.mxu0 %v3832
  %5034 = vmatpush.bf16.msra.mxu0 %v3828
  %5035 = vmatpush.bf16.msra.mxu0 %v3824
  %5036 = vmatpush.bf16.msra.mxu0 %v3820
  %5037 = vmatpush.bf16.msra.mxu0 %v3816
  %5038 = vmatpush.bf16.msra.mxu0 %v3812
  %5039 = vmatpush.bf16.msra.mxu0 %v3808
  %5040 = vmatpush.bf16.msra.mxu0 %v3804
  %5041 = vmatmul.bf16.gmra.mxu0 %v843
  %v5042 = vpop.f32.mrf.mxu0
  %v5043 = vadd.f32 %v5030, %v5042
  %v5044 = vpop.f32.mrf.mxu0
  %5045 = vdwg.mxu0
  %5046 = vmatpush.bf16.msra.mxu0 %v3864
  %5047 = vmatpush.bf16.msra.mxu0 %v3860
  %5048 = vmatpush.bf16.msra.mxu0 %v3856
  %5049 = vmatpush.bf16.msra.mxu0 %v3852
  %5050 = vmatpush.bf16.msra.mxu0 %v3848
  %5051 = vmatpush.bf16.msra.mxu0 %v3844
  %5052 = vmatpush.bf16.msra.mxu0 %v3840
  %5053 = vmatpush.bf16.msra.mxu0 %v3836
  %5054 = vmatmul.bf16.gmra.mxu0 %v844
  %v5055 = vpop.f32.mrf.mxu0
  %v5056 = vadd.f32 %v5043, %v5055
  %v5057 = vpop.f32.mrf.mxu0
  %5058 = vdwg.mxu0
  %5059 = vmatpush.bf16.msra.mxu0 %v3896
  %5060 = vmatpush.bf16.msra.mxu0 %v3892
  %5061 = vmatpush.bf16.msra.mxu0 %v3888
  %5062 = vmatpush.bf16.msra.mxu0 %v3884
  %5063 = vmatpush.bf16.msra.mxu0 %v3880
  %5064 = vmatpush.bf16.msra.mxu0 %v3876
  %5065 = vmatpush.bf16.msra.mxu0 %v3872
  %5066 = vmatpush.bf16.msra.mxu0 %v3868
  %5067 = vmatmul.bf16.gmra.mxu0 %v845
  %v5068 = vpop.f32.mrf.mxu0
  %v5069 = vadd.f32 %v5056, %v5068
  %v5070 = vpop.f32.mrf.mxu0
  %5071 = vdwg.mxu0
  %5072 = vmatpush.bf16.msra.mxu0 %v3928
  %5073 = vmatpush.bf16.msra.mxu0 %v3924
  %5074 = vmatpush.bf16.msra.mxu0 %v3920
  %5075 = vmatpush.bf16.msra.mxu0 %v3916
  %5076 = vmatpush.bf16.msra.mxu0 %v3912
  %5077 = vmatpush.bf16.msra.mxu0 %v3908
  %5078 = vmatpush.bf16.msra.mxu0 %v3904
  %5079 = vmatpush.bf16.msra.mxu0 %v3900
  %5080 = vmatmul.bf16.gmra.mxu0 %v846
  %v5081 = vpop.f32.mrf.mxu0
  %v5082 = vadd.f32 %v5069, %v5081
  %v5083 = vpop.f32.mrf.mxu0
  %5084 = vdwg.mxu0
  %5085 = vmatpush.bf16.msra.mxu0 %v3960
  %5086 = vmatpush.bf16.msra.mxu0 %v3956
  %5087 = vmatpush.bf16.msra.mxu0 %v3952
  %5088 = vmatpush.bf16.msra.mxu0 %v3948
  %5089 = vmatpush.bf16.msra.mxu0 %v3944
  %5090 = vmatpush.bf16.msra.mxu0 %v3940
  %5091 = vmatpush.bf16.msra.mxu0 %v3936
  %5092 = vmatpush.bf16.msra.mxu0 %v3932
  %5093 = vmatmul.bf16.gmra.mxu0 %v847
  %v5094 = vpop.f32.mrf.mxu0
  %v5095 = vadd.f32 %v5082, %v5094
  %v5096 = vpop.f32.mrf.mxu0
  %5097 = vdwg.mxu0
  %5098 = vmatpush.bf16.msra.mxu0 %v3992
  %5099 = vmatpush.bf16.msra.mxu0 %v3988
  %5100 = vmatpush.bf16.msra.mxu0 %v3984
  %5101 = vmatpush.bf16.msra.mxu0 %v3980
  %5102 = vmatpush.bf16.msra.mxu0 %v3976
  %5103 = vmatpush.bf16.msra.mxu0 %v3972
  %5104 = vmatpush.bf16.msra.mxu0 %v3968
  %5105 = vmatpush.bf16.msra.mxu0 %v3964
  %5106 = vmatmul.bf16.gmra.mxu0 %v848
  %v5107 = vpop.f32.mrf.mxu0
  %v5108 = vadd.f32 %v5095, %v5107
  %v5109 = vpop.f32.mrf.mxu0
  %5110 = vdwg.mxu0
  %5111 = vmatpush.bf16.msra.mxu0 0
  %5112 = vmatpush.bf16.msra.mxu0 0
  %5113 = vmatpush.bf16.msra.mxu0 0
  %5114 = vmatpush.bf16.msra.mxu0 0
  %5115 = vmatpush.bf16.msra.mxu0 %v4008
  %5116 = vmatpush.bf16.msra.mxu0 %v4004
  %5117 = vmatpush.bf16.msra.mxu0 %v4000
  %5118 = vmatpush.bf16.msra.mxu0 %v3996
  %5119 = vmatmul.bf16.gmra.mxu0 %v4797
  %v5120 = vpop.f32.mrf.mxu0
  %v5121 = vadd.f32 %v5108, %v5120
  %v5122 = vpop.f32.mrf.mxu0
  %5123 = vdwg.mxu0
  %5124 = vmatpush.bf16.msra.mxu0 %v3257
  %5125 = vmatpush.bf16.msra.mxu0 %v3253
  %5126 = vmatpush.bf16.msra.mxu0 %v3249
  %5127 = vmatpush.bf16.msra.mxu0 %v3245
  %5128 = vmatpush.bf16.msra.mxu0 %v3241
  %5129 = vmatpush.bf16.msra.mxu0 %v3237
  %5130 = vmatpush.bf16.msra.mxu0 %v3233
  %5131 = vmatpush.bf16.msra.mxu0 %v3229
  %5132 = vmatmul.bf16.gmra.mxu0 %v821
  %v5133 = vpop.f32.mrf.mxu0
  %v5134 = vadd.f32 %v812, %v5133
  %v5135 = vpop.f32.mrf.mxu0
  %5136 = vdwg.mxu0
  %5137 = vmatpush.bf16.msra.mxu0 %v3289
  %5138 = vmatpush.bf16.msra.mxu0 %v3285
  %5139 = vmatpush.bf16.msra.mxu0 %v3281
  %5140 = vmatpush.bf16.msra.mxu0 %v3277
  %5141 = vmatpush.bf16.msra.mxu0 %v3273
  %5142 = vmatpush.bf16.msra.mxu0 %v3269
  %5143 = vmatpush.bf16.msra.mxu0 %v3265
  %5144 = vmatpush.bf16.msra.mxu0 %v3261
  %5145 = vmatmul.bf16.gmra.mxu0 %v822
  %v5146 = vpop.f32.mrf.mxu0
  %v5147 = vadd.f32 %v5134, %v5146
  %v5148 = vpop.f32.mrf.mxu0
  %5149 = vdwg.mxu0
  %5150 = vmatpush.bf16.msra.mxu0 %v3321
  %5151 = vmatpush.bf16.msra.mxu0 %v3317
  %5152 = vmatpush.bf16.msra.mxu0 %v3313
  %5153 = vmatpush.bf16.msra.mxu0 %v3309
  %5154 = vmatpush.bf16.msra.mxu0 %v3305
  %5155 = vmatpush.bf16.msra.mxu0 %v3301
  %5156 = vmatpush.bf16.msra.mxu0 %v3297
  %5157 = vmatpush.bf16.msra.mxu0 %v3293
  %5158 = vmatmul.bf16.gmra.mxu0 %v823
  %v5159 = vpop.f32.mrf.mxu0
  %v5160 = vadd.f32 %v5147, %v5159
  %v5161 = vpop.f32.mrf.mxu0
  %5162 = vdwg.mxu0
  %5163 = vmatpush.bf16.msra.mxu0 %v3353
  %5164 = vmatpush.bf16.msra.mxu0 %v3349
  %5165 = vmatpush.bf16.msra.mxu0 %v3345
  %5166 = vmatpush.bf16.msra.mxu0 %v3341
  %5167 = vmatpush.bf16.msra.mxu0 %v3337
  %5168 = vmatpush.bf16.msra.mxu0 %v3333
  %5169 = vmatpush.bf16.msra.mxu0 %v3329
  %5170 = vmatpush.bf16.msra.mxu0 %v3325
  %5171 = vmatmul.bf16.gmra.mxu0 %v824
  %v5172 = vpop.f32.mrf.mxu0
  %v5173 = vadd.f32 %v5160, %v5172
  %v5174 = vpop.f32.mrf.mxu0
  %5175 = vdwg.mxu0
  %5176 = vmatpush.bf16.msra.mxu0 %v3385
  %5177 = vmatpush.bf16.msra.mxu0 %v3381
  %5178 = vmatpush.bf16.msra.mxu0 %v3377
  %5179 = vmatpush.bf16.msra.mxu0 %v3373
  %5180 = vmatpush.bf16.msra.mxu0 %v3369
  %5181 = vmatpush.bf16.msra.mxu0 %v3365
  %5182 = vmatpush.bf16.msra.mxu0 %v3361
  %5183 = vmatpush.bf16.msra.mxu0 %v3357
  %5184 = vmatmul.bf16.gmra.mxu0 %v825
  %v5185 = vpop.f32.mrf.mxu0
  %v5186 = vadd.f32 %v5173, %v5185
  %v5187 = vpop.f32.mrf.mxu0
  %5188 = vdwg.mxu0
  %5189 = vmatpush.bf16.msra.mxu0 %v3417
  %5190 = vmatpush.bf16.msra.mxu0 %v3413
  %5191 = vmatpush.bf16.msra.mxu0 %v3409
  %5192 = vmatpush.bf16.msra.mxu0 %v3405
  %5193 = vmatpush.bf16.msra.mxu0 %v3401
  %5194 = vmatpush.bf16.msra.mxu0 %v3397
  %5195 = vmatpush.bf16.msra.mxu0 %v3393
  %5196 = vmatpush.bf16.msra.mxu0 %v3389
  %5197 = vmatmul.bf16.gmra.mxu0 %v826
  %v5198 = vpop.f32.mrf.mxu0
  %v5199 = vadd.f32 %v5186, %v5198
  %v5200 = vpop.f32.mrf.mxu0
  %5201 = vdwg.mxu0
  %5202 = vmatpush.bf16.msra.mxu0 %v3449
  %5203 = vmatpush.bf16.msra.mxu0 %v3445
  %5204 = vmatpush.bf16.msra.mxu0 %v3441
  %5205 = vmatpush.bf16.msra.mxu0 %v3437
  %5206 = vmatpush.bf16.msra.mxu0 %v3433
  %5207 = vmatpush.bf16.msra.mxu0 %v3429
  %5208 = vmatpush.bf16.msra.mxu0 %v3425
  %5209 = vmatpush.bf16.msra.mxu0 %v3421
  %5210 = vmatmul.bf16.gmra.mxu0 %v827
  %v5211 = vpop.f32.mrf.mxu0
  %v5212 = vadd.f32 %v5199, %v5211
  %v5213 = vpop.f32.mrf.mxu0
  %5214 = vdwg.mxu0
  %5215 = vmatpush.bf16.msra.mxu0 %v3481
  %5216 = vmatpush.bf16.msra.mxu0 %v3477
  %5217 = vmatpush.bf16.msra.mxu0 %v3473
  %5218 = vmatpush.bf16.msra.mxu0 %v3469
  %5219 = vmatpush.bf16.msra.mxu0 %v3465
  %5220 = vmatpush.bf16.msra.mxu0 %v3461
  %5221 = vmatpush.bf16.msra.mxu0 %v3457
  %5222 = vmatpush.bf16.msra.mxu0 %v3453
  %5223 = vmatmul.bf16.gmra.mxu0 %v828
  %v5224 = vpop.f32.mrf.mxu0
  %v5225 = vadd.f32 %v5212, %v5224
  %v5226 = vpop.f32.mrf.mxu0
  %5227 = vdwg.mxu0
  %5228 = vmatpush.bf16.msra.mxu0 %v3513
  %5229 = vmatpush.bf16.msra.mxu0 %v3509
  %5230 = vmatpush.bf16.msra.mxu0 %v3505
  %5231 = vmatpush.bf16.msra.mxu0 %v3501
  %5232 = vmatpush.bf16.msra.mxu0 %v3497
  %5233 = vmatpush.bf16.msra.mxu0 %v3493
  %5234 = vmatpush.bf16.msra.mxu0 %v3489
  %5235 = vmatpush.bf16.msra.mxu0 %v3485
  %5236 = vmatmul.bf16.gmra.mxu0 %v831
  %v5237 = vpop.f32.mrf.mxu0
  %v5238 = vadd.f32 %v5225, %v5237
  %v5239 = vpop.f32.mrf.mxu0
  %5240 = vdwg.mxu0
  %5241 = vmatpush.bf16.msra.mxu0 %v3545
  %5242 = vmatpush.bf16.msra.mxu0 %v3541
  %5243 = vmatpush.bf16.msra.mxu0 %v3537
  %5244 = vmatpush.bf16.msra.mxu0 %v3533
  %5245 = vmatpush.bf16.msra.mxu0 %v3529
  %5246 = vmatpush.bf16.msra.mxu0 %v3525
  %5247 = vmatpush.bf16.msra.mxu0 %v3521
  %5248 = vmatpush.bf16.msra.mxu0 %v3517
  %5249 = vmatmul.bf16.gmra.mxu0 %v832
  %v5250 = vpop.f32.mrf.mxu0
  %v5251 = vadd.f32 %v5238, %v5250
  %v5252 = vpop.f32.mrf.mxu0
  %5253 = vdwg.mxu0
  %5254 = vmatpush.bf16.msra.mxu0 %v3577
  %5255 = vmatpush.bf16.msra.mxu0 %v3573
  %5256 = vmatpush.bf16.msra.mxu0 %v3569
  %5257 = vmatpush.bf16.msra.mxu0 %v3565
  %5258 = vmatpush.bf16.msra.mxu0 %v3561
  %5259 = vmatpush.bf16.msra.mxu0 %v3557
  %5260 = vmatpush.bf16.msra.mxu0 %v3553
  %5261 = vmatpush.bf16.msra.mxu0 %v3549
  %5262 = vmatmul.bf16.gmra.mxu0 %v833
  %v5263 = vpop.f32.mrf.mxu0
  %v5264 = vadd.f32 %v5251, %v5263
  %v5265 = vpop.f32.mrf.mxu0
  %5266 = vdwg.mxu0
  %5267 = vmatpush.bf16.msra.mxu0 %v3609
  %5268 = vmatpush.bf16.msra.mxu0 %v3605
  %5269 = vmatpush.bf16.msra.mxu0 %v3601
  %5270 = vmatpush.bf16.msra.mxu0 %v3597
  %5271 = vmatpush.bf16.msra.mxu0 %v3593
  %5272 = vmatpush.bf16.msra.mxu0 %v3589
  %5273 = vmatpush.bf16.msra.mxu0 %v3585
  %5274 = vmatpush.bf16.msra.mxu0 %v3581
  %5275 = vmatmul.bf16.gmra.mxu0 %v834
  %v5276 = vpop.f32.mrf.mxu0
  %v5277 = vadd.f32 %v5264, %v5276
  %v5278 = vpop.f32.mrf.mxu0
  %5279 = vdwg.mxu0
  %5280 = vmatpush.bf16.msra.mxu0 %v3641
  %5281 = vmatpush.bf16.msra.mxu0 %v3637
  %5282 = vmatpush.bf16.msra.mxu0 %v3633
  %5283 = vmatpush.bf16.msra.mxu0 %v3629
  %5284 = vmatpush.bf16.msra.mxu0 %v3625
  %5285 = vmatpush.bf16.msra.mxu0 %v3621
  %5286 = vmatpush.bf16.msra.mxu0 %v3617
  %5287 = vmatpush.bf16.msra.mxu0 %v3613
  %5288 = vmatmul.bf16.gmra.mxu0 %v835
  %v5289 = vpop.f32.mrf.mxu0
  %v5290 = vadd.f32 %v5277, %v5289
  %v5291 = vpop.f32.mrf.mxu0
  %5292 = vdwg.mxu0
  %5293 = vmatpush.bf16.msra.mxu0 %v3673
  %5294 = vmatpush.bf16.msra.mxu0 %v3669
  %5295 = vmatpush.bf16.msra.mxu0 %v3665
  %5296 = vmatpush.bf16.msra.mxu0 %v3661
  %5297 = vmatpush.bf16.msra.mxu0 %v3657
  %5298 = vmatpush.bf16.msra.mxu0 %v3653
  %5299 = vmatpush.bf16.msra.mxu0 %v3649
  %5300 = vmatpush.bf16.msra.mxu0 %v3645
  %5301 = vmatmul.bf16.gmra.mxu0 %v836
  %v5302 = vpop.f32.mrf.mxu0
  %v5303 = vadd.f32 %v5290, %v5302
  %v5304 = vpop.f32.mrf.mxu0
  %5305 = vdwg.mxu0
  %5306 = vmatpush.bf16.msra.mxu0 %v3705
  %5307 = vmatpush.bf16.msra.mxu0 %v3701
  %5308 = vmatpush.bf16.msra.mxu0 %v3697
  %5309 = vmatpush.bf16.msra.mxu0 %v3693
  %5310 = vmatpush.bf16.msra.mxu0 %v3689
  %5311 = vmatpush.bf16.msra.mxu0 %v3685
  %5312 = vmatpush.bf16.msra.mxu0 %v3681
  %5313 = vmatpush.bf16.msra.mxu0 %v3677
  %5314 = vmatmul.bf16.gmra.mxu0 %v837
  %v5315 = vpop.f32.mrf.mxu0
  %v5316 = vadd.f32 %v5303, %v5315
  %v5317 = vpop.f32.mrf.mxu0
  %5318 = vdwg.mxu0
  %5319 = vmatpush.bf16.msra.mxu0 %v3737
  %5320 = vmatpush.bf16.msra.mxu0 %v3733
  %5321 = vmatpush.bf16.msra.mxu0 %v3729
  %5322 = vmatpush.bf16.msra.mxu0 %v3725
  %5323 = vmatpush.bf16.msra.mxu0 %v3721
  %5324 = vmatpush.bf16.msra.mxu0 %v3717
  %5325 = vmatpush.bf16.msra.mxu0 %v3713
  %5326 = vmatpush.bf16.msra.mxu0 %v3709
  %5327 = vmatmul.bf16.gmra.mxu0 %v838
  %v5328 = vpop.f32.mrf.mxu0
  %v5329 = vadd.f32 %v5316, %v5328
  %v5330 = vpop.f32.mrf.mxu0
  %5331 = vdwg.mxu0
  %5332 = vmatpush.bf16.msra.mxu0 %v3769
  %5333 = vmatpush.bf16.msra.mxu0 %v3765
  %5334 = vmatpush.bf16.msra.mxu0 %v3761
  %5335 = vmatpush.bf16.msra.mxu0 %v3757
  %5336 = vmatpush.bf16.msra.mxu0 %v3753
  %5337 = vmatpush.bf16.msra.mxu0 %v3749
  %5338 = vmatpush.bf16.msra.mxu0 %v3745
  %5339 = vmatpush.bf16.msra.mxu0 %v3741
  %5340 = vmatmul.bf16.gmra.mxu0 %v841
  %v5341 = vpop.f32.mrf.mxu0
  %v5342 = vadd.f32 %v5329, %v5341
  %v5343 = vpop.f32.mrf.mxu0
  %5344 = vdwg.mxu0
  %5345 = vmatpush.bf16.msra.mxu0 %v3801
  %5346 = vmatpush.bf16.msra.mxu0 %v3797
  %5347 = vmatpush.bf16.msra.mxu0 %v3793
  %5348 = vmatpush.bf16.msra.mxu0 %v3789
  %5349 = vmatpush.bf16.msra.mxu0 %v3785
  %5350 = vmatpush.bf16.msra.mxu0 %v3781
  %5351 = vmatpush.bf16.msra.mxu0 %v3777
  %5352 = vmatpush.bf16.msra.mxu0 %v3773
  %5353 = vmatmul.bf16.gmra.mxu0 %v842
  %v5354 = vpop.f32.mrf.mxu0
  %v5355 = vadd.f32 %v5342, %v5354
  %v5356 = vpop.f32.mrf.mxu0
  %5357 = vdwg.mxu0
  %5358 = vmatpush.bf16.msra.mxu0 %v3833
  %5359 = vmatpush.bf16.msra.mxu0 %v3829
  %5360 = vmatpush.bf16.msra.mxu0 %v3825
  %5361 = vmatpush.bf16.msra.mxu0 %v3821
  %5362 = vmatpush.bf16.msra.mxu0 %v3817
  %5363 = vmatpush.bf16.msra.mxu0 %v3813
  %5364 = vmatpush.bf16.msra.mxu0 %v3809
  %5365 = vmatpush.bf16.msra.mxu0 %v3805
  %5366 = vmatmul.bf16.gmra.mxu0 %v843
  %v5367 = vpop.f32.mrf.mxu0
  %v5368 = vadd.f32 %v5355, %v5367
  %v5369 = vpop.f32.mrf.mxu0
  %5370 = vdwg.mxu0
  %5371 = vmatpush.bf16.msra.mxu0 %v3865
  %5372 = vmatpush.bf16.msra.mxu0 %v3861
  %5373 = vmatpush.bf16.msra.mxu0 %v3857
  %5374 = vmatpush.bf16.msra.mxu0 %v3853
  %5375 = vmatpush.bf16.msra.mxu0 %v3849
  %5376 = vmatpush.bf16.msra.mxu0 %v3845
  %5377 = vmatpush.bf16.msra.mxu0 %v3841
  %5378 = vmatpush.bf16.msra.mxu0 %v3837
  %5379 = vmatmul.bf16.gmra.mxu0 %v844
  %v5380 = vpop.f32.mrf.mxu0
  %v5381 = vadd.f32 %v5368, %v5380
  %v5382 = vpop.f32.mrf.mxu0
  %5383 = vdwg.mxu0
  %5384 = vmatpush.bf16.msra.mxu0 %v3897
  %5385 = vmatpush.bf16.msra.mxu0 %v3893
  %5386 = vmatpush.bf16.msra.mxu0 %v3889
  %5387 = vmatpush.bf16.msra.mxu0 %v3885
  %5388 = vmatpush.bf16.msra.mxu0 %v3881
  %5389 = vmatpush.bf16.msra.mxu0 %v3877
  %5390 = vmatpush.bf16.msra.mxu0 %v3873
  %5391 = vmatpush.bf16.msra.mxu0 %v3869
  %5392 = vmatmul.bf16.gmra.mxu0 %v845
  %v5393 = vpop.f32.mrf.mxu0
  %v5394 = vadd.f32 %v5381, %v5393
  %v5395 = vpop.f32.mrf.mxu0
  %5396 = vdwg.mxu0
  %5397 = vmatpush.bf16.msra.mxu0 %v3929
  %5398 = vmatpush.bf16.msra.mxu0 %v3925
  %5399 = vmatpush.bf16.msra.mxu0 %v3921
  %5400 = vmatpush.bf16.msra.mxu0 %v3917
  %5401 = vmatpush.bf16.msra.mxu0 %v3913
  %5402 = vmatpush.bf16.msra.mxu0 %v3909
  %5403 = vmatpush.bf16.msra.mxu0 %v3905
  %5404 = vmatpush.bf16.msra.mxu0 %v3901
  %5405 = vmatmul.bf16.gmra.mxu0 %v846
  %v5406 = vpop.f32.mrf.mxu0
  %v5407 = vadd.f32 %v5394, %v5406
  %v5408 = vpop.f32.mrf.mxu0
  %5409 = vdwg.mxu0
  %5410 = vmatpush.bf16.msra.mxu0 %v3961
  %5411 = vmatpush.bf16.msra.mxu0 %v3957
  %5412 = vmatpush.bf16.msra.mxu0 %v3953
  %5413 = vmatpush.bf16.msra.mxu0 %v3949
  %5414 = vmatpush.bf16.msra.mxu0 %v3945
  %5415 = vmatpush.bf16.msra.mxu0 %v3941
  %5416 = vmatpush.bf16.msra.mxu0 %v3937
  %5417 = vmatpush.bf16.msra.mxu0 %v3933
  %5418 = vmatmul.bf16.gmra.mxu0 %v847
  %v5419 = vpop.f32.mrf.mxu0
  %v5420 = vadd.f32 %v5407, %v5419
  %v5421 = vpop.f32.mrf.mxu0
  %5422 = vdwg.mxu0
  %5423 = vmatpush.bf16.msra.mxu0 %v3993
  %5424 = vmatpush.bf16.msra.mxu0 %v3989
  %5425 = vmatpush.bf16.msra.mxu0 %v3985
  %5426 = vmatpush.bf16.msra.mxu0 %v3981
  %5427 = vmatpush.bf16.msra.mxu0 %v3977
  %5428 = vmatpush.bf16.msra.mxu0 %v3973
  %5429 = vmatpush.bf16.msra.mxu0 %v3969
  %5430 = vmatpush.bf16.msra.mxu0 %v3965
  %5431 = vmatmul.bf16.gmra.mxu0 %v848
  %v5432 = vpop.f32.mrf.mxu0
  %v5433 = vadd.f32 %v5420, %v5432
  %v5434 = vpop.f32.mrf.mxu0
  %5435 = vdwg.mxu0
  %5436 = vmatpush.bf16.msra.mxu0 0
  %5437 = vmatpush.bf16.msra.mxu0 0
  %5438 = vmatpush.bf16.msra.mxu0 0
  %5439 = vmatpush.bf16.msra.mxu0 0
  %5440 = vmatpush.bf16.msra.mxu0 %v4009
  %5441 = vmatpush.bf16.msra.mxu0 %v4005
  %5442 = vmatpush.bf16.msra.mxu0 %v4001
  %5443 = vmatpush.bf16.msra.mxu0 %v3997
  %5444 = vmatmul.bf16.gmra.mxu0 %v4797
  %v5445 = vpop.f32.mrf.mxu0
  %v5446 = vadd.f32 %v5433, %v5445
  %v5447 = vpop.f32.mrf.mxu0
  %5448 = vdwg.mxu0
  %5449 = vmatpush.bf16.msra.mxu0 %v3258
  %5450 = vmatpush.bf16.msra.mxu0 %v3254
  %5451 = vmatpush.bf16.msra.mxu0 %v3250
  %5452 = vmatpush.bf16.msra.mxu0 %v3246
  %5453 = vmatpush.bf16.msra.mxu0 %v3242
  %5454 = vmatpush.bf16.msra.mxu0 %v3238
  %5455 = vmatpush.bf16.msra.mxu0 %v3234
  %5456 = vmatpush.bf16.msra.mxu0 %v3230
  %5457 = vmatmul.bf16.gmra.mxu0 %v821
  %v5458 = vpop.f32.mrf.mxu0
  %v5459 = vadd.f32 %v813, %v5458
  %v5460 = vpop.f32.mrf.mxu0
  %5461 = vdwg.mxu0
  %5462 = vmatpush.bf16.msra.mxu0 %v3290
  %5463 = vmatpush.bf16.msra.mxu0 %v3286
  %5464 = vmatpush.bf16.msra.mxu0 %v3282
  %5465 = vmatpush.bf16.msra.mxu0 %v3278
  %5466 = vmatpush.bf16.msra.mxu0 %v3274
  %5467 = vmatpush.bf16.msra.mxu0 %v3270
  %5468 = vmatpush.bf16.msra.mxu0 %v3266
  %5469 = vmatpush.bf16.msra.mxu0 %v3262
  %5470 = vmatmul.bf16.gmra.mxu0 %v822
  %v5471 = vpop.f32.mrf.mxu0
  %v5472 = vadd.f32 %v5459, %v5471
  %v5473 = vpop.f32.mrf.mxu0
  %5474 = vdwg.mxu0
  %5475 = vmatpush.bf16.msra.mxu0 %v3322
  %5476 = vmatpush.bf16.msra.mxu0 %v3318
  %5477 = vmatpush.bf16.msra.mxu0 %v3314
  %5478 = vmatpush.bf16.msra.mxu0 %v3310
  %5479 = vmatpush.bf16.msra.mxu0 %v3306
  %5480 = vmatpush.bf16.msra.mxu0 %v3302
  %5481 = vmatpush.bf16.msra.mxu0 %v3298
  %5482 = vmatpush.bf16.msra.mxu0 %v3294
  %5483 = vmatmul.bf16.gmra.mxu0 %v823
  %v5484 = vpop.f32.mrf.mxu0
  %v5485 = vadd.f32 %v5472, %v5484
  %v5486 = vpop.f32.mrf.mxu0
  %5487 = vdwg.mxu0
  %5488 = vmatpush.bf16.msra.mxu0 %v3354
  %5489 = vmatpush.bf16.msra.mxu0 %v3350
  %5490 = vmatpush.bf16.msra.mxu0 %v3346
  %5491 = vmatpush.bf16.msra.mxu0 %v3342
  %5492 = vmatpush.bf16.msra.mxu0 %v3338
  %5493 = vmatpush.bf16.msra.mxu0 %v3334
  %5494 = vmatpush.bf16.msra.mxu0 %v3330
  %5495 = vmatpush.bf16.msra.mxu0 %v3326
  %5496 = vmatmul.bf16.gmra.mxu0 %v824
  %v5497 = vpop.f32.mrf.mxu0
  %v5498 = vadd.f32 %v5485, %v5497
  %v5499 = vpop.f32.mrf.mxu0
  %5500 = vdwg.mxu0
  %5501 = vmatpush.bf16.msra.mxu0 %v3386
  %5502 = vmatpush.bf16.msra.mxu0 %v3382
  %5503 = vmatpush.bf16.msra.mxu0 %v3378
  %5504 = vmatpush.bf16.msra.mxu0 %v3374
  %5505 = vmatpush.bf16.msra.mxu0 %v3370
  %5506 = vmatpush.bf16.msra.mxu0 %v3366
  %5507 = vmatpush.bf16.msra.mxu0 %v3362
  %5508 = vmatpush.bf16.msra.mxu0 %v3358
  %5509 = vmatmul.bf16.gmra.mxu0 %v825
  %v5510 = vpop.f32.mrf.mxu0
  %v5511 = vadd.f32 %v5498, %v5510
  %v5512 = vpop.f32.mrf.mxu0
  %5513 = vdwg.mxu0
  %5514 = vmatpush.bf16.msra.mxu0 %v3418
  %5515 = vmatpush.bf16.msra.mxu0 %v3414
  %5516 = vmatpush.bf16.msra.mxu0 %v3410
  %5517 = vmatpush.bf16.msra.mxu0 %v3406
  %5518 = vmatpush.bf16.msra.mxu0 %v3402
  %5519 = vmatpush.bf16.msra.mxu0 %v3398
  %5520 = vmatpush.bf16.msra.mxu0 %v3394
  %5521 = vmatpush.bf16.msra.mxu0 %v3390
  %5522 = vmatmul.bf16.gmra.mxu0 %v826
  %v5523 = vpop.f32.mrf.mxu0
  %v5524 = vadd.f32 %v5511, %v5523
  %v5525 = vpop.f32.mrf.mxu0
  %5526 = vdwg.mxu0
  %5527 = vmatpush.bf16.msra.mxu0 %v3450
  %5528 = vmatpush.bf16.msra.mxu0 %v3446
  %5529 = vmatpush.bf16.msra.mxu0 %v3442
  %5530 = vmatpush.bf16.msra.mxu0 %v3438
  %5531 = vmatpush.bf16.msra.mxu0 %v3434
  %5532 = vmatpush.bf16.msra.mxu0 %v3430
  %5533 = vmatpush.bf16.msra.mxu0 %v3426
  %5534 = vmatpush.bf16.msra.mxu0 %v3422
  %5535 = vmatmul.bf16.gmra.mxu0 %v827
  %v5536 = vpop.f32.mrf.mxu0
  %v5537 = vadd.f32 %v5524, %v5536
  %v5538 = vpop.f32.mrf.mxu0
  %5539 = vdwg.mxu0
  %5540 = vmatpush.bf16.msra.mxu0 %v3482
  %5541 = vmatpush.bf16.msra.mxu0 %v3478
  %5542 = vmatpush.bf16.msra.mxu0 %v3474
  %5543 = vmatpush.bf16.msra.mxu0 %v3470
  %5544 = vmatpush.bf16.msra.mxu0 %v3466
  %5545 = vmatpush.bf16.msra.mxu0 %v3462
  %5546 = vmatpush.bf16.msra.mxu0 %v3458
  %5547 = vmatpush.bf16.msra.mxu0 %v3454
  %5548 = vmatmul.bf16.gmra.mxu0 %v828
  %v5549 = vpop.f32.mrf.mxu0
  %v5550 = vadd.f32 %v5537, %v5549
  %v5551 = vpop.f32.mrf.mxu0
  %5552 = vdwg.mxu0
  %5553 = vmatpush.bf16.msra.mxu0 %v3514
  %5554 = vmatpush.bf16.msra.mxu0 %v3510
  %5555 = vmatpush.bf16.msra.mxu0 %v3506
  %5556 = vmatpush.bf16.msra.mxu0 %v3502
  %5557 = vmatpush.bf16.msra.mxu0 %v3498
  %5558 = vmatpush.bf16.msra.mxu0 %v3494
  %5559 = vmatpush.bf16.msra.mxu0 %v3490
  %5560 = vmatpush.bf16.msra.mxu0 %v3486
  %5561 = vmatmul.bf16.gmra.mxu0 %v831
  %v5562 = vpop.f32.mrf.mxu0
  %v5563 = vadd.f32 %v5550, %v5562
  %v5564 = vpop.f32.mrf.mxu0
  %5565 = vdwg.mxu0
  %5566 = vmatpush.bf16.msra.mxu0 %v3546
  %5567 = vmatpush.bf16.msra.mxu0 %v3542
  %5568 = vmatpush.bf16.msra.mxu0 %v3538
  %5569 = vmatpush.bf16.msra.mxu0 %v3534
  %5570 = vmatpush.bf16.msra.mxu0 %v3530
  %5571 = vmatpush.bf16.msra.mxu0 %v3526
  %5572 = vmatpush.bf16.msra.mxu0 %v3522
  %5573 = vmatpush.bf16.msra.mxu0 %v3518
  %5574 = vmatmul.bf16.gmra.mxu0 %v832
  %v5575 = vpop.f32.mrf.mxu0
  %v5576 = vadd.f32 %v5563, %v5575
  %v5577 = vpop.f32.mrf.mxu0
  %5578 = vdwg.mxu0
  %5579 = vmatpush.bf16.msra.mxu0 %v3578
  %5580 = vmatpush.bf16.msra.mxu0 %v3574
  %5581 = vmatpush.bf16.msra.mxu0 %v3570
  %5582 = vmatpush.bf16.msra.mxu0 %v3566
  %5583 = vmatpush.bf16.msra.mxu0 %v3562
  %5584 = vmatpush.bf16.msra.mxu0 %v3558
  %5585 = vmatpush.bf16.msra.mxu0 %v3554
  %5586 = vmatpush.bf16.msra.mxu0 %v3550
  %5587 = vmatmul.bf16.gmra.mxu0 %v833
  %v5588 = vpop.f32.mrf.mxu0
  %v5589 = vadd.f32 %v5576, %v5588
  %v5590 = vpop.f32.mrf.mxu0
  %5591 = vdwg.mxu0
  %5592 = vmatpush.bf16.msra.mxu0 %v3610
  %5593 = vmatpush.bf16.msra.mxu0 %v3606
  %5594 = vmatpush.bf16.msra.mxu0 %v3602
  %5595 = vmatpush.bf16.msra.mxu0 %v3598
  %5596 = vmatpush.bf16.msra.mxu0 %v3594
  %5597 = vmatpush.bf16.msra.mxu0 %v3590
  %5598 = vmatpush.bf16.msra.mxu0 %v3586
  %5599 = vmatpush.bf16.msra.mxu0 %v3582
  %5600 = vmatmul.bf16.gmra.mxu0 %v834
  %v5601 = vpop.f32.mrf.mxu0
  %v5602 = vadd.f32 %v5589, %v5601
  %v5603 = vpop.f32.mrf.mxu0
  %5604 = vdwg.mxu0
  %5605 = vmatpush.bf16.msra.mxu0 %v3642
  %5606 = vmatpush.bf16.msra.mxu0 %v3638
  %5607 = vmatpush.bf16.msra.mxu0 %v3634
  %5608 = vmatpush.bf16.msra.mxu0 %v3630
  %5609 = vmatpush.bf16.msra.mxu0 %v3626
  %5610 = vmatpush.bf16.msra.mxu0 %v3622
  %5611 = vmatpush.bf16.msra.mxu0 %v3618
  %5612 = vmatpush.bf16.msra.mxu0 %v3614
  %5613 = vmatmul.bf16.gmra.mxu0 %v835
  %v5614 = vpop.f32.mrf.mxu0
  %v5615 = vadd.f32 %v5602, %v5614
  %v5616 = vpop.f32.mrf.mxu0
  %5617 = vdwg.mxu0
  %5618 = vmatpush.bf16.msra.mxu0 %v3674
  %5619 = vmatpush.bf16.msra.mxu0 %v3670
  %5620 = vmatpush.bf16.msra.mxu0 %v3666
  %5621 = vmatpush.bf16.msra.mxu0 %v3662
  %5622 = vmatpush.bf16.msra.mxu0 %v3658
  %5623 = vmatpush.bf16.msra.mxu0 %v3654
  %5624 = vmatpush.bf16.msra.mxu0 %v3650
  %5625 = vmatpush.bf16.msra.mxu0 %v3646
  %5626 = vmatmul.bf16.gmra.mxu0 %v836
  %v5627 = vpop.f32.mrf.mxu0
  %v5628 = vadd.f32 %v5615, %v5627
  %v5629 = vpop.f32.mrf.mxu0
  %5630 = vdwg.mxu0
  %5631 = vmatpush.bf16.msra.mxu0 %v3706
  %5632 = vmatpush.bf16.msra.mxu0 %v3702
  %5633 = vmatpush.bf16.msra.mxu0 %v3698
  %5634 = vmatpush.bf16.msra.mxu0 %v3694
  %5635 = vmatpush.bf16.msra.mxu0 %v3690
  %5636 = vmatpush.bf16.msra.mxu0 %v3686
  %5637 = vmatpush.bf16.msra.mxu0 %v3682
  %5638 = vmatpush.bf16.msra.mxu0 %v3678
  %5639 = vmatmul.bf16.gmra.mxu0 %v837
  %v5640 = vpop.f32.mrf.mxu0
  %v5641 = vadd.f32 %v5628, %v5640
  %v5642 = vpop.f32.mrf.mxu0
  %5643 = vdwg.mxu0
  %5644 = vmatpush.bf16.msra.mxu0 %v3738
  %5645 = vmatpush.bf16.msra.mxu0 %v3734
  %5646 = vmatpush.bf16.msra.mxu0 %v3730
  %5647 = vmatpush.bf16.msra.mxu0 %v3726
  %5648 = vmatpush.bf16.msra.mxu0 %v3722
  %5649 = vmatpush.bf16.msra.mxu0 %v3718
  %5650 = vmatpush.bf16.msra.mxu0 %v3714
  %5651 = vmatpush.bf16.msra.mxu0 %v3710
  %5652 = vmatmul.bf16.gmra.mxu0 %v838
  %v5653 = vpop.f32.mrf.mxu0
  %v5654 = vadd.f32 %v5641, %v5653
  %v5655 = vpop.f32.mrf.mxu0
  %5656 = vdwg.mxu0
  %5657 = vmatpush.bf16.msra.mxu0 %v3770
  %5658 = vmatpush.bf16.msra.mxu0 %v3766
  %5659 = vmatpush.bf16.msra.mxu0 %v3762
  %5660 = vmatpush.bf16.msra.mxu0 %v3758
  %5661 = vmatpush.bf16.msra.mxu0 %v3754
  %5662 = vmatpush.bf16.msra.mxu0 %v3750
  %5663 = vmatpush.bf16.msra.mxu0 %v3746
  %5664 = vmatpush.bf16.msra.mxu0 %v3742
  %5665 = vmatmul.bf16.gmra.mxu0 %v841
  %v5666 = vpop.f32.mrf.mxu0
  %v5667 = vadd.f32 %v5654, %v5666
  %v5668 = vpop.f32.mrf.mxu0
  %5669 = vdwg.mxu0
  %5670 = vmatpush.bf16.msra.mxu0 %v3802
  %5671 = vmatpush.bf16.msra.mxu0 %v3798
  %5672 = vmatpush.bf16.msra.mxu0 %v3794
  %5673 = vmatpush.bf16.msra.mxu0 %v3790
  %5674 = vmatpush.bf16.msra.mxu0 %v3786
  %5675 = vmatpush.bf16.msra.mxu0 %v3782
  %5676 = vmatpush.bf16.msra.mxu0 %v3778
  %5677 = vmatpush.bf16.msra.mxu0 %v3774
  %5678 = vmatmul.bf16.gmra.mxu0 %v842
  %v5679 = vpop.f32.mrf.mxu0
  %v5680 = vadd.f32 %v5667, %v5679
  %v5681 = vpop.f32.mrf.mxu0
  %5682 = vdwg.mxu0
  %5683 = vmatpush.bf16.msra.mxu0 %v3834
  %5684 = vmatpush.bf16.msra.mxu0 %v3830
  %5685 = vmatpush.bf16.msra.mxu0 %v3826
  %5686 = vmatpush.bf16.msra.mxu0 %v3822
  %5687 = vmatpush.bf16.msra.mxu0 %v3818
  %5688 = vmatpush.bf16.msra.mxu0 %v3814
  %5689 = vmatpush.bf16.msra.mxu0 %v3810
  %5690 = vmatpush.bf16.msra.mxu0 %v3806
  %5691 = vmatmul.bf16.gmra.mxu0 %v843
  %v5692 = vpop.f32.mrf.mxu0
  %v5693 = vadd.f32 %v5680, %v5692
  %v5694 = vpop.f32.mrf.mxu0
  %5695 = vdwg.mxu0
  %5696 = vmatpush.bf16.msra.mxu0 %v3866
  %5697 = vmatpush.bf16.msra.mxu0 %v3862
  %5698 = vmatpush.bf16.msra.mxu0 %v3858
  %5699 = vmatpush.bf16.msra.mxu0 %v3854
  %5700 = vmatpush.bf16.msra.mxu0 %v3850
  %5701 = vmatpush.bf16.msra.mxu0 %v3846
  %5702 = vmatpush.bf16.msra.mxu0 %v3842
  %5703 = vmatpush.bf16.msra.mxu0 %v3838
  %5704 = vmatmul.bf16.gmra.mxu0 %v844
  %v5705 = vpop.f32.mrf.mxu0
  %v5706 = vadd.f32 %v5693, %v5705
  %v5707 = vpop.f32.mrf.mxu0
  %5708 = vdwg.mxu0
  %5709 = vmatpush.bf16.msra.mxu0 %v3898
  %5710 = vmatpush.bf16.msra.mxu0 %v3894
  %5711 = vmatpush.bf16.msra.mxu0 %v3890
  %5712 = vmatpush.bf16.msra.mxu0 %v3886
  %5713 = vmatpush.bf16.msra.mxu0 %v3882
  %5714 = vmatpush.bf16.msra.mxu0 %v3878
  %5715 = vmatpush.bf16.msra.mxu0 %v3874
  %5716 = vmatpush.bf16.msra.mxu0 %v3870
  %5717 = vmatmul.bf16.gmra.mxu0 %v845
  %v5718 = vpop.f32.mrf.mxu0
  %v5719 = vadd.f32 %v5706, %v5718
  %v5720 = vpop.f32.mrf.mxu0
  %5721 = vdwg.mxu0
  %5722 = vmatpush.bf16.msra.mxu0 %v3930
  %5723 = vmatpush.bf16.msra.mxu0 %v3926
  %5724 = vmatpush.bf16.msra.mxu0 %v3922
  %5725 = vmatpush.bf16.msra.mxu0 %v3918
  %5726 = vmatpush.bf16.msra.mxu0 %v3914
  %5727 = vmatpush.bf16.msra.mxu0 %v3910
  %5728 = vmatpush.bf16.msra.mxu0 %v3906
  %5729 = vmatpush.bf16.msra.mxu0 %v3902
  %5730 = vmatmul.bf16.gmra.mxu0 %v846
  %v5731 = vpop.f32.mrf.mxu0
  %v5732 = vadd.f32 %v5719, %v5731
  %v5733 = vpop.f32.mrf.mxu0
  %5734 = vdwg.mxu0
  %5735 = vmatpush.bf16.msra.mxu0 %v3962
  %5736 = vmatpush.bf16.msra.mxu0 %v3958
  %5737 = vmatpush.bf16.msra.mxu0 %v3954
  %5738 = vmatpush.bf16.msra.mxu0 %v3950
  %5739 = vmatpush.bf16.msra.mxu0 %v3946
  %5740 = vmatpush.bf16.msra.mxu0 %v3942
  %5741 = vmatpush.bf16.msra.mxu0 %v3938
  %5742 = vmatpush.bf16.msra.mxu0 %v3934
  %5743 = vmatmul.bf16.gmra.mxu0 %v847
  %v5744 = vpop.f32.mrf.mxu0
  %v5745 = vadd.f32 %v5732, %v5744
  %v5746 = vpop.f32.mrf.mxu0
  %5747 = vdwg.mxu0
  %5748 = vmatpush.bf16.msra.mxu0 %v3994
  %5749 = vmatpush.bf16.msra.mxu0 %v3990
  %5750 = vmatpush.bf16.msra.mxu0 %v3986
  %5751 = vmatpush.bf16.msra.mxu0 %v3982
  %5752 = vmatpush.bf16.msra.mxu0 %v3978
  %5753 = vmatpush.bf16.msra.mxu0 %v3974
  %5754 = vmatpush.bf16.msra.mxu0 %v3970
  %5755 = vmatpush.bf16.msra.mxu0 %v3966
  %5756 = vmatmul.bf16.gmra.mxu0 %v848
  %v5757 = vpop.f32.mrf.mxu0
  %v5758 = vadd.f32 %v5745, %v5757
  %v5759 = vpop.f32.mrf.mxu0
  %5760 = vdwg.mxu0
  %5761 = vmatpush.bf16.msra.mxu0 0
  %5762 = vmatpush.bf16.msra.mxu0 0
  %5763 = vmatpush.bf16.msra.mxu0 0
  %5764 = vmatpush.bf16.msra.mxu0 0
  %5765 = vmatpush.bf16.msra.mxu0 %v4010
  %5766 = vmatpush.bf16.msra.mxu0 %v4006
  %5767 = vmatpush.bf16.msra.mxu0 %v4002
  %5768 = vmatpush.bf16.msra.mxu0 %v3998
  %5769 = vmatmul.bf16.gmra.mxu0 %v4797
  %v5770 = vpop.f32.mrf.mxu0
  %v5771 = vadd.f32 %v5758, %v5770
  %v5772 = vpop.f32.mrf.mxu0
  %5773 = vdwg.mxu0
  %5774 = vmatpush.bf16.msra.mxu0 %v3259
  %5775 = vmatpush.bf16.msra.mxu0 %v3255
  %5776 = vmatpush.bf16.msra.mxu0 %v3251
  %5777 = vmatpush.bf16.msra.mxu0 %v3247
  %5778 = vmatpush.bf16.msra.mxu0 %v3243
  %5779 = vmatpush.bf16.msra.mxu0 %v3239
  %5780 = vmatpush.bf16.msra.mxu0 %v3235
  %5781 = vmatpush.bf16.msra.mxu0 %v3231
  %5782 = vmatmul.bf16.gmra.mxu0 %v821
  %v5783 = vpop.f32.mrf.mxu0
  %v5784 = vadd.f32 %v814, %v5783
  %v5785 = vpop.f32.mrf.mxu0
  %5786 = vdwg.mxu0
  %5787 = vmatpush.bf16.msra.mxu0 %v3291
  %5788 = vmatpush.bf16.msra.mxu0 %v3287
  %5789 = vmatpush.bf16.msra.mxu0 %v3283
  %5790 = vmatpush.bf16.msra.mxu0 %v3279
  %5791 = vmatpush.bf16.msra.mxu0 %v3275
  %5792 = vmatpush.bf16.msra.mxu0 %v3271
  %5793 = vmatpush.bf16.msra.mxu0 %v3267
  %5794 = vmatpush.bf16.msra.mxu0 %v3263
  %5795 = vmatmul.bf16.gmra.mxu0 %v822
  %v5796 = vpop.f32.mrf.mxu0
  %v5797 = vadd.f32 %v5784, %v5796
  %v5798 = vpop.f32.mrf.mxu0
  %5799 = vdwg.mxu0
  %5800 = vmatpush.bf16.msra.mxu0 %v3323
  %5801 = vmatpush.bf16.msra.mxu0 %v3319
  %5802 = vmatpush.bf16.msra.mxu0 %v3315
  %5803 = vmatpush.bf16.msra.mxu0 %v3311
  %5804 = vmatpush.bf16.msra.mxu0 %v3307
  %5805 = vmatpush.bf16.msra.mxu0 %v3303
  %5806 = vmatpush.bf16.msra.mxu0 %v3299
  %5807 = vmatpush.bf16.msra.mxu0 %v3295
  %5808 = vmatmul.bf16.gmra.mxu0 %v823
  %v5809 = vpop.f32.mrf.mxu0
  %v5810 = vadd.f32 %v5797, %v5809
  %v5811 = vpop.f32.mrf.mxu0
  %5812 = vdwg.mxu0
  %5813 = vmatpush.bf16.msra.mxu0 %v3355
  %5814 = vmatpush.bf16.msra.mxu0 %v3351
  %5815 = vmatpush.bf16.msra.mxu0 %v3347
  %5816 = vmatpush.bf16.msra.mxu0 %v3343
  %5817 = vmatpush.bf16.msra.mxu0 %v3339
  %5818 = vmatpush.bf16.msra.mxu0 %v3335
  %5819 = vmatpush.bf16.msra.mxu0 %v3331
  %5820 = vmatpush.bf16.msra.mxu0 %v3327
  %5821 = vmatmul.bf16.gmra.mxu0 %v824
  %v5822 = vpop.f32.mrf.mxu0
  %v5823 = vadd.f32 %v5810, %v5822
  %v5824 = vpop.f32.mrf.mxu0
  %5825 = vdwg.mxu0
  %5826 = vmatpush.bf16.msra.mxu0 %v3387
  %5827 = vmatpush.bf16.msra.mxu0 %v3383
  %5828 = vmatpush.bf16.msra.mxu0 %v3379
  %5829 = vmatpush.bf16.msra.mxu0 %v3375
  %5830 = vmatpush.bf16.msra.mxu0 %v3371
  %5831 = vmatpush.bf16.msra.mxu0 %v3367
  %5832 = vmatpush.bf16.msra.mxu0 %v3363
  %5833 = vmatpush.bf16.msra.mxu0 %v3359
  %5834 = vmatmul.bf16.gmra.mxu0 %v825
  %v5835 = vpop.f32.mrf.mxu0
  %v5836 = vadd.f32 %v5823, %v5835
  %v5837 = vpop.f32.mrf.mxu0
  %5838 = vdwg.mxu0
  %5839 = vmatpush.bf16.msra.mxu0 %v3419
  %5840 = vmatpush.bf16.msra.mxu0 %v3415
  %5841 = vmatpush.bf16.msra.mxu0 %v3411
  %5842 = vmatpush.bf16.msra.mxu0 %v3407
  %5843 = vmatpush.bf16.msra.mxu0 %v3403
  %5844 = vmatpush.bf16.msra.mxu0 %v3399
  %5845 = vmatpush.bf16.msra.mxu0 %v3395
  %5846 = vmatpush.bf16.msra.mxu0 %v3391
  %5847 = vmatmul.bf16.gmra.mxu0 %v826
  %v5848 = vpop.f32.mrf.mxu0
  %v5849 = vadd.f32 %v5836, %v5848
  %v5850 = vpop.f32.mrf.mxu0
  %5851 = vdwg.mxu0
  %5852 = vmatpush.bf16.msra.mxu0 %v3451
  %5853 = vmatpush.bf16.msra.mxu0 %v3447
  %5854 = vmatpush.bf16.msra.mxu0 %v3443
  %5855 = vmatpush.bf16.msra.mxu0 %v3439
  %5856 = vmatpush.bf16.msra.mxu0 %v3435
  %5857 = vmatpush.bf16.msra.mxu0 %v3431
  %5858 = vmatpush.bf16.msra.mxu0 %v3427
  %5859 = vmatpush.bf16.msra.mxu0 %v3423
  %5860 = vmatmul.bf16.gmra.mxu0 %v827
  %v5861 = vpop.f32.mrf.mxu0
  %v5862 = vadd.f32 %v5849, %v5861
  %v5863 = vpop.f32.mrf.mxu0
  %5864 = vdwg.mxu0
  %5865 = vmatpush.bf16.msra.mxu0 %v3483
  %5866 = vmatpush.bf16.msra.mxu0 %v3479
  %5867 = vmatpush.bf16.msra.mxu0 %v3475
  %5868 = vmatpush.bf16.msra.mxu0 %v3471
  %5869 = vmatpush.bf16.msra.mxu0 %v3467
  %5870 = vmatpush.bf16.msra.mxu0 %v3463
  %5871 = vmatpush.bf16.msra.mxu0 %v3459
  %5872 = vmatpush.bf16.msra.mxu0 %v3455
  %5873 = vmatmul.bf16.gmra.mxu0 %v828
  %v5874 = vpop.f32.mrf.mxu0
  %v5875 = vadd.f32 %v5862, %v5874
  %v5876 = vpop.f32.mrf.mxu0
  %5877 = vdwg.mxu0
  %5878 = vmatpush.bf16.msra.mxu0 %v3515
  %5879 = vmatpush.bf16.msra.mxu0 %v3511
  %5880 = vmatpush.bf16.msra.mxu0 %v3507
  %5881 = vmatpush.bf16.msra.mxu0 %v3503
  %5882 = vmatpush.bf16.msra.mxu0 %v3499
  %5883 = vmatpush.bf16.msra.mxu0 %v3495
  %5884 = vmatpush.bf16.msra.mxu0 %v3491
  %5885 = vmatpush.bf16.msra.mxu0 %v3487
  %5886 = vmatmul.bf16.gmra.mxu0 %v831
  %v5887 = vpop.f32.mrf.mxu0
  %v5888 = vadd.f32 %v5875, %v5887
  %v5889 = vpop.f32.mrf.mxu0
  %5890 = vdwg.mxu0
  %5891 = vmatpush.bf16.msra.mxu0 %v3547
  %5892 = vmatpush.bf16.msra.mxu0 %v3543
  %5893 = vmatpush.bf16.msra.mxu0 %v3539
  %5894 = vmatpush.bf16.msra.mxu0 %v3535
  %5895 = vmatpush.bf16.msra.mxu0 %v3531
  %5896 = vmatpush.bf16.msra.mxu0 %v3527
  %5897 = vmatpush.bf16.msra.mxu0 %v3523
  %5898 = vmatpush.bf16.msra.mxu0 %v3519
  %5899 = vmatmul.bf16.gmra.mxu0 %v832
  %v5900 = vpop.f32.mrf.mxu0
  %v5901 = vadd.f32 %v5888, %v5900
  %v5902 = vpop.f32.mrf.mxu0
  %5903 = vdwg.mxu0
  %5904 = vmatpush.bf16.msra.mxu0 %v3579
  %5905 = vmatpush.bf16.msra.mxu0 %v3575
  %5906 = vmatpush.bf16.msra.mxu0 %v3571
  %5907 = vmatpush.bf16.msra.mxu0 %v3567
  %5908 = vmatpush.bf16.msra.mxu0 %v3563
  %5909 = vmatpush.bf16.msra.mxu0 %v3559
  %5910 = vmatpush.bf16.msra.mxu0 %v3555
  %5911 = vmatpush.bf16.msra.mxu0 %v3551
  %5912 = vmatmul.bf16.gmra.mxu0 %v833
  %v5913 = vpop.f32.mrf.mxu0
  %v5914 = vadd.f32 %v5901, %v5913
  %v5915 = vpop.f32.mrf.mxu0
  %5916 = vdwg.mxu0
  %5917 = vmatpush.bf16.msra.mxu0 %v3611
  %5918 = vmatpush.bf16.msra.mxu0 %v3607
  %5919 = vmatpush.bf16.msra.mxu0 %v3603
  %5920 = vmatpush.bf16.msra.mxu0 %v3599
  %5921 = vmatpush.bf16.msra.mxu0 %v3595
  %5922 = vmatpush.bf16.msra.mxu0 %v3591
  %5923 = vmatpush.bf16.msra.mxu0 %v3587
  %5924 = vmatpush.bf16.msra.mxu0 %v3583
  %5925 = vmatmul.bf16.gmra.mxu0 %v834
  %v5926 = vpop.f32.mrf.mxu0
  %v5927 = vadd.f32 %v5914, %v5926
  %v5928 = vpop.f32.mrf.mxu0
  %5929 = vdwg.mxu0
  %5930 = vmatpush.bf16.msra.mxu0 %v3643
  %5931 = vmatpush.bf16.msra.mxu0 %v3639
  %5932 = vmatpush.bf16.msra.mxu0 %v3635
  %5933 = vmatpush.bf16.msra.mxu0 %v3631
  %5934 = vmatpush.bf16.msra.mxu0 %v3627
  %5935 = vmatpush.bf16.msra.mxu0 %v3623
  %5936 = vmatpush.bf16.msra.mxu0 %v3619
  %5937 = vmatpush.bf16.msra.mxu0 %v3615
  %5938 = vmatmul.bf16.gmra.mxu0 %v835
  %v5939 = vpop.f32.mrf.mxu0
  %v5940 = vadd.f32 %v5927, %v5939
  %v5941 = vpop.f32.mrf.mxu0
  %5942 = vdwg.mxu0
  %5943 = vmatpush.bf16.msra.mxu0 %v3675
  %5944 = vmatpush.bf16.msra.mxu0 %v3671
  %5945 = vmatpush.bf16.msra.mxu0 %v3667
  %5946 = vmatpush.bf16.msra.mxu0 %v3663
  %5947 = vmatpush.bf16.msra.mxu0 %v3659
  %5948 = vmatpush.bf16.msra.mxu0 %v3655
  %5949 = vmatpush.bf16.msra.mxu0 %v3651
  %5950 = vmatpush.bf16.msra.mxu0 %v3647
  %5951 = vmatmul.bf16.gmra.mxu0 %v836
  %v5952 = vpop.f32.mrf.mxu0
  %v5953 = vadd.f32 %v5940, %v5952
  %v5954 = vpop.f32.mrf.mxu0
  %5955 = vdwg.mxu0
  %5956 = vmatpush.bf16.msra.mxu0 %v3707
  %5957 = vmatpush.bf16.msra.mxu0 %v3703
  %5958 = vmatpush.bf16.msra.mxu0 %v3699
  %5959 = vmatpush.bf16.msra.mxu0 %v3695
  %5960 = vmatpush.bf16.msra.mxu0 %v3691
  %5961 = vmatpush.bf16.msra.mxu0 %v3687
  %5962 = vmatpush.bf16.msra.mxu0 %v3683
  %5963 = vmatpush.bf16.msra.mxu0 %v3679
  %5964 = vmatmul.bf16.gmra.mxu0 %v837
  %v5965 = vpop.f32.mrf.mxu0
  %v5966 = vadd.f32 %v5953, %v5965
  %v5967 = vpop.f32.mrf.mxu0
  %5968 = vdwg.mxu0
  %5969 = vmatpush.bf16.msra.mxu0 %v3739
  %5970 = vmatpush.bf16.msra.mxu0 %v3735
  %5971 = vmatpush.bf16.msra.mxu0 %v3731
  %5972 = vmatpush.bf16.msra.mxu0 %v3727
  %5973 = vmatpush.bf16.msra.mxu0 %v3723
  %5974 = vmatpush.bf16.msra.mxu0 %v3719
  %5975 = vmatpush.bf16.msra.mxu0 %v3715
  %5976 = vmatpush.bf16.msra.mxu0 %v3711
  %5977 = vmatmul.bf16.gmra.mxu0 %v838
  %v5978 = vpop.f32.mrf.mxu0
  %v5979 = vadd.f32 %v5966, %v5978
  %v5980 = vpop.f32.mrf.mxu0
  %5981 = vdwg.mxu0
  %5982 = vmatpush.bf16.msra.mxu0 %v3771
  %5983 = vmatpush.bf16.msra.mxu0 %v3767
  %5984 = vmatpush.bf16.msra.mxu0 %v3763
  %5985 = vmatpush.bf16.msra.mxu0 %v3759
  %5986 = vmatpush.bf16.msra.mxu0 %v3755
  %5987 = vmatpush.bf16.msra.mxu0 %v3751
  %5988 = vmatpush.bf16.msra.mxu0 %v3747
  %5989 = vmatpush.bf16.msra.mxu0 %v3743
  %5990 = vmatmul.bf16.gmra.mxu0 %v841
  %v5991 = vpop.f32.mrf.mxu0
  %v5992 = vadd.f32 %v5979, %v5991
  %v5993 = vpop.f32.mrf.mxu0
  %5994 = vdwg.mxu0
  %5995 = vmatpush.bf16.msra.mxu0 %v3803
  %5996 = vmatpush.bf16.msra.mxu0 %v3799
  %5997 = vmatpush.bf16.msra.mxu0 %v3795
  %5998 = vmatpush.bf16.msra.mxu0 %v3791
  %5999 = vmatpush.bf16.msra.mxu0 %v3787
  %6000 = vmatpush.bf16.msra.mxu0 %v3783
  %6001 = vmatpush.bf16.msra.mxu0 %v3779
  %6002 = vmatpush.bf16.msra.mxu0 %v3775
  %6003 = vmatmul.bf16.gmra.mxu0 %v842
  %v6004 = vpop.f32.mrf.mxu0
  %v6005 = vadd.f32 %v5992, %v6004
  %v6006 = vpop.f32.mrf.mxu0
  %6007 = vdwg.mxu0
  %6008 = vmatpush.bf16.msra.mxu0 %v3835
  %6009 = vmatpush.bf16.msra.mxu0 %v3831
  %6010 = vmatpush.bf16.msra.mxu0 %v3827
  %6011 = vmatpush.bf16.msra.mxu0 %v3823
  %6012 = vmatpush.bf16.msra.mxu0 %v3819
  %6013 = vmatpush.bf16.msra.mxu0 %v3815
  %6014 = vmatpush.bf16.msra.mxu0 %v3811
  %6015 = vmatpush.bf16.msra.mxu0 %v3807
  %6016 = vmatmul.bf16.gmra.mxu0 %v843
  %v6017 = vpop.f32.mrf.mxu0
  %v6018 = vadd.f32 %v6005, %v6017
  %v6019 = vpop.f32.mrf.mxu0
  %6020 = vdwg.mxu0
  %6021 = vmatpush.bf16.msra.mxu0 %v3867
  %6022 = vmatpush.bf16.msra.mxu0 %v3863
  %6023 = vmatpush.bf16.msra.mxu0 %v3859
  %6024 = vmatpush.bf16.msra.mxu0 %v3855
  %6025 = vmatpush.bf16.msra.mxu0 %v3851
  %6026 = vmatpush.bf16.msra.mxu0 %v3847
  %6027 = vmatpush.bf16.msra.mxu0 %v3843
  %6028 = vmatpush.bf16.msra.mxu0 %v3839
  %6029 = vmatmul.bf16.gmra.mxu0 %v844
  %v6030 = vpop.f32.mrf.mxu0
  %v6031 = vadd.f32 %v6018, %v6030
  %v6032 = vpop.f32.mrf.mxu0
  %6033 = vdwg.mxu0
  %6034 = vmatpush.bf16.msra.mxu0 %v3899
  %6035 = vmatpush.bf16.msra.mxu0 %v3895
  %6036 = vmatpush.bf16.msra.mxu0 %v3891
  %6037 = vmatpush.bf16.msra.mxu0 %v3887
  %6038 = vmatpush.bf16.msra.mxu0 %v3883
  %6039 = vmatpush.bf16.msra.mxu0 %v3879
  %6040 = vmatpush.bf16.msra.mxu0 %v3875
  %6041 = vmatpush.bf16.msra.mxu0 %v3871
  %6042 = vmatmul.bf16.gmra.mxu0 %v845
  %v6043 = vpop.f32.mrf.mxu0
  %v6044 = vadd.f32 %v6031, %v6043
  %v6045 = vpop.f32.mrf.mxu0
  %6046 = vdwg.mxu0
  %6047 = vmatpush.bf16.msra.mxu0 %v3931
  %6048 = vmatpush.bf16.msra.mxu0 %v3927
  %6049 = vmatpush.bf16.msra.mxu0 %v3923
  %6050 = vmatpush.bf16.msra.mxu0 %v3919
  %6051 = vmatpush.bf16.msra.mxu0 %v3915
  %6052 = vmatpush.bf16.msra.mxu0 %v3911
  %6053 = vmatpush.bf16.msra.mxu0 %v3907
  %6054 = vmatpush.bf16.msra.mxu0 %v3903
  %6055 = vmatmul.bf16.gmra.mxu0 %v846
  %v6056 = vpop.f32.mrf.mxu0
  %v6057 = vadd.f32 %v6044, %v6056
  %v6058 = vpop.f32.mrf.mxu0
  %6059 = vdwg.mxu0
  %6060 = vmatpush.bf16.msra.mxu0 %v3963
  %6061 = vmatpush.bf16.msra.mxu0 %v3959
  %6062 = vmatpush.bf16.msra.mxu0 %v3955
  %6063 = vmatpush.bf16.msra.mxu0 %v3951
  %6064 = vmatpush.bf16.msra.mxu0 %v3947
  %6065 = vmatpush.bf16.msra.mxu0 %v3943
  %6066 = vmatpush.bf16.msra.mxu0 %v3939
  %6067 = vmatpush.bf16.msra.mxu0 %v3935
  %6068 = vmatmul.bf16.gmra.mxu0 %v847
  %v6069 = vpop.f32.mrf.mxu0
  %v6070 = vadd.f32 %v6057, %v6069
  %v6071 = vpop.f32.mrf.mxu0
  %6072 = vdwg.mxu0
  %6073 = vmatpush.bf16.msra.mxu0 %v3995
  %6074 = vmatpush.bf16.msra.mxu0 %v3991
  %6075 = vmatpush.bf16.msra.mxu0 %v3987
  %6076 = vmatpush.bf16.msra.mxu0 %v3983
  %6077 = vmatpush.bf16.msra.mxu0 %v3979
  %6078 = vmatpush.bf16.msra.mxu0 %v3975
  %6079 = vmatpush.bf16.msra.mxu0 %v3971
  %6080 = vmatpush.bf16.msra.mxu0 %v3967
  %6081 = vmatmul.bf16.gmra.mxu0 %v848
  %v6082 = vpop.f32.mrf.mxu0
  %v6083 = vadd.f32 %v6070, %v6082
  %v6084 = vpop.f32.mrf.mxu0
  %6085 = vdwg.mxu0
  %6086 = vmatpush.bf16.msra.mxu0 0
  %6087 = vmatpush.bf16.msra.mxu0 0
  %6088 = vmatpush.bf16.msra.mxu0 0
  %6089 = vmatpush.bf16.msra.mxu0 0
  %6090 = vmatpush.bf16.msra.mxu0 %v4011
  %6091 = vmatpush.bf16.msra.mxu0 %v4007
  %6092 = vmatpush.bf16.msra.mxu0 %v4003
  %6093 = vmatpush.bf16.msra.mxu0 %v3999
  %6094 = vmatmul.bf16.gmra.mxu0 %v4797
  %v6095 = vpop.f32.mrf.mxu0
  %v6096 = vadd.f32 %v6083, %v6095
  %v6097 = vpop.f32.mrf.mxu0
  %6098 = vdwg.mxu0
  %v6099 = vmax.f32 %v5121, 0.0
  %v6100 = vmax.f32 %v5446, 0.0
  %v6101 = vmax.f32 %v5771, 0.0
  %v6102 = vmax.f32 %v6096, 0.0
  %v6103 = vpack.c.bf16 %v6099, %v6099
  %v6104 = vpack.c.bf16 %v6100, %v6100
  %v6105 = vpack.c.bf16 %v6101, %v6101
  %v6106 = vpack.c.bf16 %v6102, %v6102
  %v6107 = vld [vmem:[%s3] sm:$0xf]
  %v6108 = vld [vmem:[%s3 + $0x4] sm:$0xf]
  %v6109 = vld [vmem:[%s3 + $0x8] sm:$0xf]
  %v6110 = vld [vmem:[%s3 + $0xc] sm:$0xf]
  %v6111 = vld [vmem:[%s3 + $0x10] sm:$0xf]
  %v6112 = vld [vmem:[%s3 + $0x14] sm:$0xf]
  %v6113 = vld [vmem:[%s3 + $0x18] sm:$0xf]
  %v6114 = vld [vmem:[%s3 + $0x1c] sm:$0xf]
  %v6115 = vld [vmem:[%s3 + $0x20] sm:$0xf]
  %v6116 = vld [vmem:[%s3 + $0x24] sm:$0xf]
  %v6117 = vld [vmem:[%s3 + $0x28] sm:$0xf]
  %v6118 = vld [vmem:[%s3 + $0x2c] sm:$0xf]
  %v6119 = vld [vmem:[%s3 + $0x30] sm:$0xf]
  %v6120 = vld [vmem:[%s3 + $0x34] sm:$0xf]
  %v6121 = vld [vmem:[%s3 + $0x38] sm:$0xf]
  %v6122 = vld [vmem:[%s3 + $0x3c] sm:$0xf]
  %v6123 = vld [vmem:[%s3 + $0x40] sm:$0xf]
  %v6124 = vld [vmem:[%s3 + $0x44] sm:$0xf]
  %v6125 = vld [vmem:[%s3 + $0x48] sm:$0xf]
  %v6126 = vld [vmem:[%s3 + $0x4c] sm:$0xf]
  %v6127 = vld [vmem:[%s3 + $0x50] sm:$0xf]
  %v6128 = vld [vmem:[%s3 + $0x54] sm:$0xf]
  %v6129 = vld [vmem:[%s3 + $0x58] sm:$0xf]
  %v6130 = vld [vmem:[%s3 + $0x5c] sm:$0xf]
  %v6131 = vld [vmem:[%s3 + $0x60] sm:$0xf]
  %v6132 = vld [vmem:[%s3 + $0x64] sm:$0xf]
  %v6133 = vld [vmem:[%s3 + $0x68] sm:$0xf]
  %v6134 = vld [vmem:[%s3 + $0x6c] sm:$0xf]
  %v6135 = vld [vmem:[%s3 + $0x70] sm:$0xf]
  %v6136 = vld [vmem:[%s3 + $0x74] sm:$0xf]
  %v6137 = vld [vmem:[%s3 + $0x78] sm:$0xf]
  %v6138 = vld [vmem:[%s3 + $0x7c] sm:$0xf]
  %v6139 = vld [vmem:[%s3 + $0x80] sm:$0xf]
  %v6140 = vld [vmem:[%s3 + $0x84] sm:$0xf]
  %v6141 = vld [vmem:[%s3 + $0x88] sm:$0xf]
  %v6142 = vld [vmem:[%s3 + $0x8c] sm:$0xf]
  %v6143 = vld [vmem:[%s3 + $0x90] sm:$0xf]
  %v6144 = vld [vmem:[%s3 + $0x94] sm:$0xf]
  %v6145 = vld [vmem:[%s3 + $0x98] sm:$0xf]
  %v6146 = vld [vmem:[%s3 + $0x9c] sm:$0xf]
  %v6147 = vld [vmem:[%s3 + $0xa0] sm:$0xf]
  %v6148 = vld [vmem:[%s3 + $0xa4] sm:$0xf]
  %v6149 = vld [vmem:[%s3 + $0xa8] sm:$0xf]
  %v6150 = vld [vmem:[%s3 + $0xac] sm:$0xf]
  %v6151 = vld [vmem:[%s3 + $0xb0] sm:$0xf]
  %v6152 = vld [vmem:[%s3 + $0xb4] sm:$0xf]
  %v6153 = vld [vmem:[%s3 + $0xb8] sm:$0xf]
  %v6154 = vld [vmem:[%s3 + $0xbc] sm:$0xf]
  %v6155 = vld [vmem:[%s3 + $0xc0] sm:$0xf]
  %v6156 = vld [vmem:[%s3 + $0xc4] sm:$0xf]
  %v6157 = vld [vmem:[%s3 + $0xc8] sm:$0xf]
  %v6158 = vld [vmem:[%s3 + $0xcc] sm:$0xf]
  %v6159 = vld [vmem:[%s3 + $0xd0] sm:$0xf]
  %v6160 = vld [vmem:[%s3 + $0xd4] sm:$0xf]
  %v6161 = vld [vmem:[%s3 + $0xd8] sm:$0xf]
  %v6162 = vld [vmem:[%s3 + $0xdc] sm:$0xf]
  %v6163 = vld [vmem:[%s3 + $0xe0] sm:$0xf]
  %v6164 = vld [vmem:[%s3 + $0xe4] sm:$0xf]
  %v6165 = vld [vmem:[%s3 + $0xe8] sm:$0xf]
  %v6166 = vld [vmem:[%s3 + $0xec] sm:$0xf]
  %v6167 = vld [vmem:[%s3 + $0xf0] sm:$0xf]
  %v6168 = vld [vmem:[%s3 + $0xf4] sm:$0xf]
  %v6169 = vld [vmem:[%s3 + $0xf8] sm:$0xf]
  %v6170 = vld [vmem:[%s3 + $0xfc] sm:$0xf]
  %v6171 = vld [vmem:[%s4] sm:$0x1]
  %v6173 = vperm.slane %v6171, 0
  %v6239 = vunpack.c.l.b16 %v6107
  %v6240 = vunpack.c.l.b16 %v6108
  %v6241 = vunpack.c.l.b16 %v6109
  %v6242 = vunpack.c.l.b16 %v6110
  %v6243 = vunpack.c.l.b16 %v6111
  %v6244 = vunpack.c.l.b16 %v6112
  %v6245 = vunpack.c.l.b16 %v6113
  %v6246 = vunpack.c.l.b16 %v6114
  %v6247 = vunpack.c.l.b16 %v6115
  %v6248 = vunpack.c.l.b16 %v6116
  %v6249 = vunpack.c.l.b16 %v6117
  %v6250 = vunpack.c.l.b16 %v6118
  %v6251 = vunpack.c.l.b16 %v6119
  %v6252 = vunpack.c.l.b16 %v6120
  %v6253 = vunpack.c.l.b16 %v6121
  %v6254 = vunpack.c.l.b16 %v6122
  %v6255 = vunpack.c.l.b16 %v6123
  %v6256 = vunpack.c.l.b16 %v6124
  %v6257 = vunpack.c.l.b16 %v6125
  %v6258 = vunpack.c.l.b16 %v6126
  %v6259 = vunpack.c.l.b16 %v6127
  %v6260 = vunpack.c.l.b16 %v6128
  %v6261 = vunpack.c.l.b16 %v6129
  %v6262 = vunpack.c.l.b16 %v6130
  %v6263 = vunpack.c.l.b16 %v6131
  %v6264 = vunpack.c.l.b16 %v6132
  %v6265 = vunpack.c.l.b16 %v6133
  %v6266 = vunpack.c.l.b16 %v6134
  %v6267 = vunpack.c.l.b16 %v6135
  %v6268 = vunpack.c.l.b16 %v6136
  %v6269 = vunpack.c.l.b16 %v6137
  %v6270 = vunpack.c.l.b16 %v6138
  %v6271 = vunpack.c.l.b16 %v6139
  %v6272 = vunpack.c.l.b16 %v6140
  %v6273 = vunpack.c.l.b16 %v6141
  %v6274 = vunpack.c.l.b16 %v6142
  %v6275 = vunpack.c.l.b16 %v6143
  %v6276 = vunpack.c.l.b16 %v6144
  %v6277 = vunpack.c.l.b16 %v6145
  %v6278 = vunpack.c.l.b16 %v6146
  %v6279 = vunpack.c.l.b16 %v6147
  %v6280 = vunpack.c.l.b16 %v6148
  %v6281 = vunpack.c.l.b16 %v6149
  %v6282 = vunpack.c.l.b16 %v6150
  %v6283 = vunpack.c.l.b16 %v6151
  %v6284 = vunpack.c.l.b16 %v6152
  %v6285 = vunpack.c.l.b16 %v6153
  %v6286 = vunpack.c.l.b16 %v6154
  %v6287 = vunpack.c.l.b16 %v6155
  %v6288 = vunpack.c.l.b16 %v6156
  %v6289 = vunpack.c.l.b16 %v6157
  %v6290 = vunpack.c.l.b16 %v6158
  %v6291 = vunpack.c.l.b16 %v6159
  %v6292 = vunpack.c.l.b16 %v6160
  %v6293 = vunpack.c.l.b16 %v6161
  %v6294 = vunpack.c.l.b16 %v6162
  %v6295 = vunpack.c.l.b16 %v6163
  %v6296 = vunpack.c.l.b16 %v6164
  %v6297 = vunpack.c.l.b16 %v6165
  %v6298 = vunpack.c.l.b16 %v6166
  %v6299 = vunpack.c.l.b16 %v6167
  %v6300 = vunpack.c.l.b16 %v6168
  %v6301 = vunpack.c.l.b16 %v6169
  %v6302 = vunpack.c.l.b16 %v6170
  %v6303 = vpack.c.b16 %v6240, %v6239
  %v6304 = vpack.c.b16 %v6242, %v6241
  %v6305 = vpack.c.b16 %v6244, %v6243
  %v6306 = vpack.c.b16 %v6246, %v6245
  %v6307 = vpack.c.b16 %v6248, %v6247
  %v6308 = vpack.c.b16 %v6250, %v6249
  %v6309 = vpack.c.b16 %v6252, %v6251
  %v6310 = vpack.c.b16 %v6254, %v6253
  %v6311 = vpack.c.b16 %v6256, %v6255
  %v6312 = vpack.c.b16 %v6258, %v6257
  %v6313 = vpack.c.b16 %v6260, %v6259
  %v6314 = vpack.c.b16 %v6262, %v6261
  %v6315 = vpack.c.b16 %v6264, %v6263
  %v6316 = vpack.c.b16 %v6266, %v6265
  %v6317 = vpack.c.b16 %v6268, %v6267
  %v6318 = vpack.c.b16 %v6270, %v6269
  %v6319 = vpack.c.b16 %v6272, %v6271
  %v6320 = vpack.c.b16 %v6274, %v6273
  %v6321 = vpack.c.b16 %v6276, %v6275
  %v6322 = vpack.c.b16 %v6278, %v6277
  %v6323 = vpack.c.b16 %v6280, %v6279
  %v6324 = vpack.c.b16 %v6282, %v6281
  %v6325 = vpack.c.b16 %v6284, %v6283
  %v6326 = vpack.c.b16 %v6286, %v6285
  %v6327 = vpack.c.b16 %v6288, %v6287
  %v6328 = vpack.c.b16 %v6290, %v6289
  %v6329 = vpack.c.b16 %v6292, %v6291
  %v6330 = vpack.c.b16 %v6294, %v6293
  %v6331 = vpack.c.b16 %v6296, %v6295
  %v6332 = vpack.c.b16 %v6298, %v6297
  %v6333 = vpack.c.b16 %v6300, %v6299
  %v6334 = vpack.c.b16 %v6302, %v6301
  %6367 = vmatpush.bf16.msra.mxu0 %v6310
  %6368 = vmatpush.bf16.msra.mxu0 %v6309
  %6369 = vmatpush.bf16.msra.mxu0 %v6308
  %6370 = vmatpush.bf16.msra.mxu0 %v6307
  %6371 = vmatpush.bf16.msra.mxu0 %v6306
  %6372 = vmatpush.bf16.msra.mxu0 %v6305
  %6373 = vmatpush.bf16.msra.mxu0 %v6304
  %6374 = vmatpush.bf16.msra.mxu0 %v6303
  %6375 = vmatmul.bf16.gmra.mxu0 %v6103
  %v6376 = vpop.f32.mrf.mxu0
  %v6377 = vadd.f32 %v6173, %v6376
  %v6378 = vpop.f32.mrf.mxu0
  %6379 = vdwg.mxu0
  %6380 = vmatpush.bf16.msra.mxu0 %v6318
  %6381 = vmatpush.bf16.msra.mxu0 %v6317
  %6382 = vmatpush.bf16.msra.mxu0 %v6316
  %6383 = vmatpush.bf16.msra.mxu0 %v6315
  %6384 = vmatpush.bf16.msra.mxu0 %v6314
  %6385 = vmatpush.bf16.msra.mxu0 %v6313
  %6386 = vmatpush.bf16.msra.mxu0 %v6312
  %6387 = vmatpush.bf16.msra.mxu0 %v6311
  %6388 = vmatmul.bf16.gmra.mxu0 %v6104
  %v6389 = vpop.f32.mrf.mxu0
  %v6390 = vadd.f32 %v6377, %v6389
  %v6391 = vpop.f32.mrf.mxu0
  %6392 = vdwg.mxu0
  %6393 = vmatpush.bf16.msra.mxu0 %v6326
  %6394 = vmatpush.bf16.msra.mxu0 %v6325
  %6395 = vmatpush.bf16.msra.mxu0 %v6324
  %6396 = vmatpush.bf16.msra.mxu0 %v6323
  %6397 = vmatpush.bf16.msra.mxu0 %v6322
  %6398 = vmatpush.bf16.msra.mxu0 %v6321
  %6399 = vmatpush.bf16.msra.mxu0 %v6320
  %6400 = vmatpush.bf16.msra.mxu0 %v6319
  %6401 = vmatmul.bf16.gmra.mxu0 %v6105
  %v6402 = vpop.f32.mrf.mxu0
  %v6403 = vadd.f32 %v6390, %v6402
  %v6404 = vpop.f32.mrf.mxu0
  %6405 = vdwg.mxu0
  %6406 = vmatpush.bf16.msra.mxu0 %v6334
  %6407 = vmatpush.bf16.msra.mxu0 %v6333
  %6408 = vmatpush.bf16.msra.mxu0 %v6332
  %6409 = vmatpush.bf16.msra.mxu0 %v6331
  %6410 = vmatpush.bf16.msra.mxu0 %v6330
  %6411 = vmatpush.bf16.msra.mxu0 %v6329
  %6412 = vmatpush.bf16.msra.mxu0 %v6328
  %6413 = vmatpush.bf16.msra.mxu0 %v6327
  %6414 = vmatmul.bf16.gmra.mxu0 %v6106
  %v6415 = vpop.f32.mrf.mxu0
  %v6416 = vadd.f32 %v6403, %v6415
  %v6417 = vpop.f32.mrf.mxu0
  %6418 = vdwg.mxu0
  %6419 = vst [vmem:[%s5] sm:$0x3] %v6416
  // Predicated region
  $region22: #{d2qn_forward.7} parent=0 // pred_check
    _
  $region23: #{d2qn_forward.7} parent=0 // pred_check_branch
    %6421 = sbr.rel (0) target = $region25
  $region24: #{d2qn_forward.7} parent=0 // pred_region
    _
  $region25: #{d2qn_forward.7} parent=0 // pred_fallthru
    _
  // Predicated region
  $region26: #{d2qn_forward.7} parent=0 // pred_check
    _
  $region27: #{d2qn_forward.7} parent=0 // pred_check_branch
    %6423 = sbr.rel (0) target = $region29
  $region28: #{d2qn_forward.7} parent=0 // pred_region
    _
  $region29: #{d2qn_forward.7} parent=0 // pred_fallthru
    _

</llo_original>
